<compile_context>
chip_gen: v5e
topology: v5e:2x2
jax: 0.10.0
libtpu: 0.0.40
codegen_flags: <defaults>
</compile_context>

<pallas_src>
from functools import partial

import jax
import jax.numpy as jnp
from jax.experimental import pallas as pl
from jax.experimental.pallas import tpu as pltpu

_LANE = 128
_HALO = 3          # max dilation of the depthwise convs => halo rows/cols


def _round_up(x, m):
    return (x + m - 1) // m * m


def _gelu_tanh(x):
    # tanh-approximate GELU: the transcendental runs on the (otherwise idle)
    # EUP slot instead of an erf polynomial on the saturated VALU.
    # Deviates from PyTorch's exact-erf F.gelu by < ~1e-3 absolute.
    c0 = 0.7978845608028654      # sqrt(2/pi)
    c1 = 0.044715
    return 0.5 * x * (1.0 + jnp.tanh(c0 * (x + c1 * x * x * x)))


def _vmem_capacity_bytes():
    try:
        return int(pltpu.get_tpu_info().vmem_capacity_bytes)
    except Exception:
        return 64 * 1024 * 1024          # v7x-safe fallback


def _default_compute_dtype():
    # Packed-bf16 VALU exists on v6e/v7x; keep elementwise math in f32 on
    # older generations (v5e and earlier have no bf16 VPU path).
    try:
        kind = jax.devices()[0].device_kind.lower()
    except Exception:
        return jnp.bfloat16
    if any(v in kind for v in ("v2", "v3", "v4", "v5")):
        return jnp.float32
    return jnp.bfloat16


def _estimate_vmem_bytes(TH, W, Wp, Cp, Fp, csize):
    """Conservative per-step VMEM estimate (slab, intermediates, out buffers)."""
    rows = TH + 2 * _HALO
    slab = rows * Wp
    tile = TH * W
    return (slab * Cp * 2 * 2                     # bf16 slab scratch + reshape copy
            + slab * Fp * (4 + csize)             # per-branch y (f32 matmul + cdt)
            + slab * Fp * csize                   # shifted column copy
            + 3 * tile * Fp * csize               # z accumulator / g / tap temp
            + tile * Cp * 4                       # project_out f32 result
            + 2 * tile * Cp * 2                   # double-buffered bf16 out block
            + (3 * Cp * Fp + Fp * Cp) * 2 + 27 * Fp * csize)   # weights


def _pick_block_h(H, W, Wp, Cp, Fp, csize, budget):
    cands = [d for d in range(1, min(H, 256) + 1) if H % d == 0]
    fitting = [th for th in cands
               if _estimate_vmem_bytes(th, W, Wp, Cp, Fp, csize) <= budget]
    if fitting:
        return max(fitting)
    # TODO(synk): add a W-tile grid axis (with column halos) for very wide
    # images instead of shrinking TH below the efficient range here.
    return min(cands)


def msfn_kernel(x_hbm, w_in1_ref, w_in2_ref, w_in3_ref,
                dw1_ref, dw2_ref, dw3_ref, w_out_ref,
                o_ref, slab_ref, dma_sem, *, TH, W, Wp, Cp, Fp, cdt):
    b = pl.program_id(0)
    t = pl.program_id(1)
    rows = TH + 2 * _HALO

    # ---- fetch the (TH+6)-row halo slab straight from the (pre-padded) HBM
    #      activation; borders are real zeros, so no masking / concatenation.
    row0 = pl.multiple_of(t * TH, TH)
    cp = pltpu.make_async_copy(x_hbm.at[b, pl.ds(row0, rows)], slab_ref, dma_sem)
    cp.start()
    # TODO(synk): double-buffer this slab DMA across grid steps to hide it fully.
    cp.wait()

    slab2d = slab_ref[...].reshape(rows * Wp, Cp)          # bf16, layout-trivial

    branches = ((1, w_in1_ref, dw1_ref),
                (2, w_in2_ref, dw2_ref),
                (3, w_in3_ref, dw3_ref))
    g = None
    for i, (dil, w_ref, dw_ref) in enumerate(branches):
        # project_in (per branch): bf16 MXU matmul, f32 accumulation, then the
        # elementwise compute dtype (bf16 on v6e/v7x, f32 on v5e).
        y = jnp.dot(slab2d, w_ref[...], preferred_element_type=jnp.float32)
        y = y.reshape(rows, Wp, Fp).astype(cdt)
        dw = dw_ref[...]                                    # (9, Fp) taps in cdt

        # Depthwise 3x3, dilation = padding = dil.  Column shift factored out:
        # only 3 sublane-offset slices materialise per branch; the row shifts
        # are leading-dim slices (free).
        z = None
        for kj in range(3):
            c0 = _HALO + (kj - 1) * dil
            ycol = y[:, c0:c0 + W, :]                       # (rows, W, Fp)
            for ki in range(3):
                r0 = _HALO + (ki - 1) * dil
                term = ycol[r0:r0 + TH] * dw[ki * 3 + kj]
                z = term if z is None else z + term
        g = _gelu_tanh(z) if i == 0 else g * z

    # ---- project_out: bf16 MXU matmul, f32 accumulation, lane-dense bf16 store.
    out = jnp.dot(g.reshape(TH * W, Fp).astype(jnp.bfloat16), w_out_ref[...],
                  preferred_element_type=jnp.float32)
    o_ref[...] = out.reshape(1, TH, W, Cp).astype(o_ref.dtype)


def msfn_forward(x_nchw, params, block_h=None, compute_dtype=None):
    B, C, H, W = x_nchw.shape
    F = params["w_in1"].shape[1]

    Cp = _round_up(C, _LANE)
    Fp = _round_up(F, _LANE)

    cdt = compute_dtype if compute_dtype is not None else _default_compute_dtype()
    csize = jnp.dtype(cdt).itemsize

    # Pad W so the padded width is sublane-tile aligned: keeps the in-kernel
    # (rows, Wp, C) <-> (rows*Wp, C) reshapes layout-trivial (no relayout copy).
    Wp = _round_up(W + 2 * _HALO, 16)
    Hp = H + 2 * _HALO

    cap = _vmem_capacity_bytes()
    if block_h is None:
        TH = _pick_block_h(H, W, Wp, Cp, Fp, csize, budget=int(0.40 * cap))
    else:
        TH = block_h
    assert H % TH == 0, (H, TH)
    n_h = H // TH
    rows = TH + 2 * _HALO

    est = _estimate_vmem_bytes(TH, W, Wp, Cp, Fp, csize)
    vmem_limit = min(int(0.80 * cap), max(2 * est + (8 << 20), 32 << 20))

    # ---- wrapper-side weight packing: lane-padded, bf16 MXU weights, cdt taps.
    def pad2(w, r, c):
        return jnp.pad(w, ((0, r - w.shape[0]), (0, c - w.shape[1])))

    w_in1 = pad2(params["w_in1"], Cp, Fp).astype(jnp.bfloat16)
    w_in2 = pad2(params["w_in2"], Cp, Fp).astype(jnp.bfloat16)
    w_in3 = pad2(params["w_in3"], Cp, Fp).astype(jnp.bfloat16)
    w_out = pad2(params["w_out"], Fp, Cp).astype(jnp.bfloat16)

    def pack_dw(w):                    # (3, 3, F) -> (9, Fp), row-major ki*3+kj
        return jnp.pad(w.reshape(9, F), ((0, 0), (0, Fp - F))).astype(cdt)

    dw1, dw2, dw3 = (pack_dw(params[k]) for k in ("dw1", "dw2", "dw3"))

    # ---- activations: NCHW -> NHWC, zero-pad channels (lane) and H/W (halo),
    #      bf16 for the MXU.  Zero padding == the convs' zero padding (bias-free).
    x = jnp.transpose(x_nchw, (0, 2, 3, 1))
    x = jnp.pad(x, ((0, 0), (_HALO, _HALO),
                    (_HALO, Wp - W - _HALO), (0, Cp - C))).astype(jnp.bfloat16)

    kernel = partial(msfn_kernel, TH=TH, W=W, Wp=Wp, Cp=Cp, Fp=Fp, cdt=cdt)

    n_pix = B * H * W
    slab_pix = B * n_h * rows * Wp
    flops = (2 * slab_pix * Cp * 3 * Fp            # project_in (incl. halo rows)
             + 2 * n_pix * Fp * Cp                 # project_out
             + n_pix * Fp * (27 * 2 + 12))         # depthwise taps + gelu + gating
    bytes_accessed = (slab_pix * Cp * 2            # slab reads (bf16)
                      + n_pix * Cp * 2             # output (bf16)
                      + (3 * Cp * Fp + Fp * Cp) * 2 + 27 * Fp * csize)

    def const_spec(shape):
        return pl.BlockSpec(shape, lambda b, t, _n=len(shape): (0,) * _n)

    out = pl.pallas_call(
        kernel,
        out_shape=jax.ShapeDtypeStruct((B, H, W, Cp), jnp.bfloat16),
        grid_spec=pltpu.PrefetchScalarGridSpec(
            num_scalar_prefetch=0,
            grid=(B, n_h),
            in_specs=[
                pl.BlockSpec(memory_space=pl.ANY),    # padded activations (HBM)
                const_spec((Cp, Fp)), const_spec((Cp, Fp)), const_spec((Cp, Fp)),
                const_spec((9, Fp)), const_spec((9, Fp)), const_spec((9, Fp)),
                const_spec((Fp, Cp)),
            ],
            out_specs=pl.BlockSpec((1, TH, W, Cp), lambda b, t: (b, t, 0, 0)),
            scratch_shapes=[pltpu.VMEM((rows, Wp, Cp), jnp.bfloat16),
                            pltpu.SemaphoreType.DMA(())],
        ),
        compiler_params=pltpu.CompilerParams(
            dimension_semantics=("parallel", "parallel"),
            vmem_limit_bytes=vmem_limit),
        cost_estimate=pl.CostEstimate(
            flops=flops, transcendentals=n_pix * Fp,
            bytes_accessed=bytes_accessed),
    )(x, w_in1, w_in2, w_in3, dw1, dw2, dw3, w_out)

    out = out[..., :C].astype(x_nchw.dtype)        # strip channel padding
    return jnp.transpose(out, (0, 3, 1, 2))        # NHWC -> NCHW


def init_params(key, dim, ffn_expansion_factor=2.66):
    """Deterministic synthetic weights matching the PyTorch module's shapes."""
    hidden = int(dim * ffn_expansion_factor)
    ks = jax.random.split(key, 6)
    s = 0.25
    # project_in: Conv3d(dim, 3*hidden, 1x1x1) weight (3F, dim, 1, 1, 1)
    w_in = jax.random.normal(ks[0], (3 * hidden, dim), jnp.float32) * s
    w_in1 = w_in[0 * hidden:1 * hidden].T          # (dim, F)
    w_in2 = w_in[1 * hidden:2 * hidden].T
    w_in3 = w_in[2 * hidden:3 * hidden].T
    # dwconv1: Conv3d(F, F, 3x3x3, groups=F) weight (F, 1, 3, 3, 3); depth==1
    # with padding 1 => only the middle depth slice (kd == 1) touches data.
    dw1_full = jax.random.normal(ks[1], (hidden, 3, 3, 3), jnp.float32) * s
    dw1 = jnp.transpose(dw1_full[:, 1, :, :], (1, 2, 0))    # (3, 3, F)
    # dwconv2 / dwconv3: Conv2d(F, F, 3x3, groups=F) weight (F, 1, 3, 3)
    dw2 = jnp.transpose(jax.random.normal(ks[2], (hidden, 3, 3), jnp.float32) * s,
                        (1, 2, 0))
    dw3 = jnp.transpose(jax.random.normal(ks[3], (hidden, 3, 3), jnp.float32) * s,
                        (1, 2, 0))
    # project_out: Conv3d(F, dim, 1x1x1) weight (dim, F, 1, 1, 1)
    w_out = (jax.random.normal(ks[4], (dim, hidden), jnp.float32) * s).T  # (F, dim)
    return dict(w_in1=w_in1, w_in2=w_in2, w_in3=w_in3,
                dw1=dw1, dw2=dw2, dw3=dw3, w_out=w_out)


def msfn_reference(x_nchw, params):
    """Pure-JAX (XLA) reference with PyTorch semantics: bf16 MXU matmuls with
    f32 accumulation, f32 depthwise convs, exact-erf GELU."""
    x = jnp.transpose(x_nchw, (0, 2, 3, 1)).astype(jnp.bfloat16)

    def mm(a, w):
        return jnp.dot(a, w.astype(jnp.bfloat16),
                       preferred_element_type=jnp.float32)

    y1 = mm(x, params["w_in1"])
    y2 = mm(x, params["w_in2"])
    y3 = mm(x, params["w_in3"])

    def dw(z, w, d):
        k = w[:, :, None, :].astype(jnp.float32)   # HWIO, I=1 (depthwise)
        return jax.lax.conv_general_dilated(
            z, k, window_strides=(1, 1), padding=[(d, d), (d, d)],
            rhs_dilation=(d, d),
            dimension_numbers=("NHWC", "HWIO", "NHWC"),
            feature_group_count=z.shape[-1],
            precision=jax.lax.Precision.HIGHEST)

    z1 = dw(y1, params["dw1"], 1)
    z2 = dw(y2, params["dw2"], 2)
    z3 = dw(y3, params["dw3"], 3)
    g = jax.nn.gelu(z1, approximate=False) * z2 * z3
    out = mm(g.astype(jnp.bfloat16), params["w_out"])
    return jnp.transpose(out, (0, 3, 1, 2))


if __name__ == "__main__":
    key = jax.random.PRNGKey(0)
    k_x, k_p = jax.random.split(key)

    B, dim, H, W = 2, 4, 16, 16
    x = jax.random.normal(k_x, (B, dim, H, W), jnp.float32)
    params = init_params(k_p, dim)

    ref = jax.block_until_ready(msfn_reference(x, params))

    # block_h=8 exercises the multi-tile / halo path (grid = (B, 2));
    # block_h=None exercises the generation-aware auto tile picker.
    for bh in (8, None):
        out = jax.block_until_ready(msfn_forward(x, params, block_h=bh))
        assert out.shape == (B, dim, H, W)
        err = jnp.max(jnp.abs(out - ref))
        assert jnp.allclose(out, ref, atol=3e-2, rtol=3e-2), \
            f"block_h={bh}: max abs err = {err}"

    print("KERNEL_OK")
</pallas_src>

<mosaic_0001>
module attributes {stable_mosaic.version = 11 : i64} {
  func.func @msfn_kernel(%arg0: i32, %arg1: i32, %arg2: memref<2x22x32x128xbf16, #tpu.memory_space<any>>, %arg3: memref<128x128xbf16, #tpu.memory_space<vmem>>, %arg4: memref<128x128xbf16, #tpu.memory_space<vmem>>, %arg5: memref<128x128xbf16, #tpu.memory_space<vmem>>, %arg6: memref<9x128xbf16, #tpu.memory_space<vmem>>, %arg7: memref<9x128xbf16, #tpu.memory_space<vmem>>, %arg8: memref<9x128xbf16, #tpu.memory_space<vmem>>, %arg9: memref<128x128xbf16, #tpu.memory_space<vmem>>, %arg10: memref<1x8x16x128xbf16, #tpu.memory_space<vmem>>, %arg11: memref<14x32x128xbf16, #tpu.memory_space<vmem>>, %arg12: memref<!tpu.dma_semaphore, #tpu.memory_space<semaphore_mem>>) attributes {dimension_semantics = [#tpu.dimension_semantics<parallel>, #tpu.dimension_semantics<parallel>], iteration_bounds = array<i64: 2, 2>, scalar_prefetch = 0 : i64, scratch_operands = 2 : i64, tpu.core_type = #tpu.core_type<tc>, window_params = [{}, {pipeline_mode = #tpu.pipeline_mode<synchronous>, transform_indices = @transform_1, window_bounds = array<i64: 128, 128>}, {pipeline_mode = #tpu.pipeline_mode<synchronous>, transform_indices = @transform_2, window_bounds = array<i64: 128, 128>}, {pipeline_mode = #tpu.pipeline_mode<synchronous>, transform_indices = @transform_3, window_bounds = array<i64: 128, 128>}, {pipeline_mode = #tpu.pipeline_mode<synchronous>, transform_indices = @transform_4, window_bounds = array<i64: 9, 128>}, {pipeline_mode = #tpu.pipeline_mode<synchronous>, transform_indices = @transform_5, window_bounds = array<i64: 9, 128>}, {pipeline_mode = #tpu.pipeline_mode<synchronous>, transform_indices = @transform_6, window_bounds = array<i64: 9, 128>}, {pipeline_mode = #tpu.pipeline_mode<synchronous>, transform_indices = @transform_7, window_bounds = array<i64: 128, 128>}, {transform_indices = @transform_8, window_bounds = array<i64: 1, 8, 16, 128>}]} {
    %c8_i32 = arith.constant 8 : i32
    %0 = arith.muli %arg1, %c8_i32 : i32
    %1 = tpu.assume_multiple %0, 8 : i32
    %c0_i32 = arith.constant 0 : i32
    %c0_i32_0 = arith.constant 0 : i32
    %2 = tpu.memref_slice %arg2[%arg0, %1, %c0_i32, %c0_i32_0] : memref<2x22x32x128xbf16, #tpu.memory_space<any>> -> memref<1x14x32x128xbf16, #tpu.memory_space<any>>
    %3 = tpu.memref_squeeze %2 : memref<1x14x32x128xbf16, #tpu.memory_space<any>> -> memref<14x32x128xbf16, #tpu.memory_space<any>>
    tpu.enqueue_dma source(%3 : memref<14x32x128xbf16, #tpu.memory_space<any>>) target(%arg11 : memref<14x32x128xbf16, #tpu.memory_space<vmem>>) target_semaphore(%arg12 : memref<!tpu.dma_semaphore, #tpu.memory_space<semaphore_mem>>)
    %c0_i32_1 = arith.constant 0 : i32
    %c0_i32_2 = arith.constant 0 : i32
    %4 = tpu.memref_slice %arg2[%arg0, %1, %c0_i32_1, %c0_i32_2] : memref<2x22x32x128xbf16, #tpu.memory_space<any>> -> memref<1x14x32x128xbf16, #tpu.memory_space<any>>
    %5 = tpu.memref_squeeze %4 : memref<1x14x32x128xbf16, #tpu.memory_space<any>> -> memref<14x32x128xbf16, #tpu.memory_space<any>>
    tpu.wait_dma2 semaphore(%arg12 : memref<!tpu.dma_semaphore, #tpu.memory_space<semaphore_mem>>) src(%5 : memref<14x32x128xbf16, #tpu.memory_space<any>>) dst(%arg11 : memref<14x32x128xbf16, #tpu.memory_space<vmem>>)
    %c0 = arith.constant 0 : index
    %c0_3 = arith.constant 0 : index
    %c0_4 = arith.constant 0 : index
    %6 = vector.load %arg11[%c0, %c0_3, %c0_4] : memref<14x32x128xbf16, #tpu.memory_space<vmem>>, vector<14x32x128xbf16>
    %7 = vector.shape_cast %6 : vector<14x32x128xbf16> to vector<448x128xbf16>
    %c0_5 = arith.constant 0 : index
    %c0_6 = arith.constant 0 : index
    %8 = vector.load %arg3[%c0_5, %c0_6] : memref<128x128xbf16, #tpu.memory_space<vmem>>, vector<128x128xbf16>
    %cst = arith.constant dense<0.000000e+00> : vector<448x128xf32>
    %9 = tpu.matmul %7, %8, %cst {dimension_numbers = #tpu.dot_dimension_numbers<[1], [0], [0], [1], [0, 0, 1, 1], [], []>} : vector<448x128xbf16>, vector<128x128xbf16>, vector<448x128xf32> -> vector<448x128xf32>
    %10 = vector.shape_cast %9 : vector<448x128xf32> to vector<14x32x128xf32>
    %11 = arith.truncf %10 : vector<14x32x128xf32> to vector<14x32x128xbf16>
    %c0_7 = arith.constant 0 : index
    %c0_8 = arith.constant 0 : index
    %12 = vector.load %arg6[%c0_7, %c0_8] : memref<9x128xbf16, #tpu.memory_space<vmem>>, vector<9x128xbf16>
    %13 = vector.extract_strided_slice %11 {offsets = [0, 2, 0], sizes = [14, 16, 128], strides = [1, 1, 1]} : vector<14x32x128xbf16> to vector<14x16x128xbf16>
    %14 = vector.extract_strided_slice %13 {offsets = [2, 0, 0], sizes = [8, 16, 128], strides = [1, 1, 1]} : vector<14x16x128xbf16> to vector<8x16x128xbf16>
    %15 = vector.extract_strided_slice %12 {offsets = [0, 0], sizes = [1, 128], strides = [1, 1]} : vector<9x128xbf16> to vector<1x128xbf16>
    %16 = vector.shape_cast %15 : vector<1x128xbf16> to vector<128xbf16>
    %17 = vector.shape_cast %16 : vector<128xbf16> to vector<1x1x128xbf16>
    %18 = vector.broadcast %17 : vector<1x1x128xbf16> to vector<8x16x128xbf16>
    %19 = arith.mulf %14, %18 : vector<8x16x128xbf16>
    %20 = vector.extract_strided_slice %13 {offsets = [3, 0, 0], sizes = [8, 16, 128], strides = [1, 1, 1]} : vector<14x16x128xbf16> to vector<8x16x128xbf16>
    %21 = vector.extract_strided_slice %12 {offsets = [3, 0], sizes = [1, 128], strides = [1, 1]} : vector<9x128xbf16> to vector<1x128xbf16>
    %22 = vector.shape_cast %21 : vector<1x128xbf16> to vector<128xbf16>
    %23 = vector.shape_cast %22 : vector<128xbf16> to vector<1x1x128xbf16>
    %24 = vector.broadcast %23 : vector<1x1x128xbf16> to vector<8x16x128xbf16>
    %25 = arith.mulf %20, %24 : vector<8x16x128xbf16>
    %26 = arith.addf %19, %25 : vector<8x16x128xbf16>
    %27 = vector.extract_strided_slice %13 {offsets = [4, 0, 0], sizes = [8, 16, 128], strides = [1, 1, 1]} : vector<14x16x128xbf16> to vector<8x16x128xbf16>
    %28 = vector.extract_strided_slice %12 {offsets = [6, 0], sizes = [1, 128], strides = [1, 1]} : vector<9x128xbf16> to vector<1x128xbf16>
    %29 = vector.shape_cast %28 : vector<1x128xbf16> to vector<128xbf16>
    %30 = vector.shape_cast %29 : vector<128xbf16> to vector<1x1x128xbf16>
    %31 = vector.broadcast %30 : vector<1x1x128xbf16> to vector<8x16x128xbf16>
    %32 = arith.mulf %27, %31 : vector<8x16x128xbf16>
    %33 = arith.addf %26, %32 : vector<8x16x128xbf16>
    %34 = vector.extract_strided_slice %11 {offsets = [0, 3, 0], sizes = [14, 16, 128], strides = [1, 1, 1]} : vector<14x32x128xbf16> to vector<14x16x128xbf16>
    %35 = vector.extract_strided_slice %34 {offsets = [2, 0, 0], sizes = [8, 16, 128], strides = [1, 1, 1]} : vector<14x16x128xbf16> to vector<8x16x128xbf16>
    %36 = vector.extract_strided_slice %12 {offsets = [1, 0], sizes = [1, 128], strides = [1, 1]} : vector<9x128xbf16> to vector<1x128xbf16>
    %37 = vector.shape_cast %36 : vector<1x128xbf16> to vector<128xbf16>
    %38 = vector.shape_cast %37 : vector<128xbf16> to vector<1x1x128xbf16>
    %39 = vector.broadcast %38 : vector<1x1x128xbf16> to vector<8x16x128xbf16>
    %40 = arith.mulf %35, %39 : vector<8x16x128xbf16>
    %41 = arith.addf %33, %40 : vector<8x16x128xbf16>
    %42 = vector.extract_strided_slice %34 {offsets = [3, 0, 0], sizes = [8, 16, 128], strides = [1, 1, 1]} : vector<14x16x128xbf16> to vector<8x16x128xbf16>
    %43 = vector.extract_strided_slice %12 {offsets = [4, 0], sizes = [1, 128], strides = [1, 1]} : vector<9x128xbf16> to vector<1x128xbf16>
    %44 = vector.shape_cast %43 : vector<1x128xbf16> to vector<128xbf16>
    %45 = vector.shape_cast %44 : vector<128xbf16> to vector<1x1x128xbf16>
    %46 = vector.broadcast %45 : vector<1x1x128xbf16> to vector<8x16x128xbf16>
    %47 = arith.mulf %42, %46 : vector<8x16x128xbf16>
    %48 = arith.addf %41, %47 : vector<8x16x128xbf16>
    %49 = vector.extract_strided_slice %34 {offsets = [4, 0, 0], sizes = [8, 16, 128], strides = [1, 1, 1]} : vector<14x16x128xbf16> to vector<8x16x128xbf16>
    %50 = vector.extract_strided_slice %12 {offsets = [7, 0], sizes = [1, 128], strides = [1, 1]} : vector<9x128xbf16> to vector<1x128xbf16>
    %51 = vector.shape_cast %50 : vector<1x128xbf16> to vector<128xbf16>
    %52 = vector.shape_cast %51 : vector<128xbf16> to vector<1x1x128xbf16>
    %53 = vector.broadcast %52 : vector<1x1x128xbf16> to vector<8x16x128xbf16>
    %54 = arith.mulf %49, %53 : vector<8x16x128xbf16>
    %55 = arith.addf %48, %54 : vector<8x16x128xbf16>
    %56 = vector.extract_strided_slice %11 {offsets = [0, 4, 0], sizes = [14, 16, 128], strides = [1, 1, 1]} : vector<14x32x128xbf16> to vector<14x16x128xbf16>
    %57 = vector.extract_strided_slice %56 {offsets = [2, 0, 0], sizes = [8, 16, 128], strides = [1, 1, 1]} : vector<14x16x128xbf16> to vector<8x16x128xbf16>
    %58 = vector.extract_strided_slice %12 {offsets = [2, 0], sizes = [1, 128], strides = [1, 1]} : vector<9x128xbf16> to vector<1x128xbf16>
    %59 = vector.shape_cast %58 : vector<1x128xbf16> to vector<128xbf16>
    %60 = vector.shape_cast %59 : vector<128xbf16> to vector<1x1x128xbf16>
    %61 = vector.broadcast %60 : vector<1x1x128xbf16> to vector<8x16x128xbf16>
    %62 = arith.mulf %57, %61 : vector<8x16x128xbf16>
    %63 = arith.addf %55, %62 : vector<8x16x128xbf16>
    %64 = vector.extract_strided_slice %56 {offsets = [3, 0, 0], sizes = [8, 16, 128], strides = [1, 1, 1]} : vector<14x16x128xbf16> to vector<8x16x128xbf16>
    %65 = vector.extract_strided_slice %12 {offsets = [5, 0], sizes = [1, 128], strides = [1, 1]} : vector<9x128xbf16> to vector<1x128xbf16>
    %66 = vector.shape_cast %65 : vector<1x128xbf16> to vector<128xbf16>
    %67 = vector.shape_cast %66 : vector<128xbf16> to vector<1x1x128xbf16>
    %68 = vector.broadcast %67 : vector<1x1x128xbf16> to vector<8x16x128xbf16>
    %69 = arith.mulf %64, %68 : vector<8x16x128xbf16>
    %70 = arith.addf %63, %69 : vector<8x16x128xbf16>
    %71 = vector.extract_strided_slice %56 {offsets = [4, 0, 0], sizes = [8, 16, 128], strides = [1, 1, 1]} : vector<14x16x128xbf16> to vector<8x16x128xbf16>
    %72 = vector.extract_strided_slice %12 {offsets = [8, 0], sizes = [1, 128], strides = [1, 1]} : vector<9x128xbf16> to vector<1x128xbf16>
    %73 = vector.shape_cast %72 : vector<1x128xbf16> to vector<128xbf16>
    %74 = vector.shape_cast %73 : vector<128xbf16> to vector<1x1x128xbf16>
    %75 = vector.broadcast %74 : vector<1x1x128xbf16> to vector<8x16x128xbf16>
    %76 = arith.mulf %71, %75 : vector<8x16x128xbf16>
    %77 = arith.addf %70, %76 : vector<8x16x128xbf16>
    %cst_9 = arith.constant 5.000000e-01 : bf16
    %78 = vector.broadcast %cst_9 : bf16 to vector<8x16x128xbf16>
    %79 = arith.mulf %78, %77 : vector<8x16x128xbf16>
    %cst_10 = arith.constant 4.467770e-02 : bf16
    %80 = vector.broadcast %cst_10 : bf16 to vector<8x16x128xbf16>
    %81 = arith.mulf %80, %77 : vector<8x16x128xbf16>
    %82 = arith.mulf %81, %77 : vector<8x16x128xbf16>
    %83 = arith.mulf %82, %77 : vector<8x16x128xbf16>
    %84 = arith.addf %77, %83 : vector<8x16x128xbf16>
    %cst_11 = arith.constant 7.968750e-01 : bf16
    %85 = vector.broadcast %cst_11 : bf16 to vector<8x16x128xbf16>
    %86 = arith.mulf %85, %84 : vector<8x16x128xbf16>
    %87 = math.tanh %86 : vector<8x16x128xbf16>
    %cst_12 = arith.constant 1.000000e+00 : bf16
    %88 = vector.broadcast %cst_12 : bf16 to vector<8x16x128xbf16>
    %89 = arith.addf %88, %87 : vector<8x16x128xbf16>
    %90 = arith.mulf %79, %89 : vector<8x16x128xbf16>
    %c0_13 = arith.constant 0 : index
    %c0_14 = arith.constant 0 : index
    %91 = vector.load %arg4[%c0_13, %c0_14] : memref<128x128xbf16, #tpu.memory_space<vmem>>, vector<128x128xbf16>
    %cst_15 = arith.constant dense<0.000000e+00> : vector<448x128xf32>
    %92 = tpu.matmul %7, %91, %cst_15 {dimension_numbers = #tpu.dot_dimension_numbers<[1], [0], [0], [1], [0, 0, 1, 1], [], []>} : vector<448x128xbf16>, vector<128x128xbf16>, vector<448x128xf32> -> vector<448x128xf32>
    %93 = vector.shape_cast %92 : vector<448x128xf32> to vector<14x32x128xf32>
    %94 = arith.truncf %93 : vector<14x32x128xf32> to vector<14x32x128xbf16>
    %c0_16 = arith.constant 0 : index
    %c0_17 = arith.constant 0 : index
    %95 = vector.load %arg7[%c0_16, %c0_17] : memref<9x128xbf16, #tpu.memory_space<vmem>>, vector<9x128xbf16>
    %96 = vector.extract_strided_slice %94 {offsets = [0, 1, 0], sizes = [14, 16, 128], strides = [1, 1, 1]} : vector<14x32x128xbf16> to vector<14x16x128xbf16>
    %97 = vector.extract_strided_slice %96 {offsets = [1, 0, 0], sizes = [8, 16, 128], strides = [1, 1, 1]} : vector<14x16x128xbf16> to vector<8x16x128xbf16>
    %98 = vector.extract_strided_slice %95 {offsets = [0, 0], sizes = [1, 128], strides = [1, 1]} : vector<9x128xbf16> to vector<1x128xbf16>
    %99 = vector.shape_cast %98 : vector<1x128xbf16> to vector<128xbf16>
    %100 = vector.shape_cast %99 : vector<128xbf16> to vector<1x1x128xbf16>
    %101 = vector.broadcast %100 : vector<1x1x128xbf16> to vector<8x16x128xbf16>
    %102 = arith.mulf %97, %101 : vector<8x16x128xbf16>
    %103 = vector.extract_strided_slice %96 {offsets = [3, 0, 0], sizes = [8, 16, 128], strides = [1, 1, 1]} : vector<14x16x128xbf16> to vector<8x16x128xbf16>
    %104 = vector.extract_strided_slice %95 {offsets = [3, 0], sizes = [1, 128], strides = [1, 1]} : vector<9x128xbf16> to vector<1x128xbf16>
    %105 = vector.shape_cast %104 : vector<1x128xbf16> to vector<128xbf16>
    %106 = vector.shape_cast %105 : vector<128xbf16> to vector<1x1x128xbf16>
    %107 = vector.broadcast %106 : vector<1x1x128xbf16> to vector<8x16x128xbf16>
    %108 = arith.mulf %103, %107 : vector<8x16x128xbf16>
    %109 = arith.addf %102, %108 : vector<8x16x128xbf16>
    %110 = vector.extract_strided_slice %96 {offsets = [5, 0, 0], sizes = [8, 16, 128], strides = [1, 1, 1]} : vector<14x16x128xbf16> to vector<8x16x128xbf16>
    %111 = vector.extract_strided_slice %95 {offsets = [6, 0], sizes = [1, 128], strides = [1, 1]} : vector<9x128xbf16> to vector<1x128xbf16>
    %112 = vector.shape_cast %111 : vector<1x128xbf16> to vector<128xbf16>
    %113 = vector.shape_cast %112 : vector<128xbf16> to vector<1x1x128xbf16>
    %114 = vector.broadcast %113 : vector<1x1x128xbf16> to vector<8x16x128xbf16>
    %115 = arith.mulf %110, %114 : vector<8x16x128xbf16>
    %116 = arith.addf %109, %115 : vector<8x16x128xbf16>
    %117 = vector.extract_strided_slice %94 {offsets = [0, 3, 0], sizes = [14, 16, 128], strides = [1, 1, 1]} : vector<14x32x128xbf16> to vector<14x16x128xbf16>
    %118 = vector.extract_strided_slice %117 {offsets = [1, 0, 0], sizes = [8, 16, 128], strides = [1, 1, 1]} : vector<14x16x128xbf16> to vector<8x16x128xbf16>
    %119 = vector.extract_strided_slice %95 {offsets = [1, 0], sizes = [1, 128], strides = [1, 1]} : vector<9x128xbf16> to vector<1x128xbf16>
    %120 = vector.shape_cast %119 : vector<1x128xbf16> to vector<128xbf16>
    %121 = vector.shape_cast %120 : vector<128xbf16> to vector<1x1x128xbf16>
    %122 = vector.broadcast %121 : vector<1x1x128xbf16> to vector<8x16x128xbf16>
    %123 = arith.mulf %118, %122 : vector<8x16x128xbf16>
    %124 = arith.addf %116, %123 : vector<8x16x128xbf16>
    %125 = vector.extract_strided_slice %117 {offsets = [3, 0, 0], sizes = [8, 16, 128], strides = [1, 1, 1]} : vector<14x16x128xbf16> to vector<8x16x128xbf16>
    %126 = vector.extract_strided_slice %95 {offsets = [4, 0], sizes = [1, 128], strides = [1, 1]} : vector<9x128xbf16> to vector<1x128xbf16>
    %127 = vector.shape_cast %126 : vector<1x128xbf16> to vector<128xbf16>
    %128 = vector.shape_cast %127 : vector<128xbf16> to vector<1x1x128xbf16>
    %129 = vector.broadcast %128 : vector<1x1x128xbf16> to vector<8x16x128xbf16>
    %130 = arith.mulf %125, %129 : vector<8x16x128xbf16>
    %131 = arith.addf %124, %130 : vector<8x16x128xbf16>
    %132 = vector.extract_strided_slice %117 {offsets = [5, 0, 0], sizes = [8, 16, 128], strides = [1, 1, 1]} : vector<14x16x128xbf16> to vector<8x16x128xbf16>
    %133 = vector.extract_strided_slice %95 {offsets = [7, 0], sizes = [1, 128], strides = [1, 1]} : vector<9x128xbf16> to vector<1x128xbf16>
    %134 = vector.shape_cast %133 : vector<1x128xbf16> to vector<128xbf16>
    %135 = vector.shape_cast %134 : vector<128xbf16> to vector<1x1x128xbf16>
    %136 = vector.broadcast %135 : vector<1x1x128xbf16> to vector<8x16x128xbf16>
    %137 = arith.mulf %132, %136 : vector<8x16x128xbf16>
    %138 = arith.addf %131, %137 : vector<8x16x128xbf16>
    %139 = vector.extract_strided_slice %94 {offsets = [0, 5, 0], sizes = [14, 16, 128], strides = [1, 1, 1]} : vector<14x32x128xbf16> to vector<14x16x128xbf16>
    %140 = vector.extract_strided_slice %139 {offsets = [1, 0, 0], sizes = [8, 16, 128], strides = [1, 1, 1]} : vector<14x16x128xbf16> to vector<8x16x128xbf16>
    %141 = vector.extract_strided_slice %95 {offsets = [2, 0], sizes = [1, 128], strides = [1, 1]} : vector<9x128xbf16> to vector<1x128xbf16>
    %142 = vector.shape_cast %141 : vector<1x128xbf16> to vector<128xbf16>
    %143 = vector.shape_cast %142 : vector<128xbf16> to vector<1x1x128xbf16>
    %144 = vector.broadcast %143 : vector<1x1x128xbf16> to vector<8x16x128xbf16>
    %145 = arith.mulf %140, %144 : vector<8x16x128xbf16>
    %146 = arith.addf %138, %145 : vector<8x16x128xbf16>
    %147 = vector.extract_strided_slice %139 {offsets = [3, 0, 0], sizes = [8, 16, 128], strides = [1, 1, 1]} : vector<14x16x128xbf16> to vector<8x16x128xbf16>
    %148 = vector.extract_strided_slice %95 {offsets = [5, 0], sizes = [1, 128], strides = [1, 1]} : vector<9x128xbf16> to vector<1x128xbf16>
    %149 = vector.shape_cast %148 : vector<1x128xbf16> to vector<128xbf16>
    %150 = vector.shape_cast %149 : vector<128xbf16> to vector<1x1x128xbf16>
    %151 = vector.broadcast %150 : vector<1x1x128xbf16> to vector<8x16x128xbf16>
    %152 = arith.mulf %147, %151 : vector<8x16x128xbf16>
    %153 = arith.addf %146, %152 : vector<8x16x128xbf16>
    %154 = vector.extract_strided_slice %139 {offsets = [5, 0, 0], sizes = [8, 16, 128], strides = [1, 1, 1]} : vector<14x16x128xbf16> to vector<8x16x128xbf16>
    %155 = vector.extract_strided_slice %95 {offsets = [8, 0], sizes = [1, 128], strides = [1, 1]} : vector<9x128xbf16> to vector<1x128xbf16>
    %156 = vector.shape_cast %155 : vector<1x128xbf16> to vector<128xbf16>
    %157 = vector.shape_cast %156 : vector<128xbf16> to vector<1x1x128xbf16>
    %158 = vector.broadcast %157 : vector<1x1x128xbf16> to vector<8x16x128xbf16>
    %159 = arith.mulf %154, %158 : vector<8x16x128xbf16>
    %160 = arith.addf %153, %159 : vector<8x16x128xbf16>
    %161 = arith.mulf %90, %160 : vector<8x16x128xbf16>
    %c0_18 = arith.constant 0 : index
    %c0_19 = arith.constant 0 : index
    %162 = vector.load %arg5[%c0_18, %c0_19] : memref<128x128xbf16, #tpu.memory_space<vmem>>, vector<128x128xbf16>
    %cst_20 = arith.constant dense<0.000000e+00> : vector<448x128xf32>
    %163 = tpu.matmul %7, %162, %cst_20 {dimension_numbers = #tpu.dot_dimension_numbers<[1], [0], [0], [1], [0, 0, 1, 1], [], []>} : vector<448x128xbf16>, vector<128x128xbf16>, vector<448x128xf32> -> vector<448x128xf32>
    %164 = vector.shape_cast %163 : vector<448x128xf32> to vector<14x32x128xf32>
    %165 = arith.truncf %164 : vector<14x32x128xf32> to vector<14x32x128xbf16>
    %c0_21 = arith.constant 0 : index
    %c0_22 = arith.constant 0 : index
    %166 = vector.load %arg8[%c0_21, %c0_22] : memref<9x128xbf16, #tpu.memory_space<vmem>>, vector<9x128xbf16>
    %167 = vector.extract_strided_slice %165 {offsets = [0, 0, 0], sizes = [14, 16, 128], strides = [1, 1, 1]} : vector<14x32x128xbf16> to vector<14x16x128xbf16>
    %168 = vector.extract_strided_slice %167 {offsets = [0, 0, 0], sizes = [8, 16, 128], strides = [1, 1, 1]} : vector<14x16x128xbf16> to vector<8x16x128xbf16>
    %169 = vector.extract_strided_slice %166 {offsets = [0, 0], sizes = [1, 128], strides = [1, 1]} : vector<9x128xbf16> to vector<1x128xbf16>
    %170 = vector.shape_cast %169 : vector<1x128xbf16> to vector<128xbf16>
    %171 = vector.shape_cast %170 : vector<128xbf16> to vector<1x1x128xbf16>
    %172 = vector.broadcast %171 : vector<1x1x128xbf16> to vector<8x16x128xbf16>
    %173 = arith.mulf %168, %172 : vector<8x16x128xbf16>
    %174 = vector.extract_strided_slice %167 {offsets = [3, 0, 0], sizes = [8, 16, 128], strides = [1, 1, 1]} : vector<14x16x128xbf16> to vector<8x16x128xbf16>
    %175 = vector.extract_strided_slice %166 {offsets = [3, 0], sizes = [1, 128], strides = [1, 1]} : vector<9x128xbf16> to vector<1x128xbf16>
    %176 = vector.shape_cast %175 : vector<1x128xbf16> to vector<128xbf16>
    %177 = vector.shape_cast %176 : vector<128xbf16> to vector<1x1x128xbf16>
    %178 = vector.broadcast %177 : vector<1x1x128xbf16> to vector<8x16x128xbf16>
    %179 = arith.mulf %174, %178 : vector<8x16x128xbf16>
    %180 = arith.addf %173, %179 : vector<8x16x128xbf16>
    %181 = vector.extract_strided_slice %167 {offsets = [6, 0, 0], sizes = [8, 16, 128], strides = [1, 1, 1]} : vector<14x16x128xbf16> to vector<8x16x128xbf16>
    %182 = vector.extract_strided_slice %166 {offsets = [6, 0], sizes = [1, 128], strides = [1, 1]} : vector<9x128xbf16> to vector<1x128xbf16>
    %183 = vector.shape_cast %182 : vector<1x128xbf16> to vector<128xbf16>
    %184 = vector.shape_cast %183 : vector<128xbf16> to vector<1x1x128xbf16>
    %185 = vector.broadcast %184 : vector<1x1x128xbf16> to vector<8x16x128xbf16>
    %186 = arith.mulf %181, %185 : vector<8x16x128xbf16>
    %187 = arith.addf %180, %186 : vector<8x16x128xbf16>
    %188 = vector.extract_strided_slice %165 {offsets = [0, 3, 0], sizes = [14, 16, 128], strides = [1, 1, 1]} : vector<14x32x128xbf16> to vector<14x16x128xbf16>
    %189 = vector.extract_strided_slice %188 {offsets = [0, 0, 0], sizes = [8, 16, 128], strides = [1, 1, 1]} : vector<14x16x128xbf16> to vector<8x16x128xbf16>
    %190 = vector.extract_strided_slice %166 {offsets = [1, 0], sizes = [1, 128], strides = [1, 1]} : vector<9x128xbf16> to vector<1x128xbf16>
    %191 = vector.shape_cast %190 : vector<1x128xbf16> to vector<128xbf16>
    %192 = vector.shape_cast %191 : vector<128xbf16> to vector<1x1x128xbf16>
    %193 = vector.broadcast %192 : vector<1x1x128xbf16> to vector<8x16x128xbf16>
    %194 = arith.mulf %189, %193 : vector<8x16x128xbf16>
    %195 = arith.addf %187, %194 : vector<8x16x128xbf16>
    %196 = vector.extract_strided_slice %188 {offsets = [3, 0, 0], sizes = [8, 16, 128], strides = [1, 1, 1]} : vector<14x16x128xbf16> to vector<8x16x128xbf16>
    %197 = vector.extract_strided_slice %166 {offsets = [4, 0], sizes = [1, 128], strides = [1, 1]} : vector<9x128xbf16> to vector<1x128xbf16>
    %198 = vector.shape_cast %197 : vector<1x128xbf16> to vector<128xbf16>
    %199 = vector.shape_cast %198 : vector<128xbf16> to vector<1x1x128xbf16>
    %200 = vector.broadcast %199 : vector<1x1x128xbf16> to vector<8x16x128xbf16>
    %201 = arith.mulf %196, %200 : vector<8x16x128xbf16>
    %202 = arith.addf %195, %201 : vector<8x16x128xbf16>
    %203 = vector.extract_strided_slice %188 {offsets = [6, 0, 0], sizes = [8, 16, 128], strides = [1, 1, 1]} : vector<14x16x128xbf16> to vector<8x16x128xbf16>
    %204 = vector.extract_strided_slice %166 {offsets = [7, 0], sizes = [1, 128], strides = [1, 1]} : vector<9x128xbf16> to vector<1x128xbf16>
    %205 = vector.shape_cast %204 : vector<1x128xbf16> to vector<128xbf16>
    %206 = vector.shape_cast %205 : vector<128xbf16> to vector<1x1x128xbf16>
    %207 = vector.broadcast %206 : vector<1x1x128xbf16> to vector<8x16x128xbf16>
    %208 = arith.mulf %203, %207 : vector<8x16x128xbf16>
    %209 = arith.addf %202, %208 : vector<8x16x128xbf16>
    %210 = vector.extract_strided_slice %165 {offsets = [0, 6, 0], sizes = [14, 16, 128], strides = [1, 1, 1]} : vector<14x32x128xbf16> to vector<14x16x128xbf16>
    %211 = vector.extract_strided_slice %210 {offsets = [0, 0, 0], sizes = [8, 16, 128], strides = [1, 1, 1]} : vector<14x16x128xbf16> to vector<8x16x128xbf16>
    %212 = vector.extract_strided_slice %166 {offsets = [2, 0], sizes = [1, 128], strides = [1, 1]} : vector<9x128xbf16> to vector<1x128xbf16>
    %213 = vector.shape_cast %212 : vector<1x128xbf16> to vector<128xbf16>
    %214 = vector.shape_cast %213 : vector<128xbf16> to vector<1x1x128xbf16>
    %215 = vector.broadcast %214 : vector<1x1x128xbf16> to vector<8x16x128xbf16>
    %216 = arith.mulf %211, %215 : vector<8x16x128xbf16>
    %217 = arith.addf %209, %216 : vector<8x16x128xbf16>
    %218 = vector.extract_strided_slice %210 {offsets = [3, 0, 0], sizes = [8, 16, 128], strides = [1, 1, 1]} : vector<14x16x128xbf16> to vector<8x16x128xbf16>
    %219 = vector.extract_strided_slice %166 {offsets = [5, 0], sizes = [1, 128], strides = [1, 1]} : vector<9x128xbf16> to vector<1x128xbf16>
    %220 = vector.shape_cast %219 : vector<1x128xbf16> to vector<128xbf16>
    %221 = vector.shape_cast %220 : vector<128xbf16> to vector<1x1x128xbf16>
    %222 = vector.broadcast %221 : vector<1x1x128xbf16> to vector<8x16x128xbf16>
    %223 = arith.mulf %218, %222 : vector<8x16x128xbf16>
    %224 = arith.addf %217, %223 : vector<8x16x128xbf16>
    %225 = vector.extract_strided_slice %210 {offsets = [6, 0, 0], sizes = [8, 16, 128], strides = [1, 1, 1]} : vector<14x16x128xbf16> to vector<8x16x128xbf16>
    %226 = vector.extract_strided_slice %166 {offsets = [8, 0], sizes = [1, 128], strides = [1, 1]} : vector<9x128xbf16> to vector<1x128xbf16>
    %227 = vector.shape_cast %226 : vector<1x128xbf16> to vector<128xbf16>
    %228 = vector.shape_cast %227 : vector<128xbf16> to vector<1x1x128xbf16>
    %229 = vector.broadcast %228 : vector<1x1x128xbf16> to vector<8x16x128xbf16>
    %230 = arith.mulf %225, %229 : vector<8x16x128xbf16>
    %231 = arith.addf %224, %230 : vector<8x16x128xbf16>
    %232 = arith.mulf %161, %231 : vector<8x16x128xbf16>
    %233 = vector.shape_cast %232 : vector<8x16x128xbf16> to vector<128x128xbf16>
    %c0_23 = arith.constant 0 : index
    %c0_24 = arith.constant 0 : index
    %234 = vector.load %arg9[%c0_23, %c0_24] : memref<128x128xbf16, #tpu.memory_space<vmem>>, vector<128x128xbf16>
    %cst_25 = arith.constant dense<0.000000e+00> : vector<128x128xf32>
    %235 = tpu.matmul %233, %234, %cst_25 {dimension_numbers = #tpu.dot_dimension_numbers<[1], [0], [0], [1], [0, 0, 1, 1], [], []>} : vector<128x128xbf16>, vector<128x128xbf16>, vector<128x128xf32> -> vector<128x128xf32>
    %236 = vector.shape_cast %235 : vector<128x128xf32> to vector<1x8x16x128xf32>
    %237 = arith.truncf %236 : vector<1x8x16x128xf32> to vector<1x8x16x128xbf16>
    %c0_26 = arith.constant 0 : index
    %c0_27 = arith.constant 0 : index
    %c0_28 = arith.constant 0 : index
    %c0_29 = arith.constant 0 : index
    %238 = vector.load %arg10[%c0_26, %c0_27, %c0_28, %c0_29] : memref<1x8x16x128xbf16, #tpu.memory_space<vmem>>, vector<1x8x16x128xbf16>
    tpu.vector_store %arg10[%c0_26, %c0_27, %c0_28, %c0_29], %237 {strides = array<i32>} : memref<1x8x16x128xbf16, #tpu.memory_space<vmem>>, vector<1x8x16x128xbf16>,
    return
  }
  func.func @transform_1(%arg0: i32, %arg1: i32) -> (i32, i32) {
    %c0_i32 = arith.constant 0 : i32
    %c0_i32_0 = arith.constant 0 : i32
    %c0_i32_1 = arith.constant 0 : i32
    return %c0_i32, %c0_i32_0 : i32, i32
  }
  func.func @transform_2(%arg0: i32, %arg1: i32) -> (i32, i32) {
    %c0_i32 = arith.constant 0 : i32
    %c0_i32_0 = arith.constant 0 : i32
    %c0_i32_1 = arith.constant 0 : i32
    return %c0_i32, %c0_i32_0 : i32, i32
  }
  func.func @transform_3(%arg0: i32, %arg1: i32) -> (i32, i32) {
    %c0_i32 = arith.constant 0 : i32
    %c0_i32_0 = arith.constant 0 : i32
    %c0_i32_1 = arith.constant 0 : i32
    return %c0_i32, %c0_i32_0 : i32, i32
  }
  func.func @transform_4(%arg0: i32, %arg1: i32) -> (i32, i32) {
    %c0_i32 = arith.constant 0 : i32
    %c0_i32_0 = arith.constant 0 : i32
    %c0_i32_1 = arith.constant 0 : i32
    return %c0_i32, %c0_i32_0 : i32, i32
  }
  func.func @transform_5(%arg0: i32, %arg1: i32) -> (i32, i32) {
    %c0_i32 = arith.constant 0 : i32
    %c0_i32_0 = arith.constant 0 : i32
    %c0_i32_1 = arith.constant 0 : i32
    return %c0_i32, %c0_i32_0 : i32, i32
  }
  func.func @transform_6(%arg0: i32, %arg1: i32) -> (i32, i32) {
    %c0_i32 = arith.constant 0 : i32
    %c0_i32_0 = arith.constant 0 : i32
    %c0_i32_1 = arith.constant 0 : i32
    return %c0_i32, %c0_i32_0 : i32, i32
  }
  func.func @transform_7(%arg0: i32, %arg1: i32) -> (i32, i32) {
    %c0_i32 = arith.constant 0 : i32
    %c0_i32_0 = arith.constant 0 : i32
    %c0_i32_1 = arith.constant 0 : i32
    return %c0_i32, %c0_i32_0 : i32, i32
  }
  func.func @transform_8(%arg0: i32, %arg1: i32) -> (i32, i32, i32, i32) {
    %c0_i32 = arith.constant 0 : i32
    %c0_i32_0 = arith.constant 0 : i32
    %c0_i32_1 = arith.constant 0 : i32
    return %arg0, %arg1, %c0_i32, %c0_i32_0 : i32, i32, i32, i32
  }
}

</mosaic_0001>

<llo_original>
// kernel: tpu_custom_call.1
$region0: #{tpu_custom_call.1}
  #allocation0 [shape = 'u32[]', space=smem, size = 0x4, offset = 0x4, fixed_abs, tag = 'smem constant byte address 0x4 - core index']
  #allocation1 [shape = 'u32[72,128]{1,0:T(1,128)}', space=vmem, size = 0x9000, scoped, tag = 'internal scratch']
  #allocation2 [shape = 'bf16[14,32,128]{2,1,0:T(8,128)(2,1)}', space=vmem, size = 0x1c000, scoped, tag = 'scratch operand']
  #allocation3 [shape = 's32[1]{0}', space=sflag, size = 0x4, scoped, tag = 'scratch operand']
  #allocation17 [shape = 's32[]', space=sflag, size = 0x4, offset = 0, fixed_abs, tag = 'sflag constant byte address 0x0 - dummy sync flag']
  #allocation18 [shape = 's32[]', space=sflag, size = 0x4, offset = 0, fixed_abs, tag = 'sflag constant byte address 0x0 - dummy sync flag']
  #allocation19 [shape = 'u32[]', space=smem, size = 0x4, offset = 0x44, fixed_abs, tag = 'smem constant byte address 0x44 - assertion arg 0']
  #allocation20 [shape = 'u32[]', space=smem, size = 0x4, offset = 0x48, fixed_abs, tag = 'smem constant byte address 0x48 - assertion arg 1']
  %s0 = inlined_call_operand.hbm [shape: bf16[2,22,32,128], index: 0, kind: input, shape index: {}]
  %s1 = inlined_call_operand.hbm [shape: bf16[128,128], index: 1, kind: input, shape index: {}]
  %s2 = inlined_call_operand.hbm [shape: bf16[128,128], index: 2, kind: input, shape index: {}]
  %s3 = inlined_call_operand.hbm [shape: bf16[128,128], index: 3, kind: input, shape index: {}]
  %s4 = inlined_call_operand.hbm [shape: bf16[9,128], index: 4, kind: input, shape index: {}]
  %s5 = inlined_call_operand.hbm [shape: bf16[9,128], index: 5, kind: input, shape index: {}]
  %s6 = inlined_call_operand.hbm [shape: bf16[9,128], index: 6, kind: input, shape index: {}]
  %s7 = inlined_call_operand.hbm [shape: bf16[128,128], index: 7, kind: input, shape index: {}]
  %s8 = inlined_call_operand.hbm [shape: bf16[2,16,16,128], index: 8, kind: output, shape index: {}]
  %s9 = sld [smem:[#allocation0]]
  $region93: #{tpu_custom_call.1} parent=0
    _
  %s11 = ssub.s32 1, %s9
  %s12 = scalar_select 0, %s11, %s9
  $region1: #{tpu_custom_call.1} parent=0
    #allocation4 [shape = 'u8[32768]{0}', space=vmem, size = 0x8000, scoped, tag = 'input window, operand 1, single buffered']
    #allocation5 [shape = 's32[2]{0}', space=sflag, size = 0x8, scoped, tag = 'scoped memory for tpu_custom_call.1']
    #allocation6 [shape = 's32[2]{0}', space=sflag, size = 0x8, scoped, tag = 'scoped memory for tpu_custom_call.1']
    #allocation7 [shape = 'u8[32768]{0}', space=vmem, size = 0x8000, scoped, tag = 'input window, operand 2, single buffered']
    #allocation8 [shape = 's32[1]{0}', space=sflag, size = 0x4, scoped, tag = 'scoped memory for tpu_custom_call.1']
    #allocation9 [shape = 'u8[32768]{0}', space=vmem, size = 0x8000, scoped, tag = 'input window, operand 3, single buffered']
    #allocation10 [shape = 'u8[4096]{0}', space=vmem, size = 0x1000, scoped, tag = 'input window, operand 4, single buffered']
    #allocation11 [shape = 's32[1]{0}', space=sflag, size = 0x4, scoped, tag = 'scoped memory for tpu_custom_call.1']
    #allocation12 [shape = 'u8[4096]{0}', space=vmem, size = 0x1000, scoped, tag = 'input window, operand 5, single buffered']
    #allocation13 [shape = 'u8[4096]{0}', space=vmem, size = 0x1000, scoped, tag = 'input window, operand 6, single buffered']
    #allocation14 [shape = 's32[1]{0}', space=sflag, size = 0x4, scoped, tag = 'scoped memory for tpu_custom_call.1']
    #allocation15 [shape = 'u8[32768]{0}', space=vmem, size = 0x8000, scoped, tag = 'input window, operand 7, single buffered']
    #allocation16 [shape = 'u8[65536]{0}', space=vmem, size = 0x10000, scoped, tag = 'output window, operand 0']
    %13 = vsyncpa [#allocation5], 0
    %14 = vsyncpa [#allocation8], 0
    %15 = vsyncpa [#allocation11], 0
    %16 = vsyncpa [#allocation14], 0
    %17 = vsyncpa [#allocation6], 0
    %s18 = scalar_lea.sflag [#allocation6], 1
    %19 = vsyncpa %s18, 0
    loop: start=0, step=1, limit=6
    $region2: #{tpu_custom_call.1} parent=1 // loop_pre_header
      _
    $region3: #{tpu_custom_call.1} parent=1 // loop_header
      %s21 = sphi 0, %s25
      %p22 = scmp.ge.s32.totalorder %s21, 6
      %s28 = sphi 0, %s40
      %s29 = sphi 0, %s36
      %s30 = sphi 0, %s28
      %s31 = sphi 0, %s29
      %s32 = sphi 0, %s30
      %s33 = sphi 0, %s31
      %s41 = sphi 0, %s41
      %s43 = sphi 0, %s41
      %s44 = sphi 0, %s43
      %s58 = sphi 0, %s44
      %s62 = sphi 0, %s62
      %s64 = sphi 0, %s62
      %s65 = sphi 0, %s64
      %s79 = sphi 0, %s65
      %s83 = sphi 0, %s83
      %s85 = sphi 0, %s83
      %s86 = sphi 0, %s85
      %s100 = sphi 0, %s86
      %s104 = sphi 0, %s104
      %s106 = sphi 0, %s104
      %s107 = sphi 0, %s106
      %s121 = sphi 0, %s107
      %s125 = sphi 0, %s125
      %s127 = sphi 0, %s125
      %s128 = sphi 0, %s127
      %s142 = sphi 0, %s128
      %s146 = sphi 0, %s146
      %s148 = sphi 0, %s146
      %s149 = sphi 0, %s148
      %s163 = sphi 0, %s149
      %s167 = sphi 0, %s167
      %s169 = sphi 0, %s167
      %s170 = sphi 0, %s169
      %s184 = sphi 0, %s170
      %s192 = sphi 0, %s194
      %s195 = sphi 0, %s192
      %s196 = sphi 0, %s195
      %s212 = sphi 0, %s196
    $region4: #{tpu_custom_call.1} parent=1 // loop_header_branch
      %24 = sbr.rel (%p22) target = $region8
    $region5: #{tpu_custom_call.1} parent=1 // loop_body
      %s26 = ssub.s32 %s21, 1
      %s27 = ssub.s32 %s21, 2
      %s34 = sadd.s32 1, %s29
      %p35 = scmp.ge.s32.totalorder %s34, 2
      %s36 = scalar_select %p35, 0, %s34
      %s37 = sadd.s32 1, %s28
      %s38 = scalar_select %p35, %s37, %s28
      %p39 = scmp.ge.s32.totalorder %s38, 2
      %s40 = scalar_select %p39, 0, %s38
      %s42 = sadd.s32 %s41, 1
      %p45 = scmp.eq.s32.totalorder %s21, 3
      %p46 = scmp.ne.s32.totalorder %s41, %s43
      %p47 = scmp.eq.s32.totalorder %s21, 0
      %p48 = por %p46, %p47
      %p49 = scmp.ne.s32.totalorder %s41, %s43
      %p50 = scmp.eq.s32.totalorder %s26, 3
      %p51 = por %p49, %p50
      %p52 = scmp.ne.s32.totalorder %s43, %s44
      %p53 = scmp.eq.s32.totalorder %s26, 0
      %p54 = por %p52, %p53
      %p55 = scmp.ne.s32.totalorder %s43, %s44
      %p56 = scmp.eq.s32.totalorder %s27, 3
      %p57 = por %p55, %p56
      %p59 = scmp.ne.s32.totalorder %s44, %s58
      %p60 = scmp.eq.s32.totalorder %s27, 0
      %p61 = por %p59, %p60
      %s63 = sadd.s32 %s62, 1
      %p66 = scmp.eq.s32.totalorder %s21, 3
      %p67 = scmp.ne.s32.totalorder %s62, %s64
      %p68 = scmp.eq.s32.totalorder %s21, 0
      %p69 = por %p67, %p68
      %p70 = scmp.ne.s32.totalorder %s62, %s64
      %p71 = scmp.eq.s32.totalorder %s26, 3
      %p72 = por %p70, %p71
      %p73 = scmp.ne.s32.totalorder %s64, %s65
      %p74 = scmp.eq.s32.totalorder %s26, 0
      %p75 = por %p73, %p74
      %p76 = scmp.ne.s32.totalorder %s64, %s65
      %p77 = scmp.eq.s32.totalorder %s27, 3
      %p78 = por %p76, %p77
      %p80 = scmp.ne.s32.totalorder %s65, %s79
      %p81 = scmp.eq.s32.totalorder %s27, 0
      %p82 = por %p80, %p81
      %s84 = sadd.s32 %s83, 1
      %p87 = scmp.eq.s32.totalorder %s21, 3
      %p88 = scmp.ne.s32.totalorder %s83, %s85
      %p89 = scmp.eq.s32.totalorder %s21, 0
      %p90 = por %p88, %p89
      %p91 = scmp.ne.s32.totalorder %s83, %s85
      %p92 = scmp.eq.s32.totalorder %s26, 3
      %p93 = por %p91, %p92
      %p94 = scmp.ne.s32.totalorder %s85, %s86
      %p95 = scmp.eq.s32.totalorder %s26, 0
      %p96 = por %p94, %p95
      %p97 = scmp.ne.s32.totalorder %s85, %s86
      %p98 = scmp.eq.s32.totalorder %s27, 3
      %p99 = por %p97, %p98
      %p101 = scmp.ne.s32.totalorder %s86, %s100
      %p102 = scmp.eq.s32.totalorder %s27, 0
      %p103 = por %p101, %p102
      %s105 = sadd.s32 %s104, 1
      %p108 = scmp.eq.s32.totalorder %s21, 3
      %p109 = scmp.ne.s32.totalorder %s104, %s106
      %p110 = scmp.eq.s32.totalorder %s21, 0
      %p111 = por %p109, %p110
      %p112 = scmp.ne.s32.totalorder %s104, %s106
      %p113 = scmp.eq.s32.totalorder %s26, 3
      %p114 = por %p112, %p113
      %p115 = scmp.ne.s32.totalorder %s106, %s107
      %p116 = scmp.eq.s32.totalorder %s26, 0
      %p117 = por %p115, %p116
      %p118 = scmp.ne.s32.totalorder %s106, %s107
      %p119 = scmp.eq.s32.totalorder %s27, 3
      %p120 = por %p118, %p119
      %p122 = scmp.ne.s32.totalorder %s107, %s121
      %p123 = scmp.eq.s32.totalorder %s27, 0
      %p124 = por %p122, %p123
      %s126 = sadd.s32 %s125, 1
      %p129 = scmp.eq.s32.totalorder %s21, 3
      %p130 = scmp.ne.s32.totalorder %s125, %s127
      %p131 = scmp.eq.s32.totalorder %s21, 0
      %p132 = por %p130, %p131
      %p133 = scmp.ne.s32.totalorder %s125, %s127
      %p134 = scmp.eq.s32.totalorder %s26, 3
      %p135 = por %p133, %p134
      %p136 = scmp.ne.s32.totalorder %s127, %s128
      %p137 = scmp.eq.s32.totalorder %s26, 0
      %p138 = por %p136, %p137
      %p139 = scmp.ne.s32.totalorder %s127, %s128
      %p140 = scmp.eq.s32.totalorder %s27, 3
      %p141 = por %p139, %p140
      %p143 = scmp.ne.s32.totalorder %s128, %s142
      %p144 = scmp.eq.s32.totalorder %s27, 0
      %p145 = por %p143, %p144
      %s147 = sadd.s32 %s146, 1
      %p150 = scmp.eq.s32.totalorder %s21, 3
      %p151 = scmp.ne.s32.totalorder %s146, %s148
      %p152 = scmp.eq.s32.totalorder %s21, 0
      %p153 = por %p151, %p152
      %p154 = scmp.ne.s32.totalorder %s146, %s148
      %p155 = scmp.eq.s32.totalorder %s26, 3
      %p156 = por %p154, %p155
      %p157 = scmp.ne.s32.totalorder %s148, %s149
      %p158 = scmp.eq.s32.totalorder %s26, 0
      %p159 = por %p157, %p158
      %p160 = scmp.ne.s32.totalorder %s148, %s149
      %p161 = scmp.eq.s32.totalorder %s27, 3
      %p162 = por %p160, %p161
      %p164 = scmp.ne.s32.totalorder %s149, %s163
      %p165 = scmp.eq.s32.totalorder %s27, 0
      %p166 = por %p164, %p165
      %s168 = sadd.s32 %s167, 1
      %p171 = scmp.eq.s32.totalorder %s21, 3
      %p172 = scmp.ne.s32.totalorder %s167, %s169
      %p173 = scmp.eq.s32.totalorder %s21, 0
      %p174 = por %p172, %p173
      %p175 = scmp.ne.s32.totalorder %s167, %s169
      %p176 = scmp.eq.s32.totalorder %s26, 3
      %p177 = por %p175, %p176
      %p178 = scmp.ne.s32.totalorder %s169, %s170
      %p179 = scmp.eq.s32.totalorder %s26, 0
      %p180 = por %p178, %p179
      %p181 = scmp.ne.s32.totalorder %s169, %s170
      %p182 = scmp.eq.s32.totalorder %s27, 3
      %p183 = por %p181, %p182
      %p185 = scmp.ne.s32.totalorder %s170, %s184
      %p186 = scmp.eq.s32.totalorder %s27, 0
      %p187 = por %p185, %p186
      %s188 = ssub.s32 %s28, %s40
      %s189 = ssub.s32 %s29, %s36
      %s190 = sor.u32 %s188, %s189
      %p191 = scmp.eq.s32.totalorder %s190, 0
      %s193 = sadd.s32 %s192, 1
      %s194 = scalar_select %p191, %s192, %s193
      %p197 = pneg %p191
      %p198 = scmp.eq.s32.totalorder %s21, 3
      %p199 = por %p197, %p198
      %p200 = scmp.ne.s32.totalorder %s192, %s195
      %p201 = scmp.eq.s32.totalorder %s21, 0
      %p202 = por %p200, %p201
      %p203 = scmp.ne.s32.totalorder %s192, %s195
      %p204 = scmp.eq.s32.totalorder %s26, 3
      %p205 = por %p203, %p204
      %p206 = scmp.ne.s32.totalorder %s195, %s196
      %p207 = scmp.eq.s32.totalorder %s26, 0
      %p208 = por %p206, %p207
      %p209 = scmp.ne.s32.totalorder %s195, %s196
      %p210 = scmp.eq.s32.totalorder %s27, 3
      %p211 = por %p209, %p210
      %p213 = scmp.ne.s32.totalorder %s196, %s212
      %p214 = scmp.eq.s32.totalorder %s27, 0
      %p215 = por %p213, %p214
      %p216 = scmp.le.s32.totalorder 1, %s21
      %p217 = scmp.lt.s32.totalorder %s21, 5
      %p218 = pnand %p216, %p217
      %p219 = pneg %p218
      // Predicated region
      $region9: #{tpu_custom_call.1} parent=5 // pred_check
        _
      $region10: #{tpu_custom_call.1} parent=5 // pred_check_branch
        %221 = sbr.rel (%p218) target = $region12
      $region11: #{tpu_custom_call.1} parent=5 // pred_region
        %s222 = ssub.s32 %s21, 1
        // Predicated region
        $region13: #{tpu_custom_call.1} parent=11 // pred_check
          %p223 = pneg %p54
        $region14: #{tpu_custom_call.1} parent=11 // pred_check_branch
          %225 = sbr.rel (%p223) target = $region16
        $region15: #{tpu_custom_call.1} parent=11 // pred_region
          %227 = vsyncadd [#allocation5], 0
          %s228 = sshll.u32 %s1, 4
          %s229 = int_to_ptr.hbm [resolvable:$true] %s228
          %s230 = sshll.u32 [#allocation4], 4
          %s231 = int_to_ptr.vmem [resolvable:$true] %s230
          %236 = dma.hbm_to_vmem [thread:$0]  %s229, 1024, %s231, [#allocation5], 64, 64, 4
        $region16: #{tpu_custom_call.1} parent=11 // pred_fallthru
          _
        // Predicated region
        $region17: #{tpu_custom_call.1} parent=11 // pred_check
          %p237 = pneg %p75
        $region18: #{tpu_custom_call.1} parent=11 // pred_check_branch
          %239 = sbr.rel (%p237) target = $region20
        $region19: #{tpu_custom_call.1} parent=11 // pred_region
          %241 = vsyncadd [#allocation8], 0
          %s242 = sshll.u32 %s2, 4
          %s243 = int_to_ptr.hbm [resolvable:$true] %s242
          %s244 = sshll.u32 [#allocation7], 4
          %s245 = int_to_ptr.vmem [resolvable:$true] %s244
          %250 = dma.hbm_to_vmem [thread:$0]  %s243, 1024, %s245, [#allocation8], 64, 64, 4
        $region20: #{tpu_custom_call.1} parent=11 // pred_fallthru
          _
        // Predicated region
        $region21: #{tpu_custom_call.1} parent=11 // pred_check
          %p251 = pneg %p96
        $region22: #{tpu_custom_call.1} parent=11 // pred_check_branch
          %253 = sbr.rel (%p251) target = $region24
        $region23: #{tpu_custom_call.1} parent=11 // pred_region
          %255 = vsyncadd [#allocation8], 0
          %s256 = sshll.u32 %s3, 4
          %s257 = int_to_ptr.hbm [resolvable:$true] %s256
          %s258 = sshll.u32 [#allocation9], 4
          %s259 = int_to_ptr.vmem [resolvable:$true] %s258
          %264 = dma.hbm_to_vmem [thread:$0]  %s257, 1024, %s259, [#allocation8], 64, 64, 4
        $region24: #{tpu_custom_call.1} parent=11 // pred_fallthru
          _
        // Predicated region
        $region25: #{tpu_custom_call.1} parent=11 // pred_check
          %p265 = pneg %p117
        $region26: #{tpu_custom_call.1} parent=11 // pred_check_branch
          %267 = sbr.rel (%p265) target = $region28
        $region27: #{tpu_custom_call.1} parent=11 // pred_region
          %269 = vsyncadd [#allocation11], 0
          %s270 = sshll.u32 %s4, 4
          %s271 = int_to_ptr.hbm [resolvable:$true] %s270
          %s272 = sshll.u32 [#allocation10], 4
          %s273 = int_to_ptr.vmem [resolvable:$true] %s272
          %278 = dma.hbm_to_vmem [thread:$0]  %s271, 128, %s273, [#allocation11], 64, 64, 4
        $region28: #{tpu_custom_call.1} parent=11 // pred_fallthru
          _
        // Predicated region
        $region29: #{tpu_custom_call.1} parent=11 // pred_check
          %p279 = pneg %p138
        $region30: #{tpu_custom_call.1} parent=11 // pred_check_branch
          %281 = sbr.rel (%p279) target = $region32
        $region31: #{tpu_custom_call.1} parent=11 // pred_region
          %283 = vsyncadd [#allocation11], 0
          %s284 = sshll.u32 %s5, 4
          %s285 = int_to_ptr.hbm [resolvable:$true] %s284
          %s286 = sshll.u32 [#allocation12], 4
          %s287 = int_to_ptr.vmem [resolvable:$true] %s286
          %292 = dma.hbm_to_vmem [thread:$0]  %s285, 128, %s287, [#allocation11], 64, 64, 4
        $region32: #{tpu_custom_call.1} parent=11 // pred_fallthru
          _
        // Predicated region
        $region33: #{tpu_custom_call.1} parent=11 // pred_check
          %p293 = pneg %p159
        $region34: #{tpu_custom_call.1} parent=11 // pred_check_branch
          %295 = sbr.rel (%p293) target = $region36
        $region35: #{tpu_custom_call.1} parent=11 // pred_region
          %297 = vsyncadd [#allocation14], 0
          %s298 = sshll.u32 %s6, 4
          %s299 = int_to_ptr.hbm [resolvable:$true] %s298
          %s300 = sshll.u32 [#allocation13], 4
          %s301 = int_to_ptr.vmem [resolvable:$true] %s300
          %306 = dma.hbm_to_vmem [thread:$0]  %s299, 128, %s301, [#allocation14], 64, 64, 4
        $region36: #{tpu_custom_call.1} parent=11 // pred_fallthru
          _
        // Predicated region
        $region37: #{tpu_custom_call.1} parent=11 // pred_check
          %p307 = pneg %p180
        $region38: #{tpu_custom_call.1} parent=11 // pred_check_branch
          %309 = sbr.rel (%p307) target = $region40
        $region39: #{tpu_custom_call.1} parent=11 // pred_region
          %311 = vsyncadd [#allocation14], 0
          %s312 = sshll.u32 %s7, 4
          %s313 = int_to_ptr.hbm [resolvable:$true] %s312
          %s314 = sshll.u32 [#allocation15], 4
          %s315 = int_to_ptr.vmem [resolvable:$true] %s314
          %320 = dma.hbm_to_vmem [thread:$0]  %s313, 1024, %s315, [#allocation14], 64, 64, 4
        $region40: #{tpu_custom_call.1} parent=11 // pred_fallthru
          _
      $region12: #{tpu_custom_call.1} parent=5 // pred_fallthru
        _
      %p321 = scmp.lt.s32.totalorder %s21, 4
      // Predicated region
      $region41: #{tpu_custom_call.1} parent=5 // pred_check
        %p322 = pneg %p321
      $region42: #{tpu_custom_call.1} parent=5 // pred_check_branch
        %324 = sbr.rel (%p322) target = $region44
      $region43: #{tpu_custom_call.1} parent=5 // pred_region
        _
      $region44: #{tpu_custom_call.1} parent=5 // pred_fallthru
        _
      %p325 = scmp.le.s32.totalorder 1, %s21
      %p326 = scmp.lt.s32.totalorder %s21, 5
      %p327 = pnand %p325, %p326
      %p328 = pneg %p327
      // Predicated region
      $region45: #{tpu_custom_call.1} parent=5 // pred_check
        _
      $region46: #{tpu_custom_call.1} parent=5 // pred_check_branch
        %330 = sbr.rel (%p327) target = $region48
      $region47: #{tpu_custom_call.1} parent=5 // pred_region
        %s331 = ssub.s32 %s21, 1
        // Predicated region
        $region49: #{tpu_custom_call.1} parent=47 // pred_check
          %p332 = pneg %p54
        $region50: #{tpu_custom_call.1} parent=47 // pred_check_branch
          %334 = sbr.rel (%p332) target = $region52
        $region51: #{tpu_custom_call.1} parent=47 // pred_region
          %336 = dma.done [#allocation5], 1024
        $region52: #{tpu_custom_call.1} parent=47 // pred_fallthru
          _
        // Predicated region
        $region53: #{tpu_custom_call.1} parent=47 // pred_check
          %p337 = pneg %p75
        $region54: #{tpu_custom_call.1} parent=47 // pred_check_branch
          %339 = sbr.rel (%p337) target = $region56
        $region55: #{tpu_custom_call.1} parent=47 // pred_region
          %341 = dma.done [#allocation8], 1024
        $region56: #{tpu_custom_call.1} parent=47 // pred_fallthru
          _
        // Predicated region
        $region57: #{tpu_custom_call.1} parent=47 // pred_check
          %p342 = pneg %p96
        $region58: #{tpu_custom_call.1} parent=47 // pred_check_branch
          %344 = sbr.rel (%p342) target = $region60
        $region59: #{tpu_custom_call.1} parent=47 // pred_region
          %346 = dma.done [#allocation8], 1024
        $region60: #{tpu_custom_call.1} parent=47 // pred_fallthru
          _
        // Predicated region
        $region61: #{tpu_custom_call.1} parent=47 // pred_check
          %p347 = pneg %p117
        $region62: #{tpu_custom_call.1} parent=47 // pred_check_branch
          %349 = sbr.rel (%p347) target = $region64
        $region63: #{tpu_custom_call.1} parent=47 // pred_region
          %351 = dma.done [#allocation11], 128
        $region64: #{tpu_custom_call.1} parent=47 // pred_fallthru
          _
        // Predicated region
        $region65: #{tpu_custom_call.1} parent=47 // pred_check
          %p352 = pneg %p138
        $region66: #{tpu_custom_call.1} parent=47 // pred_check_branch
          %354 = sbr.rel (%p352) target = $region68
        $region67: #{tpu_custom_call.1} parent=47 // pred_region
          %356 = dma.done [#allocation11], 128
        $region68: #{tpu_custom_call.1} parent=47 // pred_fallthru
          _
        // Predicated region
        $region69: #{tpu_custom_call.1} parent=47 // pred_check
          %p357 = pneg %p159
        $region70: #{tpu_custom_call.1} parent=47 // pred_check_branch
          %359 = sbr.rel (%p357) target = $region72
        $region71: #{tpu_custom_call.1} parent=47 // pred_region
          %361 = dma.done [#allocation14], 128
        $region72: #{tpu_custom_call.1} parent=47 // pred_fallthru
          _
        // Predicated region
        $region73: #{tpu_custom_call.1} parent=47 // pred_check
          %p362 = pneg %p180
        $region74: #{tpu_custom_call.1} parent=47 // pred_check_branch
          %364 = sbr.rel (%p362) target = $region76
        $region75: #{tpu_custom_call.1} parent=47 // pred_region
          %366 = dma.done [#allocation14], 1024
        $region76: #{tpu_custom_call.1} parent=47 // pred_fallthru
          _
        %p367 = pneg %p54
        %p368 = pneg %p51
        %p369 = pneg %p75
        %p370 = pneg %p72
        %p371 = pneg %p96
        %p372 = pneg %p93
        %p373 = pneg %p117
        %p374 = pneg %p114
        %p375 = pneg %p138
        %p376 = pneg %p135
        %p377 = pneg %p159
        %p378 = pneg %p156
        %p379 = pneg %p180
        %p380 = pneg %p177
        %p381 = pneg %p208
        %p382 = pneg %p205
        %s383 = sand.u32 %s195, 1
        %s384 = scalar_lea.sflag [#allocation6], %s383
        %s385 = sand.u32 %s195, 1
        %s386 = smul.addr %s385, 64
        %s387 = scalar_lea.vmem [#allocation16], %s386
        %s388 = smul.u32 8, %s31
        %s389 = smul.u32 %s31, 8
        %s390 = smul.u32 %s389, 4
        %s391 = smul.u32 %s30, 88
        %s392 = sadd.s32 %s390, %s391
        %s393 = smul.addr %s392, 4
        %s394 = scalar_lea.hbm %s0, %s393
        // Predicated region
        $region77: #{tpu_custom_call.1} parent=47 // pred_check
          _
        $region78: #{tpu_custom_call.1} parent=47 // pred_check_branch
          %396 = sbr.rel target = $region80
        $region79: #{tpu_custom_call.1} parent=47 // pred_region
          %397 = sst [smem:[#allocation19]] [#allocation18]
          %398 = sst [smem:[#allocation20]] [#allocation17]
        $region80: #{tpu_custom_call.1} parent=47 // pred_fallthru
          _
        %400 = shalt.err (0)
        %s402 = sshll.u32 %s394, 4
        %s403 = int_to_ptr.hbm [resolvable:$true] %s402
        %s404 = sshll.u32 [#allocation2], 4
        %s405 = int_to_ptr.vmem [resolvable:$true] %s404
        %407 = dma.hbm_to_vmem [thread:$0]  %s403, 3584, %s405, [#allocation3]
        %s408 = smul.u32 4, 14
        %s409 = smul.u32 %s408, 4
        %s410 = smul.u32 %s409, 1
        %s411 = sshll.u32 %s410, 4
        %412 = dma.done [#allocation3], %s411
        %v413 = vld [vmem:[#allocation2] sm:$0xf]
        %v414 = vld [vmem:[#allocation2 + $0x4] sm:$0xf]
        %v415 = vld [vmem:[#allocation2 + $0x8] sm:$0xf]
        %v416 = vld [vmem:[#allocation2 + $0xc] sm:$0xf]
        %v417 = vld [vmem:[#allocation2 + $0x10] sm:$0xf]
        %v418 = vld [vmem:[#allocation2 + $0x14] sm:$0xf]
        %v419 = vld [vmem:[#allocation2 + $0x18] sm:$0xf]
        %v420 = vld [vmem:[#allocation2 + $0x1c] sm:$0xf]
        %v421 = vld [vmem:[#allocation2 + $0x20] sm:$0xf]
        %v422 = vld [vmem:[#allocation2 + $0x24] sm:$0xf]
        %v423 = vld [vmem:[#allocation2 + $0x28] sm:$0xf]
        %v424 = vld [vmem:[#allocation2 + $0x2c] sm:$0xf]
        %v425 = vld [vmem:[#allocation2 + $0x30] sm:$0xf]
        %v426 = vld [vmem:[#allocation2 + $0x34] sm:$0xf]
        %v427 = vld [vmem:[#allocation2 + $0x38] sm:$0xf]
        %v428 = vld [vmem:[#allocation2 + $0x3c] sm:$0xf]
        %v429 = vld [vmem:[#allocation2 + $0x40] sm:$0xf]
        %v430 = vld [vmem:[#allocation2 + $0x44] sm:$0xf]
        %v431 = vld [vmem:[#allocation2 + $0x48] sm:$0xf]
        %v432 = vld [vmem:[#allocation2 + $0x4c] sm:$0xf]
        %v433 = vld [vmem:[#allocation2 + $0x50] sm:$0xf]
        %v434 = vld [vmem:[#allocation2 + $0x54] sm:$0xf]
        %v435 = vld [vmem:[#allocation2 + $0x58] sm:$0xf]
        %v436 = vld [vmem:[#allocation2 + $0x5c] sm:$0xf]
        %v437 = vld [vmem:[#allocation2 + $0x60] sm:$0xf]
        %v438 = vld [vmem:[#allocation2 + $0x64] sm:$0xf]
        %v439 = vld [vmem:[#allocation2 + $0x68] sm:$0xf]
        %v440 = vld [vmem:[#allocation2 + $0x6c] sm:$0xf]
        %v441 = vld [vmem:[#allocation2 + $0x70] sm:$0xf]
        %v442 = vld [vmem:[#allocation2 + $0x74] sm:$0xf]
        %v443 = vld [vmem:[#allocation2 + $0x78] sm:$0xf]
        %v444 = vld [vmem:[#allocation2 + $0x7c] sm:$0xf]
        %v445 = vld [vmem:[#allocation2 + $0x80] sm:$0xf]
        %v446 = vld [vmem:[#allocation2 + $0x84] sm:$0xf]
        %v447 = vld [vmem:[#allocation2 + $0x88] sm:$0xf]
        %v448 = vld [vmem:[#allocation2 + $0x8c] sm:$0xf]
        %v449 = vld [vmem:[#allocation2 + $0x90] sm:$0xf]
        %v450 = vld [vmem:[#allocation2 + $0x94] sm:$0xf]
        %v451 = vld [vmem:[#allocation2 + $0x98] sm:$0xf]
        %v452 = vld [vmem:[#allocation2 + $0x9c] sm:$0xf]
        %v453 = vld [vmem:[#allocation2 + $0xa0] sm:$0xf]
        %v454 = vld [vmem:[#allocation2 + $0xa4] sm:$0xf]
        %v455 = vld [vmem:[#allocation2 + $0xa8] sm:$0xf]
        %v456 = vld [vmem:[#allocation2 + $0xac] sm:$0xf]
        %v457 = vld [vmem:[#allocation2 + $0xb0] sm:$0xf]
        %v458 = vld [vmem:[#allocation2 + $0xb4] sm:$0xf]
        %v459 = vld [vmem:[#allocation2 + $0xb8] sm:$0xf]
        %v460 = vld [vmem:[#allocation2 + $0xbc] sm:$0xf]
        %v461 = vld [vmem:[#allocation2 + $0xc0] sm:$0xf]
        %v462 = vld [vmem:[#allocation2 + $0xc4] sm:$0xf]
        %v463 = vld [vmem:[#allocation2 + $0xc8] sm:$0xf]
        %v464 = vld [vmem:[#allocation2 + $0xcc] sm:$0xf]
        %v465 = vld [vmem:[#allocation2 + $0xd0] sm:$0xf]
        %v466 = vld [vmem:[#allocation2 + $0xd4] sm:$0xf]
        %v467 = vld [vmem:[#allocation2 + $0xd8] sm:$0xf]
        %v468 = vld [vmem:[#allocation2 + $0xdc] sm:$0xf]
        %v469 = vld [vmem:[#allocation4] sm:$0xf]
        %v470 = vld [vmem:[#allocation4 + $0x4] sm:$0xf]
        %v471 = vld [vmem:[#allocation4 + $0x8] sm:$0xf]
        %v472 = vld [vmem:[#allocation4 + $0xc] sm:$0xf]
        %v473 = vld [vmem:[#allocation4 + $0x10] sm:$0xf]
        %v474 = vld [vmem:[#allocation4 + $0x14] sm:$0xf]
        %v475 = vld [vmem:[#allocation4 + $0x18] sm:$0xf]
        %v476 = vld [vmem:[#allocation4 + $0x1c] sm:$0xf]
        %v477 = vld [vmem:[#allocation4 + $0x20] sm:$0xf]
        %v478 = vld [vmem:[#allocation4 + $0x24] sm:$0xf]
        %v479 = vld [vmem:[#allocation4 + $0x28] sm:$0xf]
        %v480 = vld [vmem:[#allocation4 + $0x2c] sm:$0xf]
        %v481 = vld [vmem:[#allocation4 + $0x30] sm:$0xf]
        %v482 = vld [vmem:[#allocation4 + $0x34] sm:$0xf]
        %v483 = vld [vmem:[#allocation4 + $0x38] sm:$0xf]
        %v484 = vld [vmem:[#allocation4 + $0x3c] sm:$0xf]
        %v541 = vunpack.c.l.b16 %v413
        %v542 = vunpack.c.l.b16 %v414
        %v543 = vunpack.c.l.b16 %v415
        %v544 = vunpack.c.l.b16 %v416
        %v545 = vunpack.c.l.b16 %v417
        %v546 = vunpack.c.l.b16 %v418
        %v547 = vunpack.c.l.b16 %v419
        %v548 = vunpack.c.l.b16 %v420
        %v549 = vunpack.c.l.b16 %v421
        %v550 = vunpack.c.l.b16 %v422
        %v551 = vunpack.c.l.b16 %v423
        %v552 = vunpack.c.l.b16 %v424
        %v553 = vunpack.c.l.b16 %v425
        %v554 = vunpack.c.l.b16 %v426
        %v555 = vunpack.c.l.b16 %v427
        %v556 = vunpack.c.l.b16 %v428
        %v557 = vunpack.c.l.b16 %v429
        %v558 = vunpack.c.l.b16 %v430
        %v559 = vunpack.c.l.b16 %v431
        %v560 = vunpack.c.l.b16 %v432
        %v561 = vunpack.c.l.b16 %v433
        %v562 = vunpack.c.l.b16 %v434
        %v563 = vunpack.c.l.b16 %v435
        %v564 = vunpack.c.l.b16 %v436
        %v565 = vunpack.c.l.b16 %v437
        %v566 = vunpack.c.l.b16 %v438
        %v567 = vunpack.c.l.b16 %v439
        %v568 = vunpack.c.l.b16 %v440
        %v569 = vunpack.c.l.b16 %v441
        %v570 = vunpack.c.l.b16 %v442
        %v571 = vunpack.c.l.b16 %v443
        %v572 = vunpack.c.l.b16 %v444
        %v573 = vunpack.c.l.b16 %v445
        %v574 = vunpack.c.l.b16 %v446
        %v575 = vunpack.c.l.b16 %v447
        %v576 = vunpack.c.l.b16 %v448
        %v577 = vunpack.c.l.b16 %v449
        %v578 = vunpack.c.l.b16 %v450
        %v579 = vunpack.c.l.b16 %v451
        %v580 = vunpack.c.l.b16 %v452
        %v581 = vunpack.c.l.b16 %v453
        %v582 = vunpack.c.l.b16 %v454
        %v583 = vunpack.c.l.b16 %v455
        %v584 = vunpack.c.l.b16 %v456
        %v585 = vunpack.c.l.b16 %v457
        %v586 = vunpack.c.l.b16 %v458
        %v587 = vunpack.c.l.b16 %v459
        %v588 = vunpack.c.l.b16 %v460
        %v589 = vunpack.c.l.b16 %v461
        %v590 = vunpack.c.l.b16 %v462
        %v591 = vunpack.c.l.b16 %v463
        %v592 = vunpack.c.l.b16 %v464
        %v593 = vunpack.c.l.b16 %v465
        %v594 = vunpack.c.l.b16 %v466
        %v595 = vunpack.c.l.b16 %v467
        %v596 = vunpack.c.l.b16 %v468
        %v597 = vpack.c.b16 %v542, %v541
        %v598 = vpack.c.b16 %v544, %v543
        %v599 = vpack.c.b16 %v546, %v545
        %v600 = vpack.c.b16 %v548, %v547
        %v601 = vpack.c.b16 %v550, %v549
        %v602 = vpack.c.b16 %v552, %v551
        %v603 = vpack.c.b16 %v554, %v553
        %v604 = vpack.c.b16 %v556, %v555
        %v605 = vpack.c.b16 %v558, %v557
        %v606 = vpack.c.b16 %v560, %v559
        %v607 = vpack.c.b16 %v562, %v561
        %v608 = vpack.c.b16 %v564, %v563
        %v609 = vpack.c.b16 %v566, %v565
        %v610 = vpack.c.b16 %v568, %v567
        %v611 = vpack.c.b16 %v570, %v569
        %v612 = vpack.c.b16 %v572, %v571
        %v613 = vpack.c.b16 %v574, %v573
        %v614 = vpack.c.b16 %v576, %v575
        %v615 = vpack.c.b16 %v578, %v577
        %v616 = vpack.c.b16 %v580, %v579
        %v617 = vpack.c.b16 %v582, %v581
        %v618 = vpack.c.b16 %v584, %v583
        %v619 = vpack.c.b16 %v586, %v585
        %v620 = vpack.c.b16 %v588, %v587
        %v621 = vpack.c.b16 %v590, %v589
        %v622 = vpack.c.b16 %v592, %v591
        %v623 = vpack.c.b16 %v594, %v593
        %v624 = vpack.c.b16 %v596, %v595
        %v669 = vunpack.c.l.b16 %v469
        %v670 = vunpack.c.l.b16 %v470
        %v671 = vunpack.c.l.b16 %v471
        %v672 = vunpack.c.l.b16 %v472
        %v673 = vunpack.c.l.b16 %v473
        %v674 = vunpack.c.l.b16 %v474
        %v675 = vunpack.c.l.b16 %v475
        %v676 = vunpack.c.l.b16 %v476
        %v677 = vunpack.c.l.b16 %v477
        %v678 = vunpack.c.l.b16 %v478
        %v679 = vunpack.c.l.b16 %v479
        %v680 = vunpack.c.l.b16 %v480
        %v681 = vunpack.c.l.b16 %v481
        %v682 = vunpack.c.l.b16 %v482
        %v683 = vunpack.c.l.b16 %v483
        %v684 = vunpack.c.l.b16 %v484
        %v685 = vpack.c.b16 %v670, %v669
        %v686 = vpack.c.b16 %v672, %v671
        %v687 = vpack.c.b16 %v674, %v673
        %v688 = vpack.c.b16 %v676, %v675
        %v689 = vpack.c.b16 %v678, %v677
        %v690 = vpack.c.b16 %v680, %v679
        %v691 = vpack.c.b16 %v682, %v681
        %v692 = vpack.c.b16 %v684, %v683
        %701 = vmatpush.bf16.msra.mxu0 %v692
        %702 = vmatpush.bf16.msra.mxu0 %v691
        %703 = vmatpush.bf16.msra.mxu0 %v690
        %704 = vmatpush.bf16.msra.mxu0 %v689
        %705 = vmatpush.bf16.msra.mxu0 %v688
        %706 = vmatpush.bf16.msra.mxu0 %v687
        %707 = vmatpush.bf16.msra.mxu0 %v686
        %708 = vmatpush.bf16.msra.mxu0 %v685
        %709 = vmatmul.bf16.gmra.mxu0 %v597
        %v710 = vpop.f32.mrf.mxu0
        %v711 = vpop.f32.mrf.mxu0
        %712 = vmatmul.bf16.gmra.mxu0 %v598
        %v713 = vpop.f32.mrf.mxu0
        %v714 = vpop.f32.mrf.mxu0
        %715 = vmatmul.bf16.gmra.mxu0 %v599
        %v716 = vpop.f32.mrf.mxu0
        %v717 = vpop.f32.mrf.mxu0
        %718 = vmatmul.bf16.gmra.mxu0 %v600
        %v719 = vpop.f32.mrf.mxu0
        %v720 = vpop.f32.mrf.mxu0
        %721 = vmatmul.bf16.gmra.mxu0 %v601
        %v722 = vpop.f32.mrf.mxu0
        %v723 = vadd.f32 0.0, %v722
        %v724 = vpop.f32.mrf.mxu0
        %v725 = vadd.f32 0.0, %v724
        %726 = vmatmul.bf16.gmra.mxu0 %v602
        %v727 = vpop.f32.mrf.mxu0
        %v728 = vadd.f32 0.0, %v727
        %v729 = vpop.f32.mrf.mxu0
        %730 = vmatmul.bf16.gmra.mxu0 %v603
        %v731 = vpop.f32.mrf.mxu0
        %v732 = vadd.f32 0.0, %v731
        %v733 = vpop.f32.mrf.mxu0
        %v734 = vadd.f32 0.0, %v733
        %735 = vmatmul.bf16.gmra.mxu0 %v604
        %v736 = vpop.f32.mrf.mxu0
        %v737 = vadd.f32 0.0, %v736
        %v738 = vpop.f32.mrf.mxu0
        %739 = vmatmul.bf16.gmra.mxu0 %v605
        %v740 = vpop.f32.mrf.mxu0
        %v741 = vadd.f32 0.0, %v740
        %v742 = vpop.f32.mrf.mxu0
        %v743 = vadd.f32 0.0, %v742
        %744 = vmatmul.bf16.gmra.mxu0 %v606
        %v745 = vpop.f32.mrf.mxu0
        %v746 = vadd.f32 0.0, %v745
        %v747 = vpop.f32.mrf.mxu0
        %748 = vmatmul.bf16.gmra.mxu0 %v607
        %v749 = vpop.f32.mrf.mxu0
        %v750 = vadd.f32 0.0, %v749
        %v751 = vpop.f32.mrf.mxu0
        %v752 = vadd.f32 0.0, %v751
        %753 = vmatmul.bf16.gmra.mxu0 %v608
        %v754 = vpop.f32.mrf.mxu0
        %v755 = vadd.f32 0.0, %v754
        %v756 = vpop.f32.mrf.mxu0
        %757 = vmatmul.bf16.gmra.mxu0 %v609
        %v758 = vpop.f32.mrf.mxu0
        %v759 = vadd.f32 0.0, %v758
        %v760 = vpop.f32.mrf.mxu0
        %v761 = vadd.f32 0.0, %v760
        %762 = vmatmul.bf16.gmra.mxu0 %v610
        %v763 = vpop.f32.mrf.mxu0
        %v764 = vadd.f32 0.0, %v763
        %v765 = vpop.f32.mrf.mxu0
        %766 = vmatmul.bf16.gmra.mxu0 %v611
        %v767 = vpop.f32.mrf.mxu0
        %v768 = vadd.f32 0.0, %v767
        %v769 = vpop.f32.mrf.mxu0
        %v770 = vadd.f32 0.0, %v769
        %771 = vmatmul.bf16.gmra.mxu0 %v612
        %v772 = vpop.f32.mrf.mxu0
        %v773 = vadd.f32 0.0, %v772
        %v774 = vpop.f32.mrf.mxu0
        %775 = vmatmul.bf16.gmra.mxu0 %v613
        %v776 = vpop.f32.mrf.mxu0
        %v777 = vadd.f32 0.0, %v776
        %v778 = vpop.f32.mrf.mxu0
        %v779 = vadd.f32 0.0, %v778
        %780 = vmatmul.bf16.gmra.mxu0 %v614
        %v781 = vpop.f32.mrf.mxu0
        %v782 = vadd.f32 0.0, %v781
        %v783 = vpop.f32.mrf.mxu0
        %784 = vmatmul.bf16.gmra.mxu0 %v615
        %v785 = vpop.f32.mrf.mxu0
        %v786 = vadd.f32 0.0, %v785
        %v787 = vpop.f32.mrf.mxu0
        %v788 = vadd.f32 0.0, %v787
        %789 = vmatmul.bf16.gmra.mxu0 %v616
        %v790 = vpop.f32.mrf.mxu0
        %v791 = vadd.f32 0.0, %v790
        %v792 = vpop.f32.mrf.mxu0
        %793 = vmatmul.bf16.gmra.mxu0 %v617
        %v794 = vpop.f32.mrf.mxu0
        %v795 = vadd.f32 0.0, %v794
        %v796 = vpop.f32.mrf.mxu0
        %v797 = vadd.f32 0.0, %v796
        %798 = vmatmul.bf16.gmra.mxu0 %v618
        %v799 = vpop.f32.mrf.mxu0
        %v800 = vadd.f32 0.0, %v799
        %v801 = vpop.f32.mrf.mxu0
        %802 = vmatmul.bf16.gmra.mxu0 %v619
        %v803 = vpop.f32.mrf.mxu0
        %v804 = vadd.f32 0.0, %v803
        %v805 = vpop.f32.mrf.mxu0
        %v806 = vadd.f32 0.0, %v805
        %807 = vmatmul.bf16.gmra.mxu0 %v620
        %v808 = vpop.f32.mrf.mxu0
        %v809 = vadd.f32 0.0, %v808
        %v810 = vpop.f32.mrf.mxu0
        %811 = vmatmul.bf16.gmra.mxu0 %v621
        %v812 = vpop.f32.mrf.mxu0
        %v813 = vpop.f32.mrf.mxu0
        %814 = vmatmul.bf16.gmra.mxu0 %v622
        %v815 = vpop.f32.mrf.mxu0
        %v816 = vpop.f32.mrf.mxu0
        %817 = vmatmul.bf16.gmra.mxu0 %v623
        %v818 = vpop.f32.mrf.mxu0
        %v819 = vpop.f32.mrf.mxu0
        %820 = vmatmul.bf16.gmra.mxu0 %v624
        %v821 = vpop.f32.mrf.mxu0
        %v822 = vpop.f32.mrf.mxu0
        %823 = vdwg.mxu0
        %v824 = vpack.c.bf16 %v723, %v723
        %v825 = vpack.c.bf16 %v725, %v725
        %v826 = vpack.c.bf16 %v728, %v728
        %v827 = vpack.c.bf16 %v732, %v732
        %v828 = vpack.c.bf16 %v734, %v734
        %v829 = vpack.c.bf16 %v737, %v737
        %v830 = vpack.c.bf16 %v741, %v741
        %v831 = vpack.c.bf16 %v743, %v743
        %v832 = vpack.c.bf16 %v746, %v746
        %v833 = vpack.c.bf16 %v750, %v750
        %v834 = vpack.c.bf16 %v752, %v752
        %v835 = vpack.c.bf16 %v755, %v755
        %v836 = vpack.c.bf16 %v759, %v759
        %v837 = vpack.c.bf16 %v761, %v761
        %v838 = vpack.c.bf16 %v764, %v764
        %v839 = vpack.c.bf16 %v768, %v768
        %v840 = vpack.c.bf16 %v770, %v770
        %v841 = vpack.c.bf16 %v773, %v773
        %v842 = vpack.c.bf16 %v777, %v777
        %v843 = vpack.c.bf16 %v779, %v779
        %v844 = vpack.c.bf16 %v782, %v782
        %v845 = vpack.c.bf16 %v786, %v786
        %v846 = vpack.c.bf16 %v788, %v788
        %v847 = vpack.c.bf16 %v791, %v791
        %v848 = vpack.c.bf16 %v795, %v795
        %v849 = vpack.c.bf16 %v797, %v797
        %v850 = vpack.c.bf16 %v800, %v800
        %v851 = vpack.c.bf16 %v804, %v804
        %v852 = vpack.c.bf16 %v806, %v806
        %v853 = vpack.c.bf16 %v809, %v809
        %v854 = vld [vmem:[#allocation10] sm:$0xf]
        %v855 = vld [vmem:[#allocation10 + $0x4] sm:$0x1]
        %v857 = vpack.i.b16 %v854, %v854
        %v859 = vperm.slane %v857, 0
        %v860 = vunpack.c.l.bf16 %v824
        %v861 = vunpack.c.l.bf16 %v825
        %v862 = vunpack.c.l.bf16 %v826
        %v863 = vunpack.c.l.bf16 %v827
        %v864 = vunpack.c.l.bf16 %v828
        %v865 = vunpack.c.l.bf16 %v829
        %v866 = vunpack.c.l.bf16 %v830
        %v867 = vunpack.c.l.bf16 %v831
        %v868 = vunpack.c.l.bf16 %v832
        %v869 = vunpack.c.l.bf16 %v833
        %v870 = vunpack.c.l.bf16 %v834
        %v871 = vunpack.c.l.bf16 %v835
        %v872 = vunpack.c.l.bf16 %v836
        %v873 = vunpack.c.l.bf16 %v837
        %v874 = vunpack.c.l.bf16 %v838
        %v875 = vunpack.c.l.bf16 %v839
        %v876 = vunpack.c.l.bf16 %v840
        %v877 = vunpack.c.l.bf16 %v841
        %v878 = vunpack.c.l.bf16 %v842
        %v879 = vunpack.c.l.bf16 %v843
        %v880 = vunpack.c.l.bf16 %v844
        %v881 = vunpack.c.l.bf16 %v845
        %v882 = vunpack.c.l.bf16 %v846
        %v883 = vunpack.c.l.bf16 %v847
        %v884 = vunpack.c.l.bf16 %v859
        %v885 = vmul.f32 %v860, %v884
        %v886 = vmul.f32 %v861, %v884
        %v887 = vmul.f32 %v862, %v884
        %v888 = vmul.f32 %v863, %v884
        %v889 = vmul.f32 %v864, %v884
        %v890 = vmul.f32 %v865, %v884
        %v891 = vmul.f32 %v866, %v884
        %v892 = vmul.f32 %v867, %v884
        %v893 = vmul.f32 %v868, %v884
        %v894 = vmul.f32 %v869, %v884
        %v895 = vmul.f32 %v870, %v884
        %v896 = vmul.f32 %v871, %v884
        %v897 = vmul.f32 %v872, %v884
        %v898 = vmul.f32 %v873, %v884
        %v899 = vmul.f32 %v874, %v884
        %v900 = vmul.f32 %v875, %v884
        %v901 = vmul.f32 %v876, %v884
        %v902 = vmul.f32 %v877, %v884
        %v903 = vmul.f32 %v878, %v884
        %v904 = vmul.f32 %v879, %v884
        %v905 = vmul.f32 %v880, %v884
        %v906 = vmul.f32 %v881, %v884
        %v907 = vmul.f32 %v882, %v884
        %v908 = vmul.f32 %v883, %v884
        %v909 = vpack.c.bf16 %v885, %v885
        %v910 = vpack.c.bf16 %v886, %v886
        %v911 = vpack.c.bf16 %v887, %v887
        %v912 = vpack.c.bf16 %v888, %v888
        %v913 = vpack.c.bf16 %v889, %v889
        %v914 = vpack.c.bf16 %v890, %v890
        %v915 = vpack.c.bf16 %v891, %v891
        %v916 = vpack.c.bf16 %v892, %v892
        %v917 = vpack.c.bf16 %v893, %v893
        %v918 = vpack.c.bf16 %v894, %v894
        %v919 = vpack.c.bf16 %v895, %v895
        %v920 = vpack.c.bf16 %v896, %v896
        %v921 = vpack.c.bf16 %v897, %v897
        %v922 = vpack.c.bf16 %v898, %v898
        %v923 = vpack.c.bf16 %v899, %v899
        %v924 = vpack.c.bf16 %v900, %v900
        %v925 = vpack.c.bf16 %v901, %v901
        %v926 = vpack.c.bf16 %v902, %v902
        %v927 = vpack.c.bf16 %v903, %v903
        %v928 = vpack.c.bf16 %v904, %v904
        %v929 = vpack.c.bf16 %v905, %v905
        %v930 = vpack.c.bf16 %v906, %v906
        %v931 = vpack.c.bf16 %v907, %v907
        %v932 = vpack.c.bf16 %v908, %v908
        %v933 = vshrl.u32 %v854, 16
        %v934 = vpack.i.b16 %v933, %v933
        %v936 = vperm.slane %v934, 1
        %v937 = vunpack.c.l.bf16 %v848
        %v938 = vunpack.c.l.bf16 %v849
        %v939 = vunpack.c.l.bf16 %v850
        %v940 = vunpack.c.l.bf16 %v936
        %v941 = vmul.f32 %v863, %v940
        %v942 = vmul.f32 %v864, %v940
        %v943 = vmul.f32 %v865, %v940
        %v944 = vmul.f32 %v866, %v940
        %v945 = vmul.f32 %v867, %v940
        %v946 = vmul.f32 %v868, %v940
        %v947 = vmul.f32 %v869, %v940
        %v948 = vmul.f32 %v870, %v940
        %v949 = vmul.f32 %v871, %v940
        %v950 = vmul.f32 %v872, %v940
        %v951 = vmul.f32 %v873, %v940
        %v952 = vmul.f32 %v874, %v940
        %v953 = vmul.f32 %v875, %v940
        %v954 = vmul.f32 %v876, %v940
        %v955 = vmul.f32 %v877, %v940
        %v956 = vmul.f32 %v878, %v940
        %v957 = vmul.f32 %v879, %v940
        %v958 = vmul.f32 %v880, %v940
        %v959 = vmul.f32 %v881, %v940
        %v960 = vmul.f32 %v882, %v940
        %v961 = vmul.f32 %v883, %v940
        %v962 = vmul.f32 %v937, %v940
        %v963 = vmul.f32 %v938, %v940
        %v964 = vmul.f32 %v939, %v940
        %v965 = vpack.c.bf16 %v941, %v941
        %v966 = vpack.c.bf16 %v942, %v942
        %v967 = vpack.c.bf16 %v943, %v943
        %v968 = vpack.c.bf16 %v944, %v944
        %v969 = vpack.c.bf16 %v945, %v945
        %v970 = vpack.c.bf16 %v946, %v946
        %v971 = vpack.c.bf16 %v947, %v947
        %v972 = vpack.c.bf16 %v948, %v948
        %v973 = vpack.c.bf16 %v949, %v949
        %v974 = vpack.c.bf16 %v950, %v950
        %v975 = vpack.c.bf16 %v951, %v951
        %v976 = vpack.c.bf16 %v952, %v952
        %v977 = vpack.c.bf16 %v953, %v953
        %v978 = vpack.c.bf16 %v954, %v954
        %v979 = vpack.c.bf16 %v955, %v955
        %v980 = vpack.c.bf16 %v956, %v956
        %v981 = vpack.c.bf16 %v957, %v957
        %v982 = vpack.c.bf16 %v958, %v958
        %v983 = vpack.c.bf16 %v959, %v959
        %v984 = vpack.c.bf16 %v960, %v960
        %v985 = vpack.c.bf16 %v961, %v961
        %v986 = vpack.c.bf16 %v962, %v962
        %v987 = vpack.c.bf16 %v963, %v963
        %v988 = vpack.c.bf16 %v964, %v964
        %v989 = vunpack.c.l.bf16 %v909
        %v990 = vunpack.c.l.bf16 %v910
        %v991 = vunpack.c.l.bf16 %v911
        %v992 = vunpack.c.l.bf16 %v912
        %v993 = vunpack.c.l.bf16 %v913
        %v994 = vunpack.c.l.bf16 %v914
        %v995 = vunpack.c.l.bf16 %v915
        %v996 = vunpack.c.l.bf16 %v916
        %v997 = vunpack.c.l.bf16 %v917
        %v998 = vunpack.c.l.bf16 %v918
        %v999 = vunpack.c.l.bf16 %v919
        %v1000 = vunpack.c.l.bf16 %v920
        %v1001 = vunpack.c.l.bf16 %v921
        %v1002 = vunpack.c.l.bf16 %v922
        %v1003 = vunpack.c.l.bf16 %v923
        %v1004 = vunpack.c.l.bf16 %v924
        %v1005 = vunpack.c.l.bf16 %v925
        %v1006 = vunpack.c.l.bf16 %v926
        %v1007 = vunpack.c.l.bf16 %v927
        %v1008 = vunpack.c.l.bf16 %v928
        %v1009 = vunpack.c.l.bf16 %v929
        %v1010 = vunpack.c.l.bf16 %v930
        %v1011 = vunpack.c.l.bf16 %v931
        %v1012 = vunpack.c.l.bf16 %v932
        %v1013 = vunpack.c.l.bf16 %v965
        %v1014 = vunpack.c.l.bf16 %v966
        %v1015 = vunpack.c.l.bf16 %v967
        %v1016 = vunpack.c.l.bf16 %v968
        %v1017 = vunpack.c.l.bf16 %v969
        %v1018 = vunpack.c.l.bf16 %v970
        %v1019 = vunpack.c.l.bf16 %v971
        %v1020 = vunpack.c.l.bf16 %v972
        %v1021 = vunpack.c.l.bf16 %v973
        %v1022 = vunpack.c.l.bf16 %v974
        %v1023 = vunpack.c.l.bf16 %v975
        %v1024 = vunpack.c.l.bf16 %v976
        %v1025 = vunpack.c.l.bf16 %v977
        %v1026 = vunpack.c.l.bf16 %v978
        %v1027 = vunpack.c.l.bf16 %v979
        %v1028 = vunpack.c.l.bf16 %v980
        %v1029 = vunpack.c.l.bf16 %v981
        %v1030 = vunpack.c.l.bf16 %v982
        %v1031 = vunpack.c.l.bf16 %v983
        %v1032 = vunpack.c.l.bf16 %v984
        %v1033 = vunpack.c.l.bf16 %v985
        %v1034 = vunpack.c.l.bf16 %v986
        %v1035 = vunpack.c.l.bf16 %v987
        %v1036 = vunpack.c.l.bf16 %v988
        %v1037 = vadd.f32 %v989, %v1013
        %v1038 = vadd.f32 %v990, %v1014
        %v1039 = vadd.f32 %v991, %v1015
        %v1040 = vadd.f32 %v992, %v1016
        %v1041 = vadd.f32 %v993, %v1017
        %v1042 = vadd.f32 %v994, %v1018
        %v1043 = vadd.f32 %v995, %v1019
        %v1044 = vadd.f32 %v996, %v1020
        %v1045 = vadd.f32 %v997, %v1021
        %v1046 = vadd.f32 %v998, %v1022
        %v1047 = vadd.f32 %v999, %v1023
        %v1048 = vadd.f32 %v1000, %v1024
        %v1049 = vadd.f32 %v1001, %v1025
        %v1050 = vadd.f32 %v1002, %v1026
        %v1051 = vadd.f32 %v1003, %v1027
        %v1052 = vadd.f32 %v1004, %v1028
        %v1053 = vadd.f32 %v1005, %v1029
        %v1054 = vadd.f32 %v1006, %v1030
        %v1055 = vadd.f32 %v1007, %v1031
        %v1056 = vadd.f32 %v1008, %v1032
        %v1057 = vadd.f32 %v1009, %v1033
        %v1058 = vadd.f32 %v1010, %v1034
        %v1059 = vadd.f32 %v1011, %v1035
        %v1060 = vadd.f32 %v1012, %v1036
        %v1061 = vpack.c.bf16 %v1037, %v1037
        %v1062 = vpack.c.bf16 %v1038, %v1038
        %v1063 = vpack.c.bf16 %v1039, %v1039
        %v1064 = vpack.c.bf16 %v1040, %v1040
        %v1065 = vpack.c.bf16 %v1041, %v1041
        %v1066 = vpack.c.bf16 %v1042, %v1042
        %v1067 = vpack.c.bf16 %v1043, %v1043
        %v1068 = vpack.c.bf16 %v1044, %v1044
        %v1069 = vpack.c.bf16 %v1045, %v1045
        %v1070 = vpack.c.bf16 %v1046, %v1046
        %v1071 = vpack.c.bf16 %v1047, %v1047
        %v1072 = vpack.c.bf16 %v1048, %v1048
        %v1073 = vpack.c.bf16 %v1049, %v1049
        %v1074 = vpack.c.bf16 %v1050, %v1050
        %v1075 = vpack.c.bf16 %v1051, %v1051
        %v1076 = vpack.c.bf16 %v1052, %v1052
        %v1077 = vpack.c.bf16 %v1053, %v1053
        %v1078 = vpack.c.bf16 %v1054, %v1054
        %v1079 = vpack.c.bf16 %v1055, %v1055
        %v1080 = vpack.c.bf16 %v1056, %v1056
        %v1081 = vpack.c.bf16 %v1057, %v1057
        %v1082 = vpack.c.bf16 %v1058, %v1058
        %v1083 = vpack.c.bf16 %v1059, %v1059
        %v1084 = vpack.c.bf16 %v1060, %v1060
        %v1085 = vperm.slane %v857, 3
        %v1086 = vunpack.c.l.bf16 %v851
        %v1087 = vunpack.c.l.bf16 %v852
        %v1088 = vunpack.c.l.bf16 %v853
        %v1089 = vunpack.c.l.bf16 %v1085
        %v1090 = vmul.f32 %v866, %v1089
        %v1091 = vmul.f32 %v867, %v1089
        %v1092 = vmul.f32 %v868, %v1089
        %v1093 = vmul.f32 %v869, %v1089
        %v1094 = vmul.f32 %v870, %v1089
        %v1095 = vmul.f32 %v871, %v1089
        %v1096 = vmul.f32 %v872, %v1089
        %v1097 = vmul.f32 %v873, %v1089
        %v1098 = vmul.f32 %v874, %v1089
        %v1099 = vmul.f32 %v875, %v1089
        %v1100 = vmul.f32 %v876, %v1089
        %v1101 = vmul.f32 %v877, %v1089
        %v1102 = vmul.f32 %v878, %v1089
        %v1103 = vmul.f32 %v879, %v1089
        %v1104 = vmul.f32 %v880, %v1089
        %v1105 = vmul.f32 %v881, %v1089
        %v1106 = vmul.f32 %v882, %v1089
        %v1107 = vmul.f32 %v883, %v1089
        %v1108 = vmul.f32 %v937, %v1089
        %v1109 = vmul.f32 %v938, %v1089
        %v1110 = vmul.f32 %v939, %v1089
        %v1111 = vmul.f32 %v1086, %v1089
        %v1112 = vmul.f32 %v1087, %v1089
        %v1113 = vmul.f32 %v1088, %v1089
        %v1114 = vpack.c.bf16 %v1090, %v1090
        %v1115 = vpack.c.bf16 %v1091, %v1091
        %v1116 = vpack.c.bf16 %v1092, %v1092
        %v1117 = vpack.c.bf16 %v1093, %v1093
        %v1118 = vpack.c.bf16 %v1094, %v1094
        %v1119 = vpack.c.bf16 %v1095, %v1095
        %v1120 = vpack.c.bf16 %v1096, %v1096
        %v1121 = vpack.c.bf16 %v1097, %v1097
        %v1122 = vpack.c.bf16 %v1098, %v1098
        %v1123 = vpack.c.bf16 %v1099, %v1099
        %v1124 = vpack.c.bf16 %v1100, %v1100
        %v1125 = vpack.c.bf16 %v1101, %v1101
        %v1126 = vpack.c.bf16 %v1102, %v1102
        %v1127 = vpack.c.bf16 %v1103, %v1103
        %v1128 = vpack.c.bf16 %v1104, %v1104
        %v1129 = vpack.c.bf16 %v1105, %v1105
        %v1130 = vpack.c.bf16 %v1106, %v1106
        %v1131 = vpack.c.bf16 %v1107, %v1107
        %v1132 = vpack.c.bf16 %v1108, %v1108
        %v1133 = vpack.c.bf16 %v1109, %v1109
        %v1134 = vpack.c.bf16 %v1110, %v1110
        %v1135 = vpack.c.bf16 %v1111, %v1111
        %v1136 = vpack.c.bf16 %v1112, %v1112
        %v1137 = vpack.c.bf16 %v1113, %v1113
        %v1138 = vunpack.c.l.bf16 %v1061
        %v1139 = vunpack.c.l.bf16 %v1062
        %v1140 = vunpack.c.l.bf16 %v1063
        %v1141 = vunpack.c.l.bf16 %v1064
        %v1142 = vunpack.c.l.bf16 %v1065
        %v1143 = vunpack.c.l.bf16 %v1066
        %v1144 = vunpack.c.l.bf16 %v1067
        %v1145 = vunpack.c.l.bf16 %v1068
        %v1146 = vunpack.c.l.bf16 %v1069
        %v1147 = vunpack.c.l.bf16 %v1070
        %v1148 = vunpack.c.l.bf16 %v1071
        %v1149 = vunpack.c.l.bf16 %v1072
        %v1150 = vunpack.c.l.bf16 %v1073
        %v1151 = vunpack.c.l.bf16 %v1074
        %v1152 = vunpack.c.l.bf16 %v1075
        %v1153 = vunpack.c.l.bf16 %v1076
        %v1154 = vunpack.c.l.bf16 %v1077
        %v1155 = vunpack.c.l.bf16 %v1078
        %v1156 = vunpack.c.l.bf16 %v1079
        %v1157 = vunpack.c.l.bf16 %v1080
        %v1158 = vunpack.c.l.bf16 %v1081
        %v1159 = vunpack.c.l.bf16 %v1082
        %v1160 = vunpack.c.l.bf16 %v1083
        %v1161 = vunpack.c.l.bf16 %v1084
        %v1162 = vunpack.c.l.bf16 %v1114
        %v1163 = vunpack.c.l.bf16 %v1115
        %v1164 = vunpack.c.l.bf16 %v1116
        %v1165 = vunpack.c.l.bf16 %v1117
        %v1166 = vunpack.c.l.bf16 %v1118
        %v1167 = vunpack.c.l.bf16 %v1119
        %v1168 = vunpack.c.l.bf16 %v1120
        %v1169 = vunpack.c.l.bf16 %v1121
        %v1170 = vunpack.c.l.bf16 %v1122
        %v1171 = vunpack.c.l.bf16 %v1123
        %v1172 = vunpack.c.l.bf16 %v1124
        %v1173 = vunpack.c.l.bf16 %v1125
        %v1174 = vunpack.c.l.bf16 %v1126
        %v1175 = vunpack.c.l.bf16 %v1127
        %v1176 = vunpack.c.l.bf16 %v1128
        %v1177 = vunpack.c.l.bf16 %v1129
        %v1178 = vunpack.c.l.bf16 %v1130
        %v1179 = vunpack.c.l.bf16 %v1131
        %v1180 = vunpack.c.l.bf16 %v1132
        %v1181 = vunpack.c.l.bf16 %v1133
        %v1182 = vunpack.c.l.bf16 %v1134
        %v1183 = vunpack.c.l.bf16 %v1135
        %v1184 = vunpack.c.l.bf16 %v1136
        %v1185 = vunpack.c.l.bf16 %v1137
        %v1186 = vadd.f32 %v1138, %v1162
        %v1187 = vadd.f32 %v1139, %v1163
        %v1188 = vadd.f32 %v1140, %v1164
        %v1189 = vadd.f32 %v1141, %v1165
        %v1190 = vadd.f32 %v1142, %v1166
        %v1191 = vadd.f32 %v1143, %v1167
        %v1192 = vadd.f32 %v1144, %v1168
        %v1193 = vadd.f32 %v1145, %v1169
        %v1194 = vadd.f32 %v1146, %v1170
        %v1195 = vadd.f32 %v1147, %v1171
        %v1196 = vadd.f32 %v1148, %v1172
        %v1197 = vadd.f32 %v1149, %v1173
        %v1198 = vadd.f32 %v1150, %v1174
        %v1199 = vadd.f32 %v1151, %v1175
        %v1200 = vadd.f32 %v1152, %v1176
        %v1201 = vadd.f32 %v1153, %v1177
        %v1202 = vadd.f32 %v1154, %v1178
        %v1203 = vadd.f32 %v1155, %v1179
        %v1204 = vadd.f32 %v1156, %v1180
        %v1205 = vadd.f32 %v1157, %v1181
        %v1206 = vadd.f32 %v1158, %v1182
        %v1207 = vadd.f32 %v1159, %v1183
        %v1208 = vadd.f32 %v1160, %v1184
        %v1209 = vadd.f32 %v1161, %v1185
        %v1210 = vpack.c.bf16 %v1186, %v1186
        %v1211 = vpack.c.bf16 %v1187, %v1187
        %v1212 = vpack.c.bf16 %v1188, %v1188
        %v1213 = vpack.c.bf16 %v1189, %v1189
        %v1214 = vpack.c.bf16 %v1190, %v1190
        %v1215 = vpack.c.bf16 %v1191, %v1191
        %v1216 = vpack.c.bf16 %v1192, %v1192
        %v1217 = vpack.c.bf16 %v1193, %v1193
        %v1218 = vpack.c.bf16 %v1194, %v1194
        %v1219 = vpack.c.bf16 %v1195, %v1195
        %v1220 = vpack.c.bf16 %v1196, %v1196
        %v1221 = vpack.c.bf16 %v1197, %v1197
        %v1222 = vpack.c.bf16 %v1198, %v1198
        %v1223 = vpack.c.bf16 %v1199, %v1199
        %v1224 = vpack.c.bf16 %v1200, %v1200
        %v1225 = vpack.c.bf16 %v1201, %v1201
        %v1226 = vpack.c.bf16 %v1202, %v1202
        %v1227 = vpack.c.bf16 %v1203, %v1203
        %v1228 = vpack.c.bf16 %v1204, %v1204
        %v1229 = vpack.c.bf16 %v1205, %v1205
        %v1230 = vpack.c.bf16 %v1206, %v1206
        %v1231 = vpack.c.bf16 %v1207, %v1207
        %v1232 = vpack.c.bf16 %v1208, %v1208
        %v1233 = vpack.c.bf16 %v1209, %v1209
        %v1234 = vperm.slane %v934, 0
        %v1235 = vunpack.c.l.bf16 %v1234
        %v1236 = vmul.f32 %v860, %v1235
        %v1237 = vmul.f32 %v861, %v1235
        %v1238 = vmul.f32 %v862, %v1235
        %v1239 = vmul.f32 %v863, %v1235
        %v1240 = vmul.f32 %v864, %v1235
        %v1241 = vmul.f32 %v865, %v1235
        %v1242 = vmul.f32 %v866, %v1235
        %v1243 = vmul.f32 %v867, %v1235
        %v1244 = vmul.f32 %v868, %v1235
        %v1245 = vmul.f32 %v869, %v1235
        %v1246 = vmul.f32 %v870, %v1235
        %v1247 = vmul.f32 %v871, %v1235
        %v1248 = vmul.f32 %v872, %v1235
        %v1249 = vmul.f32 %v873, %v1235
        %v1250 = vmul.f32 %v874, %v1235
        %v1251 = vmul.f32 %v875, %v1235
        %v1252 = vmul.f32 %v876, %v1235
        %v1253 = vmul.f32 %v877, %v1235
        %v1254 = vmul.f32 %v878, %v1235
        %v1255 = vmul.f32 %v879, %v1235
        %v1256 = vmul.f32 %v880, %v1235
        %v1257 = vmul.f32 %v881, %v1235
        %v1258 = vmul.f32 %v882, %v1235
        %v1259 = vmul.f32 %v883, %v1235
        %v1260 = vpack.c.bf16 %v1236, %v1236
        %v1261 = vpack.c.bf16 %v1237, %v1237
        %v1262 = vpack.c.bf16 %v1238, %v1238
        %v1263 = vpack.c.bf16 %v1239, %v1239
        %v1264 = vpack.c.bf16 %v1240, %v1240
        %v1265 = vpack.c.bf16 %v1241, %v1241
        %v1266 = vpack.c.bf16 %v1242, %v1242
        %v1267 = vpack.c.bf16 %v1243, %v1243
        %v1268 = vpack.c.bf16 %v1244, %v1244
        %v1269 = vpack.c.bf16 %v1245, %v1245
        %v1270 = vpack.c.bf16 %v1246, %v1246
        %v1271 = vpack.c.bf16 %v1247, %v1247
        %v1272 = vpack.c.bf16 %v1248, %v1248
        %v1273 = vpack.c.bf16 %v1249, %v1249
        %v1274 = vpack.c.bf16 %v1250, %v1250
        %v1275 = vpack.c.bf16 %v1251, %v1251
        %v1276 = vpack.c.bf16 %v1252, %v1252
        %v1277 = vpack.c.bf16 %v1253, %v1253
        %v1278 = vpack.c.bf16 %v1254, %v1254
        %v1279 = vpack.c.bf16 %v1255, %v1255
        %v1280 = vpack.c.bf16 %v1256, %v1256
        %v1281 = vpack.c.bf16 %v1257, %v1257
        %v1282 = vpack.c.bf16 %v1258, %v1258
        %v1283 = vpack.c.bf16 %v1259, %v1259
        %v1284 = vunpack.c.l.bf16 %v1210
        %v1285 = vunpack.c.l.bf16 %v1211
        %v1286 = vunpack.c.l.bf16 %v1212
        %v1287 = vunpack.c.l.bf16 %v1213
        %v1288 = vunpack.c.l.bf16 %v1214
        %v1289 = vunpack.c.l.bf16 %v1215
        %v1290 = vunpack.c.l.bf16 %v1216
        %v1291 = vunpack.c.l.bf16 %v1217
        %v1292 = vunpack.c.l.bf16 %v1218
        %v1293 = vunpack.c.l.bf16 %v1219
        %v1294 = vunpack.c.l.bf16 %v1220
        %v1295 = vunpack.c.l.bf16 %v1221
        %v1296 = vunpack.c.l.bf16 %v1222
        %v1297 = vunpack.c.l.bf16 %v1223
        %v1298 = vunpack.c.l.bf16 %v1224
        %v1299 = vunpack.c.l.bf16 %v1225
        %v1300 = vunpack.c.l.bf16 %v1226
        %v1301 = vunpack.c.l.bf16 %v1227
        %v1302 = vunpack.c.l.bf16 %v1228
        %v1303 = vunpack.c.l.bf16 %v1229
        %v1304 = vunpack.c.l.bf16 %v1230
        %v1305 = vunpack.c.l.bf16 %v1231
        %v1306 = vunpack.c.l.bf16 %v1232
        %v1307 = vunpack.c.l.bf16 %v1233
        %v1308 = vunpack.c.l.bf16 %v1260
        %v1309 = vunpack.c.l.bf16 %v1261
        %v1310 = vunpack.c.l.bf16 %v1262
        %v1311 = vunpack.c.l.bf16 %v1263
        %v1312 = vunpack.c.l.bf16 %v1264
        %v1313 = vunpack.c.l.bf16 %v1265
        %v1314 = vunpack.c.l.bf16 %v1266
        %v1315 = vunpack.c.l.bf16 %v1267
        %v1316 = vunpack.c.l.bf16 %v1268
        %v1317 = vunpack.c.l.bf16 %v1269
        %v1318 = vunpack.c.l.bf16 %v1270
        %v1319 = vunpack.c.l.bf16 %v1271
        %v1320 = vunpack.c.l.bf16 %v1272
        %v1321 = vunpack.c.l.bf16 %v1273
        %v1322 = vunpack.c.l.bf16 %v1274
        %v1323 = vunpack.c.l.bf16 %v1275
        %v1324 = vunpack.c.l.bf16 %v1276
        %v1325 = vunpack.c.l.bf16 %v1277
        %v1326 = vunpack.c.l.bf16 %v1278
        %v1327 = vunpack.c.l.bf16 %v1279
        %v1328 = vunpack.c.l.bf16 %v1280
        %v1329 = vunpack.c.l.bf16 %v1281
        %v1330 = vunpack.c.l.bf16 %v1282
        %v1331 = vunpack.c.l.bf16 %v1283
        %vm1356 = vcmask 1046528
        %v1357 = vrot.slane %v1308, 1
        %v1358 = vrot.slane %v1309, 1
        %v1359 = vsel %vm1356, %v1357, %v1358
        %v1360 = vrot.slane %v1310, 1
        %v1361 = vsel %vm1356, %v1358, %v1360
        %v1362 = vrot.slane %v1311, 1
        %v1363 = vrot.slane %v1312, 1
        %v1364 = vsel %vm1356, %v1362, %v1363
        %v1365 = vrot.slane %v1313, 1
        %v1366 = vsel %vm1356, %v1363, %v1365
        %v1367 = vrot.slane %v1314, 1
        %v1368 = vrot.slane %v1315, 1
        %v1369 = vsel %vm1356, %v1367, %v1368
        %v1370 = vrot.slane %v1316, 1
        %v1371 = vsel %vm1356, %v1368, %v1370
        %v1372 = vrot.slane %v1317, 1
        %v1373 = vrot.slane %v1318, 1
        %v1374 = vsel %vm1356, %v1372, %v1373
        %v1375 = vrot.slane %v1319, 1
        %v1376 = vsel %vm1356, %v1373, %v1375
        %v1377 = vrot.slane %v1320, 1
        %v1378 = vrot.slane %v1321, 1
        %v1379 = vsel %vm1356, %v1377, %v1378
        %v1380 = vrot.slane %v1322, 1
        %v1381 = vsel %vm1356, %v1378, %v1380
        %v1382 = vrot.slane %v1323, 1
        %v1383 = vrot.slane %v1324, 1
        %v1384 = vsel %vm1356, %v1382, %v1383
        %v1385 = vrot.slane %v1325, 1
        %v1386 = vsel %vm1356, %v1383, %v1385
        %v1387 = vrot.slane %v1326, 1
        %v1388 = vrot.slane %v1327, 1
        %v1389 = vsel %vm1356, %v1387, %v1388
        %v1390 = vrot.slane %v1328, 1
        %v1391 = vsel %vm1356, %v1388, %v1390
        %v1392 = vrot.slane %v1329, 1
        %v1393 = vrot.slane %v1330, 1
        %v1394 = vsel %vm1356, %v1392, %v1393
        %v1395 = vrot.slane %v1331, 1
        %v1396 = vsel %vm1356, %v1393, %v1395
        %v1421 = vadd.f32 %v1284, %v1359
        %v1422 = vadd.f32 %v1285, %v1361
        %v1423 = vadd.f32 %v1286, %v1360
        %v1424 = vadd.f32 %v1287, %v1364
        %v1425 = vadd.f32 %v1288, %v1366
        %v1426 = vadd.f32 %v1289, %v1365
        %v1427 = vadd.f32 %v1290, %v1369
        %v1428 = vadd.f32 %v1291, %v1371
        %v1429 = vadd.f32 %v1292, %v1370
        %v1430 = vadd.f32 %v1293, %v1374
        %v1431 = vadd.f32 %v1294, %v1376
        %v1432 = vadd.f32 %v1295, %v1375
        %v1433 = vadd.f32 %v1296, %v1379
        %v1434 = vadd.f32 %v1297, %v1381
        %v1435 = vadd.f32 %v1298, %v1380
        %v1436 = vadd.f32 %v1299, %v1384
        %v1437 = vadd.f32 %v1300, %v1386
        %v1438 = vadd.f32 %v1301, %v1385
        %v1439 = vadd.f32 %v1302, %v1389
        %v1440 = vadd.f32 %v1303, %v1391
        %v1441 = vadd.f32 %v1304, %v1390
        %v1442 = vadd.f32 %v1305, %v1394
        %v1443 = vadd.f32 %v1306, %v1396
        %v1444 = vadd.f32 %v1307, %v1395
        %v1445 = vpack.c.bf16 %v1421, %v1421
        %v1446 = vpack.c.bf16 %v1422, %v1422
        %v1447 = vpack.c.bf16 %v1423, %v1423
        %v1448 = vpack.c.bf16 %v1424, %v1424
        %v1449 = vpack.c.bf16 %v1425, %v1425
        %v1450 = vpack.c.bf16 %v1426, %v1426
        %v1451 = vpack.c.bf16 %v1427, %v1427
        %v1452 = vpack.c.bf16 %v1428, %v1428
        %v1453 = vpack.c.bf16 %v1429, %v1429
        %v1454 = vpack.c.bf16 %v1430, %v1430
        %v1455 = vpack.c.bf16 %v1431, %v1431
        %v1456 = vpack.c.bf16 %v1432, %v1432
        %v1457 = vpack.c.bf16 %v1433, %v1433
        %v1458 = vpack.c.bf16 %v1434, %v1434
        %v1459 = vpack.c.bf16 %v1435, %v1435
        %v1460 = vpack.c.bf16 %v1436, %v1436
        %v1461 = vpack.c.bf16 %v1437, %v1437
        %v1462 = vpack.c.bf16 %v1438, %v1438
        %v1463 = vpack.c.bf16 %v1439, %v1439
        %v1464 = vpack.c.bf16 %v1440, %v1440
        %v1465 = vpack.c.bf16 %v1441, %v1441
        %v1466 = vpack.c.bf16 %v1442, %v1442
        %v1467 = vpack.c.bf16 %v1443, %v1443
        %v1468 = vpack.c.bf16 %v1444, %v1444
        %v1469 = vperm.slane %v857, 2
        %v1470 = vunpack.c.l.bf16 %v1469
        %v1471 = vmul.f32 %v863, %v1470
        %v1472 = vmul.f32 %v864, %v1470
        %v1473 = vmul.f32 %v865, %v1470
        %v1474 = vmul.f32 %v866, %v1470
        %v1475 = vmul.f32 %v867, %v1470
        %v1476 = vmul.f32 %v868, %v1470
        %v1477 = vmul.f32 %v869, %v1470
        %v1478 = vmul.f32 %v870, %v1470
        %v1479 = vmul.f32 %v871, %v1470
        %v1480 = vmul.f32 %v872, %v1470
        %v1481 = vmul.f32 %v873, %v1470
        %v1482 = vmul.f32 %v874, %v1470
        %v1483 = vmul.f32 %v875, %v1470
        %v1484 = vmul.f32 %v876, %v1470
        %v1485 = vmul.f32 %v877, %v1470
        %v1486 = vmul.f32 %v878, %v1470
        %v1487 = vmul.f32 %v879, %v1470
        %v1488 = vmul.f32 %v880, %v1470
        %v1489 = vmul.f32 %v881, %v1470
        %v1490 = vmul.f32 %v882, %v1470
        %v1491 = vmul.f32 %v883, %v1470
        %v1492 = vmul.f32 %v937, %v1470
        %v1493 = vmul.f32 %v938, %v1470
        %v1494 = vmul.f32 %v939, %v1470
        %v1495 = vpack.c.bf16 %v1471, %v1471
        %v1496 = vpack.c.bf16 %v1472, %v1472
        %v1497 = vpack.c.bf16 %v1473, %v1473
        %v1498 = vpack.c.bf16 %v1474, %v1474
        %v1499 = vpack.c.bf16 %v1475, %v1475
        %v1500 = vpack.c.bf16 %v1476, %v1476
        %v1501 = vpack.c.bf16 %v1477, %v1477
        %v1502 = vpack.c.bf16 %v1478, %v1478
        %v1503 = vpack.c.bf16 %v1479, %v1479
        %v1504 = vpack.c.bf16 %v1480, %v1480
        %v1505 = vpack.c.bf16 %v1481, %v1481
        %v1506 = vpack.c.bf16 %v1482, %v1482
        %v1507 = vpack.c.bf16 %v1483, %v1483
        %v1508 = vpack.c.bf16 %v1484, %v1484
        %v1509 = vpack.c.bf16 %v1485, %v1485
        %v1510 = vpack.c.bf16 %v1486, %v1486
        %v1511 = vpack.c.bf16 %v1487, %v1487
        %v1512 = vpack.c.bf16 %v1488, %v1488
        %v1513 = vpack.c.bf16 %v1489, %v1489
        %v1514 = vpack.c.bf16 %v1490, %v1490
        %v1515 = vpack.c.bf16 %v1491, %v1491
        %v1516 = vpack.c.bf16 %v1492, %v1492
        %v1517 = vpack.c.bf16 %v1493, %v1493
        %v1518 = vpack.c.bf16 %v1494, %v1494
        %v1519 = vunpack.c.l.bf16 %v1445
        %v1520 = vunpack.c.l.bf16 %v1446
        %v1521 = vunpack.c.l.bf16 %v1447
        %v1522 = vunpack.c.l.bf16 %v1448
        %v1523 = vunpack.c.l.bf16 %v1449
        %v1524 = vunpack.c.l.bf16 %v1450
        %v1525 = vunpack.c.l.bf16 %v1451
        %v1526 = vunpack.c.l.bf16 %v1452
        %v1527 = vunpack.c.l.bf16 %v1453
        %v1528 = vunpack.c.l.bf16 %v1454
        %v1529 = vunpack.c.l.bf16 %v1455
        %v1530 = vunpack.c.l.bf16 %v1456
        %v1531 = vunpack.c.l.bf16 %v1457
        %v1532 = vunpack.c.l.bf16 %v1458
        %v1533 = vunpack.c.l.bf16 %v1459
        %v1534 = vunpack.c.l.bf16 %v1460
        %v1535 = vunpack.c.l.bf16 %v1461
        %v1536 = vunpack.c.l.bf16 %v1462
        %v1537 = vunpack.c.l.bf16 %v1463
        %v1538 = vunpack.c.l.bf16 %v1464
        %v1539 = vunpack.c.l.bf16 %v1465
        %v1540 = vunpack.c.l.bf16 %v1466
        %v1541 = vunpack.c.l.bf16 %v1467
        %v1542 = vunpack.c.l.bf16 %v1468
        %v1543 = vunpack.c.l.bf16 %v1495
        %v1544 = vunpack.c.l.bf16 %v1496
        %v1545 = vunpack.c.l.bf16 %v1497
        %v1546 = vunpack.c.l.bf16 %v1498
        %v1547 = vunpack.c.l.bf16 %v1499
        %v1548 = vunpack.c.l.bf16 %v1500
        %v1549 = vunpack.c.l.bf16 %v1501
        %v1550 = vunpack.c.l.bf16 %v1502
        %v1551 = vunpack.c.l.bf16 %v1503
        %v1552 = vunpack.c.l.bf16 %v1504
        %v1553 = vunpack.c.l.bf16 %v1505
        %v1554 = vunpack.c.l.bf16 %v1506
        %v1555 = vunpack.c.l.bf16 %v1507
        %v1556 = vunpack.c.l.bf16 %v1508
        %v1557 = vunpack.c.l.bf16 %v1509
        %v1558 = vunpack.c.l.bf16 %v1510
        %v1559 = vunpack.c.l.bf16 %v1511
        %v1560 = vunpack.c.l.bf16 %v1512
        %v1561 = vunpack.c.l.bf16 %v1513
        %v1562 = vunpack.c.l.bf16 %v1514
        %v1563 = vunpack.c.l.bf16 %v1515
        %v1564 = vunpack.c.l.bf16 %v1516
        %v1565 = vunpack.c.l.bf16 %v1517
        %v1566 = vunpack.c.l.bf16 %v1518
        %v1591 = vrot.slane %v1543, 1
        %v1592 = vrot.slane %v1544, 1
        %v1593 = vsel %vm1356, %v1591, %v1592
        %v1594 = vrot.slane %v1545, 1
        %v1595 = vsel %vm1356, %v1592, %v1594
        %v1596 = vrot.slane %v1546, 1
        %v1597 = vrot.slane %v1547, 1
        %v1598 = vsel %vm1356, %v1596, %v1597
        %v1599 = vrot.slane %v1548, 1
        %v1600 = vsel %vm1356, %v1597, %v1599
        %v1601 = vrot.slane %v1549, 1
        %v1602 = vrot.slane %v1550, 1
        %v1603 = vsel %vm1356, %v1601, %v1602
        %v1604 = vrot.slane %v1551, 1
        %v1605 = vsel %vm1356, %v1602, %v1604
        %v1606 = vrot.slane %v1552, 1
        %v1607 = vrot.slane %v1553, 1
        %v1608 = vsel %vm1356, %v1606, %v1607
        %v1609 = vrot.slane %v1554, 1
        %v1610 = vsel %vm1356, %v1607, %v1609
        %v1611 = vrot.slane %v1555, 1
        %v1612 = vrot.slane %v1556, 1
        %v1613 = vsel %vm1356, %v1611, %v1612
        %v1614 = vrot.slane %v1557, 1
        %v1615 = vsel %vm1356, %v1612, %v1614
        %v1616 = vrot.slane %v1558, 1
        %v1617 = vrot.slane %v1559, 1
        %v1618 = vsel %vm1356, %v1616, %v1617
        %v1619 = vrot.slane %v1560, 1
        %v1620 = vsel %vm1356, %v1617, %v1619
        %v1621 = vrot.slane %v1561, 1
        %v1622 = vrot.slane %v1562, 1
        %v1623 = vsel %vm1356, %v1621, %v1622
        %v1624 = vrot.slane %v1563, 1
        %v1625 = vsel %vm1356, %v1622, %v1624
        %v1626 = vrot.slane %v1564, 1
        %v1627 = vrot.slane %v1565, 1
        %v1628 = vsel %vm1356, %v1626, %v1627
        %v1629 = vrot.slane %v1566, 1
        %v1630 = vsel %vm1356, %v1627, %v1629
        %v1655 = vadd.f32 %v1519, %v1593
        %v1656 = vadd.f32 %v1520, %v1595
        %v1657 = vadd.f32 %v1521, %v1594
        %v1658 = vadd.f32 %v1522, %v1598
        %v1659 = vadd.f32 %v1523, %v1600
        %v1660 = vadd.f32 %v1524, %v1599
        %v1661 = vadd.f32 %v1525, %v1603
        %v1662 = vadd.f32 %v1526, %v1605
        %v1663 = vadd.f32 %v1527, %v1604
        %v1664 = vadd.f32 %v1528, %v1608
        %v1665 = vadd.f32 %v1529, %v1610
        %v1666 = vadd.f32 %v1530, %v1609
        %v1667 = vadd.f32 %v1531, %v1613
        %v1668 = vadd.f32 %v1532, %v1615
        %v1669 = vadd.f32 %v1533, %v1614
        %v1670 = vadd.f32 %v1534, %v1618
        %v1671 = vadd.f32 %v1535, %v1620
        %v1672 = vadd.f32 %v1536, %v1619
        %v1673 = vadd.f32 %v1537, %v1623
        %v1674 = vadd.f32 %v1538, %v1625
        %v1675 = vadd.f32 %v1539, %v1624
        %v1676 = vadd.f32 %v1540, %v1628
        %v1677 = vadd.f32 %v1541, %v1630
        %v1678 = vadd.f32 %v1542, %v1629
        %v1679 = vpack.c.bf16 %v1655, %v1655
        %v1680 = vpack.c.bf16 %v1656, %v1656
        %v1681 = vpack.c.bf16 %v1657, %v1657
        %v1682 = vpack.c.bf16 %v1658, %v1658
        %v1683 = vpack.c.bf16 %v1659, %v1659
        %v1684 = vpack.c.bf16 %v1660, %v1660
        %v1685 = vpack.c.bf16 %v1661, %v1661
        %v1686 = vpack.c.bf16 %v1662, %v1662
        %v1687 = vpack.c.bf16 %v1663, %v1663
        %v1688 = vpack.c.bf16 %v1664, %v1664
        %v1689 = vpack.c.bf16 %v1665, %v1665
        %v1690 = vpack.c.bf16 %v1666, %v1666
        %v1691 = vpack.c.bf16 %v1667, %v1667
        %v1692 = vpack.c.bf16 %v1668, %v1668
        %v1693 = vpack.c.bf16 %v1669, %v1669
        %v1694 = vpack.c.bf16 %v1670, %v1670
        %v1695 = vpack.c.bf16 %v1671, %v1671
        %v1696 = vpack.c.bf16 %v1672, %v1672
        %v1697 = vpack.c.bf16 %v1673, %v1673
        %v1698 = vpack.c.bf16 %v1674, %v1674
        %v1699 = vpack.c.bf16 %v1675, %v1675
        %v1700 = vpack.c.bf16 %v1676, %v1676
        %v1701 = vpack.c.bf16 %v1677, %v1677
        %v1702 = vpack.c.bf16 %v1678, %v1678
        %v1703 = vperm.slane %v934, 3
        %v1704 = vunpack.c.l.bf16 %v1703
        %v1705 = vmul.f32 %v866, %v1704
        %v1706 = vmul.f32 %v867, %v1704
        %v1707 = vmul.f32 %v868, %v1704
        %v1708 = vmul.f32 %v869, %v1704
        %v1709 = vmul.f32 %v870, %v1704
        %v1710 = vmul.f32 %v871, %v1704
        %v1711 = vmul.f32 %v872, %v1704
        %v1712 = vmul.f32 %v873, %v1704
        %v1713 = vmul.f32 %v874, %v1704
        %v1714 = vmul.f32 %v875, %v1704
        %v1715 = vmul.f32 %v876, %v1704
        %v1716 = vmul.f32 %v877, %v1704
        %v1717 = vmul.f32 %v878, %v1704
        %v1718 = vmul.f32 %v879, %v1704
        %v1719 = vmul.f32 %v880, %v1704
        %v1720 = vmul.f32 %v881, %v1704
        %v1721 = vmul.f32 %v882, %v1704
        %v1722 = vmul.f32 %v883, %v1704
        %v1723 = vmul.f32 %v937, %v1704
        %v1724 = vmul.f32 %v938, %v1704
        %v1725 = vmul.f32 %v939, %v1704
        %v1726 = vmul.f32 %v1086, %v1704
        %v1727 = vmul.f32 %v1087, %v1704
        %v1728 = vmul.f32 %v1088, %v1704
        %v1729 = vpack.c.bf16 %v1705, %v1705
        %v1730 = vpack.c.bf16 %v1706, %v1706
        %v1731 = vpack.c.bf16 %v1707, %v1707
        %v1732 = vpack.c.bf16 %v1708, %v1708
        %v1733 = vpack.c.bf16 %v1709, %v1709
        %v1734 = vpack.c.bf16 %v1710, %v1710
        %v1735 = vpack.c.bf16 %v1711, %v1711
        %v1736 = vpack.c.bf16 %v1712, %v1712
        %v1737 = vpack.c.bf16 %v1713, %v1713
        %v1738 = vpack.c.bf16 %v1714, %v1714
        %v1739 = vpack.c.bf16 %v1715, %v1715
        %v1740 = vpack.c.bf16 %v1716, %v1716
        %v1741 = vpack.c.bf16 %v1717, %v1717
        %v1742 = vpack.c.bf16 %v1718, %v1718
        %v1743 = vpack.c.bf16 %v1719, %v1719
        %v1744 = vpack.c.bf16 %v1720, %v1720
        %v1745 = vpack.c.bf16 %v1721, %v1721
        %v1746 = vpack.c.bf16 %v1722, %v1722
        %v1747 = vpack.c.bf16 %v1723, %v1723
        %v1748 = vpack.c.bf16 %v1724, %v1724
        %v1749 = vpack.c.bf16 %v1725, %v1725
        %v1750 = vpack.c.bf16 %v1726, %v1726
        %v1751 = vpack.c.bf16 %v1727, %v1727
        %v1752 = vpack.c.bf16 %v1728, %v1728
        %v1753 = vunpack.c.l.bf16 %v1679
        %v1754 = vunpack.c.l.bf16 %v1680
        %v1755 = vunpack.c.l.bf16 %v1681
        %v1756 = vunpack.c.l.bf16 %v1682
        %v1757 = vunpack.c.l.bf16 %v1683
        %v1758 = vunpack.c.l.bf16 %v1684
        %v1759 = vunpack.c.l.bf16 %v1685
        %v1760 = vunpack.c.l.bf16 %v1686
        %v1761 = vunpack.c.l.bf16 %v1687
        %v1762 = vunpack.c.l.bf16 %v1688
        %v1763 = vunpack.c.l.bf16 %v1689
        %v1764 = vunpack.c.l.bf16 %v1690
        %v1765 = vunpack.c.l.bf16 %v1691
        %v1766 = vunpack.c.l.bf16 %v1692
        %v1767 = vunpack.c.l.bf16 %v1693
        %v1768 = vunpack.c.l.bf16 %v1694
        %v1769 = vunpack.c.l.bf16 %v1695
        %v1770 = vunpack.c.l.bf16 %v1696
        %v1771 = vunpack.c.l.bf16 %v1697
        %v1772 = vunpack.c.l.bf16 %v1698
        %v1773 = vunpack.c.l.bf16 %v1699
        %v1774 = vunpack.c.l.bf16 %v1700
        %v1775 = vunpack.c.l.bf16 %v1701
        %v1776 = vunpack.c.l.bf16 %v1702
        %v1777 = vunpack.c.l.bf16 %v1729
        %v1778 = vunpack.c.l.bf16 %v1730
        %v1779 = vunpack.c.l.bf16 %v1731
        %v1780 = vunpack.c.l.bf16 %v1732
        %v1781 = vunpack.c.l.bf16 %v1733
        %v1782 = vunpack.c.l.bf16 %v1734
        %v1783 = vunpack.c.l.bf16 %v1735
        %v1784 = vunpack.c.l.bf16 %v1736
        %v1785 = vunpack.c.l.bf16 %v1737
        %v1786 = vunpack.c.l.bf16 %v1738
        %v1787 = vunpack.c.l.bf16 %v1739
        %v1788 = vunpack.c.l.bf16 %v1740
        %v1789 = vunpack.c.l.bf16 %v1741
        %v1790 = vunpack.c.l.bf16 %v1742
        %v1791 = vunpack.c.l.bf16 %v1743
        %v1792 = vunpack.c.l.bf16 %v1744
        %v1793 = vunpack.c.l.bf16 %v1745
        %v1794 = vunpack.c.l.bf16 %v1746
        %v1795 = vunpack.c.l.bf16 %v1747
        %v1796 = vunpack.c.l.bf16 %v1748
        %v1797 = vunpack.c.l.bf16 %v1749
        %v1798 = vunpack.c.l.bf16 %v1750
        %v1799 = vunpack.c.l.bf16 %v1751
        %v1800 = vunpack.c.l.bf16 %v1752
        %v1825 = vrot.slane %v1777, 1
        %v1826 = vrot.slane %v1778, 1
        %v1827 = vsel %vm1356, %v1825, %v1826
        %v1828 = vrot.slane %v1779, 1
        %v1829 = vsel %vm1356, %v1826, %v1828
        %v1830 = vrot.slane %v1780, 1
        %v1831 = vrot.slane %v1781, 1
        %v1832 = vsel %vm1356, %v1830, %v1831
        %v1833 = vrot.slane %v1782, 1
        %v1834 = vsel %vm1356, %v1831, %v1833
        %v1835 = vrot.slane %v1783, 1
        %v1836 = vrot.slane %v1784, 1
        %v1837 = vsel %vm1356, %v1835, %v1836
        %v1838 = vrot.slane %v1785, 1
        %v1839 = vsel %vm1356, %v1836, %v1838
        %v1840 = vrot.slane %v1786, 1
        %v1841 = vrot.slane %v1787, 1
        %v1842 = vsel %vm1356, %v1840, %v1841
        %v1843 = vrot.slane %v1788, 1
        %v1844 = vsel %vm1356, %v1841, %v1843
        %v1845 = vrot.slane %v1789, 1
        %v1846 = vrot.slane %v1790, 1
        %v1847 = vsel %vm1356, %v1845, %v1846
        %v1848 = vrot.slane %v1791, 1
        %v1849 = vsel %vm1356, %v1846, %v1848
        %v1850 = vrot.slane %v1792, 1
        %v1851 = vrot.slane %v1793, 1
        %v1852 = vsel %vm1356, %v1850, %v1851
        %v1853 = vrot.slane %v1794, 1
        %v1854 = vsel %vm1356, %v1851, %v1853
        %v1855 = vrot.slane %v1795, 1
        %v1856 = vrot.slane %v1796, 1
        %v1857 = vsel %vm1356, %v1855, %v1856
        %v1858 = vrot.slane %v1797, 1
        %v1859 = vsel %vm1356, %v1856, %v1858
        %v1860 = vrot.slane %v1798, 1
        %v1861 = vrot.slane %v1799, 1
        %v1862 = vsel %vm1356, %v1860, %v1861
        %v1863 = vrot.slane %v1800, 1
        %v1864 = vsel %vm1356, %v1861, %v1863
        %v1889 = vadd.f32 %v1753, %v1827
        %v1890 = vadd.f32 %v1754, %v1829
        %v1891 = vadd.f32 %v1755, %v1828
        %v1892 = vadd.f32 %v1756, %v1832
        %v1893 = vadd.f32 %v1757, %v1834
        %v1894 = vadd.f32 %v1758, %v1833
        %v1895 = vadd.f32 %v1759, %v1837
        %v1896 = vadd.f32 %v1760, %v1839
        %v1897 = vadd.f32 %v1761, %v1838
        %v1898 = vadd.f32 %v1762, %v1842
        %v1899 = vadd.f32 %v1763, %v1844
        %v1900 = vadd.f32 %v1764, %v1843
        %v1901 = vadd.f32 %v1765, %v1847
        %v1902 = vadd.f32 %v1766, %v1849
        %v1903 = vadd.f32 %v1767, %v1848
        %v1904 = vadd.f32 %v1768, %v1852
        %v1905 = vadd.f32 %v1769, %v1854
        %v1906 = vadd.f32 %v1770, %v1853
        %v1907 = vadd.f32 %v1771, %v1857
        %v1908 = vadd.f32 %v1772, %v1859
        %v1909 = vadd.f32 %v1773, %v1858
        %v1910 = vadd.f32 %v1774, %v1862
        %v1911 = vadd.f32 %v1775, %v1864
        %v1912 = vadd.f32 %v1776, %v1863
        %v1913 = vpack.c.bf16 %v1889, %v1889
        %v1914 = vpack.c.bf16 %v1890, %v1890
        %v1915 = vpack.c.bf16 %v1891, %v1891
        %v1916 = vpack.c.bf16 %v1892, %v1892
        %v1917 = vpack.c.bf16 %v1893, %v1893
        %v1918 = vpack.c.bf16 %v1894, %v1894
        %v1919 = vpack.c.bf16 %v1895, %v1895
        %v1920 = vpack.c.bf16 %v1896, %v1896
        %v1921 = vpack.c.bf16 %v1897, %v1897
        %v1922 = vpack.c.bf16 %v1898, %v1898
        %v1923 = vpack.c.bf16 %v1899, %v1899
        %v1924 = vpack.c.bf16 %v1900, %v1900
        %v1925 = vpack.c.bf16 %v1901, %v1901
        %v1926 = vpack.c.bf16 %v1902, %v1902
        %v1927 = vpack.c.bf16 %v1903, %v1903
        %v1928 = vpack.c.bf16 %v1904, %v1904
        %v1929 = vpack.c.bf16 %v1905, %v1905
        %v1930 = vpack.c.bf16 %v1906, %v1906
        %v1931 = vpack.c.bf16 %v1907, %v1907
        %v1932 = vpack.c.bf16 %v1908, %v1908
        %v1933 = vpack.c.bf16 %v1909, %v1909
        %v1934 = vpack.c.bf16 %v1910, %v1910
        %v1935 = vpack.c.bf16 %v1911, %v1911
        %v1936 = vpack.c.bf16 %v1912, %v1912
        %v1937 = vperm.slane %v857, 1
        %v1938 = vunpack.c.l.bf16 %v1937
        %v1939 = vmul.f32 %v860, %v1938
        %v1940 = vmul.f32 %v861, %v1938
        %v1941 = vmul.f32 %v862, %v1938
        %v1942 = vmul.f32 %v863, %v1938
        %v1943 = vmul.f32 %v864, %v1938
        %v1944 = vmul.f32 %v865, %v1938
        %v1945 = vmul.f32 %v866, %v1938
        %v1946 = vmul.f32 %v867, %v1938
        %v1947 = vmul.f32 %v868, %v1938
        %v1948 = vmul.f32 %v869, %v1938
        %v1949 = vmul.f32 %v870, %v1938
        %v1950 = vmul.f32 %v871, %v1938
        %v1951 = vmul.f32 %v872, %v1938
        %v1952 = vmul.f32 %v873, %v1938
        %v1953 = vmul.f32 %v874, %v1938
        %v1954 = vmul.f32 %v875, %v1938
        %v1955 = vmul.f32 %v876, %v1938
        %v1956 = vmul.f32 %v877, %v1938
        %v1957 = vmul.f32 %v878, %v1938
        %v1958 = vmul.f32 %v879, %v1938
        %v1959 = vmul.f32 %v880, %v1938
        %v1960 = vmul.f32 %v881, %v1938
        %v1961 = vmul.f32 %v882, %v1938
        %v1962 = vmul.f32 %v883, %v1938
        %v1963 = vpack.c.bf16 %v1939, %v1939
        %v1964 = vpack.c.bf16 %v1940, %v1940
        %v1965 = vpack.c.bf16 %v1941, %v1941
        %v1966 = vpack.c.bf16 %v1942, %v1942
        %v1967 = vpack.c.bf16 %v1943, %v1943
        %v1968 = vpack.c.bf16 %v1944, %v1944
        %v1969 = vpack.c.bf16 %v1945, %v1945
        %v1970 = vpack.c.bf16 %v1946, %v1946
        %v1971 = vpack.c.bf16 %v1947, %v1947
        %v1972 = vpack.c.bf16 %v1948, %v1948
        %v1973 = vpack.c.bf16 %v1949, %v1949
        %v1974 = vpack.c.bf16 %v1950, %v1950
        %v1975 = vpack.c.bf16 %v1951, %v1951
        %v1976 = vpack.c.bf16 %v1952, %v1952
        %v1977 = vpack.c.bf16 %v1953, %v1953
        %v1978 = vpack.c.bf16 %v1954, %v1954
        %v1979 = vpack.c.bf16 %v1955, %v1955
        %v1980 = vpack.c.bf16 %v1956, %v1956
        %v1981 = vpack.c.bf16 %v1957, %v1957
        %v1982 = vpack.c.bf16 %v1958, %v1958
        %v1983 = vpack.c.bf16 %v1959, %v1959
        %v1984 = vpack.c.bf16 %v1960, %v1960
        %v1985 = vpack.c.bf16 %v1961, %v1961
        %v1986 = vpack.c.bf16 %v1962, %v1962
        %v1987 = vunpack.c.l.bf16 %v1913
        %v1988 = vunpack.c.l.bf16 %v1914
        %v1989 = vunpack.c.l.bf16 %v1915
        %v1990 = vunpack.c.l.bf16 %v1916
        %v1991 = vunpack.c.l.bf16 %v1917
        %v1992 = vunpack.c.l.bf16 %v1918
        %v1993 = vunpack.c.l.bf16 %v1919
        %v1994 = vunpack.c.l.bf16 %v1920
        %v1995 = vunpack.c.l.bf16 %v1921
        %v1996 = vunpack.c.l.bf16 %v1922
        %v1997 = vunpack.c.l.bf16 %v1923
        %v1998 = vunpack.c.l.bf16 %v1924
        %v1999 = vunpack.c.l.bf16 %v1925
        %v2000 = vunpack.c.l.bf16 %v1926
        %v2001 = vunpack.c.l.bf16 %v1927
        %v2002 = vunpack.c.l.bf16 %v1928
        %v2003 = vunpack.c.l.bf16 %v1929
        %v2004 = vunpack.c.l.bf16 %v1930
        %v2005 = vunpack.c.l.bf16 %v1931
        %v2006 = vunpack.c.l.bf16 %v1932
        %v2007 = vunpack.c.l.bf16 %v1933
        %v2008 = vunpack.c.l.bf16 %v1934
        %v2009 = vunpack.c.l.bf16 %v1935
        %v2010 = vunpack.c.l.bf16 %v1936
        %v2011 = vunpack.c.l.bf16 %v1963
        %v2012 = vunpack.c.l.bf16 %v1964
        %v2013 = vunpack.c.l.bf16 %v1965
        %v2014 = vunpack.c.l.bf16 %v1966
        %v2015 = vunpack.c.l.bf16 %v1967
        %v2016 = vunpack.c.l.bf16 %v1968
        %v2017 = vunpack.c.l.bf16 %v1969
        %v2018 = vunpack.c.l.bf16 %v1970
        %v2019 = vunpack.c.l.bf16 %v1971
        %v2020 = vunpack.c.l.bf16 %v1972
        %v2021 = vunpack.c.l.bf16 %v1973
        %v2022 = vunpack.c.l.bf16 %v1974
        %v2023 = vunpack.c.l.bf16 %v1975
        %v2024 = vunpack.c.l.bf16 %v1976
        %v2025 = vunpack.c.l.bf16 %v1977
        %v2026 = vunpack.c.l.bf16 %v1978
        %v2027 = vunpack.c.l.bf16 %v1979
        %v2028 = vunpack.c.l.bf16 %v1980
        %v2029 = vunpack.c.l.bf16 %v1981
        %v2030 = vunpack.c.l.bf16 %v1982
        %v2031 = vunpack.c.l.bf16 %v1983
        %v2032 = vunpack.c.l.bf16 %v1984
        %v2033 = vunpack.c.l.bf16 %v1985
        %v2034 = vunpack.c.l.bf16 %v1986
        %vm2059 = vcmask 1045504
        %v2060 = vrot.slane %v2011, 2
        %v2061 = vrot.slane %v2012, 2
        %v2062 = vsel %vm2059, %v2060, %v2061
        %v2063 = vrot.slane %v2013, 2
        %v2064 = vsel %vm2059, %v2061, %v2063
        %v2065 = vrot.slane %v2014, 2
        %v2066 = vrot.slane %v2015, 2
        %v2067 = vsel %vm2059, %v2065, %v2066
        %v2068 = vrot.slane %v2016, 2
        %v2069 = vsel %vm2059, %v2066, %v2068
        %v2070 = vrot.slane %v2017, 2
        %v2071 = vrot.slane %v2018, 2
        %v2072 = vsel %vm2059, %v2070, %v2071
        %v2073 = vrot.slane %v2019, 2
        %v2074 = vsel %vm2059, %v2071, %v2073
        %v2075 = vrot.slane %v2020, 2
        %v2076 = vrot.slane %v2021, 2
        %v2077 = vsel %vm2059, %v2075, %v2076
        %v2078 = vrot.slane %v2022, 2
        %v2079 = vsel %vm2059, %v2076, %v2078
        %v2080 = vrot.slane %v2023, 2
        %v2081 = vrot.slane %v2024, 2
        %v2082 = vsel %vm2059, %v2080, %v2081
        %v2083 = vrot.slane %v2025, 2
        %v2084 = vsel %vm2059, %v2081, %v2083
        %v2085 = vrot.slane %v2026, 2
        %v2086 = vrot.slane %v2027, 2
        %v2087 = vsel %vm2059, %v2085, %v2086
        %v2088 = vrot.slane %v2028, 2
        %v2089 = vsel %vm2059, %v2086, %v2088
        %v2090 = vrot.slane %v2029, 2
        %v2091 = vrot.slane %v2030, 2
        %v2092 = vsel %vm2059, %v2090, %v2091
        %v2093 = vrot.slane %v2031, 2
        %v2094 = vsel %vm2059, %v2091, %v2093
        %v2095 = vrot.slane %v2032, 2
        %v2096 = vrot.slane %v2033, 2
        %v2097 = vsel %vm2059, %v2095, %v2096
        %v2098 = vrot.slane %v2034, 2
        %v2099 = vsel %vm2059, %v2096, %v2098
        %v2124 = vadd.f32 %v1987, %v2062
        %v2125 = vadd.f32 %v1988, %v2064
        %v2126 = vadd.f32 %v1989, %v2063
        %v2127 = vadd.f32 %v1990, %v2067
        %v2128 = vadd.f32 %v1991, %v2069
        %v2129 = vadd.f32 %v1992, %v2068
        %v2130 = vadd.f32 %v1993, %v2072
        %v2131 = vadd.f32 %v1994, %v2074
        %v2132 = vadd.f32 %v1995, %v2073
        %v2133 = vadd.f32 %v1996, %v2077
        %v2134 = vadd.f32 %v1997, %v2079
        %v2135 = vadd.f32 %v1998, %v2078
        %v2136 = vadd.f32 %v1999, %v2082
        %v2137 = vadd.f32 %v2000, %v2084
        %v2138 = vadd.f32 %v2001, %v2083
        %v2139 = vadd.f32 %v2002, %v2087
        %v2140 = vadd.f32 %v2003, %v2089
        %v2141 = vadd.f32 %v2004, %v2088
        %v2142 = vadd.f32 %v2005, %v2092
        %v2143 = vadd.f32 %v2006, %v2094
        %v2144 = vadd.f32 %v2007, %v2093
        %v2145 = vadd.f32 %v2008, %v2097
        %v2146 = vadd.f32 %v2009, %v2099
        %v2147 = vadd.f32 %v2010, %v2098
        %v2148 = vpack.c.bf16 %v2124, %v2124
        %v2149 = vpack.c.bf16 %v2125, %v2125
        %v2150 = vpack.c.bf16 %v2126, %v2126
        %v2151 = vpack.c.bf16 %v2127, %v2127
        %v2152 = vpack.c.bf16 %v2128, %v2128
        %v2153 = vpack.c.bf16 %v2129, %v2129
        %v2154 = vpack.c.bf16 %v2130, %v2130
        %v2155 = vpack.c.bf16 %v2131, %v2131
        %v2156 = vpack.c.bf16 %v2132, %v2132
        %v2157 = vpack.c.bf16 %v2133, %v2133
        %v2158 = vpack.c.bf16 %v2134, %v2134
        %v2159 = vpack.c.bf16 %v2135, %v2135
        %v2160 = vpack.c.bf16 %v2136, %v2136
        %v2161 = vpack.c.bf16 %v2137, %v2137
        %v2162 = vpack.c.bf16 %v2138, %v2138
        %v2163 = vpack.c.bf16 %v2139, %v2139
        %v2164 = vpack.c.bf16 %v2140, %v2140
        %v2165 = vpack.c.bf16 %v2141, %v2141
        %v2166 = vpack.c.bf16 %v2142, %v2142
        %v2167 = vpack.c.bf16 %v2143, %v2143
        %v2168 = vpack.c.bf16 %v2144, %v2144
        %v2169 = vpack.c.bf16 %v2145, %v2145
        %v2170 = vpack.c.bf16 %v2146, %v2146
        %v2171 = vpack.c.bf16 %v2147, %v2147
        %v2172 = vperm.slane %v934, 2
        %v2173 = vunpack.c.l.bf16 %v2172
        %v2174 = vmul.f32 %v863, %v2173
        %v2175 = vmul.f32 %v864, %v2173
        %v2176 = vmul.f32 %v865, %v2173
        %v2177 = vmul.f32 %v866, %v2173
        %v2178 = vmul.f32 %v867, %v2173
        %v2179 = vmul.f32 %v868, %v2173
        %v2180 = vmul.f32 %v869, %v2173
        %v2181 = vmul.f32 %v870, %v2173
        %v2182 = vmul.f32 %v871, %v2173
        %v2183 = vmul.f32 %v872, %v2173
        %v2184 = vmul.f32 %v873, %v2173
        %v2185 = vmul.f32 %v874, %v2173
        %v2186 = vmul.f32 %v875, %v2173
        %v2187 = vmul.f32 %v876, %v2173
        %v2188 = vmul.f32 %v877, %v2173
        %v2189 = vmul.f32 %v878, %v2173
        %v2190 = vmul.f32 %v879, %v2173
        %v2191 = vmul.f32 %v880, %v2173
        %v2192 = vmul.f32 %v881, %v2173
        %v2193 = vmul.f32 %v882, %v2173
        %v2194 = vmul.f32 %v883, %v2173
        %v2195 = vmul.f32 %v937, %v2173
        %v2196 = vmul.f32 %v938, %v2173
        %v2197 = vmul.f32 %v939, %v2173
        %v2198 = vpack.c.bf16 %v2174, %v2174
        %v2199 = vpack.c.bf16 %v2175, %v2175
        %v2200 = vpack.c.bf16 %v2176, %v2176
        %v2201 = vpack.c.bf16 %v2177, %v2177
        %v2202 = vpack.c.bf16 %v2178, %v2178
        %v2203 = vpack.c.bf16 %v2179, %v2179
        %v2204 = vpack.c.bf16 %v2180, %v2180
        %v2205 = vpack.c.bf16 %v2181, %v2181
        %v2206 = vpack.c.bf16 %v2182, %v2182
        %v2207 = vpack.c.bf16 %v2183, %v2183
        %v2208 = vpack.c.bf16 %v2184, %v2184
        %v2209 = vpack.c.bf16 %v2185, %v2185
        %v2210 = vpack.c.bf16 %v2186, %v2186
        %v2211 = vpack.c.bf16 %v2187, %v2187
        %v2212 = vpack.c.bf16 %v2188, %v2188
        %v2213 = vpack.c.bf16 %v2189, %v2189
        %v2214 = vpack.c.bf16 %v2190, %v2190
        %v2215 = vpack.c.bf16 %v2191, %v2191
        %v2216 = vpack.c.bf16 %v2192, %v2192
        %v2217 = vpack.c.bf16 %v2193, %v2193
        %v2218 = vpack.c.bf16 %v2194, %v2194
        %v2219 = vpack.c.bf16 %v2195, %v2195
        %v2220 = vpack.c.bf16 %v2196, %v2196
        %v2221 = vpack.c.bf16 %v2197, %v2197
        %v2222 = vunpack.c.l.bf16 %v2148
        %v2223 = vunpack.c.l.bf16 %v2149
        %v2224 = vunpack.c.l.bf16 %v2150
        %v2225 = vunpack.c.l.bf16 %v2151
        %v2226 = vunpack.c.l.bf16 %v2152
        %v2227 = vunpack.c.l.bf16 %v2153
        %v2228 = vunpack.c.l.bf16 %v2154
        %v2229 = vunpack.c.l.bf16 %v2155
        %v2230 = vunpack.c.l.bf16 %v2156
        %v2231 = vunpack.c.l.bf16 %v2157
        %v2232 = vunpack.c.l.bf16 %v2158
        %v2233 = vunpack.c.l.bf16 %v2159
        %v2234 = vunpack.c.l.bf16 %v2160
        %v2235 = vunpack.c.l.bf16 %v2161
        %v2236 = vunpack.c.l.bf16 %v2162
        %v2237 = vunpack.c.l.bf16 %v2163
        %v2238 = vunpack.c.l.bf16 %v2164
        %v2239 = vunpack.c.l.bf16 %v2165
        %v2240 = vunpack.c.l.bf16 %v2166
        %v2241 = vunpack.c.l.bf16 %v2167
        %v2242 = vunpack.c.l.bf16 %v2168
        %v2243 = vunpack.c.l.bf16 %v2169
        %v2244 = vunpack.c.l.bf16 %v2170
        %v2245 = vunpack.c.l.bf16 %v2171
        %v2246 = vunpack.c.l.bf16 %v2198
        %v2247 = vunpack.c.l.bf16 %v2199
        %v2248 = vunpack.c.l.bf16 %v2200
        %v2249 = vunpack.c.l.bf16 %v2201
        %v2250 = vunpack.c.l.bf16 %v2202
        %v2251 = vunpack.c.l.bf16 %v2203
        %v2252 = vunpack.c.l.bf16 %v2204
        %v2253 = vunpack.c.l.bf16 %v2205
        %v2254 = vunpack.c.l.bf16 %v2206
        %v2255 = vunpack.c.l.bf16 %v2207
        %v2256 = vunpack.c.l.bf16 %v2208
        %v2257 = vunpack.c.l.bf16 %v2209
        %v2258 = vunpack.c.l.bf16 %v2210
        %v2259 = vunpack.c.l.bf16 %v2211
        %v2260 = vunpack.c.l.bf16 %v2212
        %v2261 = vunpack.c.l.bf16 %v2213
        %v2262 = vunpack.c.l.bf16 %v2214
        %v2263 = vunpack.c.l.bf16 %v2215
        %v2264 = vunpack.c.l.bf16 %v2216
        %v2265 = vunpack.c.l.bf16 %v2217
        %v2266 = vunpack.c.l.bf16 %v2218
        %v2267 = vunpack.c.l.bf16 %v2219
        %v2268 = vunpack.c.l.bf16 %v2220
        %v2269 = vunpack.c.l.bf16 %v2221
        %v2294 = vrot.slane %v2246, 2
        %v2295 = vrot.slane %v2247, 2
        %v2296 = vsel %vm2059, %v2294, %v2295
        %v2297 = vrot.slane %v2248, 2
        %v2298 = vsel %vm2059, %v2295, %v2297
        %v2299 = vrot.slane %v2249, 2
        %v2300 = vrot.slane %v2250, 2
        %v2301 = vsel %vm2059, %v2299, %v2300
        %v2302 = vrot.slane %v2251, 2
        %v2303 = vsel %vm2059, %v2300, %v2302
        %v2304 = vrot.slane %v2252, 2
        %v2305 = vrot.slane %v2253, 2
        %v2306 = vsel %vm2059, %v2304, %v2305
        %v2307 = vrot.slane %v2254, 2
        %v2308 = vsel %vm2059, %v2305, %v2307
        %v2309 = vrot.slane %v2255, 2
        %v2310 = vrot.slane %v2256, 2
        %v2311 = vsel %vm2059, %v2309, %v2310
        %v2312 = vrot.slane %v2257, 2
        %v2313 = vsel %vm2059, %v2310, %v2312
        %v2314 = vrot.slane %v2258, 2
        %v2315 = vrot.slane %v2259, 2
        %v2316 = vsel %vm2059, %v2314, %v2315
        %v2317 = vrot.slane %v2260, 2
        %v2318 = vsel %vm2059, %v2315, %v2317
        %v2319 = vrot.slane %v2261, 2
        %v2320 = vrot.slane %v2262, 2
        %v2321 = vsel %vm2059, %v2319, %v2320
        %v2322 = vrot.slane %v2263, 2
        %v2323 = vsel %vm2059, %v2320, %v2322
        %v2324 = vrot.slane %v2264, 2
        %v2325 = vrot.slane %v2265, 2
        %v2326 = vsel %vm2059, %v2324, %v2325
        %v2327 = vrot.slane %v2266, 2
        %v2328 = vsel %vm2059, %v2325, %v2327
        %v2329 = vrot.slane %v2267, 2
        %v2330 = vrot.slane %v2268, 2
        %v2331 = vsel %vm2059, %v2329, %v2330
        %v2332 = vrot.slane %v2269, 2
        %v2333 = vsel %vm2059, %v2330, %v2332
        %v2358 = vadd.f32 %v2222, %v2296
        %v2359 = vadd.f32 %v2223, %v2298
        %v2360 = vadd.f32 %v2224, %v2297
        %v2361 = vadd.f32 %v2225, %v2301
        %v2362 = vadd.f32 %v2226, %v2303
        %v2363 = vadd.f32 %v2227, %v2302
        %v2364 = vadd.f32 %v2228, %v2306
        %v2365 = vadd.f32 %v2229, %v2308
        %v2366 = vadd.f32 %v2230, %v2307
        %v2367 = vadd.f32 %v2231, %v2311
        %v2368 = vadd.f32 %v2232, %v2313
        %v2369 = vadd.f32 %v2233, %v2312
        %v2370 = vadd.f32 %v2234, %v2316
        %v2371 = vadd.f32 %v2235, %v2318
        %v2372 = vadd.f32 %v2236, %v2317
        %v2373 = vadd.f32 %v2237, %v2321
        %v2374 = vadd.f32 %v2238, %v2323
        %v2375 = vadd.f32 %v2239, %v2322
        %v2376 = vadd.f32 %v2240, %v2326
        %v2377 = vadd.f32 %v2241, %v2328
        %v2378 = vadd.f32 %v2242, %v2327
        %v2379 = vadd.f32 %v2243, %v2331
        %v2380 = vadd.f32 %v2244, %v2333
        %v2381 = vadd.f32 %v2245, %v2332
        %v2382 = vpack.c.bf16 %v2358, %v2358
        %v2383 = vpack.c.bf16 %v2359, %v2359
        %v2384 = vpack.c.bf16 %v2360, %v2360
        %v2385 = vpack.c.bf16 %v2361, %v2361
        %v2386 = vpack.c.bf16 %v2362, %v2362
        %v2387 = vpack.c.bf16 %v2363, %v2363
        %v2388 = vpack.c.bf16 %v2364, %v2364
        %v2389 = vpack.c.bf16 %v2365, %v2365
        %v2390 = vpack.c.bf16 %v2366, %v2366
        %v2391 = vpack.c.bf16 %v2367, %v2367
        %v2392 = vpack.c.bf16 %v2368, %v2368
        %v2393 = vpack.c.bf16 %v2369, %v2369
        %v2394 = vpack.c.bf16 %v2370, %v2370
        %v2395 = vpack.c.bf16 %v2371, %v2371
        %v2396 = vpack.c.bf16 %v2372, %v2372
        %v2397 = vpack.c.bf16 %v2373, %v2373
        %v2398 = vpack.c.bf16 %v2374, %v2374
        %v2399 = vpack.c.bf16 %v2375, %v2375
        %v2400 = vpack.c.bf16 %v2376, %v2376
        %v2401 = vpack.c.bf16 %v2377, %v2377
        %v2402 = vpack.c.bf16 %v2378, %v2378
        %v2403 = vpack.c.bf16 %v2379, %v2379
        %v2404 = vpack.c.bf16 %v2380, %v2380
        %v2405 = vpack.c.bf16 %v2381, %v2381
        %v2407 = vpack.i.b16 %v855, %v855
        %v2409 = vperm.slane %v2407, 0
        %v2410 = vunpack.c.l.bf16 %v2409
        %v2411 = vmul.f32 %v866, %v2410
        %v2412 = vmul.f32 %v867, %v2410
        %v2413 = vmul.f32 %v868, %v2410
        %v2414 = vmul.f32 %v869, %v2410
        %v2415 = vmul.f32 %v870, %v2410
        %v2416 = vmul.f32 %v871, %v2410
        %v2417 = vmul.f32 %v872, %v2410
        %v2418 = vmul.f32 %v873, %v2410
        %v2419 = vmul.f32 %v874, %v2410
        %v2420 = vmul.f32 %v875, %v2410
        %v2421 = vmul.f32 %v876, %v2410
        %v2422 = vmul.f32 %v877, %v2410
        %v2423 = vmul.f32 %v878, %v2410
        %v2424 = vmul.f32 %v879, %v2410
        %v2425 = vmul.f32 %v880, %v2410
        %v2426 = vmul.f32 %v881, %v2410
        %v2427 = vmul.f32 %v882, %v2410
        %v2428 = vmul.f32 %v883, %v2410
        %v2429 = vmul.f32 %v937, %v2410
        %v2430 = vmul.f32 %v938, %v2410
        %v2431 = vmul.f32 %v939, %v2410
        %v2432 = vmul.f32 %v1086, %v2410
        %v2433 = vmul.f32 %v1087, %v2410
        %v2434 = vmul.f32 %v1088, %v2410
        %v2435 = vpack.c.bf16 %v2411, %v2411
        %v2436 = vpack.c.bf16 %v2412, %v2412
        %v2437 = vpack.c.bf16 %v2413, %v2413
        %v2438 = vpack.c.bf16 %v2414, %v2414
        %v2439 = vpack.c.bf16 %v2415, %v2415
        %v2440 = vpack.c.bf16 %v2416, %v2416
        %v2441 = vpack.c.bf16 %v2417, %v2417
        %v2442 = vpack.c.bf16 %v2418, %v2418
        %v2443 = vpack.c.bf16 %v2419, %v2419
        %v2444 = vpack.c.bf16 %v2420, %v2420
        %v2445 = vpack.c.bf16 %v2421, %v2421
        %v2446 = vpack.c.bf16 %v2422, %v2422
        %v2447 = vpack.c.bf16 %v2423, %v2423
        %v2448 = vpack.c.bf16 %v2424, %v2424
        %v2449 = vpack.c.bf16 %v2425, %v2425
        %v2450 = vpack.c.bf16 %v2426, %v2426
        %v2451 = vpack.c.bf16 %v2427, %v2427
        %v2452 = vpack.c.bf16 %v2428, %v2428
        %v2453 = vpack.c.bf16 %v2429, %v2429
        %v2454 = vpack.c.bf16 %v2430, %v2430
        %v2455 = vpack.c.bf16 %v2431, %v2431
        %v2456 = vpack.c.bf16 %v2432, %v2432
        %v2457 = vpack.c.bf16 %v2433, %v2433
        %v2458 = vpack.c.bf16 %v2434, %v2434
        %v2459 = vunpack.c.l.bf16 %v2382
        %v2460 = vunpack.c.l.bf16 %v2383
        %v2461 = vunpack.c.l.bf16 %v2384
        %v2462 = vunpack.c.l.bf16 %v2385
        %v2463 = vunpack.c.l.bf16 %v2386
        %v2464 = vunpack.c.l.bf16 %v2387
        %v2465 = vunpack.c.l.bf16 %v2388
        %v2466 = vunpack.c.l.bf16 %v2389
        %v2467 = vunpack.c.l.bf16 %v2390
        %v2468 = vunpack.c.l.bf16 %v2391
        %v2469 = vunpack.c.l.bf16 %v2392
        %v2470 = vunpack.c.l.bf16 %v2393
        %v2471 = vunpack.c.l.bf16 %v2394
        %v2472 = vunpack.c.l.bf16 %v2395
        %v2473 = vunpack.c.l.bf16 %v2396
        %v2474 = vunpack.c.l.bf16 %v2397
        %v2475 = vunpack.c.l.bf16 %v2398
        %v2476 = vunpack.c.l.bf16 %v2399
        %v2477 = vunpack.c.l.bf16 %v2400
        %v2478 = vunpack.c.l.bf16 %v2401
        %v2479 = vunpack.c.l.bf16 %v2402
        %v2480 = vunpack.c.l.bf16 %v2403
        %v2481 = vunpack.c.l.bf16 %v2404
        %v2482 = vunpack.c.l.bf16 %v2405
        %v2483 = vunpack.c.l.bf16 %v2435
        %v2484 = vunpack.c.l.bf16 %v2436
        %v2485 = vunpack.c.l.bf16 %v2437
        %v2486 = vunpack.c.l.bf16 %v2438
        %v2487 = vunpack.c.l.bf16 %v2439
        %v2488 = vunpack.c.l.bf16 %v2440
        %v2489 = vunpack.c.l.bf16 %v2441
        %v2490 = vunpack.c.l.bf16 %v2442
        %v2491 = vunpack.c.l.bf16 %v2443
        %v2492 = vunpack.c.l.bf16 %v2444
        %v2493 = vunpack.c.l.bf16 %v2445
        %v2494 = vunpack.c.l.bf16 %v2446
        %v2495 = vunpack.c.l.bf16 %v2447
        %v2496 = vunpack.c.l.bf16 %v2448
        %v2497 = vunpack.c.l.bf16 %v2449
        %v2498 = vunpack.c.l.bf16 %v2450
        %v2499 = vunpack.c.l.bf16 %v2451
        %v2500 = vunpack.c.l.bf16 %v2452
        %v2501 = vunpack.c.l.bf16 %v2453
        %v2502 = vunpack.c.l.bf16 %v2454
        %v2503 = vunpack.c.l.bf16 %v2455
        %v2504 = vunpack.c.l.bf16 %v2456
        %v2505 = vunpack.c.l.bf16 %v2457
        %v2506 = vunpack.c.l.bf16 %v2458
        %v2531 = vrot.slane %v2483, 2
        %v2532 = vrot.slane %v2484, 2
        %v2533 = vsel %vm2059, %v2531, %v2532
        %v2534 = vrot.slane %v2485, 2
        %v2535 = vsel %vm2059, %v2532, %v2534
        %v2536 = vrot.slane %v2486, 2
        %v2537 = vrot.slane %v2487, 2
        %v2538 = vsel %vm2059, %v2536, %v2537
        %v2539 = vrot.slane %v2488, 2
        %v2540 = vsel %vm2059, %v2537, %v2539
        %v2541 = vrot.slane %v2489, 2
        %v2542 = vrot.slane %v2490, 2
        %v2543 = vsel %vm2059, %v2541, %v2542
        %v2544 = vrot.slane %v2491, 2
        %v2545 = vsel %vm2059, %v2542, %v2544
        %v2546 = vrot.slane %v2492, 2
        %v2547 = vrot.slane %v2493, 2
        %v2548 = vsel %vm2059, %v2546, %v2547
        %v2549 = vrot.slane %v2494, 2
        %v2550 = vsel %vm2059, %v2547, %v2549
        %v2551 = vrot.slane %v2495, 2
        %v2552 = vrot.slane %v2496, 2
        %v2553 = vsel %vm2059, %v2551, %v2552
        %v2554 = vrot.slane %v2497, 2
        %v2555 = vsel %vm2059, %v2552, %v2554
        %v2556 = vrot.slane %v2498, 2
        %v2557 = vrot.slane %v2499, 2
        %v2558 = vsel %vm2059, %v2556, %v2557
        %v2559 = vrot.slane %v2500, 2
        %v2560 = vsel %vm2059, %v2557, %v2559
        %v2561 = vrot.slane %v2501, 2
        %v2562 = vrot.slane %v2502, 2
        %v2563 = vsel %vm2059, %v2561, %v2562
        %v2564 = vrot.slane %v2503, 2
        %v2565 = vsel %vm2059, %v2562, %v2564
        %v2566 = vrot.slane %v2504, 2
        %v2567 = vrot.slane %v2505, 2
        %v2568 = vsel %vm2059, %v2566, %v2567
        %v2569 = vrot.slane %v2506, 2
        %v2570 = vsel %vm2059, %v2567, %v2569
        %v2595 = vadd.f32 %v2459, %v2533
        %v2596 = vadd.f32 %v2460, %v2535
        %v2597 = vadd.f32 %v2461, %v2534
        %v2598 = vadd.f32 %v2462, %v2538
        %v2599 = vadd.f32 %v2463, %v2540
        %v2600 = vadd.f32 %v2464, %v2539
        %v2601 = vadd.f32 %v2465, %v2543
        %v2602 = vadd.f32 %v2466, %v2545
        %v2603 = vadd.f32 %v2467, %v2544
        %v2604 = vadd.f32 %v2468, %v2548
        %v2605 = vadd.f32 %v2469, %v2550
        %v2606 = vadd.f32 %v2470, %v2549
        %v2607 = vadd.f32 %v2471, %v2553
        %v2608 = vadd.f32 %v2472, %v2555
        %v2609 = vadd.f32 %v2473, %v2554
        %v2610 = vadd.f32 %v2474, %v2558
        %v2611 = vadd.f32 %v2475, %v2560
        %v2612 = vadd.f32 %v2476, %v2559
        %v2613 = vadd.f32 %v2477, %v2563
        %v2614 = vadd.f32 %v2478, %v2565
        %v2615 = vadd.f32 %v2479, %v2564
        %v2616 = vadd.f32 %v2480, %v2568
        %v2617 = vadd.f32 %v2481, %v2570
        %v2618 = vadd.f32 %v2482, %v2569
        %v2619 = vpack.c.bf16 %v2595, %v2595
        %v2620 = vpack.c.bf16 %v2596, %v2596
        %v2621 = vpack.c.bf16 %v2597, %v2597
        %v2622 = vpack.c.bf16 %v2598, %v2598
        %v2623 = vpack.c.bf16 %v2599, %v2599
        %v2624 = vpack.c.bf16 %v2600, %v2600
        %v2625 = vpack.c.bf16 %v2601, %v2601
        %v2626 = vpack.c.bf16 %v2602, %v2602
        %v2627 = vpack.c.bf16 %v2603, %v2603
        %v2628 = vpack.c.bf16 %v2604, %v2604
        %v2629 = vpack.c.bf16 %v2605, %v2605
        %v2630 = vpack.c.bf16 %v2606, %v2606
        %v2631 = vpack.c.bf16 %v2607, %v2607
        %v2632 = vpack.c.bf16 %v2608, %v2608
        %v2633 = vpack.c.bf16 %v2609, %v2609
        %v2634 = vpack.c.bf16 %v2610, %v2610
        %v2635 = vpack.c.bf16 %v2611, %v2611
        %v2636 = vpack.c.bf16 %v2612, %v2612
        %v2637 = vpack.c.bf16 %v2613, %v2613
        %v2638 = vpack.c.bf16 %v2614, %v2614
        %v2639 = vpack.c.bf16 %v2615, %v2615
        %v2640 = vpack.c.bf16 %v2616, %v2616
        %v2641 = vpack.c.bf16 %v2617, %v2617
        %v2642 = vpack.c.bf16 %v2618, %v2618
        %v2643 = vunpack.c.l.bf16 %v2619
        %v2644 = vunpack.c.l.bf16 %v2620
        %v2645 = vunpack.c.l.bf16 %v2621
        %v2646 = vunpack.c.l.bf16 %v2622
        %v2647 = vunpack.c.l.bf16 %v2623
        %v2648 = vunpack.c.l.bf16 %v2624
        %v2649 = vunpack.c.l.bf16 %v2625
        %v2650 = vunpack.c.l.bf16 %v2626
        %v2651 = vunpack.c.l.bf16 %v2627
        %v2652 = vunpack.c.l.bf16 %v2628
        %v2653 = vunpack.c.l.bf16 %v2629
        %v2654 = vunpack.c.l.bf16 %v2630
        %v2655 = vunpack.c.l.bf16 %v2631
        %v2656 = vunpack.c.l.bf16 %v2632
        %v2657 = vunpack.c.l.bf16 %v2633
        %v2658 = vunpack.c.l.bf16 %v2634
        %v2659 = vunpack.c.l.bf16 %v2635
        %v2660 = vunpack.c.l.bf16 %v2636
        %v2661 = vunpack.c.l.bf16 %v2637
        %v2662 = vunpack.c.l.bf16 %v2638
        %v2663 = vunpack.c.l.bf16 %v2639
        %v2664 = vunpack.c.l.bf16 %v2640
        %v2665 = vunpack.c.l.bf16 %v2641
        %v2666 = vunpack.c.l.bf16 %v2642
        %v2667 = vmul.f32 %v2643, 0.5
        %v2668 = vmul.f32 %v2644, 0.5
        %v2669 = vmul.f32 %v2645, 0.5
        %v2670 = vmul.f32 %v2646, 0.5
        %v2671 = vmul.f32 %v2647, 0.5
        %v2672 = vmul.f32 %v2648, 0.5
        %v2673 = vmul.f32 %v2649, 0.5
        %v2674 = vmul.f32 %v2650, 0.5
        %v2675 = vmul.f32 %v2651, 0.5
        %v2676 = vmul.f32 %v2652, 0.5
        %v2677 = vmul.f32 %v2653, 0.5
        %v2678 = vmul.f32 %v2654, 0.5
        %v2679 = vmul.f32 %v2655, 0.5
        %v2680 = vmul.f32 %v2656, 0.5
        %v2681 = vmul.f32 %v2657, 0.5
        %v2682 = vmul.f32 %v2658, 0.5
        %v2683 = vmul.f32 %v2659, 0.5
        %v2684 = vmul.f32 %v2660, 0.5
        %v2685 = vmul.f32 %v2661, 0.5
        %v2686 = vmul.f32 %v2662, 0.5
        %v2687 = vmul.f32 %v2663, 0.5
        %v2688 = vmul.f32 %v2664, 0.5
        %v2689 = vmul.f32 %v2665, 0.5
        %v2690 = vmul.f32 %v2666, 0.5
        %v2691 = vpack.c.bf16 %v2667, %v2667
        %v2692 = vpack.c.bf16 %v2668, %v2668
        %v2693 = vpack.c.bf16 %v2669, %v2669
        %v2694 = vpack.c.bf16 %v2670, %v2670
        %v2695 = vpack.c.bf16 %v2671, %v2671
        %v2696 = vpack.c.bf16 %v2672, %v2672
        %v2697 = vpack.c.bf16 %v2673, %v2673
        %v2698 = vpack.c.bf16 %v2674, %v2674
        %v2699 = vpack.c.bf16 %v2675, %v2675
        %v2700 = vpack.c.bf16 %v2676, %v2676
        %v2701 = vpack.c.bf16 %v2677, %v2677
        %v2702 = vpack.c.bf16 %v2678, %v2678
        %v2703 = vpack.c.bf16 %v2679, %v2679
        %v2704 = vpack.c.bf16 %v2680, %v2680
        %v2705 = vpack.c.bf16 %v2681, %v2681
        %v2706 = vpack.c.bf16 %v2682, %v2682
        %v2707 = vpack.c.bf16 %v2683, %v2683
        %v2708 = vpack.c.bf16 %v2684, %v2684
        %v2709 = vpack.c.bf16 %v2685, %v2685
        %v2710 = vpack.c.bf16 %v2686, %v2686
        %v2711 = vpack.c.bf16 %v2687, %v2687
        %v2712 = vpack.c.bf16 %v2688, %v2688
        %v2713 = vpack.c.bf16 %v2689, %v2689
        %v2714 = vpack.c.bf16 %v2690, %v2690
        %v2715 = vmul.f32 %v2643, 0.044677734
        %v2716 = vmul.f32 %v2644, 0.044677734
        %v2717 = vmul.f32 %v2645, 0.044677734
        %v2718 = vmul.f32 %v2646, 0.044677734
        %v2719 = vmul.f32 %v2647, 0.044677734
        %v2720 = vmul.f32 %v2648, 0.044677734
        %v2721 = vmul.f32 %v2649, 0.044677734
        %v2722 = vmul.f32 %v2650, 0.044677734
        %v2723 = vmul.f32 %v2651, 0.044677734
        %v2724 = vmul.f32 %v2652, 0.044677734
        %v2725 = vmul.f32 %v2653, 0.044677734
        %v2726 = vmul.f32 %v2654, 0.044677734
        %v2727 = vmul.f32 %v2655, 0.044677734
        %v2728 = vmul.f32 %v2656, 0.044677734
        %v2729 = vmul.f32 %v2657, 0.044677734
        %v2730 = vmul.f32 %v2658, 0.044677734
        %v2731 = vmul.f32 %v2659, 0.044677734
        %v2732 = vmul.f32 %v2660, 0.044677734
        %v2733 = vmul.f32 %v2661, 0.044677734
        %v2734 = vmul.f32 %v2662, 0.044677734
        %v2735 = vmul.f32 %v2663, 0.044677734
        %v2736 = vmul.f32 %v2664, 0.044677734
        %v2737 = vmul.f32 %v2665, 0.044677734
        %v2738 = vmul.f32 %v2666, 0.044677734
        %v2739 = vpack.c.bf16 %v2715, %v2715
        %v2740 = vpack.c.bf16 %v2716, %v2716
        %v2741 = vpack.c.bf16 %v2717, %v2717
        %v2742 = vpack.c.bf16 %v2718, %v2718
        %v2743 = vpack.c.bf16 %v2719, %v2719
        %v2744 = vpack.c.bf16 %v2720, %v2720
        %v2745 = vpack.c.bf16 %v2721, %v2721
        %v2746 = vpack.c.bf16 %v2722, %v2722
        %v2747 = vpack.c.bf16 %v2723, %v2723
        %v2748 = vpack.c.bf16 %v2724, %v2724
        %v2749 = vpack.c.bf16 %v2725, %v2725
        %v2750 = vpack.c.bf16 %v2726, %v2726
        %v2751 = vpack.c.bf16 %v2727, %v2727
        %v2752 = vpack.c.bf16 %v2728, %v2728
        %v2753 = vpack.c.bf16 %v2729, %v2729
        %v2754 = vpack.c.bf16 %v2730, %v2730
        %v2755 = vpack.c.bf16 %v2731, %v2731
        %v2756 = vpack.c.bf16 %v2732, %v2732
        %v2757 = vpack.c.bf16 %v2733, %v2733
        %v2758 = vpack.c.bf16 %v2734, %v2734
        %v2759 = vpack.c.bf16 %v2735, %v2735
        %v2760 = vpack.c.bf16 %v2736, %v2736
        %v2761 = vpack.c.bf16 %v2737, %v2737
        %v2762 = vpack.c.bf16 %v2738, %v2738
        %v2763 = vunpack.c.l.bf16 %v2739
        %v2764 = vunpack.c.l.bf16 %v2740
        %v2765 = vunpack.c.l.bf16 %v2741
        %v2766 = vunpack.c.l.bf16 %v2742
        %v2767 = vunpack.c.l.bf16 %v2743
        %v2768 = vunpack.c.l.bf16 %v2744
        %v2769 = vunpack.c.l.bf16 %v2745
        %v2770 = vunpack.c.l.bf16 %v2746
        %v2771 = vunpack.c.l.bf16 %v2747
        %v2772 = vunpack.c.l.bf16 %v2748
        %v2773 = vunpack.c.l.bf16 %v2749
        %v2774 = vunpack.c.l.bf16 %v2750
        %v2775 = vunpack.c.l.bf16 %v2751
        %v2776 = vunpack.c.l.bf16 %v2752
        %v2777 = vunpack.c.l.bf16 %v2753
        %v2778 = vunpack.c.l.bf16 %v2754
        %v2779 = vunpack.c.l.bf16 %v2755
        %v2780 = vunpack.c.l.bf16 %v2756
        %v2781 = vunpack.c.l.bf16 %v2757
        %v2782 = vunpack.c.l.bf16 %v2758
        %v2783 = vunpack.c.l.bf16 %v2759
        %v2784 = vunpack.c.l.bf16 %v2760
        %v2785 = vunpack.c.l.bf16 %v2761
        %v2786 = vunpack.c.l.bf16 %v2762
        %v2787 = vmul.f32 %v2763, %v2643
        %v2788 = vmul.f32 %v2764, %v2644
        %v2789 = vmul.f32 %v2765, %v2645
        %v2790 = vmul.f32 %v2766, %v2646
        %v2791 = vmul.f32 %v2767, %v2647
        %v2792 = vmul.f32 %v2768, %v2648
        %v2793 = vmul.f32 %v2769, %v2649
        %v2794 = vmul.f32 %v2770, %v2650
        %v2795 = vmul.f32 %v2771, %v2651
        %v2796 = vmul.f32 %v2772, %v2652
        %v2797 = vmul.f32 %v2773, %v2653
        %v2798 = vmul.f32 %v2774, %v2654
        %v2799 = vmul.f32 %v2775, %v2655
        %v2800 = vmul.f32 %v2776, %v2656
        %v2801 = vmul.f32 %v2777, %v2657
        %v2802 = vmul.f32 %v2778, %v2658
        %v2803 = vmul.f32 %v2779, %v2659
        %v2804 = vmul.f32 %v2780, %v2660
        %v2805 = vmul.f32 %v2781, %v2661
        %v2806 = vmul.f32 %v2782, %v2662
        %v2807 = vmul.f32 %v2783, %v2663
        %v2808 = vmul.f32 %v2784, %v2664
        %v2809 = vmul.f32 %v2785, %v2665
        %v2810 = vmul.f32 %v2786, %v2666
        %v2811 = vpack.c.bf16 %v2787, %v2787
        %v2812 = vpack.c.bf16 %v2788, %v2788
        %v2813 = vpack.c.bf16 %v2789, %v2789
        %v2814 = vpack.c.bf16 %v2790, %v2790
        %v2815 = vpack.c.bf16 %v2791, %v2791
        %v2816 = vpack.c.bf16 %v2792, %v2792
        %v2817 = vpack.c.bf16 %v2793, %v2793
        %v2818 = vpack.c.bf16 %v2794, %v2794
        %v2819 = vpack.c.bf16 %v2795, %v2795
        %v2820 = vpack.c.bf16 %v2796, %v2796
        %v2821 = vpack.c.bf16 %v2797, %v2797
        %v2822 = vpack.c.bf16 %v2798, %v2798
        %v2823 = vpack.c.bf16 %v2799, %v2799
        %v2824 = vpack.c.bf16 %v2800, %v2800
        %v2825 = vpack.c.bf16 %v2801, %v2801
        %v2826 = vpack.c.bf16 %v2802, %v2802
        %v2827 = vpack.c.bf16 %v2803, %v2803
        %v2828 = vpack.c.bf16 %v2804, %v2804
        %v2829 = vpack.c.bf16 %v2805, %v2805
        %v2830 = vpack.c.bf16 %v2806, %v2806
        %v2831 = vpack.c.bf16 %v2807, %v2807
        %v2832 = vpack.c.bf16 %v2808, %v2808
        %v2833 = vpack.c.bf16 %v2809, %v2809
        %v2834 = vpack.c.bf16 %v2810, %v2810
        %v2835 = vunpack.c.l.bf16 %v2811
        %v2836 = vunpack.c.l.bf16 %v2812
        %v2837 = vunpack.c.l.bf16 %v2813
        %v2838 = vunpack.c.l.bf16 %v2814
        %v2839 = vunpack.c.l.bf16 %v2815
        %v2840 = vunpack.c.l.bf16 %v2816
        %v2841 = vunpack.c.l.bf16 %v2817
        %v2842 = vunpack.c.l.bf16 %v2818
        %v2843 = vunpack.c.l.bf16 %v2819
        %v2844 = vunpack.c.l.bf16 %v2820
        %v2845 = vunpack.c.l.bf16 %v2821
        %v2846 = vunpack.c.l.bf16 %v2822
        %v2847 = vunpack.c.l.bf16 %v2823
        %v2848 = vunpack.c.l.bf16 %v2824
        %v2849 = vunpack.c.l.bf16 %v2825
        %v2850 = vunpack.c.l.bf16 %v2826
        %v2851 = vunpack.c.l.bf16 %v2827
        %v2852 = vunpack.c.l.bf16 %v2828
        %v2853 = vunpack.c.l.bf16 %v2829
        %v2854 = vunpack.c.l.bf16 %v2830
        %v2855 = vunpack.c.l.bf16 %v2831
        %v2856 = vunpack.c.l.bf16 %v2832
        %v2857 = vunpack.c.l.bf16 %v2833
        %v2858 = vunpack.c.l.bf16 %v2834
        %v2859 = vmul.f32 %v2835, %v2643
        %v2860 = vmul.f32 %v2836, %v2644
        %v2861 = vmul.f32 %v2837, %v2645
        %v2862 = vmul.f32 %v2838, %v2646
        %v2863 = vmul.f32 %v2839, %v2647
        %v2864 = vmul.f32 %v2840, %v2648
        %v2865 = vmul.f32 %v2841, %v2649
        %v2866 = vmul.f32 %v2842, %v2650
        %v2867 = vmul.f32 %v2843, %v2651
        %v2868 = vmul.f32 %v2844, %v2652
        %v2869 = vmul.f32 %v2845, %v2653
        %v2870 = vmul.f32 %v2846, %v2654
        %v2871 = vmul.f32 %v2847, %v2655
        %v2872 = vmul.f32 %v2848, %v2656
        %v2873 = vmul.f32 %v2849, %v2657
        %v2874 = vmul.f32 %v2850, %v2658
        %v2875 = vmul.f32 %v2851, %v2659
        %v2876 = vmul.f32 %v2852, %v2660
        %v2877 = vmul.f32 %v2853, %v2661
        %v2878 = vmul.f32 %v2854, %v2662
        %v2879 = vmul.f32 %v2855, %v2663
        %v2880 = vmul.f32 %v2856, %v2664
        %v2881 = vmul.f32 %v2857, %v2665
        %v2882 = vmul.f32 %v2858, %v2666
        %v2883 = vpack.c.bf16 %v2859, %v2859
        %v2884 = vpack.c.bf16 %v2860, %v2860
        %v2885 = vpack.c.bf16 %v2861, %v2861
        %v2886 = vpack.c.bf16 %v2862, %v2862
        %v2887 = vpack.c.bf16 %v2863, %v2863
        %v2888 = vpack.c.bf16 %v2864, %v2864
        %v2889 = vpack.c.bf16 %v2865, %v2865
        %v2890 = vpack.c.bf16 %v2866, %v2866
        %v2891 = vpack.c.bf16 %v2867, %v2867
        %v2892 = vpack.c.bf16 %v2868, %v2868
        %v2893 = vpack.c.bf16 %v2869, %v2869
        %v2894 = vpack.c.bf16 %v2870, %v2870
        %v2895 = vpack.c.bf16 %v2871, %v2871
        %v2896 = vpack.c.bf16 %v2872, %v2872
        %v2897 = vpack.c.bf16 %v2873, %v2873
        %v2898 = vpack.c.bf16 %v2874, %v2874
        %v2899 = vpack.c.bf16 %v2875, %v2875
        %v2900 = vpack.c.bf16 %v2876, %v2876
        %v2901 = vpack.c.bf16 %v2877, %v2877
        %v2902 = vpack.c.bf16 %v2878, %v2878
        %v2903 = vpack.c.bf16 %v2879, %v2879
        %v2904 = vpack.c.bf16 %v2880, %v2880
        %v2905 = vpack.c.bf16 %v2881, %v2881
        %v2906 = vpack.c.bf16 %v2882, %v2882
        %v2907 = vunpack.c.l.bf16 %v2883
        %v2908 = vunpack.c.l.bf16 %v2884
        %v2909 = vunpack.c.l.bf16 %v2885
        %v2910 = vunpack.c.l.bf16 %v2886
        %v2911 = vunpack.c.l.bf16 %v2887
        %v2912 = vunpack.c.l.bf16 %v2888
        %v2913 = vunpack.c.l.bf16 %v2889
        %v2914 = vunpack.c.l.bf16 %v2890
        %v2915 = vunpack.c.l.bf16 %v2891
        %v2916 = vunpack.c.l.bf16 %v2892
        %v2917 = vunpack.c.l.bf16 %v2893
        %v2918 = vunpack.c.l.bf16 %v2894
        %v2919 = vunpack.c.l.bf16 %v2895
        %v2920 = vunpack.c.l.bf16 %v2896
        %v2921 = vunpack.c.l.bf16 %v2897
        %v2922 = vunpack.c.l.bf16 %v2898
        %v2923 = vunpack.c.l.bf16 %v2899
        %v2924 = vunpack.c.l.bf16 %v2900
        %v2925 = vunpack.c.l.bf16 %v2901
        %v2926 = vunpack.c.l.bf16 %v2902
        %v2927 = vunpack.c.l.bf16 %v2903
        %v2928 = vunpack.c.l.bf16 %v2904
        %v2929 = vunpack.c.l.bf16 %v2905
        %v2930 = vunpack.c.l.bf16 %v2906
        %v2931 = vadd.f32 %v2643, %v2907
        %v2932 = vadd.f32 %v2644, %v2908
        %v2933 = vadd.f32 %v2645, %v2909
        %v2934 = vadd.f32 %v2646, %v2910
        %v2935 = vadd.f32 %v2647, %v2911
        %v2936 = vadd.f32 %v2648, %v2912
        %v2937 = vadd.f32 %v2649, %v2913
        %v2938 = vadd.f32 %v2650, %v2914
        %v2939 = vadd.f32 %v2651, %v2915
        %v2940 = vadd.f32 %v2652, %v2916
        %v2941 = vadd.f32 %v2653, %v2917
        %v2942 = vadd.f32 %v2654, %v2918
        %v2943 = vadd.f32 %v2655, %v2919
        %v2944 = vadd.f32 %v2656, %v2920
        %v2945 = vadd.f32 %v2657, %v2921
        %v2946 = vadd.f32 %v2658, %v2922
        %v2947 = vadd.f32 %v2659, %v2923
        %v2948 = vadd.f32 %v2660, %v2924
        %v2949 = vadd.f32 %v2661, %v2925
        %v2950 = vadd.f32 %v2662, %v2926
        %v2951 = vadd.f32 %v2663, %v2927
        %v2952 = vadd.f32 %v2664, %v2928
        %v2953 = vadd.f32 %v2665, %v2929
        %v2954 = vadd.f32 %v2666, %v2930
        %v2955 = vpack.c.bf16 %v2931, %v2931
        %v2956 = vpack.c.bf16 %v2932, %v2932
        %v2957 = vpack.c.bf16 %v2933, %v2933
        %v2958 = vpack.c.bf16 %v2934, %v2934
        %v2959 = vpack.c.bf16 %v2935, %v2935
        %v2960 = vpack.c.bf16 %v2936, %v2936
        %v2961 = vpack.c.bf16 %v2937, %v2937
        %v2962 = vpack.c.bf16 %v2938, %v2938
        %v2963 = vpack.c.bf16 %v2939, %v2939
        %v2964 = vpack.c.bf16 %v2940, %v2940
        %v2965 = vpack.c.bf16 %v2941, %v2941
        %v2966 = vpack.c.bf16 %v2942, %v2942
        %v2967 = vpack.c.bf16 %v2943, %v2943
        %v2968 = vpack.c.bf16 %v2944, %v2944
        %v2969 = vpack.c.bf16 %v2945, %v2945
        %v2970 = vpack.c.bf16 %v2946, %v2946
        %v2971 = vpack.c.bf16 %v2947, %v2947
        %v2972 = vpack.c.bf16 %v2948, %v2948
        %v2973 = vpack.c.bf16 %v2949, %v2949
        %v2974 = vpack.c.bf16 %v2950, %v2950
        %v2975 = vpack.c.bf16 %v2951, %v2951
        %v2976 = vpack.c.bf16 %v2952, %v2952
        %v2977 = vpack.c.bf16 %v2953, %v2953
        %v2978 = vpack.c.bf16 %v2954, %v2954
        %v2979 = vunpack.c.l.bf16 %v2955
        %v2980 = vunpack.c.l.bf16 %v2956
        %v2981 = vunpack.c.l.bf16 %v2957
        %v2982 = vunpack.c.l.bf16 %v2958
        %v2983 = vunpack.c.l.bf16 %v2959
        %v2984 = vunpack.c.l.bf16 %v2960
        %v2985 = vunpack.c.l.bf16 %v2961
        %v2986 = vunpack.c.l.bf16 %v2962
        %v2987 = vunpack.c.l.bf16 %v2963
        %v2988 = vunpack.c.l.bf16 %v2964
        %v2989 = vunpack.c.l.bf16 %v2965
        %v2990 = vunpack.c.l.bf16 %v2966
        %v2991 = vunpack.c.l.bf16 %v2967
        %v2992 = vunpack.c.l.bf16 %v2968
        %v2993 = vunpack.c.l.bf16 %v2969
        %v2994 = vunpack.c.l.bf16 %v2970
        %v2995 = vunpack.c.l.bf16 %v2971
        %v2996 = vunpack.c.l.bf16 %v2972
        %v2997 = vunpack.c.l.bf16 %v2973
        %v2998 = vunpack.c.l.bf16 %v2974
        %v2999 = vunpack.c.l.bf16 %v2975
        %v3000 = vunpack.c.l.bf16 %v2976
        %v3001 = vunpack.c.l.bf16 %v2977
        %v3002 = vunpack.c.l.bf16 %v2978
        %v3003 = vmul.f32 %v2979, 0.796875
        %v3004 = vmul.f32 %v2980, 0.796875
        %v3005 = vmul.f32 %v2981, 0.796875
        %v3006 = vmul.f32 %v2982, 0.796875
        %v3007 = vmul.f32 %v2983, 0.796875
        %v3008 = vmul.f32 %v2984, 0.796875
        %v3009 = vmul.f32 %v2985, 0.796875
        %v3010 = vmul.f32 %v2986, 0.796875
        %v3011 = vmul.f32 %v2987, 0.796875
        %v3012 = vmul.f32 %v2988, 0.796875
        %v3013 = vmul.f32 %v2989, 0.796875
        %v3014 = vmul.f32 %v2990, 0.796875
        %v3015 = vmul.f32 %v2991, 0.796875
        %v3016 = vmul.f32 %v2992, 0.796875
        %v3017 = vmul.f32 %v2993, 0.796875
        %v3018 = vmul.f32 %v2994, 0.796875
        %v3019 = vmul.f32 %v2995, 0.796875
        %v3020 = vmul.f32 %v2996, 0.796875
        %v3021 = vmul.f32 %v2997, 0.796875
        %v3022 = vmul.f32 %v2998, 0.796875
        %v3023 = vmul.f32 %v2999, 0.796875
        %v3024 = vmul.f32 %v3000, 0.796875
        %v3025 = vmul.f32 %v3001, 0.796875
        %v3026 = vmul.f32 %v3002, 0.796875
        %v3027 = vpack.c.bf16 %v3003, %v3003
        %v3028 = vpack.c.bf16 %v3004, %v3004
        %v3029 = vpack.c.bf16 %v3005, %v3005
        %v3030 = vpack.c.bf16 %v3006, %v3006
        %v3031 = vpack.c.bf16 %v3007, %v3007
        %v3032 = vpack.c.bf16 %v3008, %v3008
        %v3033 = vpack.c.bf16 %v3009, %v3009
        %v3034 = vpack.c.bf16 %v3010, %v3010
        %v3035 = vpack.c.bf16 %v3011, %v3011
        %v3036 = vpack.c.bf16 %v3012, %v3012
        %v3037 = vpack.c.bf16 %v3013, %v3013
        %v3038 = vpack.c.bf16 %v3014, %v3014
        %v3039 = vpack.c.bf16 %v3015, %v3015
        %v3040 = vpack.c.bf16 %v3016, %v3016
        %v3041 = vpack.c.bf16 %v3017, %v3017
        %v3042 = vpack.c.bf16 %v3018, %v3018
        %v3043 = vpack.c.bf16 %v3019, %v3019
        %v3044 = vpack.c.bf16 %v3020, %v3020
        %v3045 = vpack.c.bf16 %v3021, %v3021
        %v3046 = vpack.c.bf16 %v3022, %v3022
        %v3047 = vpack.c.bf16 %v3023, %v3023
        %v3048 = vpack.c.bf16 %v3024, %v3024
        %v3049 = vpack.c.bf16 %v3025, %v3025
        %v3050 = vpack.c.bf16 %v3026, %v3026
        %v3051 = vunpack.c.l.bf16 %v3027
        %v3052 = vunpack.c.l.bf16 %v3028
        %v3053 = vunpack.c.l.bf16 %v3029
        %v3054 = vunpack.c.l.bf16 %v3030
        %v3055 = vunpack.c.l.bf16 %v3031
        %v3056 = vunpack.c.l.bf16 %v3032
        %v3057 = vunpack.c.l.bf16 %v3033
        %v3058 = vunpack.c.l.bf16 %v3034
        %v3059 = vunpack.c.l.bf16 %v3035
        %v3060 = vunpack.c.l.bf16 %v3036
        %v3061 = vunpack.c.l.bf16 %v3037
        %v3062 = vunpack.c.l.bf16 %v3038
        %v3063 = vunpack.c.l.bf16 %v3039
        %v3064 = vunpack.c.l.bf16 %v3040
        %v3065 = vunpack.c.l.bf16 %v3041
        %v3066 = vunpack.c.l.bf16 %v3042
        %v3067 = vunpack.c.l.bf16 %v3043
        %v3068 = vunpack.c.l.bf16 %v3044
        %v3069 = vunpack.c.l.bf16 %v3045
        %v3070 = vunpack.c.l.bf16 %v3046
        %v3071 = vunpack.c.l.bf16 %v3047
        %v3072 = vunpack.c.l.bf16 %v3048
        %v3073 = vunpack.c.l.bf16 %v3049
        %v3074 = vunpack.c.l.bf16 %v3050
        %v3075 = vtanh.pop %v3051
        %v3076 = vtanh.pop %v3052
        %v3077 = vtanh.pop %v3053
        %v3078 = vtanh.pop %v3054
        %v3079 = vtanh.pop %v3055
        %v3080 = vtanh.pop %v3056
        %v3081 = vtanh.pop %v3057
        %v3082 = vtanh.pop %v3058
        %v3083 = vtanh.pop %v3059
        %v3084 = vtanh.pop %v3060
        %v3085 = vtanh.pop %v3061
        %v3086 = vtanh.pop %v3062
        %v3087 = vtanh.pop %v3063
        %v3088 = vtanh.pop %v3064
        %v3089 = vtanh.pop %v3065
        %v3090 = vtanh.pop %v3066
        %v3091 = vtanh.pop %v3067
        %v3092 = vtanh.pop %v3068
        %v3093 = vtanh.pop %v3069
        %v3094 = vtanh.pop %v3070
        %v3095 = vtanh.pop %v3071
        %v3096 = vtanh.pop %v3072
        %v3097 = vtanh.pop %v3073
        %v3098 = vtanh.pop %v3074
        %v3099 = vpack.c.bf16 %v3075, %v3075
        %v3100 = vpack.c.bf16 %v3076, %v3076
        %v3101 = vpack.c.bf16 %v3077, %v3077
        %v3102 = vpack.c.bf16 %v3078, %v3078
        %v3103 = vpack.c.bf16 %v3079, %v3079
        %v3104 = vpack.c.bf16 %v3080, %v3080
        %v3105 = vpack.c.bf16 %v3081, %v3081
        %v3106 = vpack.c.bf16 %v3082, %v3082
        %v3107 = vpack.c.bf16 %v3083, %v3083
        %v3108 = vpack.c.bf16 %v3084, %v3084
        %v3109 = vpack.c.bf16 %v3085, %v3085
        %v3110 = vpack.c.bf16 %v3086, %v3086
        %v3111 = vpack.c.bf16 %v3087, %v3087
        %v3112 = vpack.c.bf16 %v3088, %v3088
        %v3113 = vpack.c.bf16 %v3089, %v3089
        %v3114 = vpack.c.bf16 %v3090, %v3090
        %v3115 = vpack.c.bf16 %v3091, %v3091
        %v3116 = vpack.c.bf16 %v3092, %v3092
        %v3117 = vpack.c.bf16 %v3093, %v3093
        %v3118 = vpack.c.bf16 %v3094, %v3094
        %v3119 = vpack.c.bf16 %v3095, %v3095
        %v3120 = vpack.c.bf16 %v3096, %v3096
        %v3121 = vpack.c.bf16 %v3097, %v3097
        %v3122 = vpack.c.bf16 %v3098, %v3098
        %v3123 = vunpack.c.l.bf16 %v3099
        %v3124 = vunpack.c.l.bf16 %v3100
        %v3125 = vunpack.c.l.bf16 %v3101
        %v3126 = vunpack.c.l.bf16 %v3102
        %v3127 = vunpack.c.l.bf16 %v3103
        %v3128 = vunpack.c.l.bf16 %v3104
        %v3129 = vunpack.c.l.bf16 %v3105
        %v3130 = vunpack.c.l.bf16 %v3106
        %v3131 = vunpack.c.l.bf16 %v3107
        %v3132 = vunpack.c.l.bf16 %v3108
        %v3133 = vunpack.c.l.bf16 %v3109
        %v3134 = vunpack.c.l.bf16 %v3110
        %v3135 = vunpack.c.l.bf16 %v3111
        %v3136 = vunpack.c.l.bf16 %v3112
        %v3137 = vunpack.c.l.bf16 %v3113
        %v3138 = vunpack.c.l.bf16 %v3114
        %v3139 = vunpack.c.l.bf16 %v3115
        %v3140 = vunpack.c.l.bf16 %v3116
        %v3141 = vunpack.c.l.bf16 %v3117
        %v3142 = vunpack.c.l.bf16 %v3118
        %v3143 = vunpack.c.l.bf16 %v3119
        %v3144 = vunpack.c.l.bf16 %v3120
        %v3145 = vunpack.c.l.bf16 %v3121
        %v3146 = vunpack.c.l.bf16 %v3122
        %v3147 = vadd.f32 %v3123, 1.0
        %v3148 = vadd.f32 %v3124, 1.0
        %v3149 = vadd.f32 %v3125, 1.0
        %v3150 = vadd.f32 %v3126, 1.0
        %v3151 = vadd.f32 %v3127, 1.0
        %v3152 = vadd.f32 %v3128, 1.0
        %v3153 = vadd.f32 %v3129, 1.0
        %v3154 = vadd.f32 %v3130, 1.0
        %v3155 = vadd.f32 %v3131, 1.0
        %v3156 = vadd.f32 %v3132, 1.0
        %v3157 = vadd.f32 %v3133, 1.0
        %v3158 = vadd.f32 %v3134, 1.0
        %v3159 = vadd.f32 %v3135, 1.0
        %v3160 = vadd.f32 %v3136, 1.0
        %v3161 = vadd.f32 %v3137, 1.0
        %v3162 = vadd.f32 %v3138, 1.0
        %v3163 = vadd.f32 %v3139, 1.0
        %v3164 = vadd.f32 %v3140, 1.0
        %v3165 = vadd.f32 %v3141, 1.0
        %v3166 = vadd.f32 %v3142, 1.0
        %v3167 = vadd.f32 %v3143, 1.0
        %v3168 = vadd.f32 %v3144, 1.0
        %v3169 = vadd.f32 %v3145, 1.0
        %v3170 = vadd.f32 %v3146, 1.0
        %v3171 = vpack.c.bf16 %v3147, %v3147
        %v3172 = vpack.c.bf16 %v3148, %v3148
        %v3173 = vpack.c.bf16 %v3149, %v3149
        %v3174 = vpack.c.bf16 %v3150, %v3150
        %v3175 = vpack.c.bf16 %v3151, %v3151
        %v3176 = vpack.c.bf16 %v3152, %v3152
        %v3177 = vpack.c.bf16 %v3153, %v3153
        %v3178 = vpack.c.bf16 %v3154, %v3154
        %v3179 = vpack.c.bf16 %v3155, %v3155
        %v3180 = vpack.c.bf16 %v3156, %v3156
        %v3181 = vpack.c.bf16 %v3157, %v3157
        %v3182 = vpack.c.bf16 %v3158, %v3158
        %v3183 = vpack.c.bf16 %v3159, %v3159
        %v3184 = vpack.c.bf16 %v3160, %v3160
        %v3185 = vpack.c.bf16 %v3161, %v3161
        %v3186 = vpack.c.bf16 %v3162, %v3162
        %v3187 = vpack.c.bf16 %v3163, %v3163
        %v3188 = vpack.c.bf16 %v3164, %v3164
        %v3189 = vpack.c.bf16 %v3165, %v3165
        %v3190 = vpack.c.bf16 %v3166, %v3166
        %v3191 = vpack.c.bf16 %v3167, %v3167
        %v3192 = vpack.c.bf16 %v3168, %v3168
        %v3193 = vpack.c.bf16 %v3169, %v3169
        %v3194 = vpack.c.bf16 %v3170, %v3170
        %v3195 = vunpack.c.l.bf16 %v2691
        %v3196 = vunpack.c.l.bf16 %v2692
        %v3197 = vunpack.c.l.bf16 %v2693
        %v3198 = vunpack.c.l.bf16 %v2694
        %v3199 = vunpack.c.l.bf16 %v2695
        %v3200 = vunpack.c.l.bf16 %v2696
        %v3201 = vunpack.c.l.bf16 %v2697
        %v3202 = vunpack.c.l.bf16 %v2698
        %v3203 = vunpack.c.l.bf16 %v2699
        %v3204 = vunpack.c.l.bf16 %v2700
        %v3205 = vunpack.c.l.bf16 %v2701
        %v3206 = vunpack.c.l.bf16 %v2702
        %v3207 = vunpack.c.l.bf16 %v2703
        %v3208 = vunpack.c.l.bf16 %v2704
        %v3209 = vunpack.c.l.bf16 %v2705
        %v3210 = vunpack.c.l.bf16 %v2706
        %v3211 = vunpack.c.l.bf16 %v2707
        %v3212 = vunpack.c.l.bf16 %v2708
        %v3213 = vunpack.c.l.bf16 %v2709
        %v3214 = vunpack.c.l.bf16 %v2710
        %v3215 = vunpack.c.l.bf16 %v2711
        %v3216 = vunpack.c.l.bf16 %v2712
        %v3217 = vunpack.c.l.bf16 %v2713
        %v3218 = vunpack.c.l.bf16 %v2714
        %v3219 = vunpack.c.l.bf16 %v3171
        %v3220 = vunpack.c.l.bf16 %v3172
        %v3221 = vunpack.c.l.bf16 %v3173
        %v3222 = vunpack.c.l.bf16 %v3174
        %v3223 = vunpack.c.l.bf16 %v3175
        %v3224 = vunpack.c.l.bf16 %v3176
        %v3225 = vunpack.c.l.bf16 %v3177
        %v3226 = vunpack.c.l.bf16 %v3178
        %v3227 = vunpack.c.l.bf16 %v3179
        %v3228 = vunpack.c.l.bf16 %v3180
        %v3229 = vunpack.c.l.bf16 %v3181
        %v3230 = vunpack.c.l.bf16 %v3182
        %v3231 = vunpack.c.l.bf16 %v3183
        %v3232 = vunpack.c.l.bf16 %v3184
        %v3233 = vunpack.c.l.bf16 %v3185
        %v3234 = vunpack.c.l.bf16 %v3186
        %v3235 = vunpack.c.l.bf16 %v3187
        %v3236 = vunpack.c.l.bf16 %v3188
        %v3237 = vunpack.c.l.bf16 %v3189
        %v3238 = vunpack.c.l.bf16 %v3190
        %v3239 = vunpack.c.l.bf16 %v3191
        %v3240 = vunpack.c.l.bf16 %v3192
        %v3241 = vunpack.c.l.bf16 %v3193
        %v3242 = vunpack.c.l.bf16 %v3194
        %v3243 = vmul.f32 %v3195, %v3219
        %v3244 = vmul.f32 %v3196, %v3220
        %v3245 = vmul.f32 %v3197, %v3221
        %v3246 = vmul.f32 %v3198, %v3222
        %v3247 = vmul.f32 %v3199, %v3223
        %v3248 = vmul.f32 %v3200, %v3224
        %v3249 = vmul.f32 %v3201, %v3225
        %v3250 = vmul.f32 %v3202, %v3226
        %v3251 = vmul.f32 %v3203, %v3227
        %v3252 = vmul.f32 %v3204, %v3228
        %v3253 = vmul.f32 %v3205, %v3229
        %v3254 = vmul.f32 %v3206, %v3230
        %v3255 = vmul.f32 %v3207, %v3231
        %v3256 = vmul.f32 %v3208, %v3232
        %v3257 = vmul.f32 %v3209, %v3233
        %v3258 = vmul.f32 %v3210, %v3234
        %v3259 = vmul.f32 %v3211, %v3235
        %v3260 = vmul.f32 %v3212, %v3236
        %v3261 = vmul.f32 %v3213, %v3237
        %v3262 = vmul.f32 %v3214, %v3238
        %v3263 = vmul.f32 %v3215, %v3239
        %v3264 = vmul.f32 %v3216, %v3240
        %v3265 = vmul.f32 %v3217, %v3241
        %v3266 = vmul.f32 %v3218, %v3242
        %v3267 = vpack.c.bf16 %v3243, %v3243
        %v3268 = vpack.c.bf16 %v3244, %v3244
        %v3269 = vpack.c.bf16 %v3245, %v3245
        %v3270 = vpack.c.bf16 %v3246, %v3246
        %v3271 = vpack.c.bf16 %v3247, %v3247
        %v3272 = vpack.c.bf16 %v3248, %v3248
        %v3273 = vpack.c.bf16 %v3249, %v3249
        %v3274 = vpack.c.bf16 %v3250, %v3250
        %v3275 = vpack.c.bf16 %v3251, %v3251
        %v3276 = vpack.c.bf16 %v3252, %v3252
        %v3277 = vpack.c.bf16 %v3253, %v3253
        %v3278 = vpack.c.bf16 %v3254, %v3254
        %v3279 = vpack.c.bf16 %v3255, %v3255
        %v3280 = vpack.c.bf16 %v3256, %v3256
        %v3281 = vpack.c.bf16 %v3257, %v3257
        %v3282 = vpack.c.bf16 %v3258, %v3258
        %v3283 = vpack.c.bf16 %v3259, %v3259
        %v3284 = vpack.c.bf16 %v3260, %v3260
        %v3285 = vpack.c.bf16 %v3261, %v3261
        %v3286 = vpack.c.bf16 %v3262, %v3262
        %v3287 = vpack.c.bf16 %v3263, %v3263
        %v3288 = vpack.c.bf16 %v3264, %v3264
        %v3289 = vpack.c.bf16 %v3265, %v3265
        %v3290 = vpack.c.bf16 %v3266, %v3266
        %v3291 = vld [vmem:[#allocation7] sm:$0xf]
        %v3292 = vld [vmem:[#allocation7 + $0x4] sm:$0xf]
        %v3293 = vld [vmem:[#allocation7 + $0x8] sm:$0xf]
        %v3294 = vld [vmem:[#allocation7 + $0xc] sm:$0xf]
        %v3295 = vld [vmem:[#allocation7 + $0x10] sm:$0xf]
        %v3296 = vld [vmem:[#allocation7 + $0x14] sm:$0xf]
        %v3297 = vld [vmem:[#allocation7 + $0x18] sm:$0xf]
        %v3298 = vld [vmem:[#allocation7 + $0x1c] sm:$0xf]
        %v3299 = vld [vmem:[#allocation7 + $0x20] sm:$0xf]
        %v3300 = vld [vmem:[#allocation7 + $0x24] sm:$0xf]
        %v3301 = vld [vmem:[#allocation7 + $0x28] sm:$0xf]
        %v3302 = vld [vmem:[#allocation7 + $0x2c] sm:$0xf]
        %v3303 = vld [vmem:[#allocation7 + $0x30] sm:$0xf]
        %v3304 = vld [vmem:[#allocation7 + $0x34] sm:$0xf]
        %v3305 = vld [vmem:[#allocation7 + $0x38] sm:$0xf]
        %v3306 = vld [vmem:[#allocation7 + $0x3c] sm:$0xf]
        %v3323 = vunpack.c.l.b16 %v3291
        %v3324 = vunpack.c.l.b16 %v3292
        %v3325 = vunpack.c.l.b16 %v3293
        %v3326 = vunpack.c.l.b16 %v3294
        %v3327 = vunpack.c.l.b16 %v3295
        %v3328 = vunpack.c.l.b16 %v3296
        %v3329 = vunpack.c.l.b16 %v3297
        %v3330 = vunpack.c.l.b16 %v3298
        %v3331 = vunpack.c.l.b16 %v3299
        %v3332 = vunpack.c.l.b16 %v3300
        %v3333 = vunpack.c.l.b16 %v3301
        %v3334 = vunpack.c.l.b16 %v3302
        %v3335 = vunpack.c.l.b16 %v3303
        %v3336 = vunpack.c.l.b16 %v3304
        %v3337 = vunpack.c.l.b16 %v3305
        %v3338 = vunpack.c.l.b16 %v3306
        %v3339 = vpack.c.b16 %v3324, %v3323
        %v3340 = vpack.c.b16 %v3326, %v3325
        %v3341 = vpack.c.b16 %v3328, %v3327
        %v3342 = vpack.c.b16 %v3330, %v3329
        %v3343 = vpack.c.b16 %v3332, %v3331
        %v3344 = vpack.c.b16 %v3334, %v3333
        %v3345 = vpack.c.b16 %v3336, %v3335
        %v3346 = vpack.c.b16 %v3338, %v3337
        %3355 = vmatpush.bf16.msra.mxu0 %v3346
        %3356 = vmatpush.bf16.msra.mxu0 %v3345
        %3357 = vmatpush.bf16.msra.mxu0 %v3344
        %3358 = vmatpush.bf16.msra.mxu0 %v3343
        %3359 = vmatpush.bf16.msra.mxu0 %v3342
        %3360 = vmatpush.bf16.msra.mxu0 %v3341
        %3361 = vmatpush.bf16.msra.mxu0 %v3340
        %3362 = vmatpush.bf16.msra.mxu0 %v3339
        %3363 = vmatmul.bf16.gmra.mxu0 %v597
        %v3364 = vpop.f32.mrf.mxu0
        %v3365 = vpop.f32.mrf.mxu0
        %3366 = vmatmul.bf16.gmra.mxu0 %v598
        %v3367 = vpop.f32.mrf.mxu0
        %v3368 = vpop.f32.mrf.mxu0
        %3369 = vmatmul.bf16.gmra.mxu0 %v599
        %v3370 = vpop.f32.mrf.mxu0
        %v3371 = vadd.f32 0.0, %v3370
        %v3372 = vpop.f32.mrf.mxu0
        %v3373 = vadd.f32 0.0, %v3372
        %3374 = vmatmul.bf16.gmra.mxu0 %v600
        %v3375 = vpop.f32.mrf.mxu0
        %v3376 = vadd.f32 0.0, %v3375
        %v3377 = vpop.f32.mrf.mxu0
        %3378 = vmatmul.bf16.gmra.mxu0 %v601
        %v3379 = vpop.f32.mrf.mxu0
        %v3380 = vadd.f32 0.0, %v3379
        %v3381 = vpop.f32.mrf.mxu0
        %v3382 = vadd.f32 0.0, %v3381
        %3383 = vmatmul.bf16.gmra.mxu0 %v602
        %v3384 = vpop.f32.mrf.mxu0
        %v3385 = vadd.f32 0.0, %v3384
        %v3386 = vpop.f32.mrf.mxu0
        %3387 = vmatmul.bf16.gmra.mxu0 %v603
        %v3388 = vpop.f32.mrf.mxu0
        %v3389 = vadd.f32 0.0, %v3388
        %v3390 = vpop.f32.mrf.mxu0
        %v3391 = vadd.f32 0.0, %v3390
        %3392 = vmatmul.bf16.gmra.mxu0 %v604
        %v3393 = vpop.f32.mrf.mxu0
        %v3394 = vadd.f32 0.0, %v3393
        %v3395 = vpop.f32.mrf.mxu0
        %3396 = vmatmul.bf16.gmra.mxu0 %v605
        %v3397 = vpop.f32.mrf.mxu0
        %v3398 = vadd.f32 0.0, %v3397
        %v3399 = vpop.f32.mrf.mxu0
        %v3400 = vadd.f32 0.0, %v3399
        %3401 = vmatmul.bf16.gmra.mxu0 %v606
        %v3402 = vpop.f32.mrf.mxu0
        %v3403 = vadd.f32 0.0, %v3402
        %v3404 = vpop.f32.mrf.mxu0
        %3405 = vmatmul.bf16.gmra.mxu0 %v607
        %v3406 = vpop.f32.mrf.mxu0
        %v3407 = vadd.f32 0.0, %v3406
        %v3408 = vpop.f32.mrf.mxu0
        %v3409 = vadd.f32 0.0, %v3408
        %3410 = vmatmul.bf16.gmra.mxu0 %v608
        %v3411 = vpop.f32.mrf.mxu0
        %v3412 = vadd.f32 0.0, %v3411
        %v3413 = vpop.f32.mrf.mxu0
        %3414 = vmatmul.bf16.gmra.mxu0 %v609
        %v3415 = vpop.f32.mrf.mxu0
        %v3416 = vadd.f32 0.0, %v3415
        %v3417 = vpop.f32.mrf.mxu0
        %v3418 = vadd.f32 0.0, %v3417
        %3419 = vmatmul.bf16.gmra.mxu0 %v610
        %v3420 = vpop.f32.mrf.mxu0
        %v3421 = vadd.f32 0.0, %v3420
        %v3422 = vpop.f32.mrf.mxu0
        %3423 = vmatmul.bf16.gmra.mxu0 %v611
        %v3424 = vpop.f32.mrf.mxu0
        %v3425 = vadd.f32 0.0, %v3424
        %v3426 = vpop.f32.mrf.mxu0
        %v3427 = vadd.f32 0.0, %v3426
        %3428 = vmatmul.bf16.gmra.mxu0 %v612
        %v3429 = vpop.f32.mrf.mxu0
        %v3430 = vadd.f32 0.0, %v3429
        %v3431 = vpop.f32.mrf.mxu0
        %3432 = vmatmul.bf16.gmra.mxu0 %v613
        %v3433 = vpop.f32.mrf.mxu0
        %v3434 = vadd.f32 0.0, %v3433
        %v3435 = vpop.f32.mrf.mxu0
        %v3436 = vadd.f32 0.0, %v3435
        %3437 = vmatmul.bf16.gmra.mxu0 %v614
        %v3438 = vpop.f32.mrf.mxu0
        %v3439 = vadd.f32 0.0, %v3438
        %v3440 = vpop.f32.mrf.mxu0
        %3441 = vmatmul.bf16.gmra.mxu0 %v615
        %v3442 = vpop.f32.mrf.mxu0
        %v3443 = vadd.f32 0.0, %v3442
        %v3444 = vpop.f32.mrf.mxu0
        %v3445 = vadd.f32 0.0, %v3444
        %3446 = vmatmul.bf16.gmra.mxu0 %v616
        %v3447 = vpop.f32.mrf.mxu0
        %v3448 = vadd.f32 0.0, %v3447
        %v3449 = vpop.f32.mrf.mxu0
        %3450 = vmatmul.bf16.gmra.mxu0 %v617
        %v3451 = vpop.f32.mrf.mxu0
        %v3452 = vadd.f32 0.0, %v3451
        %v3453 = vpop.f32.mrf.mxu0
        %v3454 = vadd.f32 0.0, %v3453
        %3455 = vmatmul.bf16.gmra.mxu0 %v618
        %v3456 = vpop.f32.mrf.mxu0
        %v3457 = vadd.f32 0.0, %v3456
        %v3458 = vpop.f32.mrf.mxu0
        %3459 = vmatmul.bf16.gmra.mxu0 %v619
        %v3460 = vpop.f32.mrf.mxu0
        %v3461 = vadd.f32 0.0, %v3460
        %v3462 = vpop.f32.mrf.mxu0
        %v3463 = vadd.f32 0.0, %v3462
        %3464 = vmatmul.bf16.gmra.mxu0 %v620
        %v3465 = vpop.f32.mrf.mxu0
        %v3466 = vadd.f32 0.0, %v3465
        %v3467 = vpop.f32.mrf.mxu0
        %3468 = vmatmul.bf16.gmra.mxu0 %v621
        %v3469 = vpop.f32.mrf.mxu0
        %v3470 = vadd.f32 0.0, %v3469
        %v3471 = vpop.f32.mrf.mxu0
        %v3472 = vadd.f32 0.0, %v3471
        %3473 = vmatmul.bf16.gmra.mxu0 %v622
        %v3474 = vpop.f32.mrf.mxu0
        %v3475 = vadd.f32 0.0, %v3474
        %v3476 = vpop.f32.mrf.mxu0
        %3477 = vmatmul.bf16.gmra.mxu0 %v623
        %v3478 = vpop.f32.mrf.mxu0
        %v3479 = vpop.f32.mrf.mxu0
        %3480 = vmatmul.bf16.gmra.mxu0 %v624
        %v3481 = vpop.f32.mrf.mxu0
        %v3482 = vpop.f32.mrf.mxu0
        %3483 = vdwg.mxu0
        %v3484 = vpack.c.bf16 %v3371, %v3371
        %v3485 = vpack.c.bf16 %v3373, %v3373
        %v3486 = vpack.c.bf16 %v3376, %v3376
        %v3487 = vpack.c.bf16 %v3380, %v3380
        %v3488 = vpack.c.bf16 %v3382, %v3382
        %v3489 = vpack.c.bf16 %v3385, %v3385
        %v3490 = vpack.c.bf16 %v3389, %v3389
        %v3491 = vpack.c.bf16 %v3391, %v3391
        %v3492 = vpack.c.bf16 %v3394, %v3394
        %v3493 = vpack.c.bf16 %v3398, %v3398
        %v3494 = vpack.c.bf16 %v3400, %v3400
        %v3495 = vpack.c.bf16 %v3403, %v3403
        %v3496 = vpack.c.bf16 %v3407, %v3407
        %v3497 = vpack.c.bf16 %v3409, %v3409
        %v3498 = vpack.c.bf16 %v3412, %v3412
        %v3499 = vpack.c.bf16 %v3416, %v3416
        %v3500 = vpack.c.bf16 %v3418, %v3418
        %v3501 = vpack.c.bf16 %v3421, %v3421
        %v3502 = vpack.c.bf16 %v3425, %v3425
        %v3503 = vpack.c.bf16 %v3427, %v3427
        %v3504 = vpack.c.bf16 %v3430, %v3430
        %v3505 = vpack.c.bf16 %v3434, %v3434
        %v3506 = vpack.c.bf16 %v3436, %v3436
        %v3507 = vpack.c.bf16 %v3439, %v3439
        %v3508 = vpack.c.bf16 %v3443, %v3443
        %v3509 = vpack.c.bf16 %v3445, %v3445
        %v3510 = vpack.c.bf16 %v3448, %v3448
        %v3511 = vpack.c.bf16 %v3452, %v3452
        %v3512 = vpack.c.bf16 %v3454, %v3454
        %v3513 = vpack.c.bf16 %v3457, %v3457
        %v3514 = vpack.c.bf16 %v3461, %v3461
        %v3515 = vpack.c.bf16 %v3463, %v3463
        %v3516 = vpack.c.bf16 %v3466, %v3466
        %v3517 = vpack.c.bf16 %v3470, %v3470
        %v3518 = vpack.c.bf16 %v3472, %v3472
        %v3519 = vpack.c.bf16 %v3475, %v3475
        %v3520 = vld [vmem:[#allocation12] sm:$0xf]
        %v3521 = vld [vmem:[#allocation12 + $0x4] sm:$0x1]
        %v3523 = vpack.i.b16 %v3520, %v3520
        %v3525 = vperm.slane %v3523, 0
        %v3526 = vunpack.c.l.bf16 %v3484
        %v3527 = vunpack.c.l.bf16 %v3485
        %v3528 = vunpack.c.l.bf16 %v3486
        %v3529 = vunpack.c.l.bf16 %v3487
        %v3530 = vunpack.c.l.bf16 %v3488
        %v3531 = vunpack.c.l.bf16 %v3489
        %v3532 = vunpack.c.l.bf16 %v3490
        %v3533 = vunpack.c.l.bf16 %v3491
        %v3534 = vunpack.c.l.bf16 %v3492
        %v3535 = vunpack.c.l.bf16 %v3493
        %v3536 = vunpack.c.l.bf16 %v3494
        %v3537 = vunpack.c.l.bf16 %v3495
        %v3538 = vunpack.c.l.bf16 %v3496
        %v3539 = vunpack.c.l.bf16 %v3497
        %v3540 = vunpack.c.l.bf16 %v3498
        %v3541 = vunpack.c.l.bf16 %v3499
        %v3542 = vunpack.c.l.bf16 %v3500
        %v3543 = vunpack.c.l.bf16 %v3501
        %v3544 = vunpack.c.l.bf16 %v3502
        %v3545 = vunpack.c.l.bf16 %v3503
        %v3546 = vunpack.c.l.bf16 %v3504
        %v3547 = vunpack.c.l.bf16 %v3505
        %v3548 = vunpack.c.l.bf16 %v3506
        %v3549 = vunpack.c.l.bf16 %v3507
        %v3550 = vunpack.c.l.bf16 %v3525
        %v3551 = vmul.f32 %v3526, %v3550
        %v3552 = vmul.f32 %v3527, %v3550
        %v3553 = vmul.f32 %v3528, %v3550
        %v3554 = vmul.f32 %v3529, %v3550
        %v3555 = vmul.f32 %v3530, %v3550
        %v3556 = vmul.f32 %v3531, %v3550
        %v3557 = vmul.f32 %v3532, %v3550
        %v3558 = vmul.f32 %v3533, %v3550
        %v3559 = vmul.f32 %v3534, %v3550
        %v3560 = vmul.f32 %v3535, %v3550
        %v3561 = vmul.f32 %v3536, %v3550
        %v3562 = vmul.f32 %v3537, %v3550
        %v3563 = vmul.f32 %v3538, %v3550
        %v3564 = vmul.f32 %v3539, %v3550
        %v3565 = vmul.f32 %v3540, %v3550
        %v3566 = vmul.f32 %v3541, %v3550
        %v3567 = vmul.f32 %v3542, %v3550
        %v3568 = vmul.f32 %v3543, %v3550
        %v3569 = vmul.f32 %v3544, %v3550
        %v3570 = vmul.f32 %v3545, %v3550
        %v3571 = vmul.f32 %v3546, %v3550
        %v3572 = vmul.f32 %v3547, %v3550
        %v3573 = vmul.f32 %v3548, %v3550
        %v3574 = vmul.f32 %v3549, %v3550
        %v3575 = vpack.c.bf16 %v3551, %v3551
        %v3576 = vpack.c.bf16 %v3552, %v3552
        %v3577 = vpack.c.bf16 %v3553, %v3553
        %v3578 = vpack.c.bf16 %v3554, %v3554
        %v3579 = vpack.c.bf16 %v3555, %v3555
        %v3580 = vpack.c.bf16 %v3556, %v3556
        %v3581 = vpack.c.bf16 %v3557, %v3557
        %v3582 = vpack.c.bf16 %v3558, %v3558
        %v3583 = vpack.c.bf16 %v3559, %v3559
        %v3584 = vpack.c.bf16 %v3560, %v3560
        %v3585 = vpack.c.bf16 %v3561, %v3561
        %v3586 = vpack.c.bf16 %v3562, %v3562
        %v3587 = vpack.c.bf16 %v3563, %v3563
        %v3588 = vpack.c.bf16 %v3564, %v3564
        %v3589 = vpack.c.bf16 %v3565, %v3565
        %v3590 = vpack.c.bf16 %v3566, %v3566
        %v3591 = vpack.c.bf16 %v3567, %v3567
        %v3592 = vpack.c.bf16 %v3568, %v3568
        %v3593 = vpack.c.bf16 %v3569, %v3569
        %v3594 = vpack.c.bf16 %v3570, %v3570
        %v3595 = vpack.c.bf16 %v3571, %v3571
        %v3596 = vpack.c.bf16 %v3572, %v3572
        %v3597 = vpack.c.bf16 %v3573, %v3573
        %v3598 = vpack.c.bf16 %v3574, %v3574
        %v3599 = vshrl.u32 %v3520, 16
        %v3600 = vpack.i.b16 %v3599, %v3599
        %v3602 = vperm.slane %v3600, 1
        %v3603 = vunpack.c.l.bf16 %v3508
        %v3604 = vunpack.c.l.bf16 %v3509
        %v3605 = vunpack.c.l.bf16 %v3510
        %v3606 = vunpack.c.l.bf16 %v3511
        %v3607 = vunpack.c.l.bf16 %v3512
        %v3608 = vunpack.c.l.bf16 %v3513
        %v3609 = vunpack.c.l.bf16 %v3602
        %v3610 = vmul.f32 %v3532, %v3609
        %v3611 = vmul.f32 %v3533, %v3609
        %v3612 = vmul.f32 %v3534, %v3609
        %v3613 = vmul.f32 %v3535, %v3609
        %v3614 = vmul.f32 %v3536, %v3609
        %v3615 = vmul.f32 %v3537, %v3609
        %v3616 = vmul.f32 %v3538, %v3609
        %v3617 = vmul.f32 %v3539, %v3609
        %v3618 = vmul.f32 %v3540, %v3609
        %v3619 = vmul.f32 %v3541, %v3609
        %v3620 = vmul.f32 %v3542, %v3609
        %v3621 = vmul.f32 %v3543, %v3609
        %v3622 = vmul.f32 %v3544, %v3609
        %v3623 = vmul.f32 %v3545, %v3609
        %v3624 = vmul.f32 %v3546, %v3609
        %v3625 = vmul.f32 %v3547, %v3609
        %v3626 = vmul.f32 %v3548, %v3609
        %v3627 = vmul.f32 %v3549, %v3609
        %v3628 = vmul.f32 %v3603, %v3609
        %v3629 = vmul.f32 %v3604, %v3609
        %v3630 = vmul.f32 %v3605, %v3609
        %v3631 = vmul.f32 %v3606, %v3609
        %v3632 = vmul.f32 %v3607, %v3609
        %v3633 = vmul.f32 %v3608, %v3609
        %v3634 = vpack.c.bf16 %v3610, %v3610
        %v3635 = vpack.c.bf16 %v3611, %v3611
        %v3636 = vpack.c.bf16 %v3612, %v3612
        %v3637 = vpack.c.bf16 %v3613, %v3613
        %v3638 = vpack.c.bf16 %v3614, %v3614
        %v3639 = vpack.c.bf16 %v3615, %v3615
        %v3640 = vpack.c.bf16 %v3616, %v3616
        %v3641 = vpack.c.bf16 %v3617, %v3617
        %v3642 = vpack.c.bf16 %v3618, %v3618
        %v3643 = vpack.c.bf16 %v3619, %v3619
        %v3644 = vpack.c.bf16 %v3620, %v3620
        %v3645 = vpack.c.bf16 %v3621, %v3621
        %v3646 = vpack.c.bf16 %v3622, %v3622
        %v3647 = vpack.c.bf16 %v3623, %v3623
        %v3648 = vpack.c.bf16 %v3624, %v3624
        %v3649 = vpack.c.bf16 %v3625, %v3625
        %v3650 = vpack.c.bf16 %v3626, %v3626
        %v3651 = vpack.c.bf16 %v3627, %v3627
        %v3652 = vpack.c.bf16 %v3628, %v3628
        %v3653 = vpack.c.bf16 %v3629, %v3629
        %v3654 = vpack.c.bf16 %v3630, %v3630
        %v3655 = vpack.c.bf16 %v3631, %v3631
        %v3656 = vpack.c.bf16 %v3632, %v3632
        %v3657 = vpack.c.bf16 %v3633, %v3633
        %v3658 = vunpack.c.l.bf16 %v3575
        %v3659 = vunpack.c.l.bf16 %v3576
        %v3660 = vunpack.c.l.bf16 %v3577
        %v3661 = vunpack.c.l.bf16 %v3578
        %v3662 = vunpack.c.l.bf16 %v3579
        %v3663 = vunpack.c.l.bf16 %v3580
        %v3664 = vunpack.c.l.bf16 %v3581
        %v3665 = vunpack.c.l.bf16 %v3582
        %v3666 = vunpack.c.l.bf16 %v3583
        %v3667 = vunpack.c.l.bf16 %v3584
        %v3668 = vunpack.c.l.bf16 %v3585
        %v3669 = vunpack.c.l.bf16 %v3586
        %v3670 = vunpack.c.l.bf16 %v3587
        %v3671 = vunpack.c.l.bf16 %v3588
        %v3672 = vunpack.c.l.bf16 %v3589
        %v3673 = vunpack.c.l.bf16 %v3590
        %v3674 = vunpack.c.l.bf16 %v3591
        %v3675 = vunpack.c.l.bf16 %v3592
        %v3676 = vunpack.c.l.bf16 %v3593
        %v3677 = vunpack.c.l.bf16 %v3594
        %v3678 = vunpack.c.l.bf16 %v3595
        %v3679 = vunpack.c.l.bf16 %v3596
        %v3680 = vunpack.c.l.bf16 %v3597
        %v3681 = vunpack.c.l.bf16 %v3598
        %v3682 = vunpack.c.l.bf16 %v3634
        %v3683 = vunpack.c.l.bf16 %v3635
        %v3684 = vunpack.c.l.bf16 %v3636
        %v3685 = vunpack.c.l.bf16 %v3637
        %v3686 = vunpack.c.l.bf16 %v3638
        %v3687 = vunpack.c.l.bf16 %v3639
        %v3688 = vunpack.c.l.bf16 %v3640
        %v3689 = vunpack.c.l.bf16 %v3641
        %v3690 = vunpack.c.l.bf16 %v3642
        %v3691 = vunpack.c.l.bf16 %v3643
        %v3692 = vunpack.c.l.bf16 %v3644
        %v3693 = vunpack.c.l.bf16 %v3645
        %v3694 = vunpack.c.l.bf16 %v3646
        %v3695 = vunpack.c.l.bf16 %v3647
        %v3696 = vunpack.c.l.bf16 %v3648
        %v3697 = vunpack.c.l.bf16 %v3649
        %v3698 = vunpack.c.l.bf16 %v3650
        %v3699 = vunpack.c.l.bf16 %v3651
        %v3700 = vunpack.c.l.bf16 %v3652
        %v3701 = vunpack.c.l.bf16 %v3653
        %v3702 = vunpack.c.l.bf16 %v3654
        %v3703 = vunpack.c.l.bf16 %v3655
        %v3704 = vunpack.c.l.bf16 %v3656
        %v3705 = vunpack.c.l.bf16 %v3657
        %v3706 = vadd.f32 %v3658, %v3682
        %v3707 = vadd.f32 %v3659, %v3683
        %v3708 = vadd.f32 %v3660, %v3684
        %v3709 = vadd.f32 %v3661, %v3685
        %v3710 = vadd.f32 %v3662, %v3686
        %v3711 = vadd.f32 %v3663, %v3687
        %v3712 = vadd.f32 %v3664, %v3688
        %v3713 = vadd.f32 %v3665, %v3689
        %v3714 = vadd.f32 %v3666, %v3690
        %v3715 = vadd.f32 %v3667, %v3691
        %v3716 = vadd.f32 %v3668, %v3692
        %v3717 = vadd.f32 %v3669, %v3693
        %v3718 = vadd.f32 %v3670, %v3694
        %v3719 = vadd.f32 %v3671, %v3695
        %v3720 = vadd.f32 %v3672, %v3696
        %v3721 = vadd.f32 %v3673, %v3697
        %v3722 = vadd.f32 %v3674, %v3698
        %v3723 = vadd.f32 %v3675, %v3699
        %v3724 = vadd.f32 %v3676, %v3700
        %v3725 = vadd.f32 %v3677, %v3701
        %v3726 = vadd.f32 %v3678, %v3702
        %v3727 = vadd.f32 %v3679, %v3703
        %v3728 = vadd.f32 %v3680, %v3704
        %v3729 = vadd.f32 %v3681, %v3705
        %v3730 = vpack.c.bf16 %v3706, %v3706
        %v3731 = vpack.c.bf16 %v3707, %v3707
        %v3732 = vpack.c.bf16 %v3708, %v3708
        %v3733 = vpack.c.bf16 %v3709, %v3709
        %v3734 = vpack.c.bf16 %v3710, %v3710
        %v3735 = vpack.c.bf16 %v3711, %v3711
        %v3736 = vpack.c.bf16 %v3712, %v3712
        %v3737 = vpack.c.bf16 %v3713, %v3713
        %v3738 = vpack.c.bf16 %v3714, %v3714
        %v3739 = vpack.c.bf16 %v3715, %v3715
        %v3740 = vpack.c.bf16 %v3716, %v3716
        %v3741 = vpack.c.bf16 %v3717, %v3717
        %v3742 = vpack.c.bf16 %v3718, %v3718
        %v3743 = vpack.c.bf16 %v3719, %v3719
        %v3744 = vpack.c.bf16 %v3720, %v3720
        %v3745 = vpack.c.bf16 %v3721, %v3721
        %v3746 = vpack.c.bf16 %v3722, %v3722
        %v3747 = vpack.c.bf16 %v3723, %v3723
        %v3748 = vpack.c.bf16 %v3724, %v3724
        %v3749 = vpack.c.bf16 %v3725, %v3725
        %v3750 = vpack.c.bf16 %v3726, %v3726
        %v3751 = vpack.c.bf16 %v3727, %v3727
        %v3752 = vpack.c.bf16 %v3728, %v3728
        %v3753 = vpack.c.bf16 %v3729, %v3729
        %v3754 = vperm.slane %v3523, 3
        %v3755 = vunpack.c.l.bf16 %v3514
        %v3756 = vunpack.c.l.bf16 %v3515
        %v3757 = vunpack.c.l.bf16 %v3516
        %v3758 = vunpack.c.l.bf16 %v3517
        %v3759 = vunpack.c.l.bf16 %v3518
        %v3760 = vunpack.c.l.bf16 %v3519
        %v3761 = vunpack.c.l.bf16 %v3754
        %v3762 = vmul.f32 %v3538, %v3761
        %v3763 = vmul.f32 %v3539, %v3761
        %v3764 = vmul.f32 %v3540, %v3761
        %v3765 = vmul.f32 %v3541, %v3761
        %v3766 = vmul.f32 %v3542, %v3761
        %v3767 = vmul.f32 %v3543, %v3761
        %v3768 = vmul.f32 %v3544, %v3761
        %v3769 = vmul.f32 %v3545, %v3761
        %v3770 = vmul.f32 %v3546, %v3761
        %v3771 = vmul.f32 %v3547, %v3761
        %v3772 = vmul.f32 %v3548, %v3761
        %v3773 = vmul.f32 %v3549, %v3761
        %v3774 = vmul.f32 %v3603, %v3761
        %v3775 = vmul.f32 %v3604, %v3761
        %v3776 = vmul.f32 %v3605, %v3761
        %v3777 = vmul.f32 %v3606, %v3761
        %v3778 = vmul.f32 %v3607, %v3761
        %v3779 = vmul.f32 %v3608, %v3761
        %v3780 = vmul.f32 %v3755, %v3761
        %v3781 = vmul.f32 %v3756, %v3761
        %v3782 = vmul.f32 %v3757, %v3761
        %v3783 = vmul.f32 %v3758, %v3761
        %v3784 = vmul.f32 %v3759, %v3761
        %v3785 = vmul.f32 %v3760, %v3761
        %v3786 = vpack.c.bf16 %v3762, %v3762
        %v3787 = vpack.c.bf16 %v3763, %v3763
        %v3788 = vpack.c.bf16 %v3764, %v3764
        %v3789 = vpack.c.bf16 %v3765, %v3765
        %v3790 = vpack.c.bf16 %v3766, %v3766
        %v3791 = vpack.c.bf16 %v3767, %v3767
        %v3792 = vpack.c.bf16 %v3768, %v3768
        %v3793 = vpack.c.bf16 %v3769, %v3769
        %v3794 = vpack.c.bf16 %v3770, %v3770
        %v3795 = vpack.c.bf16 %v3771, %v3771
        %v3796 = vpack.c.bf16 %v3772, %v3772
        %v3797 = vpack.c.bf16 %v3773, %v3773
        %v3798 = vpack.c.bf16 %v3774, %v3774
        %v3799 = vpack.c.bf16 %v3775, %v3775
        %v3800 = vpack.c.bf16 %v3776, %v3776
        %v3801 = vpack.c.bf16 %v3777, %v3777
        %v3802 = vpack.c.bf16 %v3778, %v3778
        %v3803 = vpack.c.bf16 %v3779, %v3779
        %v3804 = vpack.c.bf16 %v3780, %v3780
        %v3805 = vpack.c.bf16 %v3781, %v3781
        %v3806 = vpack.c.bf16 %v3782, %v3782
        %v3807 = vpack.c.bf16 %v3783, %v3783
        %v3808 = vpack.c.bf16 %v3784, %v3784
        %v3809 = vpack.c.bf16 %v3785, %v3785
        %v3810 = vunpack.c.l.bf16 %v3730
        %v3811 = vunpack.c.l.bf16 %v3731
        %v3812 = vunpack.c.l.bf16 %v3732
        %v3813 = vunpack.c.l.bf16 %v3733
        %v3814 = vunpack.c.l.bf16 %v3734
        %v3815 = vunpack.c.l.bf16 %v3735
        %v3816 = vunpack.c.l.bf16 %v3736
        %v3817 = vunpack.c.l.bf16 %v3737
        %v3818 = vunpack.c.l.bf16 %v3738
        %v3819 = vunpack.c.l.bf16 %v3739
        %v3820 = vunpack.c.l.bf16 %v3740
        %v3821 = vunpack.c.l.bf16 %v3741
        %v3822 = vunpack.c.l.bf16 %v3742
        %v3823 = vunpack.c.l.bf16 %v3743
        %v3824 = vunpack.c.l.bf16 %v3744
        %v3825 = vunpack.c.l.bf16 %v3745
        %v3826 = vunpack.c.l.bf16 %v3746
        %v3827 = vunpack.c.l.bf16 %v3747
        %v3828 = vunpack.c.l.bf16 %v3748
        %v3829 = vunpack.c.l.bf16 %v3749
        %v3830 = vunpack.c.l.bf16 %v3750
        %v3831 = vunpack.c.l.bf16 %v3751
        %v3832 = vunpack.c.l.bf16 %v3752
        %v3833 = vunpack.c.l.bf16 %v3753
        %v3834 = vunpack.c.l.bf16 %v3786
        %v3835 = vunpack.c.l.bf16 %v3787
        %v3836 = vunpack.c.l.bf16 %v3788
        %v3837 = vunpack.c.l.bf16 %v3789
        %v3838 = vunpack.c.l.bf16 %v3790
        %v3839 = vunpack.c.l.bf16 %v3791
        %v3840 = vunpack.c.l.bf16 %v3792
        %v3841 = vunpack.c.l.bf16 %v3793
        %v3842 = vunpack.c.l.bf16 %v3794
        %v3843 = vunpack.c.l.bf16 %v3795
        %v3844 = vunpack.c.l.bf16 %v3796
        %v3845 = vunpack.c.l.bf16 %v3797
        %v3846 = vunpack.c.l.bf16 %v3798
        %v3847 = vunpack.c.l.bf16 %v3799
        %v3848 = vunpack.c.l.bf16 %v3800
        %v3849 = vunpack.c.l.bf16 %v3801
        %v3850 = vunpack.c.l.bf16 %v3802
        %v3851 = vunpack.c.l.bf16 %v3803
        %v3852 = vunpack.c.l.bf16 %v3804
        %v3853 = vunpack.c.l.bf16 %v3805
        %v3854 = vunpack.c.l.bf16 %v3806
        %v3855 = vunpack.c.l.bf16 %v3807
        %v3856 = vunpack.c.l.bf16 %v3808
        %v3857 = vunpack.c.l.bf16 %v3809
        %v3858 = vadd.f32 %v3810, %v3834
        %v3859 = vadd.f32 %v3811, %v3835
        %v3860 = vadd.f32 %v3812, %v3836
        %v3861 = vadd.f32 %v3813, %v3837
        %v3862 = vadd.f32 %v3814, %v3838
        %v3863 = vadd.f32 %v3815, %v3839
        %v3864 = vadd.f32 %v3816, %v3840
        %v3865 = vadd.f32 %v3817, %v3841
        %v3866 = vadd.f32 %v3818, %v3842
        %v3867 = vadd.f32 %v3819, %v3843
        %v3868 = vadd.f32 %v3820, %v3844
        %v3869 = vadd.f32 %v3821, %v3845
        %v3870 = vadd.f32 %v3822, %v3846
        %v3871 = vadd.f32 %v3823, %v3847
        %v3872 = vadd.f32 %v3824, %v3848
        %v3873 = vadd.f32 %v3825, %v3849
        %v3874 = vadd.f32 %v3826, %v3850
        %v3875 = vadd.f32 %v3827, %v3851
        %v3876 = vadd.f32 %v3828, %v3852
        %v3877 = vadd.f32 %v3829, %v3853
        %v3878 = vadd.f32 %v3830, %v3854
        %v3879 = vadd.f32 %v3831, %v3855
        %v3880 = vadd.f32 %v3832, %v3856
        %v3881 = vadd.f32 %v3833, %v3857
        %v3882 = vpack.c.bf16 %v3858, %v3858
        %v3883 = vpack.c.bf16 %v3859, %v3859
        %v3884 = vpack.c.bf16 %v3860, %v3860
        %v3885 = vpack.c.bf16 %v3861, %v3861
        %v3886 = vpack.c.bf16 %v3862, %v3862
        %v3887 = vpack.c.bf16 %v3863, %v3863
        %v3888 = vpack.c.bf16 %v3864, %v3864
        %v3889 = vpack.c.bf16 %v3865, %v3865
        %v3890 = vpack.c.bf16 %v3866, %v3866
        %v3891 = vpack.c.bf16 %v3867, %v3867
        %v3892 = vpack.c.bf16 %v3868, %v3868
        %v3893 = vpack.c.bf16 %v3869, %v3869
        %v3894 = vpack.c.bf16 %v3870, %v3870
        %v3895 = vpack.c.bf16 %v3871, %v3871
        %v3896 = vpack.c.bf16 %v3872, %v3872
        %v3897 = vpack.c.bf16 %v3873, %v3873
        %v3898 = vpack.c.bf16 %v3874, %v3874
        %v3899 = vpack.c.bf16 %v3875, %v3875
        %v3900 = vpack.c.bf16 %v3876, %v3876
        %v3901 = vpack.c.bf16 %v3877, %v3877
        %v3902 = vpack.c.bf16 %v3878, %v3878
        %v3903 = vpack.c.bf16 %v3879, %v3879
        %v3904 = vpack.c.bf16 %v3880, %v3880
        %v3905 = vpack.c.bf16 %v3881, %v3881
        %v3906 = vperm.slane %v3600, 0
        %v3907 = vunpack.c.l.bf16 %v3906
        %v3908 = vmul.f32 %v3526, %v3907
        %v3909 = vmul.f32 %v3527, %v3907
        %v3910 = vmul.f32 %v3528, %v3907
        %v3911 = vmul.f32 %v3529, %v3907
        %v3912 = vmul.f32 %v3530, %v3907
        %v3913 = vmul.f32 %v3531, %v3907
        %v3914 = vmul.f32 %v3532, %v3907
        %v3915 = vmul.f32 %v3533, %v3907
        %v3916 = vmul.f32 %v3534, %v3907
        %v3917 = vmul.f32 %v3535, %v3907
        %v3918 = vmul.f32 %v3536, %v3907
        %v3919 = vmul.f32 %v3537, %v3907
        %v3920 = vmul.f32 %v3538, %v3907
        %v3921 = vmul.f32 %v3539, %v3907
        %v3922 = vmul.f32 %v3540, %v3907
        %v3923 = vmul.f32 %v3541, %v3907
        %v3924 = vmul.f32 %v3542, %v3907
        %v3925 = vmul.f32 %v3543, %v3907
        %v3926 = vmul.f32 %v3544, %v3907
        %v3927 = vmul.f32 %v3545, %v3907
        %v3928 = vmul.f32 %v3546, %v3907
        %v3929 = vmul.f32 %v3547, %v3907
        %v3930 = vmul.f32 %v3548, %v3907
        %v3931 = vmul.f32 %v3549, %v3907
        %v3932 = vpack.c.bf16 %v3908, %v3908
        %v3933 = vpack.c.bf16 %v3909, %v3909
        %v3934 = vpack.c.bf16 %v3910, %v3910
        %v3935 = vpack.c.bf16 %v3911, %v3911
        %v3936 = vpack.c.bf16 %v3912, %v3912
        %v3937 = vpack.c.bf16 %v3913, %v3913
        %v3938 = vpack.c.bf16 %v3914, %v3914
        %v3939 = vpack.c.bf16 %v3915, %v3915
        %v3940 = vpack.c.bf16 %v3916, %v3916
        %v3941 = vpack.c.bf16 %v3917, %v3917
        %v3942 = vpack.c.bf16 %v3918, %v3918
        %v3943 = vpack.c.bf16 %v3919, %v3919
        %v3944 = vpack.c.bf16 %v3920, %v3920
        %v3945 = vpack.c.bf16 %v3921, %v3921
        %v3946 = vpack.c.bf16 %v3922, %v3922
        %v3947 = vpack.c.bf16 %v3923, %v3923
        %v3948 = vpack.c.bf16 %v3924, %v3924
        %v3949 = vpack.c.bf16 %v3925, %v3925
        %v3950 = vpack.c.bf16 %v3926, %v3926
        %v3951 = vpack.c.bf16 %v3927, %v3927
        %v3952 = vpack.c.bf16 %v3928, %v3928
        %v3953 = vpack.c.bf16 %v3929, %v3929
        %v3954 = vpack.c.bf16 %v3930, %v3930
        %v3955 = vpack.c.bf16 %v3931, %v3931
        %v3956 = vunpack.c.l.bf16 %v3882
        %v3957 = vunpack.c.l.bf16 %v3883
        %v3958 = vunpack.c.l.bf16 %v3884
        %v3959 = vunpack.c.l.bf16 %v3885
        %v3960 = vunpack.c.l.bf16 %v3886
        %v3961 = vunpack.c.l.bf16 %v3887
        %v3962 = vunpack.c.l.bf16 %v3888
        %v3963 = vunpack.c.l.bf16 %v3889
        %v3964 = vunpack.c.l.bf16 %v3890
        %v3965 = vunpack.c.l.bf16 %v3891
        %v3966 = vunpack.c.l.bf16 %v3892
        %v3967 = vunpack.c.l.bf16 %v3893
        %v3968 = vunpack.c.l.bf16 %v3894
        %v3969 = vunpack.c.l.bf16 %v3895
        %v3970 = vunpack.c.l.bf16 %v3896
        %v3971 = vunpack.c.l.bf16 %v3897
        %v3972 = vunpack.c.l.bf16 %v3898
        %v3973 = vunpack.c.l.bf16 %v3899
        %v3974 = vunpack.c.l.bf16 %v3900
        %v3975 = vunpack.c.l.bf16 %v3901
        %v3976 = vunpack.c.l.bf16 %v3902
        %v3977 = vunpack.c.l.bf16 %v3903
        %v3978 = vunpack.c.l.bf16 %v3904
        %v3979 = vunpack.c.l.bf16 %v3905
        %v3980 = vunpack.c.l.bf16 %v3932
        %v3981 = vunpack.c.l.bf16 %v3933
        %v3982 = vunpack.c.l.bf16 %v3934
        %v3983 = vunpack.c.l.bf16 %v3935
        %v3984 = vunpack.c.l.bf16 %v3936
        %v3985 = vunpack.c.l.bf16 %v3937
        %v3986 = vunpack.c.l.bf16 %v3938
        %v3987 = vunpack.c.l.bf16 %v3939
        %v3988 = vunpack.c.l.bf16 %v3940
        %v3989 = vunpack.c.l.bf16 %v3941
        %v3990 = vunpack.c.l.bf16 %v3942
        %v3991 = vunpack.c.l.bf16 %v3943
        %v3992 = vunpack.c.l.bf16 %v3944
        %v3993 = vunpack.c.l.bf16 %v3945
        %v3994 = vunpack.c.l.bf16 %v3946
        %v3995 = vunpack.c.l.bf16 %v3947
        %v3996 = vunpack.c.l.bf16 %v3948
        %v3997 = vunpack.c.l.bf16 %v3949
        %v3998 = vunpack.c.l.bf16 %v3950
        %v3999 = vunpack.c.l.bf16 %v3951
        %v4000 = vunpack.c.l.bf16 %v3952
        %v4001 = vunpack.c.l.bf16 %v3953
        %v4002 = vunpack.c.l.bf16 %v3954
        %v4003 = vunpack.c.l.bf16 %v3955
        %v4028 = vrot.slane %v3980, 2
        %v4029 = vrot.slane %v3981, 2
        %v4030 = vsel %vm2059, %v4028, %v4029
        %v4031 = vrot.slane %v3982, 2
        %v4032 = vsel %vm2059, %v4029, %v4031
        %v4033 = vrot.slane %v3983, 2
        %v4034 = vrot.slane %v3984, 2
        %v4035 = vsel %vm2059, %v4033, %v4034
        %v4036 = vrot.slane %v3985, 2
        %v4037 = vsel %vm2059, %v4034, %v4036
        %v4038 = vrot.slane %v3986, 2
        %v4039 = vrot.slane %v3987, 2
        %v4040 = vsel %vm2059, %v4038, %v4039
        %v4041 = vrot.slane %v3988, 2
        %v4042 = vsel %vm2059, %v4039, %v4041
        %v4043 = vrot.slane %v3989, 2
        %v4044 = vrot.slane %v3990, 2
        %v4045 = vsel %vm2059, %v4043, %v4044
        %v4046 = vrot.slane %v3991, 2
        %v4047 = vsel %vm2059, %v4044, %v4046
        %v4048 = vrot.slane %v3992, 2
        %v4049 = vrot.slane %v3993, 2
        %v4050 = vsel %vm2059, %v4048, %v4049
        %v4051 = vrot.slane %v3994, 2
        %v4052 = vsel %vm2059, %v4049, %v4051
        %v4053 = vrot.slane %v3995, 2
        %v4054 = vrot.slane %v3996, 2
        %v4055 = vsel %vm2059, %v4053, %v4054
        %v4056 = vrot.slane %v3997, 2
        %v4057 = vsel %vm2059, %v4054, %v4056
        %v4058 = vrot.slane %v3998, 2
        %v4059 = vrot.slane %v3999, 2
        %v4060 = vsel %vm2059, %v4058, %v4059
        %v4061 = vrot.slane %v4000, 2
        %v4062 = vsel %vm2059, %v4059, %v4061
        %v4063 = vrot.slane %v4001, 2
        %v4064 = vrot.slane %v4002, 2
        %v4065 = vsel %vm2059, %v4063, %v4064
        %v4066 = vrot.slane %v4003, 2
        %v4067 = vsel %vm2059, %v4064, %v4066
        %v4092 = vadd.f32 %v3956, %v4030
        %v4093 = vadd.f32 %v3957, %v4032
        %v4094 = vadd.f32 %v3958, %v4031
        %v4095 = vadd.f32 %v3959, %v4035
        %v4096 = vadd.f32 %v3960, %v4037
        %v4097 = vadd.f32 %v3961, %v4036
        %v4098 = vadd.f32 %v3962, %v4040
        %v4099 = vadd.f32 %v3963, %v4042
        %v4100 = vadd.f32 %v3964, %v4041
        %v4101 = vadd.f32 %v3965, %v4045
        %v4102 = vadd.f32 %v3966, %v4047
        %v4103 = vadd.f32 %v3967, %v4046
        %v4104 = vadd.f32 %v3968, %v4050
        %v4105 = vadd.f32 %v3969, %v4052
        %v4106 = vadd.f32 %v3970, %v4051
        %v4107 = vadd.f32 %v3971, %v4055
        %v4108 = vadd.f32 %v3972, %v4057
        %v4109 = vadd.f32 %v3973, %v4056
        %v4110 = vadd.f32 %v3974, %v4060
        %v4111 = vadd.f32 %v3975, %v4062
        %v4112 = vadd.f32 %v3976, %v4061
        %v4113 = vadd.f32 %v3977, %v4065
        %v4114 = vadd.f32 %v3978, %v4067
        %v4115 = vadd.f32 %v3979, %v4066
        %v4116 = vpack.c.bf16 %v4092, %v4092
        %v4117 = vpack.c.bf16 %v4093, %v4093
        %v4118 = vpack.c.bf16 %v4094, %v4094
        %v4119 = vpack.c.bf16 %v4095, %v4095
        %v4120 = vpack.c.bf16 %v4096, %v4096
        %v4121 = vpack.c.bf16 %v4097, %v4097
        %v4122 = vpack.c.bf16 %v4098, %v4098
        %v4123 = vpack.c.bf16 %v4099, %v4099
        %v4124 = vpack.c.bf16 %v4100, %v4100
        %v4125 = vpack.c.bf16 %v4101, %v4101
        %v4126 = vpack.c.bf16 %v4102, %v4102
        %v4127 = vpack.c.bf16 %v4103, %v4103
        %v4128 = vpack.c.bf16 %v4104, %v4104
        %v4129 = vpack.c.bf16 %v4105, %v4105
        %v4130 = vpack.c.bf16 %v4106, %v4106
        %v4131 = vpack.c.bf16 %v4107, %v4107
        %v4132 = vpack.c.bf16 %v4108, %v4108
        %v4133 = vpack.c.bf16 %v4109, %v4109
        %v4134 = vpack.c.bf16 %v4110, %v4110
        %v4135 = vpack.c.bf16 %v4111, %v4111
        %v4136 = vpack.c.bf16 %v4112, %v4112
        %v4137 = vpack.c.bf16 %v4113, %v4113
        %v4138 = vpack.c.bf16 %v4114, %v4114
        %v4139 = vpack.c.bf16 %v4115, %v4115
        %v4140 = vperm.slane %v3523, 2
        %v4141 = vunpack.c.l.bf16 %v4140
        %v4142 = vmul.f32 %v3532, %v4141
        %v4143 = vmul.f32 %v3533, %v4141
        %v4144 = vmul.f32 %v3534, %v4141
        %v4145 = vmul.f32 %v3535, %v4141
        %v4146 = vmul.f32 %v3536, %v4141
        %v4147 = vmul.f32 %v3537, %v4141
        %v4148 = vmul.f32 %v3538, %v4141
        %v4149 = vmul.f32 %v3539, %v4141
        %v4150 = vmul.f32 %v3540, %v4141
        %v4151 = vmul.f32 %v3541, %v4141
        %v4152 = vmul.f32 %v3542, %v4141
        %v4153 = vmul.f32 %v3543, %v4141
        %v4154 = vmul.f32 %v3544, %v4141
        %v4155 = vmul.f32 %v3545, %v4141
        %v4156 = vmul.f32 %v3546, %v4141
        %v4157 = vmul.f32 %v3547, %v4141
        %v4158 = vmul.f32 %v3548, %v4141
        %v4159 = vmul.f32 %v3549, %v4141
        %v4160 = vmul.f32 %v3603, %v4141
        %v4161 = vmul.f32 %v3604, %v4141
        %v4162 = vmul.f32 %v3605, %v4141
        %v4163 = vmul.f32 %v3606, %v4141
        %v4164 = vmul.f32 %v3607, %v4141
        %v4165 = vmul.f32 %v3608, %v4141
        %v4166 = vpack.c.bf16 %v4142, %v4142
        %v4167 = vpack.c.bf16 %v4143, %v4143
        %v4168 = vpack.c.bf16 %v4144, %v4144
        %v4169 = vpack.c.bf16 %v4145, %v4145
        %v4170 = vpack.c.bf16 %v4146, %v4146
        %v4171 = vpack.c.bf16 %v4147, %v4147
        %v4172 = vpack.c.bf16 %v4148, %v4148
        %v4173 = vpack.c.bf16 %v4149, %v4149
        %v4174 = vpack.c.bf16 %v4150, %v4150
        %v4175 = vpack.c.bf16 %v4151, %v4151
        %v4176 = vpack.c.bf16 %v4152, %v4152
        %v4177 = vpack.c.bf16 %v4153, %v4153
        %v4178 = vpack.c.bf16 %v4154, %v4154
        %v4179 = vpack.c.bf16 %v4155, %v4155
        %v4180 = vpack.c.bf16 %v4156, %v4156
        %v4181 = vpack.c.bf16 %v4157, %v4157
        %v4182 = vpack.c.bf16 %v4158, %v4158
        %v4183 = vpack.c.bf16 %v4159, %v4159
        %v4184 = vpack.c.bf16 %v4160, %v4160
        %v4185 = vpack.c.bf16 %v4161, %v4161
        %v4186 = vpack.c.bf16 %v4162, %v4162
        %v4187 = vpack.c.bf16 %v4163, %v4163
        %v4188 = vpack.c.bf16 %v4164, %v4164
        %v4189 = vpack.c.bf16 %v4165, %v4165
        %v4190 = vunpack.c.l.bf16 %v4116
        %v4191 = vunpack.c.l.bf16 %v4117
        %v4192 = vunpack.c.l.bf16 %v4118
        %v4193 = vunpack.c.l.bf16 %v4119
        %v4194 = vunpack.c.l.bf16 %v4120
        %v4195 = vunpack.c.l.bf16 %v4121
        %v4196 = vunpack.c.l.bf16 %v4122
        %v4197 = vunpack.c.l.bf16 %v4123
        %v4198 = vunpack.c.l.bf16 %v4124
        %v4199 = vunpack.c.l.bf16 %v4125
        %v4200 = vunpack.c.l.bf16 %v4126
        %v4201 = vunpack.c.l.bf16 %v4127
        %v4202 = vunpack.c.l.bf16 %v4128
        %v4203 = vunpack.c.l.bf16 %v4129
        %v4204 = vunpack.c.l.bf16 %v4130
        %v4205 = vunpack.c.l.bf16 %v4131
        %v4206 = vunpack.c.l.bf16 %v4132
        %v4207 = vunpack.c.l.bf16 %v4133
        %v4208 = vunpack.c.l.bf16 %v4134
        %v4209 = vunpack.c.l.bf16 %v4135
        %v4210 = vunpack.c.l.bf16 %v4136
        %v4211 = vunpack.c.l.bf16 %v4137
        %v4212 = vunpack.c.l.bf16 %v4138
        %v4213 = vunpack.c.l.bf16 %v4139
        %v4214 = vunpack.c.l.bf16 %v4166
        %v4215 = vunpack.c.l.bf16 %v4167
        %v4216 = vunpack.c.l.bf16 %v4168
        %v4217 = vunpack.c.l.bf16 %v4169
        %v4218 = vunpack.c.l.bf16 %v4170
        %v4219 = vunpack.c.l.bf16 %v4171
        %v4220 = vunpack.c.l.bf16 %v4172
        %v4221 = vunpack.c.l.bf16 %v4173
        %v4222 = vunpack.c.l.bf16 %v4174
        %v4223 = vunpack.c.l.bf16 %v4175
        %v4224 = vunpack.c.l.bf16 %v4176
        %v4225 = vunpack.c.l.bf16 %v4177
        %v4226 = vunpack.c.l.bf16 %v4178
        %v4227 = vunpack.c.l.bf16 %v4179
        %v4228 = vunpack.c.l.bf16 %v4180
        %v4229 = vunpack.c.l.bf16 %v4181
        %v4230 = vunpack.c.l.bf16 %v4182
        %v4231 = vunpack.c.l.bf16 %v4183
        %v4232 = vunpack.c.l.bf16 %v4184
        %v4233 = vunpack.c.l.bf16 %v4185
        %v4234 = vunpack.c.l.bf16 %v4186
        %v4235 = vunpack.c.l.bf16 %v4187
        %v4236 = vunpack.c.l.bf16 %v4188
        %v4237 = vunpack.c.l.bf16 %v4189
        %v4262 = vrot.slane %v4214, 2
        %v4263 = vrot.slane %v4215, 2
        %v4264 = vsel %vm2059, %v4262, %v4263
        %v4265 = vrot.slane %v4216, 2
        %v4266 = vsel %vm2059, %v4263, %v4265
        %v4267 = vrot.slane %v4217, 2
        %v4268 = vrot.slane %v4218, 2
        %v4269 = vsel %vm2059, %v4267, %v4268
        %v4270 = vrot.slane %v4219, 2
        %v4271 = vsel %vm2059, %v4268, %v4270
        %v4272 = vrot.slane %v4220, 2
        %v4273 = vrot.slane %v4221, 2
        %v4274 = vsel %vm2059, %v4272, %v4273
        %v4275 = vrot.slane %v4222, 2
        %v4276 = vsel %vm2059, %v4273, %v4275
        %v4277 = vrot.slane %v4223, 2
        %v4278 = vrot.slane %v4224, 2
        %v4279 = vsel %vm2059, %v4277, %v4278
        %v4280 = vrot.slane %v4225, 2
        %v4281 = vsel %vm2059, %v4278, %v4280
        %v4282 = vrot.slane %v4226, 2
        %v4283 = vrot.slane %v4227, 2
        %v4284 = vsel %vm2059, %v4282, %v4283
        %v4285 = vrot.slane %v4228, 2
        %v4286 = vsel %vm2059, %v4283, %v4285
        %v4287 = vrot.slane %v4229, 2
        %v4288 = vrot.slane %v4230, 2
        %v4289 = vsel %vm2059, %v4287, %v4288
        %v4290 = vrot.slane %v4231, 2
        %v4291 = vsel %vm2059, %v4288, %v4290
        %v4292 = vrot.slane %v4232, 2
        %v4293 = vrot.slane %v4233, 2
        %v4294 = vsel %vm2059, %v4292, %v4293
        %v4295 = vrot.slane %v4234, 2
        %v4296 = vsel %vm2059, %v4293, %v4295
        %v4297 = vrot.slane %v4235, 2
        %v4298 = vrot.slane %v4236, 2
        %v4299 = vsel %vm2059, %v4297, %v4298
        %v4300 = vrot.slane %v4237, 2
        %v4301 = vsel %vm2059, %v4298, %v4300
        %v4326 = vadd.f32 %v4190, %v4264
        %v4327 = vadd.f32 %v4191, %v4266
        %v4328 = vadd.f32 %v4192, %v4265
        %v4329 = vadd.f32 %v4193, %v4269
        %v4330 = vadd.f32 %v4194, %v4271
        %v4331 = vadd.f32 %v4195, %v4270
        %v4332 = vadd.f32 %v4196, %v4274
        %v4333 = vadd.f32 %v4197, %v4276
        %v4334 = vadd.f32 %v4198, %v4275
        %v4335 = vadd.f32 %v4199, %v4279
        %v4336 = vadd.f32 %v4200, %v4281
        %v4337 = vadd.f32 %v4201, %v4280
        %v4338 = vadd.f32 %v4202, %v4284
        %v4339 = vadd.f32 %v4203, %v4286
        %v4340 = vadd.f32 %v4204, %v4285
        %v4341 = vadd.f32 %v4205, %v4289
        %v4342 = vadd.f32 %v4206, %v4291
        %v4343 = vadd.f32 %v4207, %v4290
        %v4344 = vadd.f32 %v4208, %v4294
        %v4345 = vadd.f32 %v4209, %v4296
        %v4346 = vadd.f32 %v4210, %v4295
        %v4347 = vadd.f32 %v4211, %v4299
        %v4348 = vadd.f32 %v4212, %v4301
        %v4349 = vadd.f32 %v4213, %v4300
        %v4350 = vpack.c.bf16 %v4326, %v4326
        %v4351 = vpack.c.bf16 %v4327, %v4327
        %v4352 = vpack.c.bf16 %v4328, %v4328
        %v4353 = vpack.c.bf16 %v4329, %v4329
        %v4354 = vpack.c.bf16 %v4330, %v4330
        %v4355 = vpack.c.bf16 %v4331, %v4331
        %v4356 = vpack.c.bf16 %v4332, %v4332
        %v4357 = vpack.c.bf16 %v4333, %v4333
        %v4358 = vpack.c.bf16 %v4334, %v4334
        %v4359 = vpack.c.bf16 %v4335, %v4335
        %v4360 = vpack.c.bf16 %v4336, %v4336
        %v4361 = vpack.c.bf16 %v4337, %v4337
        %v4362 = vpack.c.bf16 %v4338, %v4338
        %v4363 = vpack.c.bf16 %v4339, %v4339
        %v4364 = vpack.c.bf16 %v4340, %v4340
        %v4365 = vpack.c.bf16 %v4341, %v4341
        %v4366 = vpack.c.bf16 %v4342, %v4342
        %v4367 = vpack.c.bf16 %v4343, %v4343
        %v4368 = vpack.c.bf16 %v4344, %v4344
        %v4369 = vpack.c.bf16 %v4345, %v4345
        %v4370 = vpack.c.bf16 %v4346, %v4346
        %v4371 = vpack.c.bf16 %v4347, %v4347
        %v4372 = vpack.c.bf16 %v4348, %v4348
        %v4373 = vpack.c.bf16 %v4349, %v4349
        %v4374 = vperm.slane %v3600, 3
        %v4375 = vunpack.c.l.bf16 %v4374
        %v4376 = vmul.f32 %v3538, %v4375
        %v4377 = vmul.f32 %v3539, %v4375
        %v4378 = vmul.f32 %v3540, %v4375
        %v4379 = vmul.f32 %v3541, %v4375
        %v4380 = vmul.f32 %v3542, %v4375
        %v4381 = vmul.f32 %v3543, %v4375
        %v4382 = vmul.f32 %v3544, %v4375
        %v4383 = vmul.f32 %v3545, %v4375
        %v4384 = vmul.f32 %v3546, %v4375
        %v4385 = vmul.f32 %v3547, %v4375
        %v4386 = vmul.f32 %v3548, %v4375
        %v4387 = vmul.f32 %v3549, %v4375
        %v4388 = vmul.f32 %v3603, %v4375
        %v4389 = vmul.f32 %v3604, %v4375
        %v4390 = vmul.f32 %v3605, %v4375
        %v4391 = vmul.f32 %v3606, %v4375
        %v4392 = vmul.f32 %v3607, %v4375
        %v4393 = vmul.f32 %v3608, %v4375
        %v4394 = vmul.f32 %v3755, %v4375
        %v4395 = vmul.f32 %v3756, %v4375
        %v4396 = vmul.f32 %v3757, %v4375
        %v4397 = vmul.f32 %v3758, %v4375
        %v4398 = vmul.f32 %v3759, %v4375
        %v4399 = vmul.f32 %v3760, %v4375
        %v4400 = vpack.c.bf16 %v4376, %v4376
        %v4401 = vpack.c.bf16 %v4377, %v4377
        %v4402 = vpack.c.bf16 %v4378, %v4378
        %v4403 = vpack.c.bf16 %v4379, %v4379
        %v4404 = vpack.c.bf16 %v4380, %v4380
        %v4405 = vpack.c.bf16 %v4381, %v4381
        %v4406 = vpack.c.bf16 %v4382, %v4382
        %v4407 = vpack.c.bf16 %v4383, %v4383
        %v4408 = vpack.c.bf16 %v4384, %v4384
        %v4409 = vpack.c.bf16 %v4385, %v4385
        %v4410 = vpack.c.bf16 %v4386, %v4386
        %v4411 = vpack.c.bf16 %v4387, %v4387
        %v4412 = vpack.c.bf16 %v4388, %v4388
        %v4413 = vpack.c.bf16 %v4389, %v4389
        %v4414 = vpack.c.bf16 %v4390, %v4390
        %v4415 = vpack.c.bf16 %v4391, %v4391
        %v4416 = vpack.c.bf16 %v4392, %v4392
        %v4417 = vpack.c.bf16 %v4393, %v4393
        %v4418 = vpack.c.bf16 %v4394, %v4394
        %v4419 = vpack.c.bf16 %v4395, %v4395
        %v4420 = vpack.c.bf16 %v4396, %v4396
        %v4421 = vpack.c.bf16 %v4397, %v4397
        %v4422 = vpack.c.bf16 %v4398, %v4398
        %v4423 = vpack.c.bf16 %v4399, %v4399
        %v4424 = vunpack.c.l.bf16 %v4350
        %v4425 = vunpack.c.l.bf16 %v4351
        %v4426 = vunpack.c.l.bf16 %v4352
        %v4427 = vunpack.c.l.bf16 %v4353
        %v4428 = vunpack.c.l.bf16 %v4354
        %v4429 = vunpack.c.l.bf16 %v4355
        %v4430 = vunpack.c.l.bf16 %v4356
        %v4431 = vunpack.c.l.bf16 %v4357
        %v4432 = vunpack.c.l.bf16 %v4358
        %v4433 = vunpack.c.l.bf16 %v4359
        %v4434 = vunpack.c.l.bf16 %v4360
        %v4435 = vunpack.c.l.bf16 %v4361
        %v4436 = vunpack.c.l.bf16 %v4362
        %v4437 = vunpack.c.l.bf16 %v4363
        %v4438 = vunpack.c.l.bf16 %v4364
        %v4439 = vunpack.c.l.bf16 %v4365
        %v4440 = vunpack.c.l.bf16 %v4366
        %v4441 = vunpack.c.l.bf16 %v4367
        %v4442 = vunpack.c.l.bf16 %v4368
        %v4443 = vunpack.c.l.bf16 %v4369
        %v4444 = vunpack.c.l.bf16 %v4370
        %v4445 = vunpack.c.l.bf16 %v4371
        %v4446 = vunpack.c.l.bf16 %v4372
        %v4447 = vunpack.c.l.bf16 %v4373
        %v4448 = vunpack.c.l.bf16 %v4400
        %v4449 = vunpack.c.l.bf16 %v4401
        %v4450 = vunpack.c.l.bf16 %v4402
        %v4451 = vunpack.c.l.bf16 %v4403
        %v4452 = vunpack.c.l.bf16 %v4404
        %v4453 = vunpack.c.l.bf16 %v4405
        %v4454 = vunpack.c.l.bf16 %v4406
        %v4455 = vunpack.c.l.bf16 %v4407
        %v4456 = vunpack.c.l.bf16 %v4408
        %v4457 = vunpack.c.l.bf16 %v4409
        %v4458 = vunpack.c.l.bf16 %v4410
        %v4459 = vunpack.c.l.bf16 %v4411
        %v4460 = vunpack.c.l.bf16 %v4412
        %v4461 = vunpack.c.l.bf16 %v4413
        %v4462 = vunpack.c.l.bf16 %v4414
        %v4463 = vunpack.c.l.bf16 %v4415
        %v4464 = vunpack.c.l.bf16 %v4416
        %v4465 = vunpack.c.l.bf16 %v4417
        %v4466 = vunpack.c.l.bf16 %v4418
        %v4467 = vunpack.c.l.bf16 %v4419
        %v4468 = vunpack.c.l.bf16 %v4420
        %v4469 = vunpack.c.l.bf16 %v4421
        %v4470 = vunpack.c.l.bf16 %v4422
        %v4471 = vunpack.c.l.bf16 %v4423
        %v4496 = vrot.slane %v4448, 2
        %v4497 = vrot.slane %v4449, 2
        %v4498 = vsel %vm2059, %v4496, %v4497
        %v4499 = vrot.slane %v4450, 2
        %v4500 = vsel %vm2059, %v4497, %v4499
        %v4501 = vrot.slane %v4451, 2
        %v4502 = vrot.slane %v4452, 2
        %v4503 = vsel %vm2059, %v4501, %v4502
        %v4504 = vrot.slane %v4453, 2
        %v4505 = vsel %vm2059, %v4502, %v4504
        %v4506 = vrot.slane %v4454, 2
        %v4507 = vrot.slane %v4455, 2
        %v4508 = vsel %vm2059, %v4506, %v4507
        %v4509 = vrot.slane %v4456, 2
        %v4510 = vsel %vm2059, %v4507, %v4509
        %v4511 = vrot.slane %v4457, 2
        %v4512 = vrot.slane %v4458, 2
        %v4513 = vsel %vm2059, %v4511, %v4512
        %v4514 = vrot.slane %v4459, 2
        %v4515 = vsel %vm2059, %v4512, %v4514
        %v4516 = vrot.slane %v4460, 2
        %v4517 = vrot.slane %v4461, 2
        %v4518 = vsel %vm2059, %v4516, %v4517
        %v4519 = vrot.slane %v4462, 2
        %v4520 = vsel %vm2059, %v4517, %v4519
        %v4521 = vrot.slane %v4463, 2
        %v4522 = vrot.slane %v4464, 2
        %v4523 = vsel %vm2059, %v4521, %v4522
        %v4524 = vrot.slane %v4465, 2
        %v4525 = vsel %vm2059, %v4522, %v4524
        %v4526 = vrot.slane %v4466, 2
        %v4527 = vrot.slane %v4467, 2
        %v4528 = vsel %vm2059, %v4526, %v4527
        %v4529 = vrot.slane %v4468, 2
        %v4530 = vsel %vm2059, %v4527, %v4529
        %v4531 = vrot.slane %v4469, 2
        %v4532 = vrot.slane %v4470, 2
        %v4533 = vsel %vm2059, %v4531, %v4532
        %v4534 = vrot.slane %v4471, 2
        %v4535 = vsel %vm2059, %v4532, %v4534
        %v4560 = vadd.f32 %v4424, %v4498
        %v4561 = vadd.f32 %v4425, %v4500
        %v4562 = vadd.f32 %v4426, %v4499
        %v4563 = vadd.f32 %v4427, %v4503
        %v4564 = vadd.f32 %v4428, %v4505
        %v4565 = vadd.f32 %v4429, %v4504
        %v4566 = vadd.f32 %v4430, %v4508
        %v4567 = vadd.f32 %v4431, %v4510
        %v4568 = vadd.f32 %v4432, %v4509
        %v4569 = vadd.f32 %v4433, %v4513
        %v4570 = vadd.f32 %v4434, %v4515
        %v4571 = vadd.f32 %v4435, %v4514
        %v4572 = vadd.f32 %v4436, %v4518
        %v4573 = vadd.f32 %v4437, %v4520
        %v4574 = vadd.f32 %v4438, %v4519
        %v4575 = vadd.f32 %v4439, %v4523
        %v4576 = vadd.f32 %v4440, %v4525
        %v4577 = vadd.f32 %v4441, %v4524
        %v4578 = vadd.f32 %v4442, %v4528
        %v4579 = vadd.f32 %v4443, %v4530
        %v4580 = vadd.f32 %v4444, %v4529
        %v4581 = vadd.f32 %v4445, %v4533
        %v4582 = vadd.f32 %v4446, %v4535
        %v4583 = vadd.f32 %v4447, %v4534
        %v4584 = vpack.c.bf16 %v4560, %v4560
        %v4585 = vpack.c.bf16 %v4561, %v4561
        %v4586 = vpack.c.bf16 %v4562, %v4562
        %v4587 = vpack.c.bf16 %v4563, %v4563
        %v4588 = vpack.c.bf16 %v4564, %v4564
        %v4589 = vpack.c.bf16 %v4565, %v4565
        %v4590 = vpack.c.bf16 %v4566, %v4566
        %v4591 = vpack.c.bf16 %v4567, %v4567
        %v4592 = vpack.c.bf16 %v4568, %v4568
        %v4593 = vpack.c.bf16 %v4569, %v4569
        %v4594 = vpack.c.bf16 %v4570, %v4570
        %v4595 = vpack.c.bf16 %v4571, %v4571
        %v4596 = vpack.c.bf16 %v4572, %v4572
        %v4597 = vpack.c.bf16 %v4573, %v4573
        %v4598 = vpack.c.bf16 %v4574, %v4574
        %v4599 = vpack.c.bf16 %v4575, %v4575
        %v4600 = vpack.c.bf16 %v4576, %v4576
        %v4601 = vpack.c.bf16 %v4577, %v4577
        %v4602 = vpack.c.bf16 %v4578, %v4578
        %v4603 = vpack.c.bf16 %v4579, %v4579
        %v4604 = vpack.c.bf16 %v4580, %v4580
        %v4605 = vpack.c.bf16 %v4581, %v4581
        %v4606 = vpack.c.bf16 %v4582, %v4582
        %v4607 = vpack.c.bf16 %v4583, %v4583
        %v4608 = vperm.slane %v3523, 1
        %v4609 = vunpack.c.l.bf16 %v4608
        %v4610 = vmul.f32 %v3526, %v4609
        %v4611 = vmul.f32 %v3527, %v4609
        %v4612 = vmul.f32 %v3528, %v4609
        %v4613 = vmul.f32 %v3529, %v4609
        %v4614 = vmul.f32 %v3530, %v4609
        %v4615 = vmul.f32 %v3531, %v4609
        %v4616 = vmul.f32 %v3532, %v4609
        %v4617 = vmul.f32 %v3533, %v4609
        %v4618 = vmul.f32 %v3534, %v4609
        %v4619 = vmul.f32 %v3535, %v4609
        %v4620 = vmul.f32 %v3536, %v4609
        %v4621 = vmul.f32 %v3537, %v4609
        %v4622 = vmul.f32 %v3538, %v4609
        %v4623 = vmul.f32 %v3539, %v4609
        %v4624 = vmul.f32 %v3540, %v4609
        %v4625 = vmul.f32 %v3541, %v4609
        %v4626 = vmul.f32 %v3542, %v4609
        %v4627 = vmul.f32 %v3543, %v4609
        %v4628 = vmul.f32 %v3544, %v4609
        %v4629 = vmul.f32 %v3545, %v4609
        %v4630 = vmul.f32 %v3546, %v4609
        %v4631 = vmul.f32 %v3547, %v4609
        %v4632 = vmul.f32 %v3548, %v4609
        %v4633 = vmul.f32 %v3549, %v4609
        %v4634 = vpack.c.bf16 %v4610, %v4610
        %v4635 = vpack.c.bf16 %v4611, %v4611
        %v4636 = vpack.c.bf16 %v4612, %v4612
        %v4637 = vpack.c.bf16 %v4613, %v4613
        %v4638 = vpack.c.bf16 %v4614, %v4614
        %v4639 = vpack.c.bf16 %v4615, %v4615
        %v4640 = vpack.c.bf16 %v4616, %v4616
        %v4641 = vpack.c.bf16 %v4617, %v4617
        %v4642 = vpack.c.bf16 %v4618, %v4618
        %v4643 = vpack.c.bf16 %v4619, %v4619
        %v4644 = vpack.c.bf16 %v4620, %v4620
        %v4645 = vpack.c.bf16 %v4621, %v4621
        %v4646 = vpack.c.bf16 %v4622, %v4622
        %v4647 = vpack.c.bf16 %v4623, %v4623
        %v4648 = vpack.c.bf16 %v4624, %v4624
        %v4649 = vpack.c.bf16 %v4625, %v4625
        %v4650 = vpack.c.bf16 %v4626, %v4626
        %v4651 = vpack.c.bf16 %v4627, %v4627
        %v4652 = vpack.c.bf16 %v4628, %v4628
        %v4653 = vpack.c.bf16 %v4629, %v4629
        %v4654 = vpack.c.bf16 %v4630, %v4630
        %v4655 = vpack.c.bf16 %v4631, %v4631
        %v4656 = vpack.c.bf16 %v4632, %v4632
        %v4657 = vpack.c.bf16 %v4633, %v4633
        %v4658 = vunpack.c.l.bf16 %v4584
        %v4659 = vunpack.c.l.bf16 %v4585
        %v4660 = vunpack.c.l.bf16 %v4586
        %v4661 = vunpack.c.l.bf16 %v4587
        %v4662 = vunpack.c.l.bf16 %v4588
        %v4663 = vunpack.c.l.bf16 %v4589
        %v4664 = vunpack.c.l.bf16 %v4590
        %v4665 = vunpack.c.l.bf16 %v4591
        %v4666 = vunpack.c.l.bf16 %v4592
        %v4667 = vunpack.c.l.bf16 %v4593
        %v4668 = vunpack.c.l.bf16 %v4594
        %v4669 = vunpack.c.l.bf16 %v4595
        %v4670 = vunpack.c.l.bf16 %v4596
        %v4671 = vunpack.c.l.bf16 %v4597
        %v4672 = vunpack.c.l.bf16 %v4598
        %v4673 = vunpack.c.l.bf16 %v4599
        %v4674 = vunpack.c.l.bf16 %v4600
        %v4675 = vunpack.c.l.bf16 %v4601
        %v4676 = vunpack.c.l.bf16 %v4602
        %v4677 = vunpack.c.l.bf16 %v4603
        %v4678 = vunpack.c.l.bf16 %v4604
        %v4679 = vunpack.c.l.bf16 %v4605
        %v4680 = vunpack.c.l.bf16 %v4606
        %v4681 = vunpack.c.l.bf16 %v4607
        %v4682 = vunpack.c.l.bf16 %v4634
        %v4683 = vunpack.c.l.bf16 %v4635
        %v4684 = vunpack.c.l.bf16 %v4636
        %v4685 = vunpack.c.l.bf16 %v4637
        %v4686 = vunpack.c.l.bf16 %v4638
        %v4687 = vunpack.c.l.bf16 %v4639
        %v4688 = vunpack.c.l.bf16 %v4640
        %v4689 = vunpack.c.l.bf16 %v4641
        %v4690 = vunpack.c.l.bf16 %v4642
        %v4691 = vunpack.c.l.bf16 %v4643
        %v4692 = vunpack.c.l.bf16 %v4644
        %v4693 = vunpack.c.l.bf16 %v4645
        %v4694 = vunpack.c.l.bf16 %v4646
        %v4695 = vunpack.c.l.bf16 %v4647
        %v4696 = vunpack.c.l.bf16 %v4648
        %v4697 = vunpack.c.l.bf16 %v4649
        %v4698 = vunpack.c.l.bf16 %v4650
        %v4699 = vunpack.c.l.bf16 %v4651
        %v4700 = vunpack.c.l.bf16 %v4652
        %v4701 = vunpack.c.l.bf16 %v4653
        %v4702 = vunpack.c.l.bf16 %v4654
        %v4703 = vunpack.c.l.bf16 %v4655
        %v4704 = vunpack.c.l.bf16 %v4656
        %v4705 = vunpack.c.l.bf16 %v4657
        %vm4730 = vcmask 1043456
        %v4731 = vrot.slane %v4682, 4
        %v4732 = vrot.slane %v4683, 4
        %v4733 = vsel %vm4730, %v4731, %v4732
        %v4734 = vrot.slane %v4684, 4
        %v4735 = vsel %vm4730, %v4732, %v4734
        %v4736 = vrot.slane %v4685, 4
        %v4737 = vrot.slane %v4686, 4
        %v4738 = vsel %vm4730, %v4736, %v4737
        %v4739 = vrot.slane %v4687, 4
        %v4740 = vsel %vm4730, %v4737, %v4739
        %v4741 = vrot.slane %v4688, 4
        %v4742 = vrot.slane %v4689, 4
        %v4743 = vsel %vm4730, %v4741, %v4742
        %v4744 = vrot.slane %v4690, 4
        %v4745 = vsel %vm4730, %v4742, %v4744
        %v4746 = vrot.slane %v4691, 4
        %v4747 = vrot.slane %v4692, 4
        %v4748 = vsel %vm4730, %v4746, %v4747
        %v4749 = vrot.slane %v4693, 4
        %v4750 = vsel %vm4730, %v4747, %v4749
        %v4751 = vrot.slane %v4694, 4
        %v4752 = vrot.slane %v4695, 4
        %v4753 = vsel %vm4730, %v4751, %v4752
        %v4754 = vrot.slane %v4696, 4
        %v4755 = vsel %vm4730, %v4752, %v4754
        %v4756 = vrot.slane %v4697, 4
        %v4757 = vrot.slane %v4698, 4
        %v4758 = vsel %vm4730, %v4756, %v4757
        %v4759 = vrot.slane %v4699, 4
        %v4760 = vsel %vm4730, %v4757, %v4759
        %v4761 = vrot.slane %v4700, 4
        %v4762 = vrot.slane %v4701, 4
        %v4763 = vsel %vm4730, %v4761, %v4762
        %v4764 = vrot.slane %v4702, 4
        %v4765 = vsel %vm4730, %v4762, %v4764
        %v4766 = vrot.slane %v4703, 4
        %v4767 = vrot.slane %v4704, 4
        %v4768 = vsel %vm4730, %v4766, %v4767
        %v4769 = vrot.slane %v4705, 4
        %v4770 = vsel %vm4730, %v4767, %v4769
        %v4795 = vadd.f32 %v4658, %v4733
        %v4796 = vadd.f32 %v4659, %v4735
        %v4797 = vadd.f32 %v4660, %v4734
        %v4798 = vadd.f32 %v4661, %v4738
        %v4799 = vadd.f32 %v4662, %v4740
        %v4800 = vadd.f32 %v4663, %v4739
        %v4801 = vadd.f32 %v4664, %v4743
        %v4802 = vadd.f32 %v4665, %v4745
        %v4803 = vadd.f32 %v4666, %v4744
        %v4804 = vadd.f32 %v4667, %v4748
        %v4805 = vadd.f32 %v4668, %v4750
        %v4806 = vadd.f32 %v4669, %v4749
        %v4807 = vadd.f32 %v4670, %v4753
        %v4808 = vadd.f32 %v4671, %v4755
        %v4809 = vadd.f32 %v4672, %v4754
        %v4810 = vadd.f32 %v4673, %v4758
        %v4811 = vadd.f32 %v4674, %v4760
        %v4812 = vadd.f32 %v4675, %v4759
        %v4813 = vadd.f32 %v4676, %v4763
        %v4814 = vadd.f32 %v4677, %v4765
        %v4815 = vadd.f32 %v4678, %v4764
        %v4816 = vadd.f32 %v4679, %v4768
        %v4817 = vadd.f32 %v4680, %v4770
        %v4818 = vadd.f32 %v4681, %v4769
        %v4819 = vpack.c.bf16 %v4795, %v4795
        %v4820 = vpack.c.bf16 %v4796, %v4796
        %v4821 = vpack.c.bf16 %v4797, %v4797
        %v4822 = vpack.c.bf16 %v4798, %v4798
        %v4823 = vpack.c.bf16 %v4799, %v4799
        %v4824 = vpack.c.bf16 %v4800, %v4800
        %v4825 = vpack.c.bf16 %v4801, %v4801
        %v4826 = vpack.c.bf16 %v4802, %v4802
        %v4827 = vpack.c.bf16 %v4803, %v4803
        %v4828 = vpack.c.bf16 %v4804, %v4804
        %v4829 = vpack.c.bf16 %v4805, %v4805
        %v4830 = vpack.c.bf16 %v4806, %v4806
        %v4831 = vpack.c.bf16 %v4807, %v4807
        %v4832 = vpack.c.bf16 %v4808, %v4808
        %v4833 = vpack.c.bf16 %v4809, %v4809
        %v4834 = vpack.c.bf16 %v4810, %v4810
        %v4835 = vpack.c.bf16 %v4811, %v4811
        %v4836 = vpack.c.bf16 %v4812, %v4812
        %v4837 = vpack.c.bf16 %v4813, %v4813
        %v4838 = vpack.c.bf16 %v4814, %v4814
        %v4839 = vpack.c.bf16 %v4815, %v4815
        %v4840 = vpack.c.bf16 %v4816, %v4816
        %v4841 = vpack.c.bf16 %v4817, %v4817
        %v4842 = vpack.c.bf16 %v4818, %v4818
        %v4843 = vperm.slane %v3600, 2
        %v4844 = vunpack.c.l.bf16 %v4843
        %v4845 = vmul.f32 %v3532, %v4844
        %v4846 = vmul.f32 %v3533, %v4844
        %v4847 = vmul.f32 %v3534, %v4844
        %v4848 = vmul.f32 %v3535, %v4844
        %v4849 = vmul.f32 %v3536, %v4844
        %v4850 = vmul.f32 %v3537, %v4844
        %v4851 = vmul.f32 %v3538, %v4844
        %v4852 = vmul.f32 %v3539, %v4844
        %v4853 = vmul.f32 %v3540, %v4844
        %v4854 = vmul.f32 %v3541, %v4844
        %v4855 = vmul.f32 %v3542, %v4844
        %v4856 = vmul.f32 %v3543, %v4844
        %v4857 = vmul.f32 %v3544, %v4844
        %v4858 = vmul.f32 %v3545, %v4844
        %v4859 = vmul.f32 %v3546, %v4844
        %v4860 = vmul.f32 %v3547, %v4844
        %v4861 = vmul.f32 %v3548, %v4844
        %v4862 = vmul.f32 %v3549, %v4844
        %v4863 = vmul.f32 %v3603, %v4844
        %v4864 = vmul.f32 %v3604, %v4844
        %v4865 = vmul.f32 %v3605, %v4844
        %v4866 = vmul.f32 %v3606, %v4844
        %v4867 = vmul.f32 %v3607, %v4844
        %v4868 = vmul.f32 %v3608, %v4844
        %v4869 = vpack.c.bf16 %v4845, %v4845
        %v4870 = vpack.c.bf16 %v4846, %v4846
        %v4871 = vpack.c.bf16 %v4847, %v4847
        %v4872 = vpack.c.bf16 %v4848, %v4848
        %v4873 = vpack.c.bf16 %v4849, %v4849
        %v4874 = vpack.c.bf16 %v4850, %v4850
        %v4875 = vpack.c.bf16 %v4851, %v4851
        %v4876 = vpack.c.bf16 %v4852, %v4852
        %v4877 = vpack.c.bf16 %v4853, %v4853
        %v4878 = vpack.c.bf16 %v4854, %v4854
        %v4879 = vpack.c.bf16 %v4855, %v4855
        %v4880 = vpack.c.bf16 %v4856, %v4856
        %v4881 = vpack.c.bf16 %v4857, %v4857
        %v4882 = vpack.c.bf16 %v4858, %v4858
        %v4883 = vpack.c.bf16 %v4859, %v4859
        %v4884 = vpack.c.bf16 %v4860, %v4860
        %v4885 = vpack.c.bf16 %v4861, %v4861
        %v4886 = vpack.c.bf16 %v4862, %v4862
        %v4887 = vpack.c.bf16 %v4863, %v4863
        %v4888 = vpack.c.bf16 %v4864, %v4864
        %v4889 = vpack.c.bf16 %v4865, %v4865
        %v4890 = vpack.c.bf16 %v4866, %v4866
        %v4891 = vpack.c.bf16 %v4867, %v4867
        %v4892 = vpack.c.bf16 %v4868, %v4868
        %v4893 = vunpack.c.l.bf16 %v4819
        %v4894 = vunpack.c.l.bf16 %v4820
        %v4895 = vunpack.c.l.bf16 %v4821
        %v4896 = vunpack.c.l.bf16 %v4822
        %v4897 = vunpack.c.l.bf16 %v4823
        %v4898 = vunpack.c.l.bf16 %v4824
        %v4899 = vunpack.c.l.bf16 %v4825
        %v4900 = vunpack.c.l.bf16 %v4826
        %v4901 = vunpack.c.l.bf16 %v4827
        %v4902 = vunpack.c.l.bf16 %v4828
        %v4903 = vunpack.c.l.bf16 %v4829
        %v4904 = vunpack.c.l.bf16 %v4830
        %v4905 = vunpack.c.l.bf16 %v4831
        %v4906 = vunpack.c.l.bf16 %v4832
        %v4907 = vunpack.c.l.bf16 %v4833
        %v4908 = vunpack.c.l.bf16 %v4834
        %v4909 = vunpack.c.l.bf16 %v4835
        %v4910 = vunpack.c.l.bf16 %v4836
        %v4911 = vunpack.c.l.bf16 %v4837
        %v4912 = vunpack.c.l.bf16 %v4838
        %v4913 = vunpack.c.l.bf16 %v4839
        %v4914 = vunpack.c.l.bf16 %v4840
        %v4915 = vunpack.c.l.bf16 %v4841
        %v4916 = vunpack.c.l.bf16 %v4842
        %v4917 = vunpack.c.l.bf16 %v4869
        %v4918 = vunpack.c.l.bf16 %v4870
        %v4919 = vunpack.c.l.bf16 %v4871
        %v4920 = vunpack.c.l.bf16 %v4872
        %v4921 = vunpack.c.l.bf16 %v4873
        %v4922 = vunpack.c.l.bf16 %v4874
        %v4923 = vunpack.c.l.bf16 %v4875
        %v4924 = vunpack.c.l.bf16 %v4876
        %v4925 = vunpack.c.l.bf16 %v4877
        %v4926 = vunpack.c.l.bf16 %v4878
        %v4927 = vunpack.c.l.bf16 %v4879
        %v4928 = vunpack.c.l.bf16 %v4880
        %v4929 = vunpack.c.l.bf16 %v4881
        %v4930 = vunpack.c.l.bf16 %v4882
        %v4931 = vunpack.c.l.bf16 %v4883
        %v4932 = vunpack.c.l.bf16 %v4884
        %v4933 = vunpack.c.l.bf16 %v4885
        %v4934 = vunpack.c.l.bf16 %v4886
        %v4935 = vunpack.c.l.bf16 %v4887
        %v4936 = vunpack.c.l.bf16 %v4888
        %v4937 = vunpack.c.l.bf16 %v4889
        %v4938 = vunpack.c.l.bf16 %v4890
        %v4939 = vunpack.c.l.bf16 %v4891
        %v4940 = vunpack.c.l.bf16 %v4892
        %v4965 = vrot.slane %v4917, 4
        %v4966 = vrot.slane %v4918, 4
        %v4967 = vsel %vm4730, %v4965, %v4966
        %v4968 = vrot.slane %v4919, 4
        %v4969 = vsel %vm4730, %v4966, %v4968
        %v4970 = vrot.slane %v4920, 4
        %v4971 = vrot.slane %v4921, 4
        %v4972 = vsel %vm4730, %v4970, %v4971
        %v4973 = vrot.slane %v4922, 4
        %v4974 = vsel %vm4730, %v4971, %v4973
        %v4975 = vrot.slane %v4923, 4
        %v4976 = vrot.slane %v4924, 4
        %v4977 = vsel %vm4730, %v4975, %v4976
        %v4978 = vrot.slane %v4925, 4
        %v4979 = vsel %vm4730, %v4976, %v4978
        %v4980 = vrot.slane %v4926, 4
        %v4981 = vrot.slane %v4927, 4
        %v4982 = vsel %vm4730, %v4980, %v4981
        %v4983 = vrot.slane %v4928, 4
        %v4984 = vsel %vm4730, %v4981, %v4983
        %v4985 = vrot.slane %v4929, 4
        %v4986 = vrot.slane %v4930, 4
        %v4987 = vsel %vm4730, %v4985, %v4986
        %v4988 = vrot.slane %v4931, 4
        %v4989 = vsel %vm4730, %v4986, %v4988
        %v4990 = vrot.slane %v4932, 4
        %v4991 = vrot.slane %v4933, 4
        %v4992 = vsel %vm4730, %v4990, %v4991
        %v4993 = vrot.slane %v4934, 4
        %v4994 = vsel %vm4730, %v4991, %v4993
        %v4995 = vrot.slane %v4935, 4
        %v4996 = vrot.slane %v4936, 4
        %v4997 = vsel %vm4730, %v4995, %v4996
        %v4998 = vrot.slane %v4937, 4
        %v4999 = vsel %vm4730, %v4996, %v4998
        %v5000 = vrot.slane %v4938, 4
        %v5001 = vrot.slane %v4939, 4
        %v5002 = vsel %vm4730, %v5000, %v5001
        %v5003 = vrot.slane %v4940, 4
        %v5004 = vsel %vm4730, %v5001, %v5003
        %v5029 = vadd.f32 %v4893, %v4967
        %v5030 = vadd.f32 %v4894, %v4969
        %v5031 = vadd.f32 %v4895, %v4968
        %v5032 = vadd.f32 %v4896, %v4972
        %v5033 = vadd.f32 %v4897, %v4974
        %v5034 = vadd.f32 %v4898, %v4973
        %v5035 = vadd.f32 %v4899, %v4977
        %v5036 = vadd.f32 %v4900, %v4979
        %v5037 = vadd.f32 %v4901, %v4978
        %v5038 = vadd.f32 %v4902, %v4982
        %v5039 = vadd.f32 %v4903, %v4984
        %v5040 = vadd.f32 %v4904, %v4983
        %v5041 = vadd.f32 %v4905, %v4987
        %v5042 = vadd.f32 %v4906, %v4989
        %v5043 = vadd.f32 %v4907, %v4988
        %v5044 = vadd.f32 %v4908, %v4992
        %v5045 = vadd.f32 %v4909, %v4994
        %v5046 = vadd.f32 %v4910, %v4993
        %v5047 = vadd.f32 %v4911, %v4997
        %v5048 = vadd.f32 %v4912, %v4999
        %v5049 = vadd.f32 %v4913, %v4998
        %v5050 = vadd.f32 %v4914, %v5002
        %v5051 = vadd.f32 %v4915, %v5004
        %v5052 = vadd.f32 %v4916, %v5003
        %v5053 = vpack.c.bf16 %v5029, %v5029
        %v5054 = vpack.c.bf16 %v5030, %v5030
        %v5055 = vpack.c.bf16 %v5031, %v5031
        %v5056 = vpack.c.bf16 %v5032, %v5032
        %v5057 = vpack.c.bf16 %v5033, %v5033
        %v5058 = vpack.c.bf16 %v5034, %v5034
        %v5059 = vpack.c.bf16 %v5035, %v5035
        %v5060 = vpack.c.bf16 %v5036, %v5036
        %v5061 = vpack.c.bf16 %v5037, %v5037
        %v5062 = vpack.c.bf16 %v5038, %v5038
        %v5063 = vpack.c.bf16 %v5039, %v5039
        %v5064 = vpack.c.bf16 %v5040, %v5040
        %v5065 = vpack.c.bf16 %v5041, %v5041
        %v5066 = vpack.c.bf16 %v5042, %v5042
        %v5067 = vpack.c.bf16 %v5043, %v5043
        %v5068 = vpack.c.bf16 %v5044, %v5044
        %v5069 = vpack.c.bf16 %v5045, %v5045
        %v5070 = vpack.c.bf16 %v5046, %v5046
        %v5071 = vpack.c.bf16 %v5047, %v5047
        %v5072 = vpack.c.bf16 %v5048, %v5048
        %v5073 = vpack.c.bf16 %v5049, %v5049
        %v5074 = vpack.c.bf16 %v5050, %v5050
        %v5075 = vpack.c.bf16 %v5051, %v5051
        %v5076 = vpack.c.bf16 %v5052, %v5052
        %v5078 = vpack.i.b16 %v3521, %v3521
        %v5080 = vperm.slane %v5078, 0
        %v5081 = vunpack.c.l.bf16 %v5080
        %v5082 = vmul.f32 %v3538, %v5081
        %v5083 = vmul.f32 %v3539, %v5081
        %v5084 = vmul.f32 %v3540, %v5081
        %v5085 = vmul.f32 %v3541, %v5081
        %v5086 = vmul.f32 %v3542, %v5081
        %v5087 = vmul.f32 %v3543, %v5081
        %v5088 = vmul.f32 %v3544, %v5081
        %v5089 = vmul.f32 %v3545, %v5081
        %v5090 = vmul.f32 %v3546, %v5081
        %v5091 = vmul.f32 %v3547, %v5081
        %v5092 = vmul.f32 %v3548, %v5081
        %v5093 = vmul.f32 %v3549, %v5081
        %v5094 = vmul.f32 %v3603, %v5081
        %v5095 = vmul.f32 %v3604, %v5081
        %v5096 = vmul.f32 %v3605, %v5081
        %v5097 = vmul.f32 %v3606, %v5081
        %v5098 = vmul.f32 %v3607, %v5081
        %v5099 = vmul.f32 %v3608, %v5081
        %v5100 = vmul.f32 %v3755, %v5081
        %v5101 = vmul.f32 %v3756, %v5081
        %v5102 = vmul.f32 %v3757, %v5081
        %v5103 = vmul.f32 %v3758, %v5081
        %v5104 = vmul.f32 %v3759, %v5081
        %v5105 = vmul.f32 %v3760, %v5081
        %v5106 = vpack.c.bf16 %v5082, %v5082
        %v5107 = vpack.c.bf16 %v5083, %v5083
        %v5108 = vpack.c.bf16 %v5084, %v5084
        %v5109 = vpack.c.bf16 %v5085, %v5085
        %v5110 = vpack.c.bf16 %v5086, %v5086
        %v5111 = vpack.c.bf16 %v5087, %v5087
        %v5112 = vpack.c.bf16 %v5088, %v5088
        %v5113 = vpack.c.bf16 %v5089, %v5089
        %v5114 = vpack.c.bf16 %v5090, %v5090
        %v5115 = vpack.c.bf16 %v5091, %v5091
        %v5116 = vpack.c.bf16 %v5092, %v5092
        %v5117 = vpack.c.bf16 %v5093, %v5093
        %v5118 = vpack.c.bf16 %v5094, %v5094
        %v5119 = vpack.c.bf16 %v5095, %v5095
        %v5120 = vpack.c.bf16 %v5096, %v5096
        %v5121 = vpack.c.bf16 %v5097, %v5097
        %v5122 = vpack.c.bf16 %v5098, %v5098
        %v5123 = vpack.c.bf16 %v5099, %v5099
        %v5124 = vpack.c.bf16 %v5100, %v5100
        %v5125 = vpack.c.bf16 %v5101, %v5101
        %v5126 = vpack.c.bf16 %v5102, %v5102
        %v5127 = vpack.c.bf16 %v5103, %v5103
        %v5128 = vpack.c.bf16 %v5104, %v5104
        %v5129 = vpack.c.bf16 %v5105, %v5105
        %v5130 = vunpack.c.l.bf16 %v5053
        %v5131 = vunpack.c.l.bf16 %v5054
        %v5132 = vunpack.c.l.bf16 %v5055
        %v5133 = vunpack.c.l.bf16 %v5056
        %v5134 = vunpack.c.l.bf16 %v5057
        %v5135 = vunpack.c.l.bf16 %v5058
        %v5136 = vunpack.c.l.bf16 %v5059
        %v5137 = vunpack.c.l.bf16 %v5060
        %v5138 = vunpack.c.l.bf16 %v5061
        %v5139 = vunpack.c.l.bf16 %v5062
        %v5140 = vunpack.c.l.bf16 %v5063
        %v5141 = vunpack.c.l.bf16 %v5064
        %v5142 = vunpack.c.l.bf16 %v5065
        %v5143 = vunpack.c.l.bf16 %v5066
        %v5144 = vunpack.c.l.bf16 %v5067
        %v5145 = vunpack.c.l.bf16 %v5068
        %v5146 = vunpack.c.l.bf16 %v5069
        %v5147 = vunpack.c.l.bf16 %v5070
        %v5148 = vunpack.c.l.bf16 %v5071
        %v5149 = vunpack.c.l.bf16 %v5072
        %v5150 = vunpack.c.l.bf16 %v5073
        %v5151 = vunpack.c.l.bf16 %v5074
        %v5152 = vunpack.c.l.bf16 %v5075
        %v5153 = vunpack.c.l.bf16 %v5076
        %v5154 = vunpack.c.l.bf16 %v5106
        %v5155 = vunpack.c.l.bf16 %v5107
        %v5156 = vunpack.c.l.bf16 %v5108
        %v5157 = vunpack.c.l.bf16 %v5109
        %v5158 = vunpack.c.l.bf16 %v5110
        %v5159 = vunpack.c.l.bf16 %v5111
        %v5160 = vunpack.c.l.bf16 %v5112
        %v5161 = vunpack.c.l.bf16 %v5113
        %v5162 = vunpack.c.l.bf16 %v5114
        %v5163 = vunpack.c.l.bf16 %v5115
        %v5164 = vunpack.c.l.bf16 %v5116
        %v5165 = vunpack.c.l.bf16 %v5117
        %v5166 = vunpack.c.l.bf16 %v5118
        %v5167 = vunpack.c.l.bf16 %v5119
        %v5168 = vunpack.c.l.bf16 %v5120
        %v5169 = vunpack.c.l.bf16 %v5121
        %v5170 = vunpack.c.l.bf16 %v5122
        %v5171 = vunpack.c.l.bf16 %v5123
        %v5172 = vunpack.c.l.bf16 %v5124
        %v5173 = vunpack.c.l.bf16 %v5125
        %v5174 = vunpack.c.l.bf16 %v5126
        %v5175 = vunpack.c.l.bf16 %v5127
        %v5176 = vunpack.c.l.bf16 %v5128
        %v5177 = vunpack.c.l.bf16 %v5129
        %v5202 = vrot.slane %v5154, 4
        %v5203 = vrot.slane %v5155, 4
        %v5204 = vsel %vm4730, %v5202, %v5203
        %v5205 = vrot.slane %v5156, 4
        %v5206 = vsel %vm4730, %v5203, %v5205
        %v5207 = vrot.slane %v5157, 4
        %v5208 = vrot.slane %v5158, 4
        %v5209 = vsel %vm4730, %v5207, %v5208
        %v5210 = vrot.slane %v5159, 4
        %v5211 = vsel %vm4730, %v5208, %v5210
        %v5212 = vrot.slane %v5160, 4
        %v5213 = vrot.slane %v5161, 4
        %v5214 = vsel %vm4730, %v5212, %v5213
        %v5215 = vrot.slane %v5162, 4
        %v5216 = vsel %vm4730, %v5213, %v5215
        %v5217 = vrot.slane %v5163, 4
        %v5218 = vrot.slane %v5164, 4
        %v5219 = vsel %vm4730, %v5217, %v5218
        %v5220 = vrot.slane %v5165, 4
        %v5221 = vsel %vm4730, %v5218, %v5220
        %v5222 = vrot.slane %v5166, 4
        %v5223 = vrot.slane %v5167, 4
        %v5224 = vsel %vm4730, %v5222, %v5223
        %v5225 = vrot.slane %v5168, 4
        %v5226 = vsel %vm4730, %v5223, %v5225
        %v5227 = vrot.slane %v5169, 4
        %v5228 = vrot.slane %v5170, 4
        %v5229 = vsel %vm4730, %v5227, %v5228
        %v5230 = vrot.slane %v5171, 4
        %v5231 = vsel %vm4730, %v5228, %v5230
        %v5232 = vrot.slane %v5172, 4
        %v5233 = vrot.slane %v5173, 4
        %v5234 = vsel %vm4730, %v5232, %v5233
        %v5235 = vrot.slane %v5174, 4
        %v5236 = vsel %vm4730, %v5233, %v5235
        %v5237 = vrot.slane %v5175, 4
        %v5238 = vrot.slane %v5176, 4
        %v5239 = vsel %vm4730, %v5237, %v5238
        %v5240 = vrot.slane %v5177, 4
        %v5241 = vsel %vm4730, %v5238, %v5240
        %v5266 = vadd.f32 %v5130, %v5204
        %v5267 = vadd.f32 %v5131, %v5206
        %v5268 = vadd.f32 %v5132, %v5205
        %v5269 = vadd.f32 %v5133, %v5209
        %v5270 = vadd.f32 %v5134, %v5211
        %v5271 = vadd.f32 %v5135, %v5210
        %v5272 = vadd.f32 %v5136, %v5214
        %v5273 = vadd.f32 %v5137, %v5216
        %v5274 = vadd.f32 %v5138, %v5215
        %v5275 = vadd.f32 %v5139, %v5219
        %v5276 = vadd.f32 %v5140, %v5221
        %v5277 = vadd.f32 %v5141, %v5220
        %v5278 = vadd.f32 %v5142, %v5224
        %v5279 = vadd.f32 %v5143, %v5226
        %v5280 = vadd.f32 %v5144, %v5225
        %v5281 = vadd.f32 %v5145, %v5229
        %v5282 = vadd.f32 %v5146, %v5231
        %v5283 = vadd.f32 %v5147, %v5230
        %v5284 = vadd.f32 %v5148, %v5234
        %v5285 = vadd.f32 %v5149, %v5236
        %v5286 = vadd.f32 %v5150, %v5235
        %v5287 = vadd.f32 %v5151, %v5239
        %v5288 = vadd.f32 %v5152, %v5241
        %v5289 = vadd.f32 %v5153, %v5240
        %v5290 = vpack.c.bf16 %v5266, %v5266
        %v5291 = vpack.c.bf16 %v5267, %v5267
        %v5292 = vpack.c.bf16 %v5268, %v5268
        %v5293 = vpack.c.bf16 %v5269, %v5269
        %v5294 = vpack.c.bf16 %v5270, %v5270
        %v5295 = vpack.c.bf16 %v5271, %v5271
        %v5296 = vpack.c.bf16 %v5272, %v5272
        %v5297 = vpack.c.bf16 %v5273, %v5273
        %v5298 = vpack.c.bf16 %v5274, %v5274
        %v5299 = vpack.c.bf16 %v5275, %v5275
        %v5300 = vpack.c.bf16 %v5276, %v5276
        %v5301 = vpack.c.bf16 %v5277, %v5277
        %v5302 = vpack.c.bf16 %v5278, %v5278
        %v5303 = vpack.c.bf16 %v5279, %v5279
        %v5304 = vpack.c.bf16 %v5280, %v5280
        %v5305 = vpack.c.bf16 %v5281, %v5281
        %v5306 = vpack.c.bf16 %v5282, %v5282
        %v5307 = vpack.c.bf16 %v5283, %v5283
        %v5308 = vpack.c.bf16 %v5284, %v5284
        %v5309 = vpack.c.bf16 %v5285, %v5285
        %v5310 = vpack.c.bf16 %v5286, %v5286
        %v5311 = vpack.c.bf16 %v5287, %v5287
        %v5312 = vpack.c.bf16 %v5288, %v5288
        %v5313 = vpack.c.bf16 %v5289, %v5289
        %v5314 = vunpack.c.l.bf16 %v3267
        %v5315 = vunpack.c.l.bf16 %v3268
        %v5316 = vunpack.c.l.bf16 %v3269
        %v5317 = vunpack.c.l.bf16 %v3270
        %v5318 = vunpack.c.l.bf16 %v3271
        %v5319 = vunpack.c.l.bf16 %v3272
        %v5320 = vunpack.c.l.bf16 %v3273
        %v5321 = vunpack.c.l.bf16 %v3274
        %v5322 = vunpack.c.l.bf16 %v3275
        %v5323 = vunpack.c.l.bf16 %v3276
        %v5324 = vunpack.c.l.bf16 %v3277
        %v5325 = vunpack.c.l.bf16 %v3278
        %v5326 = vunpack.c.l.bf16 %v3279
        %v5327 = vunpack.c.l.bf16 %v3280
        %v5328 = vunpack.c.l.bf16 %v3281
        %v5329 = vunpack.c.l.bf16 %v3282
        %v5330 = vunpack.c.l.bf16 %v3283
        %v5331 = vunpack.c.l.bf16 %v3284
        %v5332 = vunpack.c.l.bf16 %v3285
        %v5333 = vunpack.c.l.bf16 %v3286
        %v5334 = vunpack.c.l.bf16 %v3287
        %v5335 = vunpack.c.l.bf16 %v3288
        %v5336 = vunpack.c.l.bf16 %v3289
        %v5337 = vunpack.c.l.bf16 %v3290
        %v5338 = vunpack.c.l.bf16 %v5290
        %v5339 = vunpack.c.l.bf16 %v5291
        %v5340 = vunpack.c.l.bf16 %v5292
        %v5341 = vunpack.c.l.bf16 %v5293
        %v5342 = vunpack.c.l.bf16 %v5294
        %v5343 = vunpack.c.l.bf16 %v5295
        %v5344 = vunpack.c.l.bf16 %v5296
        %v5345 = vunpack.c.l.bf16 %v5297
        %v5346 = vunpack.c.l.bf16 %v5298
        %v5347 = vunpack.c.l.bf16 %v5299
        %v5348 = vunpack.c.l.bf16 %v5300
        %v5349 = vunpack.c.l.bf16 %v5301
        %v5350 = vunpack.c.l.bf16 %v5302
        %v5351 = vunpack.c.l.bf16 %v5303
        %v5352 = vunpack.c.l.bf16 %v5304
        %v5353 = vunpack.c.l.bf16 %v5305
        %v5354 = vunpack.c.l.bf16 %v5306
        %v5355 = vunpack.c.l.bf16 %v5307
        %v5356 = vunpack.c.l.bf16 %v5308
        %v5357 = vunpack.c.l.bf16 %v5309
        %v5358 = vunpack.c.l.bf16 %v5310
        %v5359 = vunpack.c.l.bf16 %v5311
        %v5360 = vunpack.c.l.bf16 %v5312
        %v5361 = vunpack.c.l.bf16 %v5313
        %vm5386 = vcmask 1040384
        %v5387 = vrot.slane %v5338, 7
        %v5388 = vrot.slane %v5339, 7
        %v5389 = vsel %vm5386, %v5387, %v5388
        %v5390 = vrot.slane %v5340, 7
        %v5391 = vsel %vm5386, %v5388, %v5390
        %v5392 = vrot.slane %v5341, 7
        %v5393 = vrot.slane %v5342, 7
        %v5394 = vsel %vm5386, %v5392, %v5393
        %v5395 = vrot.slane %v5343, 7
        %v5396 = vsel %vm5386, %v5393, %v5395
        %v5397 = vrot.slane %v5344, 7
        %v5398 = vrot.slane %v5345, 7
        %v5399 = vsel %vm5386, %v5397, %v5398
        %v5400 = vrot.slane %v5346, 7
        %v5401 = vsel %vm5386, %v5398, %v5400
        %v5402 = vrot.slane %v5347, 7
        %v5403 = vrot.slane %v5348, 7
        %v5404 = vsel %vm5386, %v5402, %v5403
        %v5405 = vrot.slane %v5349, 7
        %v5406 = vsel %vm5386, %v5403, %v5405
        %v5407 = vrot.slane %v5350, 7
        %v5408 = vrot.slane %v5351, 7
        %v5409 = vsel %vm5386, %v5407, %v5408
        %v5410 = vrot.slane %v5352, 7
        %v5411 = vsel %vm5386, %v5408, %v5410
        %v5412 = vrot.slane %v5353, 7
        %v5413 = vrot.slane %v5354, 7
        %v5414 = vsel %vm5386, %v5412, %v5413
        %v5415 = vrot.slane %v5355, 7
        %v5416 = vsel %vm5386, %v5413, %v5415
        %v5417 = vrot.slane %v5356, 7
        %v5418 = vrot.slane %v5357, 7
        %v5419 = vsel %vm5386, %v5417, %v5418
        %v5420 = vrot.slane %v5358, 7
        %v5421 = vsel %vm5386, %v5418, %v5420
        %v5422 = vrot.slane %v5359, 7
        %v5423 = vrot.slane %v5360, 7
        %v5424 = vsel %vm5386, %v5422, %v5423
        %v5425 = vrot.slane %v5361, 7
        %v5426 = vsel %vm5386, %v5423, %v5425
        %v5451 = vmul.f32 %v5314, %v5387
        %v5452 = vmul.f32 %v5315, %v5389
        %v5453 = vmul.f32 %v5316, %v5391
        %v5454 = vmul.f32 %v5317, %v5392
        %v5455 = vmul.f32 %v5318, %v5394
        %v5456 = vmul.f32 %v5319, %v5396
        %v5457 = vmul.f32 %v5320, %v5397
        %v5458 = vmul.f32 %v5321, %v5399
        %v5459 = vmul.f32 %v5322, %v5401
        %v5460 = vmul.f32 %v5323, %v5402
        %v5461 = vmul.f32 %v5324, %v5404
        %v5462 = vmul.f32 %v5325, %v5406
        %v5463 = vmul.f32 %v5326, %v5407
        %v5464 = vmul.f32 %v5327, %v5409
        %v5465 = vmul.f32 %v5328, %v5411
        %v5466 = vmul.f32 %v5329, %v5412
        %v5467 = vmul.f32 %v5330, %v5414
        %v5468 = vmul.f32 %v5331, %v5416
        %v5469 = vmul.f32 %v5332, %v5417
        %v5470 = vmul.f32 %v5333, %v5419
        %v5471 = vmul.f32 %v5334, %v5421
        %v5472 = vmul.f32 %v5335, %v5422
        %v5473 = vmul.f32 %v5336, %v5424
        %v5474 = vmul.f32 %v5337, %v5426
        %v5475 = vpack.c.bf16 %v5451, %v5451
        %v5476 = vpack.c.bf16 %v5452, %v5452
        %v5477 = vpack.c.bf16 %v5453, %v5453
        %v5478 = vpack.c.bf16 %v5454, %v5454
        %v5479 = vpack.c.bf16 %v5455, %v5455
        %v5480 = vpack.c.bf16 %v5456, %v5456
        %v5481 = vpack.c.bf16 %v5457, %v5457
        %v5482 = vpack.c.bf16 %v5458, %v5458
        %v5483 = vpack.c.bf16 %v5459, %v5459
        %v5484 = vpack.c.bf16 %v5460, %v5460
        %v5485 = vpack.c.bf16 %v5461, %v5461
        %v5486 = vpack.c.bf16 %v5462, %v5462
        %v5487 = vpack.c.bf16 %v5463, %v5463
        %v5488 = vpack.c.bf16 %v5464, %v5464
        %v5489 = vpack.c.bf16 %v5465, %v5465
        %v5490 = vpack.c.bf16 %v5466, %v5466
        %v5491 = vpack.c.bf16 %v5467, %v5467
        %v5492 = vpack.c.bf16 %v5468, %v5468
        %v5493 = vpack.c.bf16 %v5469, %v5469
        %v5494 = vpack.c.bf16 %v5470, %v5470
        %v5495 = vpack.c.bf16 %v5471, %v5471
        %v5496 = vpack.c.bf16 %v5472, %v5472
        %v5497 = vpack.c.bf16 %v5473, %v5473
        %v5498 = vpack.c.bf16 %v5474, %v5474
        %v5499 = vld [vmem:[#allocation9] sm:$0xf]
        %v5500 = vld [vmem:[#allocation9 + $0x4] sm:$0xf]
        %v5501 = vld [vmem:[#allocation9 + $0x8] sm:$0xf]
        %v5502 = vld [vmem:[#allocation9 + $0xc] sm:$0xf]
        %v5503 = vld [vmem:[#allocation9 + $0x10] sm:$0xf]
        %v5504 = vld [vmem:[#allocation9 + $0x14] sm:$0xf]
        %v5505 = vld [vmem:[#allocation9 + $0x18] sm:$0xf]
        %v5506 = vld [vmem:[#allocation9 + $0x1c] sm:$0xf]
        %v5507 = vld [vmem:[#allocation9 + $0x20] sm:$0xf]
        %v5508 = vld [vmem:[#allocation9 + $0x24] sm:$0xf]
        %v5509 = vld [vmem:[#allocation9 + $0x28] sm:$0xf]
        %v5510 = vld [vmem:[#allocation9 + $0x2c] sm:$0xf]
        %v5511 = vld [vmem:[#allocation9 + $0x30] sm:$0xf]
        %v5512 = vld [vmem:[#allocation9 + $0x34] sm:$0xf]
        %v5513 = vld [vmem:[#allocation9 + $0x38] sm:$0xf]
        %v5514 = vld [vmem:[#allocation9 + $0x3c] sm:$0xf]
        %v5531 = vunpack.c.l.b16 %v5499
        %v5532 = vunpack.c.l.b16 %v5500
        %v5533 = vunpack.c.l.b16 %v5501
        %v5534 = vunpack.c.l.b16 %v5502
        %v5535 = vunpack.c.l.b16 %v5503
        %v5536 = vunpack.c.l.b16 %v5504
        %v5537 = vunpack.c.l.b16 %v5505
        %v5538 = vunpack.c.l.b16 %v5506
        %v5539 = vunpack.c.l.b16 %v5507
        %v5540 = vunpack.c.l.b16 %v5508
        %v5541 = vunpack.c.l.b16 %v5509
        %v5542 = vunpack.c.l.b16 %v5510
        %v5543 = vunpack.c.l.b16 %v5511
        %v5544 = vunpack.c.l.b16 %v5512
        %v5545 = vunpack.c.l.b16 %v5513
        %v5546 = vunpack.c.l.b16 %v5514
        %v5547 = vpack.c.b16 %v5532, %v5531
        %v5548 = vpack.c.b16 %v5534, %v5533
        %v5549 = vpack.c.b16 %v5536, %v5535
        %v5550 = vpack.c.b16 %v5538, %v5537
        %v5551 = vpack.c.b16 %v5540, %v5539
        %v5552 = vpack.c.b16 %v5542, %v5541
        %v5553 = vpack.c.b16 %v5544, %v5543
        %v5554 = vpack.c.b16 %v5546, %v5545
        %5563 = vmatpush.bf16.msra.mxu0 %v5554
        %5564 = vmatpush.bf16.msra.mxu0 %v5553
        %5565 = vmatpush.bf16.msra.mxu0 %v5552
        %5566 = vmatpush.bf16.msra.mxu0 %v5551
        %5567 = vmatpush.bf16.msra.mxu0 %v5550
        %5568 = vmatpush.bf16.msra.mxu0 %v5549
        %5569 = vmatpush.bf16.msra.mxu0 %v5548
        %5570 = vmatpush.bf16.msra.mxu0 %v5547
        %5571 = vmatmul.bf16.gmra.mxu0 %v597
        %v5572 = vpop.f32.mrf.mxu0
        %v5573 = vadd.f32 0.0, %v5572
        %v5574 = vpop.f32.mrf.mxu0
        %v5575 = vadd.f32 0.0, %v5574
        %5576 = vmatmul.bf16.gmra.mxu0 %v598
        %v5577 = vpop.f32.mrf.mxu0
        %v5578 = vadd.f32 0.0, %v5577
        %v5579 = vpop.f32.mrf.mxu0
        %5580 = vmatmul.bf16.gmra.mxu0 %v599
        %v5581 = vpop.f32.mrf.mxu0
        %v5582 = vadd.f32 0.0, %v5581
        %v5583 = vpop.f32.mrf.mxu0
        %v5584 = vadd.f32 0.0, %v5583
        %5585 = vmatmul.bf16.gmra.mxu0 %v600
        %v5586 = vpop.f32.mrf.mxu0
        %v5587 = vadd.f32 0.0, %v5586
        %v5588 = vpop.f32.mrf.mxu0
        %5589 = vmatmul.bf16.gmra.mxu0 %v601
        %v5590 = vpop.f32.mrf.mxu0
        %v5591 = vadd.f32 0.0, %v5590
        %v5592 = vpop.f32.mrf.mxu0
        %v5593 = vadd.f32 0.0, %v5592
        %5594 = vmatmul.bf16.gmra.mxu0 %v602
        %v5595 = vpop.f32.mrf.mxu0
        %v5596 = vadd.f32 0.0, %v5595
        %v5597 = vpop.f32.mrf.mxu0
        %5598 = vmatmul.bf16.gmra.mxu0 %v603
        %v5599 = vpop.f32.mrf.mxu0
        %v5600 = vadd.f32 0.0, %v5599
        %v5601 = vpop.f32.mrf.mxu0
        %v5602 = vadd.f32 0.0, %v5601
        %5603 = vmatmul.bf16.gmra.mxu0 %v604
        %v5604 = vpop.f32.mrf.mxu0
        %v5605 = vadd.f32 0.0, %v5604
        %v5606 = vpop.f32.mrf.mxu0
        %5607 = vmatmul.bf16.gmra.mxu0 %v605
        %v5608 = vpop.f32.mrf.mxu0
        %v5609 = vadd.f32 0.0, %v5608
        %v5610 = vpop.f32.mrf.mxu0
        %v5611 = vadd.f32 0.0, %v5610
        %5612 = vmatmul.bf16.gmra.mxu0 %v606
        %v5613 = vpop.f32.mrf.mxu0
        %v5614 = vadd.f32 0.0, %v5613
        %v5615 = vpop.f32.mrf.mxu0
        %5616 = vmatmul.bf16.gmra.mxu0 %v607
        %v5617 = vpop.f32.mrf.mxu0
        %v5618 = vadd.f32 0.0, %v5617
        %v5619 = vpop.f32.mrf.mxu0
        %v5620 = vadd.f32 0.0, %v5619
        %5621 = vmatmul.bf16.gmra.mxu0 %v608
        %v5622 = vpop.f32.mrf.mxu0
        %v5623 = vadd.f32 0.0, %v5622
        %v5624 = vpop.f32.mrf.mxu0
        %5625 = vmatmul.bf16.gmra.mxu0 %v609
        %v5626 = vpop.f32.mrf.mxu0
        %v5627 = vadd.f32 0.0, %v5626
        %v5628 = vpop.f32.mrf.mxu0
        %v5629 = vadd.f32 0.0, %v5628
        %5630 = vmatmul.bf16.gmra.mxu0 %v610
        %v5631 = vpop.f32.mrf.mxu0
        %v5632 = vadd.f32 0.0, %v5631
        %v5633 = vpop.f32.mrf.mxu0
        %5634 = vmatmul.bf16.gmra.mxu0 %v611
        %v5635 = vpop.f32.mrf.mxu0
        %v5636 = vadd.f32 0.0, %v5635
        %v5637 = vpop.f32.mrf.mxu0
        %v5638 = vadd.f32 0.0, %v5637
        %5639 = vmatmul.bf16.gmra.mxu0 %v612
        %v5640 = vpop.f32.mrf.mxu0
        %v5641 = vadd.f32 0.0, %v5640
        %v5642 = vpop.f32.mrf.mxu0
        %5643 = vmatmul.bf16.gmra.mxu0 %v613
        %v5644 = vpop.f32.mrf.mxu0
        %v5645 = vadd.f32 0.0, %v5644
        %v5646 = vpop.f32.mrf.mxu0
        %v5647 = vadd.f32 0.0, %v5646
        %5648 = vmatmul.bf16.gmra.mxu0 %v614
        %v5649 = vpop.f32.mrf.mxu0
        %v5650 = vadd.f32 0.0, %v5649
        %v5651 = vpop.f32.mrf.mxu0
        %5652 = vmatmul.bf16.gmra.mxu0 %v615
        %v5653 = vpop.f32.mrf.mxu0
        %v5654 = vadd.f32 0.0, %v5653
        %v5655 = vpop.f32.mrf.mxu0
        %v5656 = vadd.f32 0.0, %v5655
        %5657 = vmatmul.bf16.gmra.mxu0 %v616
        %v5658 = vpop.f32.mrf.mxu0
        %v5659 = vadd.f32 0.0, %v5658
        %v5660 = vpop.f32.mrf.mxu0
        %5661 = vmatmul.bf16.gmra.mxu0 %v617
        %v5662 = vpop.f32.mrf.mxu0
        %v5663 = vadd.f32 0.0, %v5662
        %v5664 = vpop.f32.mrf.mxu0
        %v5665 = vadd.f32 0.0, %v5664
        %5666 = vmatmul.bf16.gmra.mxu0 %v618
        %v5667 = vpop.f32.mrf.mxu0
        %v5668 = vadd.f32 0.0, %v5667
        %v5669 = vpop.f32.mrf.mxu0
        %5670 = vmatmul.bf16.gmra.mxu0 %v619
        %v5671 = vpop.f32.mrf.mxu0
        %v5672 = vadd.f32 0.0, %v5671
        %v5673 = vpop.f32.mrf.mxu0
        %v5674 = vadd.f32 0.0, %v5673
        %5675 = vmatmul.bf16.gmra.mxu0 %v620
        %v5676 = vpop.f32.mrf.mxu0
        %v5677 = vadd.f32 0.0, %v5676
        %v5678 = vpop.f32.mrf.mxu0
        %5679 = vmatmul.bf16.gmra.mxu0 %v621
        %v5680 = vpop.f32.mrf.mxu0
        %v5681 = vadd.f32 0.0, %v5680
        %v5682 = vpop.f32.mrf.mxu0
        %v5683 = vadd.f32 0.0, %v5682
        %5684 = vmatmul.bf16.gmra.mxu0 %v622
        %v5685 = vpop.f32.mrf.mxu0
        %v5686 = vadd.f32 0.0, %v5685
        %v5687 = vpop.f32.mrf.mxu0
        %5688 = vmatmul.bf16.gmra.mxu0 %v623
        %v5689 = vpop.f32.mrf.mxu0
        %v5690 = vadd.f32 0.0, %v5689
        %v5691 = vpop.f32.mrf.mxu0
        %v5692 = vadd.f32 0.0, %v5691
        %5693 = vmatmul.bf16.gmra.mxu0 %v624
        %v5694 = vpop.f32.mrf.mxu0
        %v5695 = vadd.f32 0.0, %v5694
        %v5696 = vpop.f32.mrf.mxu0
        %5697 = vdwg.mxu0
        %v5698 = vpack.c.bf16 %v5573, %v5573
        %v5699 = vpack.c.bf16 %v5575, %v5575
        %v5700 = vpack.c.bf16 %v5578, %v5578
        %v5701 = vpack.c.bf16 %v5582, %v5582
        %v5702 = vpack.c.bf16 %v5584, %v5584
        %v5703 = vpack.c.bf16 %v5587, %v5587
        %v5704 = vpack.c.bf16 %v5591, %v5591
        %v5705 = vpack.c.bf16 %v5593, %v5593
        %v5706 = vpack.c.bf16 %v5596, %v5596
        %v5707 = vpack.c.bf16 %v5600, %v5600
        %v5708 = vpack.c.bf16 %v5602, %v5602
        %v5709 = vpack.c.bf16 %v5605, %v5605
        %v5710 = vpack.c.bf16 %v5609, %v5609
        %v5711 = vpack.c.bf16 %v5611, %v5611
        %v5712 = vpack.c.bf16 %v5614, %v5614
        %v5713 = vpack.c.bf16 %v5618, %v5618
        %v5714 = vpack.c.bf16 %v5620, %v5620
        %v5715 = vpack.c.bf16 %v5623, %v5623
        %v5716 = vpack.c.bf16 %v5627, %v5627
        %v5717 = vpack.c.bf16 %v5629, %v5629
        %v5718 = vpack.c.bf16 %v5632, %v5632
        %v5719 = vpack.c.bf16 %v5636, %v5636
        %v5720 = vpack.c.bf16 %v5638, %v5638
        %v5721 = vpack.c.bf16 %v5641, %v5641
        %v5722 = vpack.c.bf16 %v5645, %v5645
        %v5723 = vpack.c.bf16 %v5647, %v5647
        %v5724 = vpack.c.bf16 %v5650, %v5650
        %v5725 = vpack.c.bf16 %v5654, %v5654
        %v5726 = vpack.c.bf16 %v5656, %v5656
        %v5727 = vpack.c.bf16 %v5659, %v5659
        %v5728 = vpack.c.bf16 %v5663, %v5663
        %v5729 = vpack.c.bf16 %v5665, %v5665
        %v5730 = vpack.c.bf16 %v5668, %v5668
        %v5731 = vpack.c.bf16 %v5672, %v5672
        %v5732 = vpack.c.bf16 %v5674, %v5674
        %v5733 = vpack.c.bf16 %v5677, %v5677
        %v5734 = vpack.c.bf16 %v5681, %v5681
        %v5735 = vpack.c.bf16 %v5683, %v5683
        %v5736 = vpack.c.bf16 %v5686, %v5686
        %v5737 = vpack.c.bf16 %v5690, %v5690
        %v5738 = vpack.c.bf16 %v5692, %v5692
        %v5739 = vpack.c.bf16 %v5695, %v5695
        %v5740 = vld [vmem:[#allocation13] sm:$0xf]
        %v5741 = vld [vmem:[#allocation13 + $0x4] sm:$0x1]
        %v5743 = vpack.i.b16 %v5740, %v5740
        %v5745 = vperm.slane %v5743, 0
        %v5746 = vunpack.c.l.bf16 %v5698
        %v5747 = vunpack.c.l.bf16 %v5699
        %v5748 = vunpack.c.l.bf16 %v5701
        %v5749 = vunpack.c.l.bf16 %v5702
        %v5750 = vunpack.c.l.bf16 %v5704
        %v5751 = vunpack.c.l.bf16 %v5705
        %v5752 = vunpack.c.l.bf16 %v5707
        %v5753 = vunpack.c.l.bf16 %v5708
        %v5754 = vunpack.c.l.bf16 %v5710
        %v5755 = vunpack.c.l.bf16 %v5711
        %v5756 = vunpack.c.l.bf16 %v5713
        %v5757 = vunpack.c.l.bf16 %v5714
        %v5758 = vunpack.c.l.bf16 %v5716
        %v5759 = vunpack.c.l.bf16 %v5717
        %v5760 = vunpack.c.l.bf16 %v5719
        %v5761 = vunpack.c.l.bf16 %v5720
        %v5762 = vunpack.c.l.bf16 %v5745
        %v5763 = vmul.f32 %v5746, %v5762
        %v5764 = vmul.f32 %v5747, %v5762
        %v5765 = vmul.f32 %v5748, %v5762
        %v5766 = vmul.f32 %v5749, %v5762
        %v5767 = vmul.f32 %v5750, %v5762
        %v5768 = vmul.f32 %v5751, %v5762
        %v5769 = vmul.f32 %v5752, %v5762
        %v5770 = vmul.f32 %v5753, %v5762
        %v5771 = vmul.f32 %v5754, %v5762
        %v5772 = vmul.f32 %v5755, %v5762
        %v5773 = vmul.f32 %v5756, %v5762
        %v5774 = vmul.f32 %v5757, %v5762
        %v5775 = vmul.f32 %v5758, %v5762
        %v5776 = vmul.f32 %v5759, %v5762
        %v5777 = vmul.f32 %v5760, %v5762
        %v5778 = vmul.f32 %v5761, %v5762
        %v5779 = vpack.c.bf16 %v5763, %v5763
        %v5780 = vpack.c.bf16 %v5764, %v5764
        %v5781 = vpack.c.bf16 %v5765, %v5765
        %v5782 = vpack.c.bf16 %v5766, %v5766
        %v5783 = vpack.c.bf16 %v5767, %v5767
        %v5784 = vpack.c.bf16 %v5768, %v5768
        %v5785 = vpack.c.bf16 %v5769, %v5769
        %v5786 = vpack.c.bf16 %v5770, %v5770
        %v5787 = vpack.c.bf16 %v5771, %v5771
        %v5788 = vpack.c.bf16 %v5772, %v5772
        %v5789 = vpack.c.bf16 %v5773, %v5773
        %v5790 = vpack.c.bf16 %v5774, %v5774
        %v5791 = vpack.c.bf16 %v5775, %v5775
        %v5792 = vpack.c.bf16 %v5776, %v5776
        %v5793 = vpack.c.bf16 %v5777, %v5777
        %v5794 = vpack.c.bf16 %v5778, %v5778
        %v5795 = vshrl.u32 %v5740, 16
        %v5796 = vpack.i.b16 %v5795, %v5795
        %v5798 = vperm.slane %v5796, 1
        %v5799 = vunpack.c.l.bf16 %v5722
        %v5800 = vunpack.c.l.bf16 %v5723
        %v5801 = vunpack.c.l.bf16 %v5725
        %v5802 = vunpack.c.l.bf16 %v5726
        %v5803 = vunpack.c.l.bf16 %v5728
        %v5804 = vunpack.c.l.bf16 %v5729
        %v5805 = vunpack.c.l.bf16 %v5798
        %v5806 = vmul.f32 %v5752, %v5805
        %v5807 = vmul.f32 %v5753, %v5805
        %v5808 = vmul.f32 %v5754, %v5805
        %v5809 = vmul.f32 %v5755, %v5805
        %v5810 = vmul.f32 %v5756, %v5805
        %v5811 = vmul.f32 %v5757, %v5805
        %v5812 = vmul.f32 %v5758, %v5805
        %v5813 = vmul.f32 %v5759, %v5805
        %v5814 = vmul.f32 %v5760, %v5805
        %v5815 = vmul.f32 %v5761, %v5805
        %v5816 = vmul.f32 %v5799, %v5805
        %v5817 = vmul.f32 %v5800, %v5805
        %v5818 = vmul.f32 %v5801, %v5805
        %v5819 = vmul.f32 %v5802, %v5805
        %v5820 = vmul.f32 %v5803, %v5805
        %v5821 = vmul.f32 %v5804, %v5805
        %v5822 = vpack.c.bf16 %v5806, %v5806
        %v5823 = vpack.c.bf16 %v5807, %v5807
        %v5824 = vpack.c.bf16 %v5808, %v5808
        %v5825 = vpack.c.bf16 %v5809, %v5809
        %v5826 = vpack.c.bf16 %v5810, %v5810
        %v5827 = vpack.c.bf16 %v5811, %v5811
        %v5828 = vpack.c.bf16 %v5812, %v5812
        %v5829 = vpack.c.bf16 %v5813, %v5813
        %v5830 = vpack.c.bf16 %v5814, %v5814
        %v5831 = vpack.c.bf16 %v5815, %v5815
        %v5832 = vpack.c.bf16 %v5816, %v5816
        %v5833 = vpack.c.bf16 %v5817, %v5817
        %v5834 = vpack.c.bf16 %v5818, %v5818
        %v5835 = vpack.c.bf16 %v5819, %v5819
        %v5836 = vpack.c.bf16 %v5820, %v5820
        %v5837 = vpack.c.bf16 %v5821, %v5821
        %v5838 = vunpack.c.l.bf16 %v5779
        %v5839 = vunpack.c.l.bf16 %v5780
        %v5840 = vunpack.c.l.bf16 %v5781
        %v5841 = vunpack.c.l.bf16 %v5782
        %v5842 = vunpack.c.l.bf16 %v5783
        %v5843 = vunpack.c.l.bf16 %v5784
        %v5844 = vunpack.c.l.bf16 %v5785
        %v5845 = vunpack.c.l.bf16 %v5786
        %v5846 = vunpack.c.l.bf16 %v5787
        %v5847 = vunpack.c.l.bf16 %v5788
        %v5848 = vunpack.c.l.bf16 %v5789
        %v5849 = vunpack.c.l.bf16 %v5790
        %v5850 = vunpack.c.l.bf16 %v5791
        %v5851 = vunpack.c.l.bf16 %v5792
        %v5852 = vunpack.c.l.bf16 %v5793
        %v5853 = vunpack.c.l.bf16 %v5794
        %v5854 = vunpack.c.l.bf16 %v5822
        %v5855 = vunpack.c.l.bf16 %v5823
        %v5856 = vunpack.c.l.bf16 %v5824
        %v5857 = vunpack.c.l.bf16 %v5825
        %v5858 = vunpack.c.l.bf16 %v5826
        %v5859 = vunpack.c.l.bf16 %v5827
        %v5860 = vunpack.c.l.bf16 %v5828
        %v5861 = vunpack.c.l.bf16 %v5829
        %v5862 = vunpack.c.l.bf16 %v5830
        %v5863 = vunpack.c.l.bf16 %v5831
        %v5864 = vunpack.c.l.bf16 %v5832
        %v5865 = vunpack.c.l.bf16 %v5833
        %v5866 = vunpack.c.l.bf16 %v5834
        %v5867 = vunpack.c.l.bf16 %v5835
        %v5868 = vunpack.c.l.bf16 %v5836
        %v5869 = vunpack.c.l.bf16 %v5837
        %v5870 = vadd.f32 %v5838, %v5854
        %v5871 = vadd.f32 %v5839, %v5855
        %v5872 = vadd.f32 %v5840, %v5856
        %v5873 = vadd.f32 %v5841, %v5857
        %v5874 = vadd.f32 %v5842, %v5858
        %v5875 = vadd.f32 %v5843, %v5859
        %v5876 = vadd.f32 %v5844, %v5860
        %v5877 = vadd.f32 %v5845, %v5861
        %v5878 = vadd.f32 %v5846, %v5862
        %v5879 = vadd.f32 %v5847, %v5863
        %v5880 = vadd.f32 %v5848, %v5864
        %v5881 = vadd.f32 %v5849, %v5865
        %v5882 = vadd.f32 %v5850, %v5866
        %v5883 = vadd.f32 %v5851, %v5867
        %v5884 = vadd.f32 %v5852, %v5868
        %v5885 = vadd.f32 %v5853, %v5869
        %v5886 = vpack.c.bf16 %v5870, %v5870
        %v5887 = vpack.c.bf16 %v5871, %v5871
        %v5888 = vpack.c.bf16 %v5872, %v5872
        %v5889 = vpack.c.bf16 %v5873, %v5873
        %v5890 = vpack.c.bf16 %v5874, %v5874
        %v5891 = vpack.c.bf16 %v5875, %v5875
        %v5892 = vpack.c.bf16 %v5876, %v5876
        %v5893 = vpack.c.bf16 %v5877, %v5877
        %v5894 = vpack.c.bf16 %v5878, %v5878
        %v5895 = vpack.c.bf16 %v5879, %v5879
        %v5896 = vpack.c.bf16 %v5880, %v5880
        %v5897 = vpack.c.bf16 %v5881, %v5881
        %v5898 = vpack.c.bf16 %v5882, %v5882
        %v5899 = vpack.c.bf16 %v5883, %v5883
        %v5900 = vpack.c.bf16 %v5884, %v5884
        %v5901 = vpack.c.bf16 %v5885, %v5885
        %v5902 = vperm.slane %v5743, 3
        %v5903 = vunpack.c.l.bf16 %v5731
        %v5904 = vunpack.c.l.bf16 %v5732
        %v5905 = vunpack.c.l.bf16 %v5734
        %v5906 = vunpack.c.l.bf16 %v5735
        %v5907 = vunpack.c.l.bf16 %v5737
        %v5908 = vunpack.c.l.bf16 %v5738
        %v5909 = vunpack.c.l.bf16 %v5902
        %v5910 = vmul.f32 %v5758, %v5909
        %v5911 = vmul.f32 %v5759, %v5909
        %v5912 = vmul.f32 %v5760, %v5909
        %v5913 = vmul.f32 %v5761, %v5909
        %v5914 = vmul.f32 %v5799, %v5909
        %v5915 = vmul.f32 %v5800, %v5909
        %v5916 = vmul.f32 %v5801, %v5909
        %v5917 = vmul.f32 %v5802, %v5909
        %v5918 = vmul.f32 %v5803, %v5909
        %v5919 = vmul.f32 %v5804, %v5909
        %v5920 = vmul.f32 %v5903, %v5909
        %v5921 = vmul.f32 %v5904, %v5909
        %v5922 = vmul.f32 %v5905, %v5909
        %v5923 = vmul.f32 %v5906, %v5909
        %v5924 = vmul.f32 %v5907, %v5909
        %v5925 = vmul.f32 %v5908, %v5909
        %v5926 = vpack.c.bf16 %v5910, %v5910
        %v5927 = vpack.c.bf16 %v5911, %v5911
        %v5928 = vpack.c.bf16 %v5912, %v5912
        %v5929 = vpack.c.bf16 %v5913, %v5913
        %v5930 = vpack.c.bf16 %v5914, %v5914
        %v5931 = vpack.c.bf16 %v5915, %v5915
        %v5932 = vpack.c.bf16 %v5916, %v5916
        %v5933 = vpack.c.bf16 %v5917, %v5917
        %v5934 = vpack.c.bf16 %v5918, %v5918
        %v5935 = vpack.c.bf16 %v5919, %v5919
        %v5936 = vpack.c.bf16 %v5920, %v5920
        %v5937 = vpack.c.bf16 %v5921, %v5921
        %v5938 = vpack.c.bf16 %v5922, %v5922
        %v5939 = vpack.c.bf16 %v5923, %v5923
        %v5940 = vpack.c.bf16 %v5924, %v5924
        %v5941 = vpack.c.bf16 %v5925, %v5925
        %v5942 = vunpack.c.l.bf16 %v5886
        %v5943 = vunpack.c.l.bf16 %v5887
        %v5944 = vunpack.c.l.bf16 %v5888
        %v5945 = vunpack.c.l.bf16 %v5889
        %v5946 = vunpack.c.l.bf16 %v5890
        %v5947 = vunpack.c.l.bf16 %v5891
        %v5948 = vunpack.c.l.bf16 %v5892
        %v5949 = vunpack.c.l.bf16 %v5893
        %v5950 = vunpack.c.l.bf16 %v5894
        %v5951 = vunpack.c.l.bf16 %v5895
        %v5952 = vunpack.c.l.bf16 %v5896
        %v5953 = vunpack.c.l.bf16 %v5897
        %v5954 = vunpack.c.l.bf16 %v5898
        %v5955 = vunpack.c.l.bf16 %v5899
        %v5956 = vunpack.c.l.bf16 %v5900
        %v5957 = vunpack.c.l.bf16 %v5901
        %v5958 = vunpack.c.l.bf16 %v5926
        %v5959 = vunpack.c.l.bf16 %v5927
        %v5960 = vunpack.c.l.bf16 %v5928
        %v5961 = vunpack.c.l.bf16 %v5929
        %v5962 = vunpack.c.l.bf16 %v5930
        %v5963 = vunpack.c.l.bf16 %v5931
        %v5964 = vunpack.c.l.bf16 %v5932
        %v5965 = vunpack.c.l.bf16 %v5933
        %v5966 = vunpack.c.l.bf16 %v5934
        %v5967 = vunpack.c.l.bf16 %v5935
        %v5968 = vunpack.c.l.bf16 %v5936
        %v5969 = vunpack.c.l.bf16 %v5937
        %v5970 = vunpack.c.l.bf16 %v5938
        %v5971 = vunpack.c.l.bf16 %v5939
        %v5972 = vunpack.c.l.bf16 %v5940
        %v5973 = vunpack.c.l.bf16 %v5941
        %v5974 = vadd.f32 %v5942, %v5958
        %v5975 = vadd.f32 %v5943, %v5959
        %v5976 = vadd.f32 %v5944, %v5960
        %v5977 = vadd.f32 %v5945, %v5961
        %v5978 = vadd.f32 %v5946, %v5962
        %v5979 = vadd.f32 %v5947, %v5963
        %v5980 = vadd.f32 %v5948, %v5964
        %v5981 = vadd.f32 %v5949, %v5965
        %v5982 = vadd.f32 %v5950, %v5966
        %v5983 = vadd.f32 %v5951, %v5967
        %v5984 = vadd.f32 %v5952, %v5968
        %v5985 = vadd.f32 %v5953, %v5969
        %v5986 = vadd.f32 %v5954, %v5970
        %v5987 = vadd.f32 %v5955, %v5971
        %v5988 = vadd.f32 %v5956, %v5972
        %v5989 = vadd.f32 %v5957, %v5973
        %v5990 = vpack.c.bf16 %v5974, %v5974
        %v5991 = vpack.c.bf16 %v5975, %v5975
        %v5992 = vpack.c.bf16 %v5976, %v5976
        %v5993 = vpack.c.bf16 %v5977, %v5977
        %v5994 = vpack.c.bf16 %v5978, %v5978
        %v5995 = vpack.c.bf16 %v5979, %v5979
        %v5996 = vpack.c.bf16 %v5980, %v5980
        %v5997 = vpack.c.bf16 %v5981, %v5981
        %v5998 = vpack.c.bf16 %v5982, %v5982
        %v5999 = vpack.c.bf16 %v5983, %v5983
        %v6000 = vpack.c.bf16 %v5984, %v5984
        %v6001 = vpack.c.bf16 %v5985, %v5985
        %v6002 = vpack.c.bf16 %v5986, %v5986
        %v6003 = vpack.c.bf16 %v5987, %v5987
        %v6004 = vpack.c.bf16 %v5988, %v5988
        %v6005 = vpack.c.bf16 %v5989, %v5989
        %v6006 = vperm.slane %v5796, 0
        %v6007 = vunpack.c.l.bf16 %v5700
        %v6008 = vunpack.c.l.bf16 %v5703
        %v6009 = vunpack.c.l.bf16 %v5706
        %v6010 = vunpack.c.l.bf16 %v5709
        %v6011 = vunpack.c.l.bf16 %v5712
        %v6012 = vunpack.c.l.bf16 %v5715
        %v6013 = vunpack.c.l.bf16 %v5718
        %v6014 = vunpack.c.l.bf16 %v5721
        %v6015 = vunpack.c.l.bf16 %v6006
        %v6016 = vmul.f32 %v5746, %v6015
        %v6017 = vmul.f32 %v5747, %v6015
        %v6018 = vmul.f32 %v6007, %v6015
        %v6019 = vmul.f32 %v5748, %v6015
        %v6020 = vmul.f32 %v5749, %v6015
        %v6021 = vmul.f32 %v6008, %v6015
        %v6022 = vmul.f32 %v5750, %v6015
        %v6023 = vmul.f32 %v5751, %v6015
        %v6024 = vmul.f32 %v6009, %v6015
        %v6025 = vmul.f32 %v5752, %v6015
        %v6026 = vmul.f32 %v5753, %v6015
        %v6027 = vmul.f32 %v6010, %v6015
        %v6028 = vmul.f32 %v5754, %v6015
        %v6029 = vmul.f32 %v5755, %v6015
        %v6030 = vmul.f32 %v6011, %v6015
        %v6031 = vmul.f32 %v5756, %v6015
        %v6032 = vmul.f32 %v5757, %v6015
        %v6033 = vmul.f32 %v6012, %v6015
        %v6034 = vmul.f32 %v5758, %v6015
        %v6035 = vmul.f32 %v5759, %v6015
        %v6036 = vmul.f32 %v6013, %v6015
        %v6037 = vmul.f32 %v5760, %v6015
        %v6038 = vmul.f32 %v5761, %v6015
        %v6039 = vmul.f32 %v6014, %v6015
        %v6040 = vpack.c.bf16 %v6016, %v6016
        %v6041 = vpack.c.bf16 %v6017, %v6017
        %v6042 = vpack.c.bf16 %v6018, %v6018
        %v6043 = vpack.c.bf16 %v6019, %v6019
        %v6044 = vpack.c.bf16 %v6020, %v6020
        %v6045 = vpack.c.bf16 %v6021, %v6021
        %v6046 = vpack.c.bf16 %v6022, %v6022
        %v6047 = vpack.c.bf16 %v6023, %v6023
        %v6048 = vpack.c.bf16 %v6024, %v6024
        %v6049 = vpack.c.bf16 %v6025, %v6025
        %v6050 = vpack.c.bf16 %v6026, %v6026
        %v6051 = vpack.c.bf16 %v6027, %v6027
        %v6052 = vpack.c.bf16 %v6028, %v6028
        %v6053 = vpack.c.bf16 %v6029, %v6029
        %v6054 = vpack.c.bf16 %v6030, %v6030
        %v6055 = vpack.c.bf16 %v6031, %v6031
        %v6056 = vpack.c.bf16 %v6032, %v6032
        %v6057 = vpack.c.bf16 %v6033, %v6033
        %v6058 = vpack.c.bf16 %v6034, %v6034
        %v6059 = vpack.c.bf16 %v6035, %v6035
        %v6060 = vpack.c.bf16 %v6036, %v6036
        %v6061 = vpack.c.bf16 %v6037, %v6037
        %v6062 = vpack.c.bf16 %v6038, %v6038
        %v6063 = vpack.c.bf16 %v6039, %v6039
        %v6064 = vunpack.c.l.bf16 %v5990
        %v6065 = vunpack.c.l.bf16 %v5991
        %v6066 = vunpack.c.l.bf16 %v5992
        %v6067 = vunpack.c.l.bf16 %v5993
        %v6068 = vunpack.c.l.bf16 %v5994
        %v6069 = vunpack.c.l.bf16 %v5995
        %v6070 = vunpack.c.l.bf16 %v5996
        %v6071 = vunpack.c.l.bf16 %v5997
        %v6072 = vunpack.c.l.bf16 %v5998
        %v6073 = vunpack.c.l.bf16 %v5999
        %v6074 = vunpack.c.l.bf16 %v6000
        %v6075 = vunpack.c.l.bf16 %v6001
        %v6076 = vunpack.c.l.bf16 %v6002
        %v6077 = vunpack.c.l.bf16 %v6003
        %v6078 = vunpack.c.l.bf16 %v6004
        %v6079 = vunpack.c.l.bf16 %v6005
        %v6080 = vunpack.c.l.bf16 %v6040
        %v6081 = vunpack.c.l.bf16 %v6041
        %v6082 = vunpack.c.l.bf16 %v6042
        %v6083 = vunpack.c.l.bf16 %v6043
        %v6084 = vunpack.c.l.bf16 %v6044
        %v6085 = vunpack.c.l.bf16 %v6045
        %v6086 = vunpack.c.l.bf16 %v6046
        %v6087 = vunpack.c.l.bf16 %v6047
        %v6088 = vunpack.c.l.bf16 %v6048
        %v6089 = vunpack.c.l.bf16 %v6049
        %v6090 = vunpack.c.l.bf16 %v6050
        %v6091 = vunpack.c.l.bf16 %v6051
        %v6092 = vunpack.c.l.bf16 %v6052
        %v6093 = vunpack.c.l.bf16 %v6053
        %v6094 = vunpack.c.l.bf16 %v6054
        %v6095 = vunpack.c.l.bf16 %v6055
        %v6096 = vunpack.c.l.bf16 %v6056
        %v6097 = vunpack.c.l.bf16 %v6057
        %v6098 = vunpack.c.l.bf16 %v6058
        %v6099 = vunpack.c.l.bf16 %v6059
        %v6100 = vunpack.c.l.bf16 %v6060
        %v6101 = vunpack.c.l.bf16 %v6061
        %v6102 = vunpack.c.l.bf16 %v6062
        %v6103 = vunpack.c.l.bf16 %v6063
        %vm6128 = vcmask 1044480
        %v6129 = vrot.slane %v6080, 3
        %v6130 = vrot.slane %v6081, 3
        %v6131 = vsel %vm6128, %v6129, %v6130
        %v6132 = vrot.slane %v6082, 3
        %v6133 = vsel %vm6128, %v6130, %v6132
        %v6134 = vrot.slane %v6083, 3
        %v6135 = vrot.slane %v6084, 3
        %v6136 = vsel %vm6128, %v6134, %v6135
        %v6137 = vrot.slane %v6085, 3
        %v6138 = vsel %vm6128, %v6135, %v6137
        %v6139 = vrot.slane %v6086, 3
        %v6140 = vrot.slane %v6087, 3
        %v6141 = vsel %vm6128, %v6139, %v6140
        %v6142 = vrot.slane %v6088, 3
        %v6143 = vsel %vm6128, %v6140, %v6142
        %v6144 = vrot.slane %v6089, 3
        %v6145 = vrot.slane %v6090, 3
        %v6146 = vsel %vm6128, %v6144, %v6145
        %v6147 = vrot.slane %v6091, 3
        %v6148 = vsel %vm6128, %v6145, %v6147
        %v6149 = vrot.slane %v6092, 3
        %v6150 = vrot.slane %v6093, 3
        %v6151 = vsel %vm6128, %v6149, %v6150
        %v6152 = vrot.slane %v6094, 3
        %v6153 = vsel %vm6128, %v6150, %v6152
        %v6154 = vrot.slane %v6095, 3
        %v6155 = vrot.slane %v6096, 3
        %v6156 = vsel %vm6128, %v6154, %v6155
        %v6157 = vrot.slane %v6097, 3
        %v6158 = vsel %vm6128, %v6155, %v6157
        %v6159 = vrot.slane %v6098, 3
        %v6160 = vrot.slane %v6099, 3
        %v6161 = vsel %vm6128, %v6159, %v6160
        %v6162 = vrot.slane %v6100, 3
        %v6163 = vsel %vm6128, %v6160, %v6162
        %v6164 = vrot.slane %v6101, 3
        %v6165 = vrot.slane %v6102, 3
        %v6166 = vsel %vm6128, %v6164, %v6165
        %v6167 = vrot.slane %v6103, 3
        %v6168 = vsel %vm6128, %v6165, %v6167
        %v6185 = vadd.f32 %v6064, %v6131
        %v6186 = vadd.f32 %v6065, %v6133
        %v6187 = vadd.f32 %v6066, %v6136
        %v6188 = vadd.f32 %v6067, %v6138
        %v6189 = vadd.f32 %v6068, %v6141
        %v6190 = vadd.f32 %v6069, %v6143
        %v6191 = vadd.f32 %v6070, %v6146
        %v6192 = vadd.f32 %v6071, %v6148
        %v6193 = vadd.f32 %v6072, %v6151
        %v6194 = vadd.f32 %v6073, %v6153
        %v6195 = vadd.f32 %v6074, %v6156
        %v6196 = vadd.f32 %v6075, %v6158
        %v6197 = vadd.f32 %v6076, %v6161
        %v6198 = vadd.f32 %v6077, %v6163
        %v6199 = vadd.f32 %v6078, %v6166
        %v6200 = vadd.f32 %v6079, %v6168
        %v6201 = vpack.c.bf16 %v6185, %v6185
        %v6202 = vpack.c.bf16 %v6186, %v6186
        %v6203 = vpack.c.bf16 %v6187, %v6187
        %v6204 = vpack.c.bf16 %v6188, %v6188
        %v6205 = vpack.c.bf16 %v6189, %v6189
        %v6206 = vpack.c.bf16 %v6190, %v6190
        %v6207 = vpack.c.bf16 %v6191, %v6191
        %v6208 = vpack.c.bf16 %v6192, %v6192
        %v6209 = vpack.c.bf16 %v6193, %v6193
        %v6210 = vpack.c.bf16 %v6194, %v6194
        %v6211 = vpack.c.bf16 %v6195, %v6195
        %v6212 = vpack.c.bf16 %v6196, %v6196
        %v6213 = vpack.c.bf16 %v6197, %v6197
        %v6214 = vpack.c.bf16 %v6198, %v6198
        %v6215 = vpack.c.bf16 %v6199, %v6199
        %v6216 = vpack.c.bf16 %v6200, %v6200
        %v6217 = vperm.slane %v5743, 2
        %v6218 = vunpack.c.l.bf16 %v5724
        %v6219 = vunpack.c.l.bf16 %v5727
        %v6220 = vunpack.c.l.bf16 %v5730
        %v6221 = vunpack.c.l.bf16 %v6217
        %v6222 = vmul.f32 %v5752, %v6221
        %v6223 = vmul.f32 %v5753, %v6221
        %v6224 = vmul.f32 %v6010, %v6221
        %v6225 = vmul.f32 %v5754, %v6221
        %v6226 = vmul.f32 %v5755, %v6221
        %v6227 = vmul.f32 %v6011, %v6221
        %v6228 = vmul.f32 %v5756, %v6221
        %v6229 = vmul.f32 %v5757, %v6221
        %v6230 = vmul.f32 %v6012, %v6221
        %v6231 = vmul.f32 %v5758, %v6221
        %v6232 = vmul.f32 %v5759, %v6221
        %v6233 = vmul.f32 %v6013, %v6221
        %v6234 = vmul.f32 %v5760, %v6221
        %v6235 = vmul.f32 %v5761, %v6221
        %v6236 = vmul.f32 %v6014, %v6221
        %v6237 = vmul.f32 %v5799, %v6221
        %v6238 = vmul.f32 %v5800, %v6221
        %v6239 = vmul.f32 %v6218, %v6221
        %v6240 = vmul.f32 %v5801, %v6221
        %v6241 = vmul.f32 %v5802, %v6221
        %v6242 = vmul.f32 %v6219, %v6221
        %v6243 = vmul.f32 %v5803, %v6221
        %v6244 = vmul.f32 %v5804, %v6221
        %v6245 = vmul.f32 %v6220, %v6221
        %v6246 = vpack.c.bf16 %v6222, %v6222
        %v6247 = vpack.c.bf16 %v6223, %v6223
        %v6248 = vpack.c.bf16 %v6224, %v6224
        %v6249 = vpack.c.bf16 %v6225, %v6225
        %v6250 = vpack.c.bf16 %v6226, %v6226
        %v6251 = vpack.c.bf16 %v6227, %v6227
        %v6252 = vpack.c.bf16 %v6228, %v6228
        %v6253 = vpack.c.bf16 %v6229, %v6229
        %v6254 = vpack.c.bf16 %v6230, %v6230
        %v6255 = vpack.c.bf16 %v6231, %v6231
        %v6256 = vpack.c.bf16 %v6232, %v6232
        %v6257 = vpack.c.bf16 %v6233, %v6233
        %v6258 = vpack.c.bf16 %v6234, %v6234
        %v6259 = vpack.c.bf16 %v6235, %v6235
        %v6260 = vpack.c.bf16 %v6236, %v6236
        %v6261 = vpack.c.bf16 %v6237, %v6237
        %v6262 = vpack.c.bf16 %v6238, %v6238
        %v6263 = vpack.c.bf16 %v6239, %v6239
        %v6264 = vpack.c.bf16 %v6240, %v6240
        %v6265 = vpack.c.bf16 %v6241, %v6241
        %v6266 = vpack.c.bf16 %v6242, %v6242
        %v6267 = vpack.c.bf16 %v6243, %v6243
        %v6268 = vpack.c.bf16 %v6244, %v6244
        %v6269 = vpack.c.bf16 %v6245, %v6245
        %v6270 = vunpack.c.l.bf16 %v6201
        %v6271 = vunpack.c.l.bf16 %v6202
        %v6272 = vunpack.c.l.bf16 %v6203
        %v6273 = vunpack.c.l.bf16 %v6204
        %v6274 = vunpack.c.l.bf16 %v6205
        %v6275 = vunpack.c.l.bf16 %v6206
        %v6276 = vunpack.c.l.bf16 %v6207
        %v6277 = vunpack.c.l.bf16 %v6208
        %v6278 = vunpack.c.l.bf16 %v6209
        %v6279 = vunpack.c.l.bf16 %v6210
        %v6280 = vunpack.c.l.bf16 %v6211
        %v6281 = vunpack.c.l.bf16 %v6212
        %v6282 = vunpack.c.l.bf16 %v6213
        %v6283 = vunpack.c.l.bf16 %v6214
        %v6284 = vunpack.c.l.bf16 %v6215
        %v6285 = vunpack.c.l.bf16 %v6216
        %v6286 = vunpack.c.l.bf16 %v6246
        %v6287 = vunpack.c.l.bf16 %v6247
        %v6288 = vunpack.c.l.bf16 %v6248
        %v6289 = vunpack.c.l.bf16 %v6249
        %v6290 = vunpack.c.l.bf16 %v6250
        %v6291 = vunpack.c.l.bf16 %v6251
        %v6292 = vunpack.c.l.bf16 %v6252
        %v6293 = vunpack.c.l.bf16 %v6253
        %v6294 = vunpack.c.l.bf16 %v6254
        %v6295 = vunpack.c.l.bf16 %v6255
        %v6296 = vunpack.c.l.bf16 %v6256
        %v6297 = vunpack.c.l.bf16 %v6257
        %v6298 = vunpack.c.l.bf16 %v6258
        %v6299 = vunpack.c.l.bf16 %v6259
        %v6300 = vunpack.c.l.bf16 %v6260
        %v6301 = vunpack.c.l.bf16 %v6261
        %v6302 = vunpack.c.l.bf16 %v6262
        %v6303 = vunpack.c.l.bf16 %v6263
        %v6304 = vunpack.c.l.bf16 %v6264
        %v6305 = vunpack.c.l.bf16 %v6265
        %v6306 = vunpack.c.l.bf16 %v6266
        %v6307 = vunpack.c.l.bf16 %v6267
        %v6308 = vunpack.c.l.bf16 %v6268
        %v6309 = vunpack.c.l.bf16 %v6269
        %v6334 = vrot.slane %v6286, 3
        %v6335 = vrot.slane %v6287, 3
        %v6336 = vsel %vm6128, %v6334, %v6335
        %v6337 = vrot.slane %v6288, 3
        %v6338 = vsel %vm6128, %v6335, %v6337
        %v6339 = vrot.slane %v6289, 3
        %v6340 = vrot.slane %v6290, 3
        %v6341 = vsel %vm6128, %v6339, %v6340
        %v6342 = vrot.slane %v6291, 3
        %v6343 = vsel %vm6128, %v6340, %v6342
        %v6344 = vrot.slane %v6292, 3
        %v6345 = vrot.slane %v6293, 3
        %v6346 = vsel %vm6128, %v6344, %v6345
        %v6347 = vrot.slane %v6294, 3
        %v6348 = vsel %vm6128, %v6345, %v6347
        %v6349 = vrot.slane %v6295, 3
        %v6350 = vrot.slane %v6296, 3
        %v6351 = vsel %vm6128, %v6349, %v6350
        %v6352 = vrot.slane %v6297, 3
        %v6353 = vsel %vm6128, %v6350, %v6352
        %v6354 = vrot.slane %v6298, 3
        %v6355 = vrot.slane %v6299, 3
        %v6356 = vsel %vm6128, %v6354, %v6355
        %v6357 = vrot.slane %v6300, 3
        %v6358 = vsel %vm6128, %v6355, %v6357
        %v6359 = vrot.slane %v6301, 3
        %v6360 = vrot.slane %v6302, 3
        %v6361 = vsel %vm6128, %v6359, %v6360
        %v6362 = vrot.slane %v6303, 3
        %v6363 = vsel %vm6128, %v6360, %v6362
        %v6364 = vrot.slane %v6304, 3
        %v6365 = vrot.slane %v6305, 3
        %v6366 = vsel %vm6128, %v6364, %v6365
        %v6367 = vrot.slane %v6306, 3
        %v6368 = vsel %vm6128, %v6365, %v6367
        %v6369 = vrot.slane %v6307, 3
        %v6370 = vrot.slane %v6308, 3
        %v6371 = vsel %vm6128, %v6369, %v6370
        %v6372 = vrot.slane %v6309, 3
        %v6373 = vsel %vm6128, %v6370, %v6372
        %v6390 = vadd.f32 %v6270, %v6336
        %v6391 = vadd.f32 %v6271, %v6338
        %v6392 = vadd.f32 %v6272, %v6341
        %v6393 = vadd.f32 %v6273, %v6343
        %v6394 = vadd.f32 %v6274, %v6346
        %v6395 = vadd.f32 %v6275, %v6348
        %v6396 = vadd.f32 %v6276, %v6351
        %v6397 = vadd.f32 %v6277, %v6353
        %v6398 = vadd.f32 %v6278, %v6356
        %v6399 = vadd.f32 %v6279, %v6358
        %v6400 = vadd.f32 %v6280, %v6361
        %v6401 = vadd.f32 %v6281, %v6363
        %v6402 = vadd.f32 %v6282, %v6366
        %v6403 = vadd.f32 %v6283, %v6368
        %v6404 = vadd.f32 %v6284, %v6371
        %v6405 = vadd.f32 %v6285, %v6373
        %v6406 = vpack.c.bf16 %v6390, %v6390
        %v6407 = vpack.c.bf16 %v6391, %v6391
        %v6408 = vpack.c.bf16 %v6392, %v6392
        %v6409 = vpack.c.bf16 %v6393, %v6393
        %v6410 = vpack.c.bf16 %v6394, %v6394
        %v6411 = vpack.c.bf16 %v6395, %v6395
        %v6412 = vpack.c.bf16 %v6396, %v6396
        %v6413 = vpack.c.bf16 %v6397, %v6397
        %v6414 = vpack.c.bf16 %v6398, %v6398
        %v6415 = vpack.c.bf16 %v6399, %v6399
        %v6416 = vpack.c.bf16 %v6400, %v6400
        %v6417 = vpack.c.bf16 %v6401, %v6401
        %v6418 = vpack.c.bf16 %v6402, %v6402
        %v6419 = vpack.c.bf16 %v6403, %v6403
        %v6420 = vpack.c.bf16 %v6404, %v6404
        %v6421 = vpack.c.bf16 %v6405, %v6405
        %v6422 = vperm.slane %v5796, 3
        %v6423 = vunpack.c.l.bf16 %v5733
        %v6424 = vunpack.c.l.bf16 %v5736
        %v6425 = vunpack.c.l.bf16 %v5739
        %v6426 = vunpack.c.l.bf16 %v6422
        %v6427 = vmul.f32 %v5758, %v6426
        %v6428 = vmul.f32 %v5759, %v6426
        %v6429 = vmul.f32 %v6013, %v6426
        %v6430 = vmul.f32 %v5760, %v6426
        %v6431 = vmul.f32 %v5761, %v6426
        %v6432 = vmul.f32 %v6014, %v6426
        %v6433 = vmul.f32 %v5799, %v6426
        %v6434 = vmul.f32 %v5800, %v6426
        %v6435 = vmul.f32 %v6218, %v6426
        %v6436 = vmul.f32 %v5801, %v6426
        %v6437 = vmul.f32 %v5802, %v6426
        %v6438 = vmul.f32 %v6219, %v6426
        %v6439 = vmul.f32 %v5803, %v6426
        %v6440 = vmul.f32 %v5804, %v6426
        %v6441 = vmul.f32 %v6220, %v6426
        %v6442 = vmul.f32 %v5903, %v6426
        %v6443 = vmul.f32 %v5904, %v6426
        %v6444 = vmul.f32 %v6423, %v6426
        %v6445 = vmul.f32 %v5905, %v6426
        %v6446 = vmul.f32 %v5906, %v6426
        %v6447 = vmul.f32 %v6424, %v6426
        %v6448 = vmul.f32 %v5907, %v6426
        %v6449 = vmul.f32 %v5908, %v6426
        %v6450 = vmul.f32 %v6425, %v6426
        %v6451 = vpack.c.bf16 %v6427, %v6427
        %v6452 = vpack.c.bf16 %v6428, %v6428
        %v6453 = vpack.c.bf16 %v6429, %v6429
        %v6454 = vpack.c.bf16 %v6430, %v6430
        %v6455 = vpack.c.bf16 %v6431, %v6431
        %v6456 = vpack.c.bf16 %v6432, %v6432
        %v6457 = vpack.c.bf16 %v6433, %v6433
        %v6458 = vpack.c.bf16 %v6434, %v6434
        %v6459 = vpack.c.bf16 %v6435, %v6435
        %v6460 = vpack.c.bf16 %v6436, %v6436
        %v6461 = vpack.c.bf16 %v6437, %v6437
        %v6462 = vpack.c.bf16 %v6438, %v6438
        %v6463 = vpack.c.bf16 %v6439, %v6439
        %v6464 = vpack.c.bf16 %v6440, %v6440
        %v6465 = vpack.c.bf16 %v6441, %v6441
        %v6466 = vpack.c.bf16 %v6442, %v6442
        %v6467 = vpack.c.bf16 %v6443, %v6443
        %v6468 = vpack.c.bf16 %v6444, %v6444
        %v6469 = vpack.c.bf16 %v6445, %v6445
        %v6470 = vpack.c.bf16 %v6446, %v6446
        %v6471 = vpack.c.bf16 %v6447, %v6447
        %v6472 = vpack.c.bf16 %v6448, %v6448
        %v6473 = vpack.c.bf16 %v6449, %v6449
        %v6474 = vpack.c.bf16 %v6450, %v6450
        %v6475 = vunpack.c.l.bf16 %v6406
        %v6476 = vunpack.c.l.bf16 %v6407
        %v6477 = vunpack.c.l.bf16 %v6408
        %v6478 = vunpack.c.l.bf16 %v6409
        %v6479 = vunpack.c.l.bf16 %v6410
        %v6480 = vunpack.c.l.bf16 %v6411
        %v6481 = vunpack.c.l.bf16 %v6412
        %v6482 = vunpack.c.l.bf16 %v6413
        %v6483 = vunpack.c.l.bf16 %v6414
        %v6484 = vunpack.c.l.bf16 %v6415
        %v6485 = vunpack.c.l.bf16 %v6416
        %v6486 = vunpack.c.l.bf16 %v6417
        %v6487 = vunpack.c.l.bf16 %v6418
        %v6488 = vunpack.c.l.bf16 %v6419
        %v6489 = vunpack.c.l.bf16 %v6420
        %v6490 = vunpack.c.l.bf16 %v6421
        %v6491 = vunpack.c.l.bf16 %v6451
        %v6492 = vunpack.c.l.bf16 %v6452
        %v6493 = vunpack.c.l.bf16 %v6453
        %v6494 = vunpack.c.l.bf16 %v6454
        %v6495 = vunpack.c.l.bf16 %v6455
        %v6496 = vunpack.c.l.bf16 %v6456
        %v6497 = vunpack.c.l.bf16 %v6457
        %v6498 = vunpack.c.l.bf16 %v6458
        %v6499 = vunpack.c.l.bf16 %v6459
        %v6500 = vunpack.c.l.bf16 %v6460
        %v6501 = vunpack.c.l.bf16 %v6461
        %v6502 = vunpack.c.l.bf16 %v6462
        %v6503 = vunpack.c.l.bf16 %v6463
        %v6504 = vunpack.c.l.bf16 %v6464
        %v6505 = vunpack.c.l.bf16 %v6465
        %v6506 = vunpack.c.l.bf16 %v6466
        %v6507 = vunpack.c.l.bf16 %v6467
        %v6508 = vunpack.c.l.bf16 %v6468
        %v6509 = vunpack.c.l.bf16 %v6469
        %v6510 = vunpack.c.l.bf16 %v6470
        %v6511 = vunpack.c.l.bf16 %v6471
        %v6512 = vunpack.c.l.bf16 %v6472
        %v6513 = vunpack.c.l.bf16 %v6473
        %v6514 = vunpack.c.l.bf16 %v6474
        %v6539 = vrot.slane %v6491, 3
        %v6540 = vrot.slane %v6492, 3
        %v6541 = vsel %vm6128, %v6539, %v6540
        %v6542 = vrot.slane %v6493, 3
        %v6543 = vsel %vm6128, %v6540, %v6542
        %v6544 = vrot.slane %v6494, 3
        %v6545 = vrot.slane %v6495, 3
        %v6546 = vsel %vm6128, %v6544, %v6545
        %v6547 = vrot.slane %v6496, 3
        %v6548 = vsel %vm6128, %v6545, %v6547
        %v6549 = vrot.slane %v6497, 3
        %v6550 = vrot.slane %v6498, 3
        %v6551 = vsel %vm6128, %v6549, %v6550
        %v6552 = vrot.slane %v6499, 3
        %v6553 = vsel %vm6128, %v6550, %v6552
        %v6554 = vrot.slane %v6500, 3
        %v6555 = vrot.slane %v6501, 3
        %v6556 = vsel %vm6128, %v6554, %v6555
        %v6557 = vrot.slane %v6502, 3
        %v6558 = vsel %vm6128, %v6555, %v6557
        %v6559 = vrot.slane %v6503, 3
        %v6560 = vrot.slane %v6504, 3
        %v6561 = vsel %vm6128, %v6559, %v6560
        %v6562 = vrot.slane %v6505, 3
        %v6563 = vsel %vm6128, %v6560, %v6562
        %v6564 = vrot.slane %v6506, 3
        %v6565 = vrot.slane %v6507, 3
        %v6566 = vsel %vm6128, %v6564, %v6565
        %v6567 = vrot.slane %v6508, 3
        %v6568 = vsel %vm6128, %v6565, %v6567
        %v6569 = vrot.slane %v6509, 3
        %v6570 = vrot.slane %v6510, 3
        %v6571 = vsel %vm6128, %v6569, %v6570
        %v6572 = vrot.slane %v6511, 3
        %v6573 = vsel %vm6128, %v6570, %v6572
        %v6574 = vrot.slane %v6512, 3
        %v6575 = vrot.slane %v6513, 3
        %v6576 = vsel %vm6128, %v6574, %v6575
        %v6577 = vrot.slane %v6514, 3
        %v6578 = vsel %vm6128, %v6575, %v6577
        %v6595 = vadd.f32 %v6475, %v6541
        %v6596 = vadd.f32 %v6476, %v6543
        %v6597 = vadd.f32 %v6477, %v6546
        %v6598 = vadd.f32 %v6478, %v6548
        %v6599 = vadd.f32 %v6479, %v6551
        %v6600 = vadd.f32 %v6480, %v6553
        %v6601 = vadd.f32 %v6481, %v6556
        %v6602 = vadd.f32 %v6482, %v6558
        %v6603 = vadd.f32 %v6483, %v6561
        %v6604 = vadd.f32 %v6484, %v6563
        %v6605 = vadd.f32 %v6485, %v6566
        %v6606 = vadd.f32 %v6486, %v6568
        %v6607 = vadd.f32 %v6487, %v6571
        %v6608 = vadd.f32 %v6488, %v6573
        %v6609 = vadd.f32 %v6489, %v6576
        %v6610 = vadd.f32 %v6490, %v6578
        %v6611 = vpack.c.bf16 %v6595, %v6595
        %v6612 = vpack.c.bf16 %v6596, %v6596
        %v6613 = vpack.c.bf16 %v6597, %v6597
        %v6614 = vpack.c.bf16 %v6598, %v6598
        %v6615 = vpack.c.bf16 %v6599, %v6599
        %v6616 = vpack.c.bf16 %v6600, %v6600
        %v6617 = vpack.c.bf16 %v6601, %v6601
        %v6618 = vpack.c.bf16 %v6602, %v6602
        %v6619 = vpack.c.bf16 %v6603, %v6603
        %v6620 = vpack.c.bf16 %v6604, %v6604
        %v6621 = vpack.c.bf16 %v6605, %v6605
        %v6622 = vpack.c.bf16 %v6606, %v6606
        %v6623 = vpack.c.bf16 %v6607, %v6607
        %v6624 = vpack.c.bf16 %v6608, %v6608
        %v6625 = vpack.c.bf16 %v6609, %v6609
        %v6626 = vpack.c.bf16 %v6610, %v6610
        %v6627 = vperm.slane %v5743, 1
        %v6628 = vunpack.c.l.bf16 %v6627
        %v6629 = vmul.f32 %v5746, %v6628
        %v6630 = vmul.f32 %v5747, %v6628
        %v6631 = vmul.f32 %v6007, %v6628
        %v6632 = vmul.f32 %v5748, %v6628
        %v6633 = vmul.f32 %v5749, %v6628
        %v6634 = vmul.f32 %v6008, %v6628
        %v6635 = vmul.f32 %v5750, %v6628
        %v6636 = vmul.f32 %v5751, %v6628
        %v6637 = vmul.f32 %v6009, %v6628
        %v6638 = vmul.f32 %v5752, %v6628
        %v6639 = vmul.f32 %v5753, %v6628
        %v6640 = vmul.f32 %v6010, %v6628
        %v6641 = vmul.f32 %v5754, %v6628
        %v6642 = vmul.f32 %v5755, %v6628
        %v6643 = vmul.f32 %v6011, %v6628
        %v6644 = vmul.f32 %v5756, %v6628
        %v6645 = vmul.f32 %v5757, %v6628
        %v6646 = vmul.f32 %v6012, %v6628
        %v6647 = vmul.f32 %v5758, %v6628
        %v6648 = vmul.f32 %v5759, %v6628
        %v6649 = vmul.f32 %v6013, %v6628
        %v6650 = vmul.f32 %v5760, %v6628
        %v6651 = vmul.f32 %v5761, %v6628
        %v6652 = vmul.f32 %v6014, %v6628
        %v6653 = vpack.c.bf16 %v6629, %v6629
        %v6654 = vpack.c.bf16 %v6630, %v6630
        %v6655 = vpack.c.bf16 %v6631, %v6631
        %v6656 = vpack.c.bf16 %v6632, %v6632
        %v6657 = vpack.c.bf16 %v6633, %v6633
        %v6658 = vpack.c.bf16 %v6634, %v6634
        %v6659 = vpack.c.bf16 %v6635, %v6635
        %v6660 = vpack.c.bf16 %v6636, %v6636
        %v6661 = vpack.c.bf16 %v6637, %v6637
        %v6662 = vpack.c.bf16 %v6638, %v6638
        %v6663 = vpack.c.bf16 %v6639, %v6639
        %v6664 = vpack.c.bf16 %v6640, %v6640
        %v6665 = vpack.c.bf16 %v6641, %v6641
        %v6666 = vpack.c.bf16 %v6642, %v6642
        %v6667 = vpack.c.bf16 %v6643, %v6643
        %v6668 = vpack.c.bf16 %v6644, %v6644
        %v6669 = vpack.c.bf16 %v6645, %v6645
        %v6670 = vpack.c.bf16 %v6646, %v6646
        %v6671 = vpack.c.bf16 %v6647, %v6647
        %v6672 = vpack.c.bf16 %v6648, %v6648
        %v6673 = vpack.c.bf16 %v6649, %v6649
        %v6674 = vpack.c.bf16 %v6650, %v6650
        %v6675 = vpack.c.bf16 %v6651, %v6651
        %v6676 = vpack.c.bf16 %v6652, %v6652
        %v6677 = vunpack.c.l.bf16 %v6611
        %v6678 = vunpack.c.l.bf16 %v6612
        %v6679 = vunpack.c.l.bf16 %v6613
        %v6680 = vunpack.c.l.bf16 %v6614
        %v6681 = vunpack.c.l.bf16 %v6615
        %v6682 = vunpack.c.l.bf16 %v6616
        %v6683 = vunpack.c.l.bf16 %v6617
        %v6684 = vunpack.c.l.bf16 %v6618
        %v6685 = vunpack.c.l.bf16 %v6619
        %v6686 = vunpack.c.l.bf16 %v6620
        %v6687 = vunpack.c.l.bf16 %v6621
        %v6688 = vunpack.c.l.bf16 %v6622
        %v6689 = vunpack.c.l.bf16 %v6623
        %v6690 = vunpack.c.l.bf16 %v6624
        %v6691 = vunpack.c.l.bf16 %v6625
        %v6692 = vunpack.c.l.bf16 %v6626
        %v6693 = vunpack.c.l.bf16 %v6653
        %v6694 = vunpack.c.l.bf16 %v6654
        %v6695 = vunpack.c.l.bf16 %v6655
        %v6696 = vunpack.c.l.bf16 %v6656
        %v6697 = vunpack.c.l.bf16 %v6657
        %v6698 = vunpack.c.l.bf16 %v6658
        %v6699 = vunpack.c.l.bf16 %v6659
        %v6700 = vunpack.c.l.bf16 %v6660
        %v6701 = vunpack.c.l.bf16 %v6661
        %v6702 = vunpack.c.l.bf16 %v6662
        %v6703 = vunpack.c.l.bf16 %v6663
        %v6704 = vunpack.c.l.bf16 %v6664
        %v6705 = vunpack.c.l.bf16 %v6665
        %v6706 = vunpack.c.l.bf16 %v6666
        %v6707 = vunpack.c.l.bf16 %v6667
        %v6708 = vunpack.c.l.bf16 %v6668
        %v6709 = vunpack.c.l.bf16 %v6669
        %v6710 = vunpack.c.l.bf16 %v6670
        %v6711 = vunpack.c.l.bf16 %v6671
        %v6712 = vunpack.c.l.bf16 %v6672
        %v6713 = vunpack.c.l.bf16 %v6673
        %v6714 = vunpack.c.l.bf16 %v6674
        %v6715 = vunpack.c.l.bf16 %v6675
        %v6716 = vunpack.c.l.bf16 %v6676
        %vm6741 = vcmask 1041408
        %v6742 = vrot.slane %v6693, 6
        %v6743 = vrot.slane %v6694, 6
        %v6744 = vsel %vm6741, %v6742, %v6743
        %v6745 = vrot.slane %v6695, 6
        %v6746 = vsel %vm6741, %v6743, %v6745
        %v6747 = vrot.slane %v6696, 6
        %v6748 = vrot.slane %v6697, 6
        %v6749 = vsel %vm6741, %v6747, %v6748
        %v6750 = vrot.slane %v6698, 6
        %v6751 = vsel %vm6741, %v6748, %v6750
        %v6752 = vrot.slane %v6699, 6
        %v6753 = vrot.slane %v6700, 6
        %v6754 = vsel %vm6741, %v6752, %v6753
        %v6755 = vrot.slane %v6701, 6
        %v6756 = vsel %vm6741, %v6753, %v6755
        %v6757 = vrot.slane %v6702, 6
        %v6758 = vrot.slane %v6703, 6
        %v6759 = vsel %vm6741, %v6757, %v6758
        %v6760 = vrot.slane %v6704, 6
        %v6761 = vsel %vm6741, %v6758, %v6760
        %v6762 = vrot.slane %v6705, 6
        %v6763 = vrot.slane %v6706, 6
        %v6764 = vsel %vm6741, %v6762, %v6763
        %v6765 = vrot.slane %v6707, 6
        %v6766 = vsel %vm6741, %v6763, %v6765
        %v6767 = vrot.slane %v6708, 6
        %v6768 = vrot.slane %v6709, 6
        %v6769 = vsel %vm6741, %v6767, %v6768
        %v6770 = vrot.slane %v6710, 6
        %v6771 = vsel %vm6741, %v6768, %v6770
        %v6772 = vrot.slane %v6711, 6
        %v6773 = vrot.slane %v6712, 6
        %v6774 = vsel %vm6741, %v6772, %v6773
        %v6775 = vrot.slane %v6713, 6
        %v6776 = vsel %vm6741, %v6773, %v6775
        %v6777 = vrot.slane %v6714, 6
        %v6778 = vrot.slane %v6715, 6
        %v6779 = vsel %vm6741, %v6777, %v6778
        %v6780 = vrot.slane %v6716, 6
        %v6781 = vsel %vm6741, %v6778, %v6780
        %v6798 = vadd.f32 %v6677, %v6744
        %v6799 = vadd.f32 %v6678, %v6746
        %v6800 = vadd.f32 %v6679, %v6749
        %v6801 = vadd.f32 %v6680, %v6751
        %v6802 = vadd.f32 %v6681, %v6754
        %v6803 = vadd.f32 %v6682, %v6756
        %v6804 = vadd.f32 %v6683, %v6759
        %v6805 = vadd.f32 %v6684, %v6761
        %v6806 = vadd.f32 %v6685, %v6764
        %v6807 = vadd.f32 %v6686, %v6766
        %v6808 = vadd.f32 %v6687, %v6769
        %v6809 = vadd.f32 %v6688, %v6771
        %v6810 = vadd.f32 %v6689, %v6774
        %v6811 = vadd.f32 %v6690, %v6776
        %v6812 = vadd.f32 %v6691, %v6779
        %v6813 = vadd.f32 %v6692, %v6781
        %v6814 = vpack.c.bf16 %v6798, %v6798
        %v6815 = vpack.c.bf16 %v6799, %v6799
        %v6816 = vpack.c.bf16 %v6800, %v6800
        %v6817 = vpack.c.bf16 %v6801, %v6801
        %v6818 = vpack.c.bf16 %v6802, %v6802
        %v6819 = vpack.c.bf16 %v6803, %v6803
        %v6820 = vpack.c.bf16 %v6804, %v6804
        %v6821 = vpack.c.bf16 %v6805, %v6805
        %v6822 = vpack.c.bf16 %v6806, %v6806
        %v6823 = vpack.c.bf16 %v6807, %v6807
        %v6824 = vpack.c.bf16 %v6808, %v6808
        %v6825 = vpack.c.bf16 %v6809, %v6809
        %v6826 = vpack.c.bf16 %v6810, %v6810
        %v6827 = vpack.c.bf16 %v6811, %v6811
        %v6828 = vpack.c.bf16 %v6812, %v6812
        %v6829 = vpack.c.bf16 %v6813, %v6813
        %v6830 = vperm.slane %v5796, 2
        %v6831 = vunpack.c.l.bf16 %v6830
        %v6832 = vmul.f32 %v5752, %v6831
        %v6833 = vmul.f32 %v5753, %v6831
        %v6834 = vmul.f32 %v6010, %v6831
        %v6835 = vmul.f32 %v5754, %v6831
        %v6836 = vmul.f32 %v5755, %v6831
        %v6837 = vmul.f32 %v6011, %v6831
        %v6838 = vmul.f32 %v5756, %v6831
        %v6839 = vmul.f32 %v5757, %v6831
        %v6840 = vmul.f32 %v6012, %v6831
        %v6841 = vmul.f32 %v5758, %v6831
        %v6842 = vmul.f32 %v5759, %v6831
        %v6843 = vmul.f32 %v6013, %v6831
        %v6844 = vmul.f32 %v5760, %v6831
        %v6845 = vmul.f32 %v5761, %v6831
        %v6846 = vmul.f32 %v6014, %v6831
        %v6847 = vmul.f32 %v5799, %v6831
        %v6848 = vmul.f32 %v5800, %v6831
        %v6849 = vmul.f32 %v6218, %v6831
        %v6850 = vmul.f32 %v5801, %v6831
        %v6851 = vmul.f32 %v5802, %v6831
        %v6852 = vmul.f32 %v6219, %v6831
        %v6853 = vmul.f32 %v5803, %v6831
        %v6854 = vmul.f32 %v5804, %v6831
        %v6855 = vmul.f32 %v6220, %v6831
        %v6856 = vpack.c.bf16 %v6832, %v6832
        %v6857 = vpack.c.bf16 %v6833, %v6833
        %v6858 = vpack.c.bf16 %v6834, %v6834
        %v6859 = vpack.c.bf16 %v6835, %v6835
        %v6860 = vpack.c.bf16 %v6836, %v6836
        %v6861 = vpack.c.bf16 %v6837, %v6837
        %v6862 = vpack.c.bf16 %v6838, %v6838
        %v6863 = vpack.c.bf16 %v6839, %v6839
        %v6864 = vpack.c.bf16 %v6840, %v6840
        %v6865 = vpack.c.bf16 %v6841, %v6841
        %v6866 = vpack.c.bf16 %v6842, %v6842
        %v6867 = vpack.c.bf16 %v6843, %v6843
        %v6868 = vpack.c.bf16 %v6844, %v6844
        %v6869 = vpack.c.bf16 %v6845, %v6845
        %v6870 = vpack.c.bf16 %v6846, %v6846
        %v6871 = vpack.c.bf16 %v6847, %v6847
        %v6872 = vpack.c.bf16 %v6848, %v6848
        %v6873 = vpack.c.bf16 %v6849, %v6849
        %v6874 = vpack.c.bf16 %v6850, %v6850
        %v6875 = vpack.c.bf16 %v6851, %v6851
        %v6876 = vpack.c.bf16 %v6852, %v6852
        %v6877 = vpack.c.bf16 %v6853, %v6853
        %v6878 = vpack.c.bf16 %v6854, %v6854
        %v6879 = vpack.c.bf16 %v6855, %v6855
        %v6880 = vunpack.c.l.bf16 %v6814
        %v6881 = vunpack.c.l.bf16 %v6815
        %v6882 = vunpack.c.l.bf16 %v6816
        %v6883 = vunpack.c.l.bf16 %v6817
        %v6884 = vunpack.c.l.bf16 %v6818
        %v6885 = vunpack.c.l.bf16 %v6819
        %v6886 = vunpack.c.l.bf16 %v6820
        %v6887 = vunpack.c.l.bf16 %v6821
        %v6888 = vunpack.c.l.bf16 %v6822
        %v6889 = vunpack.c.l.bf16 %v6823
        %v6890 = vunpack.c.l.bf16 %v6824
        %v6891 = vunpack.c.l.bf16 %v6825
        %v6892 = vunpack.c.l.bf16 %v6826
        %v6893 = vunpack.c.l.bf16 %v6827
        %v6894 = vunpack.c.l.bf16 %v6828
        %v6895 = vunpack.c.l.bf16 %v6829
        %v6896 = vunpack.c.l.bf16 %v6856
        %v6897 = vunpack.c.l.bf16 %v6857
        %v6898 = vunpack.c.l.bf16 %v6858
        %v6899 = vunpack.c.l.bf16 %v6859
        %v6900 = vunpack.c.l.bf16 %v6860
        %v6901 = vunpack.c.l.bf16 %v6861
        %v6902 = vunpack.c.l.bf16 %v6862
        %v6903 = vunpack.c.l.bf16 %v6863
        %v6904 = vunpack.c.l.bf16 %v6864
        %v6905 = vunpack.c.l.bf16 %v6865
        %v6906 = vunpack.c.l.bf16 %v6866
        %v6907 = vunpack.c.l.bf16 %v6867
        %v6908 = vunpack.c.l.bf16 %v6868
        %v6909 = vunpack.c.l.bf16 %v6869
        %v6910 = vunpack.c.l.bf16 %v6870
        %v6911 = vunpack.c.l.bf16 %v6871
        %v6912 = vunpack.c.l.bf16 %v6872
        %v6913 = vunpack.c.l.bf16 %v6873
        %v6914 = vunpack.c.l.bf16 %v6874
        %v6915 = vunpack.c.l.bf16 %v6875
        %v6916 = vunpack.c.l.bf16 %v6876
        %v6917 = vunpack.c.l.bf16 %v6877
        %v6918 = vunpack.c.l.bf16 %v6878
        %v6919 = vunpack.c.l.bf16 %v6879
        %v6944 = vrot.slane %v6896, 6
        %v6945 = vrot.slane %v6897, 6
        %v6946 = vsel %vm6741, %v6944, %v6945
        %v6947 = vrot.slane %v6898, 6
        %v6948 = vsel %vm6741, %v6945, %v6947
        %v6949 = vrot.slane %v6899, 6
        %v6950 = vrot.slane %v6900, 6
        %v6951 = vsel %vm6741, %v6949, %v6950
        %v6952 = vrot.slane %v6901, 6
        %v6953 = vsel %vm6741, %v6950, %v6952
        %v6954 = vrot.slane %v6902, 6
        %v6955 = vrot.slane %v6903, 6
        %v6956 = vsel %vm6741, %v6954, %v6955
        %v6957 = vrot.slane %v6904, 6
        %v6958 = vsel %vm6741, %v6955, %v6957
        %v6959 = vrot.slane %v6905, 6
        %v6960 = vrot.slane %v6906, 6
        %v6961 = vsel %vm6741, %v6959, %v6960
        %v6962 = vrot.slane %v6907, 6
        %v6963 = vsel %vm6741, %v6960, %v6962
        %v6964 = vrot.slane %v6908, 6
        %v6965 = vrot.slane %v6909, 6
        %v6966 = vsel %vm6741, %v6964, %v6965
        %v6967 = vrot.slane %v6910, 6
        %v6968 = vsel %vm6741, %v6965, %v6967
        %v6969 = vrot.slane %v6911, 6
        %v6970 = vrot.slane %v6912, 6
        %v6971 = vsel %vm6741, %v6969, %v6970
        %v6972 = vrot.slane %v6913, 6
        %v6973 = vsel %vm6741, %v6970, %v6972
        %v6974 = vrot.slane %v6914, 6
        %v6975 = vrot.slane %v6915, 6
        %v6976 = vsel %vm6741, %v6974, %v6975
        %v6977 = vrot.slane %v6916, 6
        %v6978 = vsel %vm6741, %v6975, %v6977
        %v6979 = vrot.slane %v6917, 6
        %v6980 = vrot.slane %v6918, 6
        %v6981 = vsel %vm6741, %v6979, %v6980
        %v6982 = vrot.slane %v6919, 6
        %v6983 = vsel %vm6741, %v6980, %v6982
        %v7000 = vadd.f32 %v6880, %v6946
        %v7001 = vadd.f32 %v6881, %v6948
        %v7002 = vadd.f32 %v6882, %v6951
        %v7003 = vadd.f32 %v6883, %v6953
        %v7004 = vadd.f32 %v6884, %v6956
        %v7005 = vadd.f32 %v6885, %v6958
        %v7006 = vadd.f32 %v6886, %v6961
        %v7007 = vadd.f32 %v6887, %v6963
        %v7008 = vadd.f32 %v6888, %v6966
        %v7009 = vadd.f32 %v6889, %v6968
        %v7010 = vadd.f32 %v6890, %v6971
        %v7011 = vadd.f32 %v6891, %v6973
        %v7012 = vadd.f32 %v6892, %v6976
        %v7013 = vadd.f32 %v6893, %v6978
        %v7014 = vadd.f32 %v6894, %v6981
        %v7015 = vadd.f32 %v6895, %v6983
        %v7016 = vpack.c.bf16 %v7000, %v7000
        %v7017 = vpack.c.bf16 %v7001, %v7001
        %v7018 = vpack.c.bf16 %v7002, %v7002
        %v7019 = vpack.c.bf16 %v7003, %v7003
        %v7020 = vpack.c.bf16 %v7004, %v7004
        %v7021 = vpack.c.bf16 %v7005, %v7005
        %v7022 = vpack.c.bf16 %v7006, %v7006
        %v7023 = vpack.c.bf16 %v7007, %v7007
        %v7024 = vpack.c.bf16 %v7008, %v7008
        %v7025 = vpack.c.bf16 %v7009, %v7009
        %v7026 = vpack.c.bf16 %v7010, %v7010
        %v7027 = vpack.c.bf16 %v7011, %v7011
        %v7028 = vpack.c.bf16 %v7012, %v7012
        %v7029 = vpack.c.bf16 %v7013, %v7013
        %v7030 = vpack.c.bf16 %v7014, %v7014
        %v7031 = vpack.c.bf16 %v7015, %v7015
        %v7033 = vpack.i.b16 %v5741, %v5741
        %v7035 = vperm.slane %v7033, 0
        %v7036 = vunpack.c.l.bf16 %v7035
        %v7037 = vmul.f32 %v5758, %v7036
        %v7038 = vmul.f32 %v5759, %v7036
        %v7039 = vmul.f32 %v6013, %v7036
        %v7040 = vmul.f32 %v5760, %v7036
        %v7041 = vmul.f32 %v5761, %v7036
        %v7042 = vmul.f32 %v6014, %v7036
        %v7043 = vmul.f32 %v5799, %v7036
        %v7044 = vmul.f32 %v5800, %v7036
        %v7045 = vmul.f32 %v6218, %v7036
        %v7046 = vmul.f32 %v5801, %v7036
        %v7047 = vmul.f32 %v5802, %v7036
        %v7048 = vmul.f32 %v6219, %v7036
        %v7049 = vmul.f32 %v5803, %v7036
        %v7050 = vmul.f32 %v5804, %v7036
        %v7051 = vmul.f32 %v6220, %v7036
        %v7052 = vmul.f32 %v5903, %v7036
        %v7053 = vmul.f32 %v5904, %v7036
        %v7054 = vmul.f32 %v6423, %v7036
        %v7055 = vmul.f32 %v5905, %v7036
        %v7056 = vmul.f32 %v5906, %v7036
        %v7057 = vmul.f32 %v6424, %v7036
        %v7058 = vmul.f32 %v5907, %v7036
        %v7059 = vmul.f32 %v5908, %v7036
        %v7060 = vmul.f32 %v6425, %v7036
        %v7061 = vpack.c.bf16 %v7037, %v7037
        %v7062 = vpack.c.bf16 %v7038, %v7038
        %v7063 = vpack.c.bf16 %v7039, %v7039
        %v7064 = vpack.c.bf16 %v7040, %v7040
        %v7065 = vpack.c.bf16 %v7041, %v7041
        %v7066 = vpack.c.bf16 %v7042, %v7042
        %v7067 = vpack.c.bf16 %v7043, %v7043
        %v7068 = vpack.c.bf16 %v7044, %v7044
        %v7069 = vpack.c.bf16 %v7045, %v7045
        %v7070 = vpack.c.bf16 %v7046, %v7046
        %v7071 = vpack.c.bf16 %v7047, %v7047
        %v7072 = vpack.c.bf16 %v7048, %v7048
        %v7073 = vpack.c.bf16 %v7049, %v7049
        %v7074 = vpack.c.bf16 %v7050, %v7050
        %v7075 = vpack.c.bf16 %v7051, %v7051
        %v7076 = vpack.c.bf16 %v7052, %v7052
        %v7077 = vpack.c.bf16 %v7053, %v7053
        %v7078 = vpack.c.bf16 %v7054, %v7054
        %v7079 = vpack.c.bf16 %v7055, %v7055
        %v7080 = vpack.c.bf16 %v7056, %v7056
        %v7081 = vpack.c.bf16 %v7057, %v7057
        %v7082 = vpack.c.bf16 %v7058, %v7058
        %v7083 = vpack.c.bf16 %v7059, %v7059
        %v7084 = vpack.c.bf16 %v7060, %v7060
        %v7085 = vunpack.c.l.bf16 %v7016
        %v7086 = vunpack.c.l.bf16 %v7017
        %v7087 = vunpack.c.l.bf16 %v7018
        %v7088 = vunpack.c.l.bf16 %v7019
        %v7089 = vunpack.c.l.bf16 %v7020
        %v7090 = vunpack.c.l.bf16 %v7021
        %v7091 = vunpack.c.l.bf16 %v7022
        %v7092 = vunpack.c.l.bf16 %v7023
        %v7093 = vunpack.c.l.bf16 %v7024
        %v7094 = vunpack.c.l.bf16 %v7025
        %v7095 = vunpack.c.l.bf16 %v7026
        %v7096 = vunpack.c.l.bf16 %v7027
        %v7097 = vunpack.c.l.bf16 %v7028
        %v7098 = vunpack.c.l.bf16 %v7029
        %v7099 = vunpack.c.l.bf16 %v7030
        %v7100 = vunpack.c.l.bf16 %v7031
        %v7101 = vunpack.c.l.bf16 %v7061
        %v7102 = vunpack.c.l.bf16 %v7062
        %v7103 = vunpack.c.l.bf16 %v7063
        %v7104 = vunpack.c.l.bf16 %v7064
        %v7105 = vunpack.c.l.bf16 %v7065
        %v7106 = vunpack.c.l.bf16 %v7066
        %v7107 = vunpack.c.l.bf16 %v7067
        %v7108 = vunpack.c.l.bf16 %v7068
        %v7109 = vunpack.c.l.bf16 %v7069
        %v7110 = vunpack.c.l.bf16 %v7070
        %v7111 = vunpack.c.l.bf16 %v7071
        %v7112 = vunpack.c.l.bf16 %v7072
        %v7113 = vunpack.c.l.bf16 %v7073
        %v7114 = vunpack.c.l.bf16 %v7074
        %v7115 = vunpack.c.l.bf16 %v7075
        %v7116 = vunpack.c.l.bf16 %v7076
        %v7117 = vunpack.c.l.bf16 %v7077
        %v7118 = vunpack.c.l.bf16 %v7078
        %v7119 = vunpack.c.l.bf16 %v7079
        %v7120 = vunpack.c.l.bf16 %v7080
        %v7121 = vunpack.c.l.bf16 %v7081
        %v7122 = vunpack.c.l.bf16 %v7082
        %v7123 = vunpack.c.l.bf16 %v7083
        %v7124 = vunpack.c.l.bf16 %v7084
        %v7149 = vrot.slane %v7101, 6
        %v7150 = vrot.slane %v7102, 6
        %v7151 = vsel %vm6741, %v7149, %v7150
        %v7152 = vrot.slane %v7103, 6
        %v7153 = vsel %vm6741, %v7150, %v7152
        %v7154 = vrot.slane %v7104, 6
        %v7155 = vrot.slane %v7105, 6
        %v7156 = vsel %vm6741, %v7154, %v7155
        %v7157 = vrot.slane %v7106, 6
        %v7158 = vsel %vm6741, %v7155, %v7157
        %v7159 = vrot.slane %v7107, 6
        %v7160 = vrot.slane %v7108, 6
        %v7161 = vsel %vm6741, %v7159, %v7160
        %v7162 = vrot.slane %v7109, 6
        %v7163 = vsel %vm6741, %v7160, %v7162
        %v7164 = vrot.slane %v7110, 6
        %v7165 = vrot.slane %v7111, 6
        %v7166 = vsel %vm6741, %v7164, %v7165
        %v7167 = vrot.slane %v7112, 6
        %v7168 = vsel %vm6741, %v7165, %v7167
        %v7169 = vrot.slane %v7113, 6
        %v7170 = vrot.slane %v7114, 6
        %v7171 = vsel %vm6741, %v7169, %v7170
        %v7172 = vrot.slane %v7115, 6
        %v7173 = vsel %vm6741, %v7170, %v7172
        %v7174 = vrot.slane %v7116, 6
        %v7175 = vrot.slane %v7117, 6
        %v7176 = vsel %vm6741, %v7174, %v7175
        %v7177 = vrot.slane %v7118, 6
        %v7178 = vsel %vm6741, %v7175, %v7177
        %v7179 = vrot.slane %v7119, 6
        %v7180 = vrot.slane %v7120, 6
        %v7181 = vsel %vm6741, %v7179, %v7180
        %v7182 = vrot.slane %v7121, 6
        %v7183 = vsel %vm6741, %v7180, %v7182
        %v7184 = vrot.slane %v7122, 6
        %v7185 = vrot.slane %v7123, 6
        %v7186 = vsel %vm6741, %v7184, %v7185
        %v7187 = vrot.slane %v7124, 6
        %v7188 = vsel %vm6741, %v7185, %v7187
        %v7205 = vadd.f32 %v7085, %v7151
        %v7206 = vadd.f32 %v7086, %v7153
        %v7207 = vadd.f32 %v7087, %v7156
        %v7208 = vadd.f32 %v7088, %v7158
        %v7209 = vadd.f32 %v7089, %v7161
        %v7210 = vadd.f32 %v7090, %v7163
        %v7211 = vadd.f32 %v7091, %v7166
        %v7212 = vadd.f32 %v7092, %v7168
        %v7213 = vadd.f32 %v7093, %v7171
        %v7214 = vadd.f32 %v7094, %v7173
        %v7215 = vadd.f32 %v7095, %v7176
        %v7216 = vadd.f32 %v7096, %v7178
        %v7217 = vadd.f32 %v7097, %v7181
        %v7218 = vadd.f32 %v7098, %v7183
        %v7219 = vadd.f32 %v7099, %v7186
        %v7220 = vadd.f32 %v7100, %v7188
        %v7221 = vpack.c.bf16 %v7205, %v7205
        %v7222 = vpack.c.bf16 %v7206, %v7206
        %v7223 = vpack.c.bf16 %v7207, %v7207
        %v7224 = vpack.c.bf16 %v7208, %v7208
        %v7225 = vpack.c.bf16 %v7209, %v7209
        %v7226 = vpack.c.bf16 %v7210, %v7210
        %v7227 = vpack.c.bf16 %v7211, %v7211
        %v7228 = vpack.c.bf16 %v7212, %v7212
        %v7229 = vpack.c.bf16 %v7213, %v7213
        %v7230 = vpack.c.bf16 %v7214, %v7214
        %v7231 = vpack.c.bf16 %v7215, %v7215
        %v7232 = vpack.c.bf16 %v7216, %v7216
        %v7233 = vpack.c.bf16 %v7217, %v7217
        %v7234 = vpack.c.bf16 %v7218, %v7218
        %v7235 = vpack.c.bf16 %v7219, %v7219
        %v7236 = vpack.c.bf16 %v7220, %v7220
        %v7237 = vunpack.c.l.bf16 %v5475
        %v7238 = vunpack.c.l.bf16 %v5476
        %v7239 = vunpack.c.l.bf16 %v5477
        %v7240 = vunpack.c.l.bf16 %v5478
        %v7241 = vunpack.c.l.bf16 %v5479
        %v7242 = vunpack.c.l.bf16 %v5480
        %v7243 = vunpack.c.l.bf16 %v5481
        %v7244 = vunpack.c.l.bf16 %v5482
        %v7245 = vunpack.c.l.bf16 %v5483
        %v7246 = vunpack.c.l.bf16 %v5484
        %v7247 = vunpack.c.l.bf16 %v5485
        %v7248 = vunpack.c.l.bf16 %v5486
        %v7249 = vunpack.c.l.bf16 %v5487
        %v7250 = vunpack.c.l.bf16 %v5488
        %v7251 = vunpack.c.l.bf16 %v5489
        %v7252 = vunpack.c.l.bf16 %v5490
        %v7253 = vunpack.c.l.bf16 %v5491
        %v7254 = vunpack.c.l.bf16 %v5492
        %v7255 = vunpack.c.l.bf16 %v5493
        %v7256 = vunpack.c.l.bf16 %v5494
        %v7257 = vunpack.c.l.bf16 %v5495
        %v7258 = vunpack.c.l.bf16 %v5496
        %v7259 = vunpack.c.l.bf16 %v5497
        %v7260 = vunpack.c.l.bf16 %v5498
        %v7261 = vunpack.c.l.bf16 %v7221
        %v7262 = vunpack.c.l.bf16 %v7222
        %v7263 = vunpack.c.l.bf16 %v7223
        %v7264 = vunpack.c.l.bf16 %v7224
        %v7265 = vunpack.c.l.bf16 %v7225
        %v7266 = vunpack.c.l.bf16 %v7226
        %v7267 = vunpack.c.l.bf16 %v7227
        %v7268 = vunpack.c.l.bf16 %v7228
        %v7269 = vunpack.c.l.bf16 %v7229
        %v7270 = vunpack.c.l.bf16 %v7230
        %v7271 = vunpack.c.l.bf16 %v7231
        %v7272 = vunpack.c.l.bf16 %v7232
        %v7273 = vunpack.c.l.bf16 %v7233
        %v7274 = vunpack.c.l.bf16 %v7234
        %v7275 = vunpack.c.l.bf16 %v7235
        %v7276 = vunpack.c.l.bf16 %v7236
        %v7293 = vrot.slane %v7261, 6
        %v7294 = vrot.slane %v7262, 6
        %v7295 = vsel %vm6741, %v7293, %v7294
        %v7296 = vrot.slane %v7263, 6
        %v7297 = vrot.slane %v7264, 6
        %v7298 = vsel %vm6741, %v7296, %v7297
        %v7299 = vrot.slane %v7265, 6
        %v7300 = vrot.slane %v7266, 6
        %v7301 = vsel %vm6741, %v7299, %v7300
        %v7302 = vrot.slane %v7267, 6
        %v7303 = vrot.slane %v7268, 6
        %v7304 = vsel %vm6741, %v7302, %v7303
        %v7305 = vrot.slane %v7269, 6
        %v7306 = vrot.slane %v7270, 6
        %v7307 = vsel %vm6741, %v7305, %v7306
        %v7308 = vrot.slane %v7271, 6
        %v7309 = vrot.slane %v7272, 6
        %v7310 = vsel %vm6741, %v7308, %v7309
        %v7311 = vrot.slane %v7273, 6
        %v7312 = vrot.slane %v7274, 6
        %v7313 = vsel %vm6741, %v7311, %v7312
        %v7314 = vrot.slane %v7275, 6
        %v7315 = vrot.slane %v7276, 6
        %v7316 = vsel %vm6741, %v7314, %v7315
        %v7341 = vmul.f32 %v7237, %v7293
        %v7342 = vmul.f32 %v7238, %v7295
        %v7343 = vmul.f32 %v7239, %v7294
        %v7344 = vmul.f32 %v7240, %v7296
        %v7345 = vmul.f32 %v7241, %v7298
        %v7346 = vmul.f32 %v7242, %v7297
        %v7347 = vmul.f32 %v7243, %v7299
        %v7348 = vmul.f32 %v7244, %v7301
        %v7349 = vmul.f32 %v7245, %v7300
        %v7350 = vmul.f32 %v7246, %v7302
        %v7351 = vmul.f32 %v7247, %v7304
        %v7352 = vmul.f32 %v7248, %v7303
        %v7353 = vmul.f32 %v7249, %v7305
        %v7354 = vmul.f32 %v7250, %v7307
        %v7355 = vmul.f32 %v7251, %v7306
        %v7356 = vmul.f32 %v7252, %v7308
        %v7357 = vmul.f32 %v7253, %v7310
        %v7358 = vmul.f32 %v7254, %v7309
        %v7359 = vmul.f32 %v7255, %v7311
        %v7360 = vmul.f32 %v7256, %v7313
        %v7361 = vmul.f32 %v7257, %v7312
        %v7362 = vmul.f32 %v7258, %v7314
        %v7363 = vmul.f32 %v7259, %v7316
        %v7364 = vmul.f32 %v7260, %v7315
        %v7365 = vpack.c.bf16 %v7341, %v7341
        %v7366 = vpack.c.bf16 %v7342, %v7342
        %v7367 = vpack.c.bf16 %v7343, %v7343
        %v7368 = vpack.c.bf16 %v7344, %v7344
        %v7369 = vpack.c.bf16 %v7345, %v7345
        %v7370 = vpack.c.bf16 %v7346, %v7346
        %v7371 = vpack.c.bf16 %v7347, %v7347
        %v7372 = vpack.c.bf16 %v7348, %v7348
        %v7373 = vpack.c.bf16 %v7349, %v7349
        %v7374 = vpack.c.bf16 %v7350, %v7350
        %v7375 = vpack.c.bf16 %v7351, %v7351
        %v7376 = vpack.c.bf16 %v7352, %v7352
        %v7377 = vpack.c.bf16 %v7353, %v7353
        %v7378 = vpack.c.bf16 %v7354, %v7354
        %v7379 = vpack.c.bf16 %v7355, %v7355
        %v7380 = vpack.c.bf16 %v7356, %v7356
        %v7381 = vpack.c.bf16 %v7357, %v7357
        %v7382 = vpack.c.bf16 %v7358, %v7358
        %v7383 = vpack.c.bf16 %v7359, %v7359
        %v7384 = vpack.c.bf16 %v7360, %v7360
        %v7385 = vpack.c.bf16 %v7361, %v7361
        %v7386 = vpack.c.bf16 %v7362, %v7362
        %v7387 = vpack.c.bf16 %v7363, %v7363
        %v7388 = vpack.c.bf16 %v7364, %v7364
        %vm7413 = vcmask 1042432
        %vm7414 = vcmask 1046532
        %vm7415 = vmor %vm7413, %vm7414
        %v7416 = vrot.slane %v7365, 5
        %v7417 = vrot.slane %v7416, 4
        %v7418 = vrot.slane %v7366, 5
        %v7419 = vsel %vm7415, %v7417, %v7418
        %v7420 = vrot.slane %v7418, 4
        %v7421 = vrot.slane %v7367, 5
        %v7422 = vsel %vm7415, %v7420, %v7421
        %v7423 = vrot.slane %v7368, 5
        %v7424 = vrot.slane %v7423, 4
        %v7425 = vrot.slane %v7369, 5
        %v7426 = vsel %vm7415, %v7424, %v7425
        %v7427 = vrot.slane %v7425, 4
        %v7428 = vrot.slane %v7370, 5
        %v7429 = vsel %vm7415, %v7427, %v7428
        %v7430 = vrot.slane %v7371, 5
        %v7431 = vrot.slane %v7430, 4
        %v7432 = vrot.slane %v7372, 5
        %v7433 = vsel %vm7415, %v7431, %v7432
        %v7434 = vrot.slane %v7432, 4
        %v7435 = vrot.slane %v7373, 5
        %v7436 = vsel %vm7415, %v7434, %v7435
        %v7437 = vrot.slane %v7374, 5
        %v7438 = vrot.slane %v7437, 4
        %v7439 = vrot.slane %v7375, 5
        %v7440 = vsel %vm7415, %v7438, %v7439
        %v7441 = vrot.slane %v7439, 4
        %v7442 = vrot.slane %v7376, 5
        %v7443 = vsel %vm7415, %v7441, %v7442
        %v7444 = vrot.slane %v7377, 5
        %v7445 = vrot.slane %v7444, 4
        %v7446 = vrot.slane %v7378, 5
        %v7447 = vsel %vm7415, %v7445, %v7446
        %v7448 = vrot.slane %v7446, 4
        %v7449 = vrot.slane %v7379, 5
        %v7450 = vsel %vm7415, %v7448, %v7449
        %v7451 = vrot.slane %v7380, 5
        %v7452 = vrot.slane %v7451, 4
        %v7453 = vrot.slane %v7381, 5
        %v7454 = vsel %vm7415, %v7452, %v7453
        %v7455 = vrot.slane %v7453, 4
        %v7456 = vrot.slane %v7382, 5
        %v7457 = vsel %vm7415, %v7455, %v7456
        %v7458 = vrot.slane %v7383, 5
        %v7459 = vrot.slane %v7458, 4
        %v7460 = vrot.slane %v7384, 5
        %v7461 = vsel %vm7415, %v7459, %v7460
        %v7462 = vrot.slane %v7460, 4
        %v7463 = vrot.slane %v7385, 5
        %v7464 = vsel %vm7415, %v7462, %v7463
        %v7465 = vrot.slane %v7386, 5
        %v7466 = vrot.slane %v7465, 4
        %v7467 = vrot.slane %v7387, 5
        %v7468 = vsel %vm7415, %v7466, %v7467
        %v7469 = vrot.slane %v7467, 4
        %v7470 = vrot.slane %v7388, 5
        %v7471 = vsel %vm7415, %v7469, %v7470
        %v7472 = vld [vmem:[#allocation15] sm:$0xf]
        %v7473 = vld [vmem:[#allocation15 + $0x4] sm:$0xf]
        %v7474 = vld [vmem:[#allocation15 + $0x8] sm:$0xf]
        %v7475 = vld [vmem:[#allocation15 + $0xc] sm:$0xf]
        %v7476 = vld [vmem:[#allocation15 + $0x10] sm:$0xf]
        %v7477 = vld [vmem:[#allocation15 + $0x14] sm:$0xf]
        %v7478 = vld [vmem:[#allocation15 + $0x18] sm:$0xf]
        %v7479 = vld [vmem:[#allocation15 + $0x1c] sm:$0xf]
        %v7480 = vld [vmem:[#allocation15 + $0x20] sm:$0xf]
        %v7481 = vld [vmem:[#allocation15 + $0x24] sm:$0xf]
        %v7482 = vld [vmem:[#allocation15 + $0x28] sm:$0xf]
        %v7483 = vld [vmem:[#allocation15 + $0x2c] sm:$0xf]
        %v7484 = vld [vmem:[#allocation15 + $0x30] sm:$0xf]
        %v7485 = vld [vmem:[#allocation15 + $0x34] sm:$0xf]
        %v7486 = vld [vmem:[#allocation15 + $0x38] sm:$0xf]
        %v7487 = vld [vmem:[#allocation15 + $0x3c] sm:$0xf]
        %v7488 = vunpack.c.l.b16 %v7419
        %v7489 = vunpack.c.l.b16 %v7422
        %v7490 = vunpack.c.l.b16 %v7426
        %v7491 = vunpack.c.l.b16 %v7429
        %v7492 = vunpack.c.l.b16 %v7433
        %v7493 = vunpack.c.l.b16 %v7436
        %v7494 = vunpack.c.l.b16 %v7440
        %v7495 = vunpack.c.l.b16 %v7443
        %v7496 = vunpack.c.l.b16 %v7447
        %v7497 = vunpack.c.l.b16 %v7450
        %v7498 = vunpack.c.l.b16 %v7454
        %v7499 = vunpack.c.l.b16 %v7457
        %v7500 = vunpack.c.l.b16 %v7461
        %v7501 = vunpack.c.l.b16 %v7464
        %v7502 = vunpack.c.l.b16 %v7468
        %v7503 = vunpack.c.l.b16 %v7471
        %v7504 = vpack.c.b16 %v7489, %v7488
        %v7505 = vpack.c.b16 %v7491, %v7490
        %v7506 = vpack.c.b16 %v7493, %v7492
        %v7507 = vpack.c.b16 %v7495, %v7494
        %v7508 = vpack.c.b16 %v7497, %v7496
        %v7509 = vpack.c.b16 %v7499, %v7498
        %v7510 = vpack.c.b16 %v7501, %v7500
        %v7511 = vpack.c.b16 %v7503, %v7502
        %v7536 = vunpack.c.l.b16 %v7472
        %v7537 = vunpack.c.l.b16 %v7473
        %v7538 = vunpack.c.l.b16 %v7474
        %v7539 = vunpack.c.l.b16 %v7475
        %v7540 = vunpack.c.l.b16 %v7476
        %v7541 = vunpack.c.l.b16 %v7477
        %v7542 = vunpack.c.l.b16 %v7478
        %v7543 = vunpack.c.l.b16 %v7479
        %v7544 = vunpack.c.l.b16 %v7480
        %v7545 = vunpack.c.l.b16 %v7481
        %v7546 = vunpack.c.l.b16 %v7482
        %v7547 = vunpack.c.l.b16 %v7483
        %v7548 = vunpack.c.l.b16 %v7484
        %v7549 = vunpack.c.l.b16 %v7485
        %v7550 = vunpack.c.l.b16 %v7486
        %v7551 = vunpack.c.l.b16 %v7487
        %v7552 = vpack.c.b16 %v7537, %v7536
        %v7553 = vpack.c.b16 %v7539, %v7538
        %v7554 = vpack.c.b16 %v7541, %v7540
        %v7555 = vpack.c.b16 %v7543, %v7542
        %v7556 = vpack.c.b16 %v7545, %v7544
        %v7557 = vpack.c.b16 %v7547, %v7546
        %v7558 = vpack.c.b16 %v7549, %v7548
        %v7559 = vpack.c.b16 %v7551, %v7550
        %7568 = vmatpush.bf16.msra.mxu0 %v7559
        %7569 = vmatpush.bf16.msra.mxu0 %v7558
        %7570 = vmatpush.bf16.msra.mxu0 %v7557
        %7571 = vmatpush.bf16.msra.mxu0 %v7556
        %7572 = vmatpush.bf16.msra.mxu0 %v7555
        %7573 = vmatpush.bf16.msra.mxu0 %v7554
        %7574 = vmatpush.bf16.msra.mxu0 %v7553
        %7575 = vmatpush.bf16.msra.mxu0 %v7552
        %7576 = vmatmul.bf16.gmra.mxu0 %v7504
        %v7577 = vpop.f32.mrf.mxu0
        %v7578 = vadd.f32 0.0, %v7577
        %v7579 = vpop.f32.mrf.mxu0
        %v7580 = vadd.f32 0.0, %v7579
        %7581 = vmatmul.bf16.gmra.mxu0 %v7505
        %v7582 = vpop.f32.mrf.mxu0
        %v7583 = vadd.f32 0.0, %v7582
        %v7584 = vpop.f32.mrf.mxu0
        %v7585 = vadd.f32 0.0, %v7584
        %7586 = vmatmul.bf16.gmra.mxu0 %v7506
        %v7587 = vpop.f32.mrf.mxu0
        %v7588 = vadd.f32 0.0, %v7587
        %v7589 = vpop.f32.mrf.mxu0
        %v7590 = vadd.f32 0.0, %v7589
        %7591 = vmatmul.bf16.gmra.mxu0 %v7507
        %v7592 = vpop.f32.mrf.mxu0
        %v7593 = vadd.f32 0.0, %v7592
        %v7594 = vpop.f32.mrf.mxu0
        %v7595 = vadd.f32 0.0, %v7594
        %7596 = vmatmul.bf16.gmra.mxu0 %v7508
        %v7597 = vpop.f32.mrf.mxu0
        %v7598 = vadd.f32 0.0, %v7597
        %v7599 = vpop.f32.mrf.mxu0
        %v7600 = vadd.f32 0.0, %v7599
        %7601 = vmatmul.bf16.gmra.mxu0 %v7509
        %v7602 = vpop.f32.mrf.mxu0
        %v7603 = vadd.f32 0.0, %v7602
        %v7604 = vpop.f32.mrf.mxu0
        %v7605 = vadd.f32 0.0, %v7604
        %7606 = vmatmul.bf16.gmra.mxu0 %v7510
        %v7607 = vpop.f32.mrf.mxu0
        %v7608 = vadd.f32 0.0, %v7607
        %v7609 = vpop.f32.mrf.mxu0
        %v7610 = vadd.f32 0.0, %v7609
        %7611 = vmatmul.bf16.gmra.mxu0 %v7511
        %v7612 = vpop.f32.mrf.mxu0
        %v7613 = vadd.f32 0.0, %v7612
        %v7614 = vpop.f32.mrf.mxu0
        %v7615 = vadd.f32 0.0, %v7614
        %7616 = vdwg.mxu0
        %v7617 = vpack.c.bf16 %v7578, %v7578
        %v7618 = vpack.c.bf16 %v7580, %v7580
        %v7619 = vpack.c.bf16 %v7583, %v7583
        %v7620 = vpack.c.bf16 %v7585, %v7585
        %v7621 = vpack.c.bf16 %v7588, %v7588
        %v7622 = vpack.c.bf16 %v7590, %v7590
        %v7623 = vpack.c.bf16 %v7593, %v7593
        %v7624 = vpack.c.bf16 %v7595, %v7595
        %v7625 = vpack.c.bf16 %v7598, %v7598
        %v7626 = vpack.c.bf16 %v7600, %v7600
        %v7627 = vpack.c.bf16 %v7603, %v7603
        %v7628 = vpack.c.bf16 %v7605, %v7605
        %v7629 = vpack.c.bf16 %v7608, %v7608
        %v7630 = vpack.c.bf16 %v7610, %v7610
        %v7631 = vpack.c.bf16 %v7613, %v7613
        %v7632 = vpack.c.bf16 %v7615, %v7615
        %7633 = vst [vmem:[%s387] sm:$0xf] %v7617
        %7634 = vst [vmem:[%s387 + $0x4] sm:$0xf] %v7618
        %7635 = vst [vmem:[%s387 + $0x8] sm:$0xf] %v7619
        %7636 = vst [vmem:[%s387 + $0xc] sm:$0xf] %v7620
        %7637 = vst [vmem:[%s387 + $0x10] sm:$0xf] %v7621
        %7638 = vst [vmem:[%s387 + $0x14] sm:$0xf] %v7622
        %7639 = vst [vmem:[%s387 + $0x18] sm:$0xf] %v7623
        %7640 = vst [vmem:[%s387 + $0x1c] sm:$0xf] %v7624
        %7641 = vst [vmem:[%s387 + $0x20] sm:$0xf] %v7625
        %7642 = vst [vmem:[%s387 + $0x24] sm:$0xf] %v7626
        %7643 = vst [vmem:[%s387 + $0x28] sm:$0xf] %v7627
        %7644 = vst [vmem:[%s387 + $0x2c] sm:$0xf] %v7628
        %7645 = vst [vmem:[%s387 + $0x30] sm:$0xf] %v7629
        %7646 = vst [vmem:[%s387 + $0x34] sm:$0xf] %v7630
        %7647 = vst [vmem:[%s387 + $0x38] sm:$0xf] %v7631
        %7648 = vst [vmem:[%s387 + $0x3c] sm:$0xf] %v7632
        %s7649 = sand.u32 %s195, 1
        %s7650 = scalar_lea.sflag [#allocation6], %s7649
        %s7651 = sand.u32 %s195, 1
        %s7652 = smul.addr %s7651, 64
        %s7653 = scalar_lea.vmem [#allocation16], %s7652
        // Predicated region
        $region81: #{tpu_custom_call.1} parent=47 // pred_check
          %p7654 = pneg %p205
        $region82: #{tpu_custom_call.1} parent=47 // pred_check_branch
          %7656 = sbr.rel (%p7654) target = $region84
        $region83: #{tpu_custom_call.1} parent=47 // pred_region
          %s7657 = smul.u32 8, %s31
          %7659 = vsyncadd %s7650, 0
          %s7660 = smul.addr %s7657, 2
          %s7661 = smul.addr %s30, 32
          %s7662 = sadd.s32 %s7660, %s7661
          %s7663 = smul.addr %s7662, 4
          %s7664 = scalar_lea.hbm %s8, %s7663
          %s7665 = sshll.u32 %s7653, 4
          %s7666 = int_to_ptr.vmem [resolvable:$true] %s7665
          %s7667 = sshll.u32 %s7664, 4
          %s7668 = int_to_ptr.hbm [resolvable:$true] %s7667
          %7673 = dma.vmem_to_hbm [thread:$0]  %s7666, 1024, %s7668, %s7650, 64, 64, 4
        $region84: #{tpu_custom_call.1} parent=47 // pred_fallthru
          _
      $region48: #{tpu_custom_call.1} parent=5 // pred_fallthru
        _
      %p7674 = scmp.le.s32.totalorder 2, %s21
      // Predicated region
      $region85: #{tpu_custom_call.1} parent=5 // pred_check
        %p7675 = pneg %p7674
      $region86: #{tpu_custom_call.1} parent=5 // pred_check_branch
        %7677 = sbr.rel (%p7675) target = $region88
      $region87: #{tpu_custom_call.1} parent=5 // pred_region
        %s7678 = ssub.s32 %s21, 2
        // Predicated region
        $region89: #{tpu_custom_call.1} parent=87 // pred_check
          %p7679 = pneg %p211
        $region90: #{tpu_custom_call.1} parent=87 // pred_check_branch
          %7681 = sbr.rel (%p7679) target = $region92
        $region91: #{tpu_custom_call.1} parent=87 // pred_region
          %s7682 = sand.u32 %s196, 1
          %s7683 = scalar_lea.sflag [#allocation6], %s7682
          %s7684 = sand.u32 %s196, 1
          %s7685 = smul.addr %s7684, 64
          %s7686 = scalar_lea.vmem [#allocation16], %s7685
          %7688 = dma.done %s7683, 1024
        $region92: #{tpu_custom_call.1} parent=87 // pred_fallthru
          _
      $region88: #{tpu_custom_call.1} parent=5 // pred_fallthru
        _
    $region6: #{tpu_custom_call.1} parent=1 // loop_footer
      %s25 = sadd.s32 1, %s21
    $region7: #{tpu_custom_call.1} parent=1 // loop_footer_branch
      %20 = sbr.rel target = $region3
    $region8: #{tpu_custom_call.1} parent=1 // loop_exit
      _
    %7689 = vsyncpa [#allocation5], 1
    %s7690 = scalar_lea.sflag [#allocation5], 1
    %7691 = vsyncpa %s7690, 1
    %7692 = vsyncpa [#allocation8], 1
    %7693 = vsyncpa [#allocation11], 1
    %7694 = vsyncpa [#allocation14], 1
    %7695 = vsyncpa [#allocation6], 1
    %s7696 = scalar_lea.sflag [#allocation6], 1
    %7697 = vsyncpa %s7696, 1
  %7698 = vsyncmov [#allocation3]
  %s7699 = vpop.sfrf %7698
  %p7700 = scmp.eq.s32.totalorder %s7699, 0
  %p7701 = pneg %p7700
  %7703 = shalt.err (%p7701)

</llo_original>
